<compile_context>
chip_gen: v7x
topology: tpu7x:2x2x1
jax: 0.10.0
libtpu: 0.0.40
codegen_flags: <defaults>
</compile_context>

<pallas_src>
import jax
import jax.numpy as jnp
from jax.experimental import pallas as pl
from jax.experimental.pallas import tpu as pltpu

# ---- small synthetic dimensions consistent with the forward pass ----
B = 2               # batch
L = 8               # max_length (stand-in for 128)
H = 32              # hidden size (stand-in for 768)
NUM_HEADS = 8       # nn.MultiheadAttention(hidden_size, num_heads=8)
HEAD_DIM = H // NUM_HEADS
FFN = 4 * H         # BERT intermediate size
VOCAB = 128         # synthetic vocab (stands in for the 21128-entry BERT vocab)
NUM_LAYERS = 2      # bert.encoder.layer[:2]
PAD = 128           # lane-dense output / packed-vector width
SCALE = 1.0 / (HEAD_DIM ** 0.5)


# ============================ fused Pallas kernel =============================


def _detection_kernel(acts_ref, vec128_ref, l_vecs_ref, ca_wqkv_ref, w32_ref,
                      hd_w2p_ref, l_wqkv3_ref, l_bqkv3_ref, l_wo3_ref,
                      l_wout_ref, l_wi_ref, hidden_ref, det_ref):
  f32 = jnp.float32
  bf16 = jnp.bfloat16

  def bdot(x, w):
    # bf16 operands, f32 accumulation on the MXU.
    return jnp.dot(x.astype(bf16), w.astype(bf16), preferred_element_type=f32)

  def layer_norm(x, g, b, eps):
    mu = jnp.mean(x, axis=-1, keepdims=True)
    var = jnp.mean(jnp.square(x - mu), axis=-1, keepdims=True)
    return (x - mu) * jax.lax.rsqrt(var + eps) * g + b

  # ---- unpack the consolidated slabs (static row / lane slices) ----
  acts = acts_ref[...]                          # (3*B*L, H) f32
  word = acts[0:B * L, :]                       # word embeddings, rows (b, l)
  summ = acts[B * L:2 * B * L, :]               # masked summary embeddings
  add_slab = acts[2 * B * L:3 * B * L, :]       # fusion bias + position embed

  vec128 = vec128_ref[...]                      # (5, 128) f32
  ca_vec = vec128[NUM_LAYERS:NUM_LAYERS + 1, :]
  ca_bqkv = ca_vec[:, 0:3 * H]
  ca_bo = ca_vec[:, 3 * H:4 * H]
  hd_vec = vec128[NUM_LAYERS + 1:NUM_LAYERS + 2, :]
  hd_b1 = hd_vec[:, 0:H]
  hd_lng = hd_vec[:, H:2 * H]
  hd_lnb = hd_vec[:, 2 * H:3 * H]
  hd_b2p = vec128[NUM_LAYERS + 2:NUM_LAYERS + 3, :]

  w32 = w32_ref[...]                            # (4H, H) bf16 stacked weights
  ca_wo = w32[0:H, :]
  fus_wa = w32[H:2 * H, :]                      # fusion weight, word half
  fus_wb = w32[2 * H:3 * H, :]                  # fusion weight, context half
  hd_w1 = w32[3 * H:4 * H, :]

  # head-grouping matrices (built once): G[e, h] = 1 iff lane e belongs to head h
  e_i = jax.lax.broadcasted_iota(jnp.int32, (H, NUM_HEADS), 0)
  h_i = jax.lax.broadcasted_iota(jnp.int32, (H, NUM_HEADS), 1)
  G = jnp.where((e_i >= h_i * HEAD_DIM) & (e_i < (h_i + 1) * HEAD_DIM),
                1.0, 0.0).astype(bf16)          # (H, nh)
  e_t = jax.lax.broadcasted_iota(jnp.int32, (NUM_HEADS, H), 1)
  h_t = jax.lax.broadcasted_iota(jnp.int32, (NUM_HEADS, H), 0)
  GT = jnp.where((e_t >= h_t * HEAD_DIM) & (e_t < (h_t + 1) * HEAD_DIM),
                 1.0, 0.0).astype(bf16)         # (nh, H)

  # ---- CrossAttention: batch-first tensors fed into a seq-first
  # nn.MultiheadAttention, so attention runs over the batch axis (size B) for
  # each sequence position l and head h.  Computed fully vectorized over all
  # (b, l) rows and all heads at once; the key axis (size B=2) is unrolled.
  ca_w = ca_wqkv_ref[...]                       # (H, 3H) packed QKV weight
  kv = bdot(word, ca_w) + ca_bqkv               # (B*L, 3H)  keys/values <- word
  qp = bdot(summ, ca_w) + ca_bqkv               # (B*L, 3H)  queries    <- summary
  q = qp[:, 0:H]
  k = kv[:, H:2 * H]
  v = kv[:, 2 * H:3 * H]

  s_parts, v_parts = [], []
  for bp in range(B):
    k_blk = k[bp * L:(bp + 1) * L, :]
    v_blk = v[bp * L:(bp + 1) * L, :]
    k_sel = jnp.concatenate([k_blk] * B, axis=0)   # row (b, l) -> key (bp, l)
    v_sel = jnp.concatenate([v_blk] * B, axis=0)
    # per-head dot products for every row at once: (q*k) summed per head group
    s_parts.append(jnp.dot((q * k_sel).astype(bf16), G,
                           preferred_element_type=f32) * SCALE)   # (B*L, nh)
    v_parts.append(v_sel)
  m = s_parts[0]
  for bp in range(1, B):
    m = jnp.maximum(m, s_parts[bp])
  e_parts = [jnp.exp(s - m) for s in s_parts]
  denom = e_parts[0]
  for bp in range(1, B):
    denom = denom + e_parts[bp]
  inv = pl.reciprocal(denom, approx=True)
  ctx = jnp.zeros((B * L, H), f32)
  for bp in range(B):
    p_full = jnp.dot((e_parts[bp] * inv).astype(bf16), GT,
                     preferred_element_type=f32)   # prob broadcast to head lanes
    ctx = ctx + p_full * v_parts[bp]
  ctx = bdot(ctx, ca_wo) + ca_bo                   # out_proj, rows (b, l)

  # ---- fusion Linear over cat([word, ctx], -1) (single packed weight slab,
  # applied as two row-sliced matmuls) + bias + position embeddings.
  x = bdot(word, fus_wa) + bdot(ctx, fus_wb) + add_slab

  def self_attention(x2d, wqkv3, bqkv3, wo3):
    # Head-batched attention: heads were folded into the leading einsum batch
    # dim host-side (per-head weight slabs), so no lane-splitting relayouts.
    x3 = x2d.reshape(B, L, H).astype(bf16)
    xb = jnp.concatenate([x3] * NUM_HEADS, axis=0)            # (nh*B, L, H)
    qkv = jnp.einsum('bte,bef->btf', xb, wqkv3,
                     preferred_element_type=f32) + bqkv3      # (nh*B, L, 3*hd)
    qh = qkv[:, :, 0:HEAD_DIM].astype(bf16)
    kh = qkv[:, :, HEAD_DIM:2 * HEAD_DIM].astype(bf16)
    vh = qkv[:, :, 2 * HEAD_DIM:3 * HEAD_DIM].astype(bf16)
    s = jnp.einsum('bqd,bkd->bqk', qh, kh,
                   preferred_element_type=f32) * SCALE        # (nh*B, L, L)
    s = s - jnp.max(s, axis=-1, keepdims=True)
    p = jnp.exp(s)
    p = p * pl.reciprocal(jnp.sum(p, axis=-1, keepdims=True), approx=True)
    c = jnp.einsum('bqk,bkd->bqd', p.astype(bf16), vh,
                   preferred_element_type=f32)                # (nh*B, L, hd)
    o = jnp.einsum('btd,bdf->btf', c.astype(bf16), wo3,
                   preferred_element_type=f32)                # (nh*B, L, H)
    out = o[0:B]
    for hh in range(1, NUM_HEADS):                            # sum over heads
      out = out + o[hh * B:(hh + 1) * B]
    return out.reshape(B * L, H)

  # ---- 2 BERT encoder layers (post-LN, GELU FFN, no attention mask — the
  # original calls transformer_layer(x) without a mask).
  # TODO(synk): tanh-approx GELU vs HF BERT's exact erf GELU (tiny deviation).
  for li in range(NUM_LAYERS):
    vecs = l_vecs_ref[li]                                     # (6, H)
    bo_attn, ln1g, ln1b = vecs[0:1, :], vecs[1:2, :], vecs[2:3, :]
    bout, ln2g, ln2b = vecs[3:4, :], vecs[4:5, :], vecs[5:6, :]
    bi = vec128[li:li + 1, :]                                 # (1, FFN)

    attn = self_attention(x, l_wqkv3_ref[li], l_bqkv3_ref[li],
                          l_wo3_ref[li]) + bo_attn
    h1 = layer_norm(attn + x, ln1g, ln1b, 1e-12)
    inter = jax.nn.gelu(bdot(h1, l_wi_ref[li]) + bi, approximate=True)
    ffn = bdot(inter, l_wout_ref[li]) + bout
    x = layer_norm(ffn + h1, ln2g, ln2b, 1e-12)

  # ---- detection head: Linear -> LayerNorm -> GELU -> Linear(H,1) -> Sigmoid.
  # The N=1 weight/bias are padded to 128 lanes so the store is lane-dense;
  # only column 0 is the real probability (wrapper slices it and applies the
  # attention mask).
  d1 = bdot(x, hd_w1) + hd_b1
  d1 = jax.nn.gelu(layer_norm(d1, hd_lng, hd_lnb, 1e-5), approximate=True)
  logits = bdot(d1, hd_w2p_ref[...]) + hd_b2p                 # (B*L, 128)
  det_ref[...] = jax.nn.sigmoid(logits)

  # lane-dense 128-wide hidden-state output; wrapper slices [:, :H].
  hidden_ref[...] = jnp.zeros((B * L, PAD), f32)
  hidden_ref[:, 0:H] = x


# ============================ pallas_call wrapper =============================


def _zero_index_map(ndim):
  return lambda i, _n=ndim: (0,) * _n


def _fused_forward(acts, p):
  inputs = [acts, p["vec128"], p["l_vecs"], p["ca_wqkv"], p["w32_stack"],
            p["hd_w2p"], p["l_wqkv3"], p["l_bqkv3"], p["l_wo3"],
            p["l_wout"], p["l_wi"]]
  in_specs = [pl.BlockSpec(a.shape, _zero_index_map(a.ndim)) for a in inputs]
  out_shape = (
      jax.ShapeDtypeStruct((B * L, PAD), jnp.float32),   # padded hidden states
      jax.ShapeDtypeStruct((B * L, PAD), jnp.float32),   # padded detection probs
  )
  out_specs = (
      pl.BlockSpec((B * L, PAD), _zero_index_map(2)),
      pl.BlockSpec((B * L, PAD), _zero_index_map(2)),
  )
  return pl.pallas_call(
      _detection_kernel,
      grid=(1,),
      in_specs=in_specs,
      out_specs=out_specs,
      out_shape=out_shape,
      compiler_params=pltpu.CompilerParams(
          dimension_semantics=("arbitrary",)),
  )(*inputs)


def detection_network(input_ids, attention_mask, summary_ids, summary_mask, params):
  # TODO(synk): HF tokenizer + pretrained embedding table replaced by
  # precomputed ids and a synthetic embedding table (gathered with plain XLA).
  word_emb = params["embed"][input_ids]                               # (B, L, H)
  sum_emb = params["embed"][summary_ids] * summary_mask[..., None]    # (B, L, H)
  # Dropout(p=0.1) on both embedding streams is identity at inference.

  # fusion bias + position embeddings precombined into one additive slab.
  add_slab = jnp.tile(params["pos_embed"], (B, 1)) + params["fus_b"][None, :]
  acts = jnp.concatenate([word_emb.reshape(B * L, H),
                          sum_emb.reshape(B * L, H),
                          add_slab], axis=0)                          # (3*B*L, H)

  hidden_pad, det_pad = _fused_forward(acts, params)
  hidden_states = hidden_pad[:, :H].reshape(B, L, H)
  detection_outputs = det_pad[:, 0].reshape(B, L) * attention_mask
  return hidden_states, detection_outputs


# ============================= parameter creation =============================


def init_params(seed=0):
  base = jax.random.PRNGKey(seed)
  counter = [0]

  def nxt():
    counter[0] += 1
    return jax.random.fold_in(base, counter[0])

  def nrm(shape, scale=0.02):
    return (scale * jax.random.normal(nxt(), shape)).astype(jnp.float32)

  bf16 = jnp.bfloat16
  ones = lambda n: jnp.ones((n,), jnp.float32)
  zeros = lambda n: jnp.zeros((n,), jnp.float32)

  # TODO(synk): pretrained hfl/chinese-roberta-wwm-ext embeddings and encoder
  # weights are synthetic stand-ins (identical math, reduced dims).
  embed = nrm((VOCAB, H))
  pos_embed = nrm((L, H))

  ca_wqkv = nrm((H, 3 * H))
  ca_bqkv = nrm((3 * H,))
  ca_wo = nrm((H, H))
  ca_bo = nrm((H,))

  fus_w = nrm((2 * H, H))           # rows 0:H multiply word, H:2H multiply ctx
  fus_b = nrm((H,))

  layers = []
  for _ in range(NUM_LAYERS):
    layers.append(dict(
        wq=nrm((H, H)), wk=nrm((H, H)), wv=nrm((H, H)),
        bq=nrm((H,)), bk=nrm((H,)), bv=nrm((H,)),
        wo=nrm((H, H)), bo=nrm((H,)),
        ln1g=ones(H), ln1b=zeros(H),
        wi=nrm((H, FFN)), bi=nrm((FFN,)),
        wout=nrm((FFN, H)), bout=nrm((H,)),
        ln2g=ones(H), ln2b=zeros(H)))

  hd_w1 = nrm((H, H))
  hd_b1 = nrm((H,))
  hd_lng, hd_lnb = ones(H), zeros(H)
  hd_w2 = nrm((H, 1))
  hd_b2 = nrm((1,))

  # per-head arrangement of the self-attention weights, batch order (head, b),
  # so the kernel folds heads into the leading einsum batch dim.
  def head_arrange(lyr):
    wqkv_h, bqkv_h, wo_h = [], [], []
    for h in range(NUM_HEADS):
      lo, hi = h * HEAD_DIM, (h + 1) * HEAD_DIM
      wqkv_h.append(jnp.concatenate(
          [lyr["wq"][:, lo:hi], lyr["wk"][:, lo:hi], lyr["wv"][:, lo:hi]],
          axis=1))                                               # (H, 3*hd)
      bqkv_h.append(jnp.concatenate(
          [lyr["bq"][lo:hi], lyr["bk"][lo:hi], lyr["bv"][lo:hi]]))
      wo_h.append(lyr["wo"][lo:hi, :])                           # (hd, H)
    wqkv3 = jnp.repeat(jnp.stack(wqkv_h), B, axis=0)             # (nh*B, H, 3*hd)
    bqkv3 = jnp.repeat(jnp.stack(bqkv_h), B, axis=0)[:, None, :] # (nh*B, 1, 3*hd)
    wo3 = jnp.repeat(jnp.stack(wo_h), B, axis=0)                 # (nh*B, hd, H)
    return wqkv3, bqkv3, wo3

  arranged = [head_arrange(lyr) for lyr in layers]
  l_wqkv3 = jnp.stack([a[0] for a in arranged]).astype(bf16)
  l_bqkv3 = jnp.stack([a[1] for a in arranged])
  l_wo3 = jnp.stack([a[2] for a in arranged]).astype(bf16)
  l_wi = jnp.stack([lyr["wi"] for lyr in layers]).astype(bf16)    # (2, H, FFN)
  l_wout = jnp.stack([lyr["wout"] for lyr in layers]).astype(bf16)  # (2, FFN, H)
  l_vecs = jnp.stack([jnp.stack([lyr["bo"], lyr["ln1g"], lyr["ln1b"],
                                 lyr["bout"], lyr["ln2g"], lyr["ln2b"]])
                      for lyr in layers])                         # (2, 6, H)

  # consolidated 128-lane f32 vector slab:
  #   rows 0..NUM_LAYERS-1 : FFN biases, row NUM_LAYERS : [ca_bqkv | ca_bo],
  #   row NUM_LAYERS+1 : [hd_b1 | hd_lng | hd_lnb | 0], row NUM_LAYERS+2 : padded b2.
  ca_vec = jnp.concatenate([ca_bqkv, ca_bo])[None, :]
  hd_vec = jnp.concatenate([hd_b1, hd_lng, hd_lnb, zeros(PAD - 3 * H)])[None, :]
  hd_b2p = jnp.zeros((1, PAD), jnp.float32).at[0, 0].set(hd_b2[0])
  vec128 = jnp.concatenate(
      [jnp.stack([lyr["bi"] for lyr in layers]), ca_vec, hd_vec, hd_b2p], axis=0)

  # stacked lane-width-H bf16 matmul weights: [ca_wo ; fusion(2H) ; hd_w1]
  w32_stack = jnp.concatenate([ca_wo, fus_w, hd_w1], axis=0).astype(bf16)

  # N=1 detection-head weight padded to a lane-dense 128-wide slab (col 0 real).
  hd_w2p = jnp.zeros((H, PAD), jnp.float32).at[:, 0].set(hd_w2[:, 0]).astype(bf16)

  return dict(
      embed=embed, pos_embed=pos_embed, fus_b=fus_b,
      ca_wqkv=ca_wqkv.astype(bf16),
      vec128=vec128, l_vecs=l_vecs,
      w32_stack=w32_stack, hd_w2p=hd_w2p,
      l_wqkv3=l_wqkv3, l_bqkv3=l_bqkv3, l_wo3=l_wo3,
      l_wout=l_wout, l_wi=l_wi)


# ==================================== main ====================================

if __name__ == "__main__":
  key = jax.random.PRNGKey(0)
  k_ids, k_sum = jax.random.split(key)
  input_ids = jax.random.randint(k_ids, (B, L), 0, VOCAB)
  summary_ids = jax.random.randint(k_sum, (B, L), 0, VOCAB)
  attention_mask = jnp.ones((B, L), jnp.float32).at[:, -2:].set(0.0)
  summary_mask = jnp.ones((B, L), jnp.float32).at[:, -3:].set(0.0)

  params = init_params(0)
  forward = jax.jit(detection_network)

  hidden_states, detection_outputs = forward(
      input_ids, attention_mask, summary_ids, summary_mask, params)
  jax.block_until_ready((hidden_states, detection_outputs))

  assert hidden_states.shape == (B, L, H)
  assert hidden_states.dtype == jnp.float32
  assert detection_outputs.shape == (B, L)
  assert detection_outputs.dtype == jnp.float32
  assert bool(jnp.all(jnp.isfinite(hidden_states)))
  assert bool(jnp.all(jnp.isfinite(detection_outputs)))
  print("KERNEL_OK")
</pallas_src>

<mosaic_0001>
module attributes {stable_mosaic.version = 11 : i64} {
  func.func @_detection_kernel(%arg0: i32, %arg1: memref<48x32xf32, #tpu.memory_space<vmem>>, %arg2: memref<5x128xf32, #tpu.memory_space<vmem>>, %arg3: memref<2x6x32xf32, #tpu.memory_space<vmem>>, %arg4: memref<32x96xbf16, #tpu.memory_space<vmem>>, %arg5: memref<128x32xbf16, #tpu.memory_space<vmem>>, %arg6: memref<32x128xbf16, #tpu.memory_space<vmem>>, %arg7: memref<2x16x32x12xbf16, #tpu.memory_space<vmem>>, %arg8: memref<2x16x1x12xf32, #tpu.memory_space<vmem>>, %arg9: memref<2x16x4x32xbf16, #tpu.memory_space<vmem>>, %arg10: memref<2x128x32xbf16, #tpu.memory_space<vmem>>, %arg11: memref<2x32x128xbf16, #tpu.memory_space<vmem>>, %arg12: memref<16x128xf32, #tpu.memory_space<vmem>>, %arg13: memref<16x128xf32, #tpu.memory_space<vmem>>) attributes {dimension_semantics = [#tpu.dimension_semantics<arbitrary>], iteration_bounds = array<i64: 1>, scalar_prefetch = 0 : i64, scratch_operands = 0 : i64, tpu.core_type = #tpu.core_type<tc>, window_params = [{pipeline_mode = #tpu.pipeline_mode<synchronous>, transform_indices = @transform_0, window_bounds = array<i64: 48, 32>}, {pipeline_mode = #tpu.pipeline_mode<synchronous>, transform_indices = @transform_1, window_bounds = array<i64: 5, 128>}, {pipeline_mode = #tpu.pipeline_mode<synchronous>, transform_indices = @transform_2, window_bounds = array<i64: 2, 6, 32>}, {pipeline_mode = #tpu.pipeline_mode<synchronous>, transform_indices = @transform_3, window_bounds = array<i64: 32, 96>}, {pipeline_mode = #tpu.pipeline_mode<synchronous>, transform_indices = @transform_4, window_bounds = array<i64: 128, 32>}, {pipeline_mode = #tpu.pipeline_mode<synchronous>, transform_indices = @transform_5, window_bounds = array<i64: 32, 128>}, {pipeline_mode = #tpu.pipeline_mode<synchronous>, transform_indices = @transform_6, window_bounds = array<i64: 2, 16, 32, 12>}, {pipeline_mode = #tpu.pipeline_mode<synchronous>, transform_indices = @transform_7, window_bounds = array<i64: 2, 16, 1, 12>}, {pipeline_mode = #tpu.pipeline_mode<synchronous>, transform_indices = @transform_8, window_bounds = array<i64: 2, 16, 4, 32>}, {pipeline_mode = #tpu.pipeline_mode<synchronous>, transform_indices = @transform_9, window_bounds = array<i64: 2, 128, 32>}, {pipeline_mode = #tpu.pipeline_mode<synchronous>, transform_indices = @transform_10, window_bounds = array<i64: 2, 32, 128>}, {pipeline_mode = #tpu.pipeline_mode<synchronous>, transform_indices = @transform_11, window_bounds = array<i64: 16, 128>}, {pipeline_mode = #tpu.pipeline_mode<synchronous>, transform_indices = @transform_12, window_bounds = array<i64: 16, 128>}]} {
    %c0 = arith.constant 0 : index
    %c0_0 = arith.constant 0 : index
    %0 = vector.load %arg1[%c0, %c0_0] : memref<48x32xf32, #tpu.memory_space<vmem>>, vector<48x32xf32>
    %1 = vector.extract_strided_slice %0 {offsets = [0, 0], sizes = [16, 32], strides = [1, 1]} : vector<48x32xf32> to vector<16x32xf32>
    %2 = vector.extract_strided_slice %0 {offsets = [16, 0], sizes = [16, 32], strides = [1, 1]} : vector<48x32xf32> to vector<16x32xf32>
    %3 = vector.extract_strided_slice %0 {offsets = [32, 0], sizes = [16, 32], strides = [1, 1]} : vector<48x32xf32> to vector<16x32xf32>
    %c0_1 = arith.constant 0 : index
    %c0_2 = arith.constant 0 : index
    %4 = vector.load %arg2[%c0_1, %c0_2] : memref<5x128xf32, #tpu.memory_space<vmem>>, vector<5x128xf32>
    %5 = vector.extract_strided_slice %4 {offsets = [2, 0], sizes = [1, 128], strides = [1, 1]} : vector<5x128xf32> to vector<1x128xf32>
    %6 = vector.extract_strided_slice %5 {offsets = [0, 0], sizes = [1, 96], strides = [1, 1]} : vector<1x128xf32> to vector<1x96xf32>
    %7 = vector.extract_strided_slice %5 {offsets = [0, 96], sizes = [1, 32], strides = [1, 1]} : vector<1x128xf32> to vector<1x32xf32>
    %8 = vector.extract_strided_slice %4 {offsets = [3, 0], sizes = [1, 128], strides = [1, 1]} : vector<5x128xf32> to vector<1x128xf32>
    %9 = vector.extract_strided_slice %8 {offsets = [0, 0], sizes = [1, 32], strides = [1, 1]} : vector<1x128xf32> to vector<1x32xf32>
    %10 = vector.extract_strided_slice %8 {offsets = [0, 32], sizes = [1, 32], strides = [1, 1]} : vector<1x128xf32> to vector<1x32xf32>
    %11 = vector.extract_strided_slice %8 {offsets = [0, 64], sizes = [1, 32], strides = [1, 1]} : vector<1x128xf32> to vector<1x32xf32>
    %12 = vector.extract_strided_slice %4 {offsets = [4, 0], sizes = [1, 128], strides = [1, 1]} : vector<5x128xf32> to vector<1x128xf32>
    %c0_3 = arith.constant 0 : index
    %c0_4 = arith.constant 0 : index
    %13 = vector.load %arg5[%c0_3, %c0_4] : memref<128x32xbf16, #tpu.memory_space<vmem>>, vector<128x32xbf16>
    %14 = vector.extract_strided_slice %13 {offsets = [0, 0], sizes = [32, 32], strides = [1, 1]} : vector<128x32xbf16> to vector<32x32xbf16>
    %15 = vector.extract_strided_slice %13 {offsets = [32, 0], sizes = [32, 32], strides = [1, 1]} : vector<128x32xbf16> to vector<32x32xbf16>
    %16 = vector.extract_strided_slice %13 {offsets = [64, 0], sizes = [32, 32], strides = [1, 1]} : vector<128x32xbf16> to vector<32x32xbf16>
    %17 = vector.extract_strided_slice %13 {offsets = [96, 0], sizes = [32, 32], strides = [1, 1]} : vector<128x32xbf16> to vector<32x32xbf16>
    %18 = tpu.iota {dimensions = array<i32: 0>} : vector<32x8xi32>
    %19 = tpu.iota {dimensions = array<i32: 1>} : vector<32x8xi32>
    %c4_i32 = arith.constant 4 : i32
    %20 = vector.broadcast %c4_i32 : i32 to vector<32x8xi32>
    %21 = arith.muli %19, %20 : vector<32x8xi32>
    %22 = arith.cmpi sge, %18, %21 : vector<32x8xi32>
    %c1_i32 = arith.constant 1 : i32
    %23 = vector.broadcast %c1_i32 : i32 to vector<32x8xi32>
    %24 = arith.addi %19, %23 : vector<32x8xi32>
    %c4_i32_5 = arith.constant 4 : i32
    %25 = vector.broadcast %c4_i32_5 : i32 to vector<32x8xi32>
    %26 = arith.muli %24, %25 : vector<32x8xi32>
    %27 = arith.cmpi slt, %18, %26 : vector<32x8xi32>
    %28 = arith.andi %22, %27 : vector<32x8xi1>
    %cst = arith.constant 1.000000e+00 : f32
    %cst_6 = arith.constant 0.000000e+00 : f32
    %29 = vector.broadcast %cst : f32 to vector<32x8xf32>
    %30 = vector.broadcast %cst_6 : f32 to vector<32x8xf32>
    %31 = arith.select %28, %29, %30 : vector<32x8xi1>, vector<32x8xf32>
    %32 = arith.truncf %31 : vector<32x8xf32> to vector<32x8xbf16>
    %33 = tpu.iota {dimensions = array<i32: 1>} : vector<8x32xi32>
    %34 = tpu.iota {dimensions = array<i32: 0>} : vector<8x32xi32>
    %c4_i32_7 = arith.constant 4 : i32
    %35 = vector.broadcast %c4_i32_7 : i32 to vector<8x32xi32>
    %36 = arith.muli %34, %35 : vector<8x32xi32>
    %37 = arith.cmpi sge, %33, %36 : vector<8x32xi32>
    %c1_i32_8 = arith.constant 1 : i32
    %38 = vector.broadcast %c1_i32_8 : i32 to vector<8x32xi32>
    %39 = arith.addi %34, %38 : vector<8x32xi32>
    %c4_i32_9 = arith.constant 4 : i32
    %40 = vector.broadcast %c4_i32_9 : i32 to vector<8x32xi32>
    %41 = arith.muli %39, %40 : vector<8x32xi32>
    %42 = arith.cmpi slt, %33, %41 : vector<8x32xi32>
    %43 = arith.andi %37, %42 : vector<8x32xi1>
    %cst_10 = arith.constant 1.000000e+00 : f32
    %cst_11 = arith.constant 0.000000e+00 : f32
    %44 = vector.broadcast %cst_10 : f32 to vector<8x32xf32>
    %45 = vector.broadcast %cst_11 : f32 to vector<8x32xf32>
    %46 = arith.select %43, %44, %45 : vector<8x32xi1>, vector<8x32xf32>
    %47 = arith.truncf %46 : vector<8x32xf32> to vector<8x32xbf16>
    %c0_12 = arith.constant 0 : index
    %c0_13 = arith.constant 0 : index
    %48 = vector.load %arg4[%c0_12, %c0_13] : memref<32x96xbf16, #tpu.memory_space<vmem>>, vector<32x96xbf16>
    %49 = arith.truncf %1 : vector<16x32xf32> to vector<16x32xbf16>
    %cst_14 = arith.constant dense<0.000000e+00> : vector<16x96xf32>
    %50 = tpu.matmul %49, %48, %cst_14 {dimension_numbers = #tpu.dot_dimension_numbers<[1], [0], [0], [1], [0, 0, 1, 1], [], []>} : vector<16x32xbf16>, vector<32x96xbf16>, vector<16x96xf32> -> vector<16x96xf32>
    %51 = vector.broadcast %6 : vector<1x96xf32> to vector<16x96xf32>
    %52 = arith.addf %50, %51 : vector<16x96xf32>
    %53 = arith.truncf %2 : vector<16x32xf32> to vector<16x32xbf16>
    %cst_15 = arith.constant dense<0.000000e+00> : vector<16x96xf32>
    %54 = tpu.matmul %53, %48, %cst_15 {dimension_numbers = #tpu.dot_dimension_numbers<[1], [0], [0], [1], [0, 0, 1, 1], [], []>} : vector<16x32xbf16>, vector<32x96xbf16>, vector<16x96xf32> -> vector<16x96xf32>
    %55 = vector.broadcast %6 : vector<1x96xf32> to vector<16x96xf32>
    %56 = arith.addf %54, %55 : vector<16x96xf32>
    %57 = vector.extract_strided_slice %56 {offsets = [0, 0], sizes = [16, 32], strides = [1, 1]} : vector<16x96xf32> to vector<16x32xf32>
    %58 = vector.extract_strided_slice %52 {offsets = [0, 32], sizes = [16, 32], strides = [1, 1]} : vector<16x96xf32> to vector<16x32xf32>
    %59 = vector.extract_strided_slice %52 {offsets = [0, 64], sizes = [16, 32], strides = [1, 1]} : vector<16x96xf32> to vector<16x32xf32>
    %60 = vector.extract_strided_slice %58 {offsets = [0, 0], sizes = [8, 32], strides = [1, 1]} : vector<16x32xf32> to vector<8x32xf32>
    %61 = vector.extract_strided_slice %59 {offsets = [0, 0], sizes = [8, 32], strides = [1, 1]} : vector<16x32xf32> to vector<8x32xf32>
    %62 = tpu.concatenate %60, %60 in 0 : vector<8x32xf32>, vector<8x32xf32> -> vector<16x32xf32>
    %63 = tpu.concatenate %61, %61 in 0 : vector<8x32xf32>, vector<8x32xf32> -> vector<16x32xf32>
    %64 = arith.mulf %57, %62 : vector<16x32xf32>
    %65 = arith.truncf %64 : vector<16x32xf32> to vector<16x32xbf16>
    %cst_16 = arith.constant dense<0.000000e+00> : vector<16x8xf32>
    %66 = tpu.matmul %65, %32, %cst_16 {dimension_numbers = #tpu.dot_dimension_numbers<[1], [0], [0], [1], [0, 0, 1, 1], [], []>} : vector<16x32xbf16>, vector<32x8xbf16>, vector<16x8xf32> -> vector<16x8xf32>
    %cst_17 = arith.constant 5.000000e-01 : f32
    %67 = vector.broadcast %cst_17 : f32 to vector<16x8xf32>
    %68 = arith.mulf %66, %67 : vector<16x8xf32>
    %69 = vector.extract_strided_slice %58 {offsets = [8, 0], sizes = [8, 32], strides = [1, 1]} : vector<16x32xf32> to vector<8x32xf32>
    %70 = vector.extract_strided_slice %59 {offsets = [8, 0], sizes = [8, 32], strides = [1, 1]} : vector<16x32xf32> to vector<8x32xf32>
    %71 = tpu.concatenate %69, %69 in 0 : vector<8x32xf32>, vector<8x32xf32> -> vector<16x32xf32>
    %72 = tpu.concatenate %70, %70 in 0 : vector<8x32xf32>, vector<8x32xf32> -> vector<16x32xf32>
    %73 = arith.mulf %57, %71 : vector<16x32xf32>
    %74 = arith.truncf %73 : vector<16x32xf32> to vector<16x32xbf16>
    %cst_18 = arith.constant dense<0.000000e+00> : vector<16x8xf32>
    %75 = tpu.matmul %74, %32, %cst_18 {dimension_numbers = #tpu.dot_dimension_numbers<[1], [0], [0], [1], [0, 0, 1, 1], [], []>} : vector<16x32xbf16>, vector<32x8xbf16>, vector<16x8xf32> -> vector<16x8xf32>
    %cst_19 = arith.constant 5.000000e-01 : f32
    %76 = vector.broadcast %cst_19 : f32 to vector<16x8xf32>
    %77 = arith.mulf %75, %76 : vector<16x8xf32>
    %78 = arith.maximumf %68, %77 : vector<16x8xf32>
    %79 = arith.subf %68, %78 : vector<16x8xf32>
    %80 = math.exp %79 : vector<16x8xf32>
    %81 = arith.subf %77, %78 : vector<16x8xf32>
    %82 = math.exp %81 : vector<16x8xf32>
    %83 = arith.addf %80, %82 : vector<16x8xf32>
    %84 = tpu.reciprocal %83 {approx = true} : vector<16x8xf32> -> vector<16x8xf32>
    %cst_20 = arith.constant 0.000000e+00 : f32
    %85 = vector.broadcast %cst_20 : f32 to vector<16x32xf32>
    %86 = arith.mulf %80, %84 : vector<16x8xf32>
    %87 = arith.truncf %86 : vector<16x8xf32> to vector<16x8xbf16>
    %cst_21 = arith.constant dense<0.000000e+00> : vector<16x32xf32>
    %88 = tpu.matmul %87, %47, %cst_21 {dimension_numbers = #tpu.dot_dimension_numbers<[1], [0], [0], [1], [0, 0, 1, 1], [], []>} : vector<16x8xbf16>, vector<8x32xbf16>, vector<16x32xf32> -> vector<16x32xf32>
    %89 = arith.mulf %88, %63 : vector<16x32xf32>
    %90 = arith.addf %85, %89 : vector<16x32xf32>
    %91 = arith.mulf %82, %84 : vector<16x8xf32>
    %92 = arith.truncf %91 : vector<16x8xf32> to vector<16x8xbf16>
    %cst_22 = arith.constant dense<0.000000e+00> : vector<16x32xf32>
    %93 = tpu.matmul %92, %47, %cst_22 {dimension_numbers = #tpu.dot_dimension_numbers<[1], [0], [0], [1], [0, 0, 1, 1], [], []>} : vector<16x8xbf16>, vector<8x32xbf16>, vector<16x32xf32> -> vector<16x32xf32>
    %94 = arith.mulf %93, %72 : vector<16x32xf32>
    %95 = arith.addf %90, %94 : vector<16x32xf32>
    %96 = arith.truncf %95 : vector<16x32xf32> to vector<16x32xbf16>
    %cst_23 = arith.constant dense<0.000000e+00> : vector<16x32xf32>
    %97 = tpu.matmul %96, %14, %cst_23 {dimension_numbers = #tpu.dot_dimension_numbers<[1], [0], [0], [1], [0, 0, 1, 1], [], []>} : vector<16x32xbf16>, vector<32x32xbf16>, vector<16x32xf32> -> vector<16x32xf32>
    %98 = vector.broadcast %7 : vector<1x32xf32> to vector<16x32xf32>
    %99 = arith.addf %97, %98 : vector<16x32xf32>
    %100 = arith.truncf %1 : vector<16x32xf32> to vector<16x32xbf16>
    %cst_24 = arith.constant dense<0.000000e+00> : vector<16x32xf32>
    %101 = tpu.matmul %100, %15, %cst_24 {dimension_numbers = #tpu.dot_dimension_numbers<[1], [0], [0], [1], [0, 0, 1, 1], [], []>} : vector<16x32xbf16>, vector<32x32xbf16>, vector<16x32xf32> -> vector<16x32xf32>
    %102 = arith.truncf %99 : vector<16x32xf32> to vector<16x32xbf16>
    %cst_25 = arith.constant dense<0.000000e+00> : vector<16x32xf32>
    %103 = tpu.matmul %102, %16, %cst_25 {dimension_numbers = #tpu.dot_dimension_numbers<[1], [0], [0], [1], [0, 0, 1, 1], [], []>} : vector<16x32xbf16>, vector<32x32xbf16>, vector<16x32xf32> -> vector<16x32xf32>
    %104 = arith.addf %101, %103 : vector<16x32xf32>
    %105 = arith.addf %104, %3 : vector<16x32xf32>
    %c0_26 = arith.constant 0 : index
    %c0_27 = arith.constant 0 : index
    %c0_28 = arith.constant 0 : index
    %106 = vector.load %arg3[%c0_26, %c0_27, %c0_28] : memref<2x6x32xf32, #tpu.memory_space<vmem>>, vector<1x6x32xf32>
    %107 = vector.shape_cast %106 : vector<1x6x32xf32> to vector<6x32xf32>
    %108 = vector.extract_strided_slice %107 {offsets = [0, 0], sizes = [1, 32], strides = [1, 1]} : vector<6x32xf32> to vector<1x32xf32>
    %109 = vector.extract_strided_slice %107 {offsets = [1, 0], sizes = [1, 32], strides = [1, 1]} : vector<6x32xf32> to vector<1x32xf32>
    %110 = vector.extract_strided_slice %107 {offsets = [2, 0], sizes = [1, 32], strides = [1, 1]} : vector<6x32xf32> to vector<1x32xf32>
    %111 = vector.extract_strided_slice %107 {offsets = [3, 0], sizes = [1, 32], strides = [1, 1]} : vector<6x32xf32> to vector<1x32xf32>
    %112 = vector.extract_strided_slice %107 {offsets = [4, 0], sizes = [1, 32], strides = [1, 1]} : vector<6x32xf32> to vector<1x32xf32>
    %113 = vector.extract_strided_slice %107 {offsets = [5, 0], sizes = [1, 32], strides = [1, 1]} : vector<6x32xf32> to vector<1x32xf32>
    %114 = vector.extract_strided_slice %4 {offsets = [0, 0], sizes = [1, 128], strides = [1, 1]} : vector<5x128xf32> to vector<1x128xf32>
    %c0_29 = arith.constant 0 : index
    %c0_30 = arith.constant 0 : index
    %c0_31 = arith.constant 0 : index
    %c0_32 = arith.constant 0 : index
    %115 = vector.load %arg7[%c0_29, %c0_30, %c0_31, %c0_32] : memref<2x16x32x12xbf16, #tpu.memory_space<vmem>>, vector<1x16x32x12xbf16>
    %116 = vector.shape_cast %115 : vector<1x16x32x12xbf16> to vector<16x32x12xbf16>
    %c0_33 = arith.constant 0 : index
    %c0_34 = arith.constant 0 : index
    %c0_35 = arith.constant 0 : index
    %c0_36 = arith.constant 0 : index
    %117 = vector.load %arg8[%c0_33, %c0_34, %c0_35, %c0_36] : memref<2x16x1x12xf32, #tpu.memory_space<vmem>>, vector<1x16x1x12xf32>
    %118 = vector.shape_cast %117 : vector<1x16x1x12xf32> to vector<16x1x12xf32>
    %c0_37 = arith.constant 0 : index
    %c0_38 = arith.constant 0 : index
    %c0_39 = arith.constant 0 : index
    %c0_40 = arith.constant 0 : index
    %119 = vector.load %arg9[%c0_37, %c0_38, %c0_39, %c0_40] : memref<2x16x4x32xbf16, #tpu.memory_space<vmem>>, vector<1x16x4x32xbf16>
    %120 = vector.shape_cast %119 : vector<1x16x4x32xbf16> to vector<16x4x32xbf16>
    %121 = vector.shape_cast %105 : vector<16x32xf32> to vector<2x8x32xf32>
    %122 = arith.truncf %121 : vector<2x8x32xf32> to vector<2x8x32xbf16>
    %123 = tpu.concatenate %122, %122, %122, %122, %122, %122, %122, %122 in 0 : vector<2x8x32xbf16>, vector<2x8x32xbf16>, vector<2x8x32xbf16>, vector<2x8x32xbf16>, vector<2x8x32xbf16>, vector<2x8x32xbf16>, vector<2x8x32xbf16>, vector<2x8x32xbf16> -> vector<16x8x32xbf16>
    "tpu.trace_start"() <{level = 10 : i32, message = "bte,bef->btf"}> : () -> ()
    %cst_41 = arith.constant dense<0.000000e+00> : vector<16x8x12xf32>
    %124 = tpu.matmul %123, %116, %cst_41 {dimension_numbers = #tpu.dot_dimension_numbers<[2], [1], [1], [2], [0, 0, 0, 1, 1, 2], [0], [0]>} : vector<16x8x32xbf16>, vector<16x32x12xbf16>, vector<16x8x12xf32> -> vector<16x8x12xf32>
    "tpu.trace_stop"() : () -> ()
    %125 = vector.broadcast %118 : vector<16x1x12xf32> to vector<16x8x12xf32>
    %126 = arith.addf %124, %125 : vector<16x8x12xf32>
    %127 = vector.extract_strided_slice %126 {offsets = [0, 0, 0], sizes = [16, 8, 4], strides = [1, 1, 1]} : vector<16x8x12xf32> to vector<16x8x4xf32>
    %128 = arith.truncf %127 : vector<16x8x4xf32> to vector<16x8x4xbf16>
    %129 = vector.extract_strided_slice %126 {offsets = [0, 0, 4], sizes = [16, 8, 4], strides = [1, 1, 1]} : vector<16x8x12xf32> to vector<16x8x4xf32>
    %130 = arith.truncf %129 : vector<16x8x4xf32> to vector<16x8x4xbf16>
    %131 = vector.extract_strided_slice %126 {offsets = [0, 0, 8], sizes = [16, 8, 4], strides = [1, 1, 1]} : vector<16x8x12xf32> to vector<16x8x4xf32>
    %132 = arith.truncf %131 : vector<16x8x4xf32> to vector<16x8x4xbf16>
    "tpu.trace_start"() <{level = 10 : i32, message = "bqd,bkd->bqk"}> : () -> ()
    %cst_42 = arith.constant dense<0.000000e+00> : vector<16x8x8xf32>
    %133 = tpu.matmul %128, %130, %cst_42 {dimension_numbers = #tpu.dot_dimension_numbers<[2], [2], [1], [1], [0, 0, 0, 1, 1, 1], [0], [0]>} : vector<16x8x4xbf16>, vector<16x8x4xbf16>, vector<16x8x8xf32> -> vector<16x8x8xf32>
    "tpu.trace_stop"() : () -> ()
    %cst_43 = arith.constant 5.000000e-01 : f32
    %134 = vector.broadcast %cst_43 : f32 to vector<16x8x8xf32>
    %135 = arith.mulf %133, %134 : vector<16x8x8xf32>
    %cst_44 = arith.constant dense<0xFF800000> : vector<16x8xf32>
    %136 = vector.multi_reduction <maximumf>, %135, %cst_44 [2] : vector<16x8x8xf32> to vector<16x8xf32>
    %137 = vector.shape_cast %136 : vector<16x8xf32> to vector<16x8x1xf32>
    %138 = vector.broadcast %137 : vector<16x8x1xf32> to vector<16x8x8xf32>
    %139 = arith.subf %135, %138 : vector<16x8x8xf32>
    %140 = math.exp %139 : vector<16x8x8xf32>
    %cst_45 = arith.constant dense<0.000000e+00> : vector<16x8xf32>
    %141 = vector.multi_reduction <add>, %140, %cst_45 [2] : vector<16x8x8xf32> to vector<16x8xf32>
    %142 = vector.shape_cast %141 : vector<16x8xf32> to vector<16x8x1xf32>
    %143 = tpu.reciprocal %142 {approx = true} : vector<16x8x1xf32> -> vector<16x8x1xf32>
    %144 = vector.broadcast %143 : vector<16x8x1xf32> to vector<16x8x8xf32>
    %145 = arith.mulf %140, %144 : vector<16x8x8xf32>
    %146 = arith.truncf %145 : vector<16x8x8xf32> to vector<16x8x8xbf16>
    "tpu.trace_start"() <{level = 10 : i32, message = "bqk,bkd->bqd"}> : () -> ()
    %cst_46 = arith.constant dense<0.000000e+00> : vector<16x8x4xf32>
    %147 = tpu.matmul %146, %132, %cst_46 {dimension_numbers = #tpu.dot_dimension_numbers<[2], [1], [1], [2], [0, 0, 0, 1, 1, 2], [0], [0]>} : vector<16x8x8xbf16>, vector<16x8x4xbf16>, vector<16x8x4xf32> -> vector<16x8x4xf32>
    "tpu.trace_stop"() : () -> ()
    %148 = arith.truncf %147 : vector<16x8x4xf32> to vector<16x8x4xbf16>
    "tpu.trace_start"() <{level = 10 : i32, message = "btd,bdf->btf"}> : () -> ()
    %cst_47 = arith.constant dense<0.000000e+00> : vector<16x8x32xf32>
    %149 = tpu.matmul %148, %120, %cst_47 {dimension_numbers = #tpu.dot_dimension_numbers<[2], [1], [1], [2], [0, 0, 0, 1, 1, 2], [0], [0]>} : vector<16x8x4xbf16>, vector<16x4x32xbf16>, vector<16x8x32xf32> -> vector<16x8x32xf32>
    "tpu.trace_stop"() : () -> ()
    %150 = vector.extract_strided_slice %149 {offsets = [0, 0, 0], sizes = [2, 8, 32], strides = [1, 1, 1]} : vector<16x8x32xf32> to vector<2x8x32xf32>
    %151 = vector.extract_strided_slice %149 {offsets = [2, 0, 0], sizes = [2, 8, 32], strides = [1, 1, 1]} : vector<16x8x32xf32> to vector<2x8x32xf32>
    %152 = arith.addf %150, %151 : vector<2x8x32xf32>
    %153 = vector.extract_strided_slice %149 {offsets = [4, 0, 0], sizes = [2, 8, 32], strides = [1, 1, 1]} : vector<16x8x32xf32> to vector<2x8x32xf32>
    %154 = arith.addf %152, %153 : vector<2x8x32xf32>
    %155 = vector.extract_strided_slice %149 {offsets = [6, 0, 0], sizes = [2, 8, 32], strides = [1, 1, 1]} : vector<16x8x32xf32> to vector<2x8x32xf32>
    %156 = arith.addf %154, %155 : vector<2x8x32xf32>
    %157 = vector.extract_strided_slice %149 {offsets = [8, 0, 0], sizes = [2, 8, 32], strides = [1, 1, 1]} : vector<16x8x32xf32> to vector<2x8x32xf32>
    %158 = arith.addf %156, %157 : vector<2x8x32xf32>
    %159 = vector.extract_strided_slice %149 {offsets = [10, 0, 0], sizes = [2, 8, 32], strides = [1, 1, 1]} : vector<16x8x32xf32> to vector<2x8x32xf32>
    %160 = arith.addf %158, %159 : vector<2x8x32xf32>
    %161 = vector.extract_strided_slice %149 {offsets = [12, 0, 0], sizes = [2, 8, 32], strides = [1, 1, 1]} : vector<16x8x32xf32> to vector<2x8x32xf32>
    %162 = arith.addf %160, %161 : vector<2x8x32xf32>
    %163 = vector.extract_strided_slice %149 {offsets = [14, 0, 0], sizes = [2, 8, 32], strides = [1, 1, 1]} : vector<16x8x32xf32> to vector<2x8x32xf32>
    %164 = arith.addf %162, %163 : vector<2x8x32xf32>
    %165 = vector.shape_cast %164 : vector<2x8x32xf32> to vector<16x32xf32>
    %166 = vector.broadcast %108 : vector<1x32xf32> to vector<16x32xf32>
    %167 = arith.addf %165, %166 : vector<16x32xf32>
    %168 = arith.addf %167, %105 : vector<16x32xf32>
    %cst_48 = arith.constant dense<0.000000e+00> : vector<16xf32>
    %169 = vector.multi_reduction <add>, %168, %cst_48 [1] : vector<16x32xf32> to vector<16xf32>
    %170 = vector.shape_cast %169 : vector<16xf32> to vector<16x1xf32>
    %cst_49 = arith.constant 3.200000e+01 : f32
    %171 = vector.broadcast %cst_49 : f32 to vector<16x1xf32>
    %172 = arith.divf %170, %171 : vector<16x1xf32>
    %173 = vector.broadcast %172 : vector<16x1xf32> to vector<16x32xf32>
    %174 = arith.subf %168, %173 : vector<16x32xf32>
    %175 = arith.mulf %174, %174 : vector<16x32xf32>
    %cst_50 = arith.constant dense<0.000000e+00> : vector<16xf32>
    %176 = vector.multi_reduction <add>, %175, %cst_50 [1] : vector<16x32xf32> to vector<16xf32>
    %177 = vector.shape_cast %176 : vector<16xf32> to vector<16x1xf32>
    %cst_51 = arith.constant 3.200000e+01 : f32
    %178 = vector.broadcast %cst_51 : f32 to vector<16x1xf32>
    %179 = arith.divf %177, %178 : vector<16x1xf32>
    %180 = vector.broadcast %172 : vector<16x1xf32> to vector<16x32xf32>
    %181 = arith.subf %168, %180 : vector<16x32xf32>
    %cst_52 = arith.constant 9.99999996E-13 : f32
    %182 = vector.broadcast %cst_52 : f32 to vector<16x1xf32>
    %183 = arith.addf %179, %182 : vector<16x1xf32>
    %184 = math.rsqrt %183 : vector<16x1xf32>
    %185 = vector.broadcast %184 : vector<16x1xf32> to vector<16x32xf32>
    %186 = arith.mulf %181, %185 : vector<16x32xf32>
    %187 = vector.broadcast %109 : vector<1x32xf32> to vector<16x32xf32>
    %188 = arith.mulf %186, %187 : vector<16x32xf32>
    %189 = vector.broadcast %110 : vector<1x32xf32> to vector<16x32xf32>
    %190 = arith.addf %188, %189 : vector<16x32xf32>
    %c0_53 = arith.constant 0 : index
    %c0_54 = arith.constant 0 : index
    %c0_55 = arith.constant 0 : index
    %191 = vector.load %arg11[%c0_53, %c0_54, %c0_55] : memref<2x32x128xbf16, #tpu.memory_space<vmem>>, vector<1x32x128xbf16>
    %192 = vector.shape_cast %191 : vector<1x32x128xbf16> to vector<32x128xbf16>
    %193 = arith.truncf %190 : vector<16x32xf32> to vector<16x32xbf16>
    %cst_56 = arith.constant dense<0.000000e+00> : vector<16x128xf32>
    %194 = tpu.matmul %193, %192, %cst_56 {dimension_numbers = #tpu.dot_dimension_numbers<[1], [0], [0], [1], [0, 0, 1, 1], [], []>} : vector<16x32xbf16>, vector<32x128xbf16>, vector<16x128xf32> -> vector<16x128xf32>
    %195 = vector.broadcast %114 : vector<1x128xf32> to vector<16x128xf32>
    %196 = arith.addf %194, %195 : vector<16x128xf32>
    %197 = arith.mulf %196, %196 : vector<16x128xf32>
    %198 = arith.mulf %196, %197 : vector<16x128xf32>
    %cst_57 = arith.constant 4.471500e-02 : f32
    %199 = vector.broadcast %cst_57 : f32 to vector<16x128xf32>
    %200 = arith.mulf %199, %198 : vector<16x128xf32>
    %201 = arith.addf %196, %200 : vector<16x128xf32>
    %cst_58 = arith.constant 0.797884583 : f32
    %202 = vector.broadcast %cst_58 : f32 to vector<16x128xf32>
    %203 = arith.mulf %202, %201 : vector<16x128xf32>
    %204 = math.tanh %203 : vector<16x128xf32>
    %cst_59 = arith.constant 1.000000e+00 : f32
    %205 = vector.broadcast %cst_59 : f32 to vector<16x128xf32>
    %206 = arith.addf %205, %204 : vector<16x128xf32>
    %cst_60 = arith.constant 5.000000e-01 : f32
    %207 = vector.broadcast %cst_60 : f32 to vector<16x128xf32>
    %208 = arith.mulf %207, %206 : vector<16x128xf32>
    %209 = arith.mulf %196, %208 : vector<16x128xf32>
    %c0_61 = arith.constant 0 : index
    %c0_62 = arith.constant 0 : index
    %c0_63 = arith.constant 0 : index
    %210 = vector.load %arg10[%c0_61, %c0_62, %c0_63] : memref<2x128x32xbf16, #tpu.memory_space<vmem>>, vector<1x128x32xbf16>
    %211 = vector.shape_cast %210 : vector<1x128x32xbf16> to vector<128x32xbf16>
    %212 = arith.truncf %209 : vector<16x128xf32> to vector<16x128xbf16>
    %cst_64 = arith.constant dense<0.000000e+00> : vector<16x32xf32>
    %213 = tpu.matmul %212, %211, %cst_64 {dimension_numbers = #tpu.dot_dimension_numbers<[1], [0], [0], [1], [0, 0, 1, 1], [], []>} : vector<16x128xbf16>, vector<128x32xbf16>, vector<16x32xf32> -> vector<16x32xf32>
    %214 = vector.broadcast %111 : vector<1x32xf32> to vector<16x32xf32>
    %215 = arith.addf %213, %214 : vector<16x32xf32>
    %216 = arith.addf %215, %190 : vector<16x32xf32>
    %cst_65 = arith.constant dense<0.000000e+00> : vector<16xf32>
    %217 = vector.multi_reduction <add>, %216, %cst_65 [1] : vector<16x32xf32> to vector<16xf32>
    %218 = vector.shape_cast %217 : vector<16xf32> to vector<16x1xf32>
    %cst_66 = arith.constant 3.200000e+01 : f32
    %219 = vector.broadcast %cst_66 : f32 to vector<16x1xf32>
    %220 = arith.divf %218, %219 : vector<16x1xf32>
    %221 = vector.broadcast %220 : vector<16x1xf32> to vector<16x32xf32>
    %222 = arith.subf %216, %221 : vector<16x32xf32>
    %223 = arith.mulf %222, %222 : vector<16x32xf32>
    %cst_67 = arith.constant dense<0.000000e+00> : vector<16xf32>
    %224 = vector.multi_reduction <add>, %223, %cst_67 [1] : vector<16x32xf32> to vector<16xf32>
    %225 = vector.shape_cast %224 : vector<16xf32> to vector<16x1xf32>
    %cst_68 = arith.constant 3.200000e+01 : f32
    %226 = vector.broadcast %cst_68 : f32 to vector<16x1xf32>
    %227 = arith.divf %225, %226 : vector<16x1xf32>
    %228 = vector.broadcast %220 : vector<16x1xf32> to vector<16x32xf32>
    %229 = arith.subf %216, %228 : vector<16x32xf32>
    %cst_69 = arith.constant 9.99999996E-13 : f32
    %230 = vector.broadcast %cst_69 : f32 to vector<16x1xf32>
    %231 = arith.addf %227, %230 : vector<16x1xf32>
    %232 = math.rsqrt %231 : vector<16x1xf32>
    %233 = vector.broadcast %232 : vector<16x1xf32> to vector<16x32xf32>
    %234 = arith.mulf %229, %233 : vector<16x32xf32>
    %235 = vector.broadcast %112 : vector<1x32xf32> to vector<16x32xf32>
    %236 = arith.mulf %234, %235 : vector<16x32xf32>
    %237 = vector.broadcast %113 : vector<1x32xf32> to vector<16x32xf32>
    %238 = arith.addf %236, %237 : vector<16x32xf32>
    %c1 = arith.constant 1 : index
    %c0_70 = arith.constant 0 : index
    %c0_71 = arith.constant 0 : index
    %239 = vector.load %arg3[%c1, %c0_70, %c0_71] : memref<2x6x32xf32, #tpu.memory_space<vmem>>, vector<1x6x32xf32>
    %240 = vector.shape_cast %239 : vector<1x6x32xf32> to vector<6x32xf32>
    %241 = vector.extract_strided_slice %240 {offsets = [0, 0], sizes = [1, 32], strides = [1, 1]} : vector<6x32xf32> to vector<1x32xf32>
    %242 = vector.extract_strided_slice %240 {offsets = [1, 0], sizes = [1, 32], strides = [1, 1]} : vector<6x32xf32> to vector<1x32xf32>
    %243 = vector.extract_strided_slice %240 {offsets = [2, 0], sizes = [1, 32], strides = [1, 1]} : vector<6x32xf32> to vector<1x32xf32>
    %244 = vector.extract_strided_slice %240 {offsets = [3, 0], sizes = [1, 32], strides = [1, 1]} : vector<6x32xf32> to vector<1x32xf32>
    %245 = vector.extract_strided_slice %240 {offsets = [4, 0], sizes = [1, 32], strides = [1, 1]} : vector<6x32xf32> to vector<1x32xf32>
    %246 = vector.extract_strided_slice %240 {offsets = [5, 0], sizes = [1, 32], strides = [1, 1]} : vector<6x32xf32> to vector<1x32xf32>
    %247 = vector.extract_strided_slice %4 {offsets = [1, 0], sizes = [1, 128], strides = [1, 1]} : vector<5x128xf32> to vector<1x128xf32>
    %c1_72 = arith.constant 1 : index
    %c0_73 = arith.constant 0 : index
    %c0_74 = arith.constant 0 : index
    %c0_75 = arith.constant 0 : index
    %248 = vector.load %arg7[%c1_72, %c0_73, %c0_74, %c0_75] : memref<2x16x32x12xbf16, #tpu.memory_space<vmem>>, vector<1x16x32x12xbf16>
    %249 = vector.shape_cast %248 : vector<1x16x32x12xbf16> to vector<16x32x12xbf16>
    %c1_76 = arith.constant 1 : index
    %c0_77 = arith.constant 0 : index
    %c0_78 = arith.constant 0 : index
    %c0_79 = arith.constant 0 : index
    %250 = vector.load %arg8[%c1_76, %c0_77, %c0_78, %c0_79] : memref<2x16x1x12xf32, #tpu.memory_space<vmem>>, vector<1x16x1x12xf32>
    %251 = vector.shape_cast %250 : vector<1x16x1x12xf32> to vector<16x1x12xf32>
    %c1_80 = arith.constant 1 : index
    %c0_81 = arith.constant 0 : index
    %c0_82 = arith.constant 0 : index
    %c0_83 = arith.constant 0 : index
    %252 = vector.load %arg9[%c1_80, %c0_81, %c0_82, %c0_83] : memref<2x16x4x32xbf16, #tpu.memory_space<vmem>>, vector<1x16x4x32xbf16>
    %253 = vector.shape_cast %252 : vector<1x16x4x32xbf16> to vector<16x4x32xbf16>
    %254 = vector.shape_cast %238 : vector<16x32xf32> to vector<2x8x32xf32>
    %255 = arith.truncf %254 : vector<2x8x32xf32> to vector<2x8x32xbf16>
    %256 = tpu.concatenate %255, %255, %255, %255, %255, %255, %255, %255 in 0 : vector<2x8x32xbf16>, vector<2x8x32xbf16>, vector<2x8x32xbf16>, vector<2x8x32xbf16>, vector<2x8x32xbf16>, vector<2x8x32xbf16>, vector<2x8x32xbf16>, vector<2x8x32xbf16> -> vector<16x8x32xbf16>
    "tpu.trace_start"() <{level = 10 : i32, message = "bte,bef->btf"}> : () -> ()
    %cst_84 = arith.constant dense<0.000000e+00> : vector<16x8x12xf32>
    %257 = tpu.matmul %256, %249, %cst_84 {dimension_numbers = #tpu.dot_dimension_numbers<[2], [1], [1], [2], [0, 0, 0, 1, 1, 2], [0], [0]>} : vector<16x8x32xbf16>, vector<16x32x12xbf16>, vector<16x8x12xf32> -> vector<16x8x12xf32>
    "tpu.trace_stop"() : () -> ()
    %258 = vector.broadcast %251 : vector<16x1x12xf32> to vector<16x8x12xf32>
    %259 = arith.addf %257, %258 : vector<16x8x12xf32>
    %260 = vector.extract_strided_slice %259 {offsets = [0, 0, 0], sizes = [16, 8, 4], strides = [1, 1, 1]} : vector<16x8x12xf32> to vector<16x8x4xf32>
    %261 = arith.truncf %260 : vector<16x8x4xf32> to vector<16x8x4xbf16>
    %262 = vector.extract_strided_slice %259 {offsets = [0, 0, 4], sizes = [16, 8, 4], strides = [1, 1, 1]} : vector<16x8x12xf32> to vector<16x8x4xf32>
    %263 = arith.truncf %262 : vector<16x8x4xf32> to vector<16x8x4xbf16>
    %264 = vector.extract_strided_slice %259 {offsets = [0, 0, 8], sizes = [16, 8, 4], strides = [1, 1, 1]} : vector<16x8x12xf32> to vector<16x8x4xf32>
    %265 = arith.truncf %264 : vector<16x8x4xf32> to vector<16x8x4xbf16>
    "tpu.trace_start"() <{level = 10 : i32, message = "bqd,bkd->bqk"}> : () -> ()
    %cst_85 = arith.constant dense<0.000000e+00> : vector<16x8x8xf32>
    %266 = tpu.matmul %261, %263, %cst_85 {dimension_numbers = #tpu.dot_dimension_numbers<[2], [2], [1], [1], [0, 0, 0, 1, 1, 1], [0], [0]>} : vector<16x8x4xbf16>, vector<16x8x4xbf16>, vector<16x8x8xf32> -> vector<16x8x8xf32>
    "tpu.trace_stop"() : () -> ()
    %cst_86 = arith.constant 5.000000e-01 : f32
    %267 = vector.broadcast %cst_86 : f32 to vector<16x8x8xf32>
    %268 = arith.mulf %266, %267 : vector<16x8x8xf32>
    %cst_87 = arith.constant dense<0xFF800000> : vector<16x8xf32>
    %269 = vector.multi_reduction <maximumf>, %268, %cst_87 [2] : vector<16x8x8xf32> to vector<16x8xf32>
    %270 = vector.shape_cast %269 : vector<16x8xf32> to vector<16x8x1xf32>
    %271 = vector.broadcast %270 : vector<16x8x1xf32> to vector<16x8x8xf32>
    %272 = arith.subf %268, %271 : vector<16x8x8xf32>
    %273 = math.exp %272 : vector<16x8x8xf32>
    %cst_88 = arith.constant dense<0.000000e+00> : vector<16x8xf32>
    %274 = vector.multi_reduction <add>, %273, %cst_88 [2] : vector<16x8x8xf32> to vector<16x8xf32>
    %275 = vector.shape_cast %274 : vector<16x8xf32> to vector<16x8x1xf32>
    %276 = tpu.reciprocal %275 {approx = true} : vector<16x8x1xf32> -> vector<16x8x1xf32>
    %277 = vector.broadcast %276 : vector<16x8x1xf32> to vector<16x8x8xf32>
    %278 = arith.mulf %273, %277 : vector<16x8x8xf32>
    %279 = arith.truncf %278 : vector<16x8x8xf32> to vector<16x8x8xbf16>
    "tpu.trace_start"() <{level = 10 : i32, message = "bqk,bkd->bqd"}> : () -> ()
    %cst_89 = arith.constant dense<0.000000e+00> : vector<16x8x4xf32>
    %280 = tpu.matmul %279, %265, %cst_89 {dimension_numbers = #tpu.dot_dimension_numbers<[2], [1], [1], [2], [0, 0, 0, 1, 1, 2], [0], [0]>} : vector<16x8x8xbf16>, vector<16x8x4xbf16>, vector<16x8x4xf32> -> vector<16x8x4xf32>
    "tpu.trace_stop"() : () -> ()
    %281 = arith.truncf %280 : vector<16x8x4xf32> to vector<16x8x4xbf16>
    "tpu.trace_start"() <{level = 10 : i32, message = "btd,bdf->btf"}> : () -> ()
    %cst_90 = arith.constant dense<0.000000e+00> : vector<16x8x32xf32>
    %282 = tpu.matmul %281, %253, %cst_90 {dimension_numbers = #tpu.dot_dimension_numbers<[2], [1], [1], [2], [0, 0, 0, 1, 1, 2], [0], [0]>} : vector<16x8x4xbf16>, vector<16x4x32xbf16>, vector<16x8x32xf32> -> vector<16x8x32xf32>
    "tpu.trace_stop"() : () -> ()
    %283 = vector.extract_strided_slice %282 {offsets = [0, 0, 0], sizes = [2, 8, 32], strides = [1, 1, 1]} : vector<16x8x32xf32> to vector<2x8x32xf32>
    %284 = vector.extract_strided_slice %282 {offsets = [2, 0, 0], sizes = [2, 8, 32], strides = [1, 1, 1]} : vector<16x8x32xf32> to vector<2x8x32xf32>
    %285 = arith.addf %283, %284 : vector<2x8x32xf32>
    %286 = vector.extract_strided_slice %282 {offsets = [4, 0, 0], sizes = [2, 8, 32], strides = [1, 1, 1]} : vector<16x8x32xf32> to vector<2x8x32xf32>
    %287 = arith.addf %285, %286 : vector<2x8x32xf32>
    %288 = vector.extract_strided_slice %282 {offsets = [6, 0, 0], sizes = [2, 8, 32], strides = [1, 1, 1]} : vector<16x8x32xf32> to vector<2x8x32xf32>
    %289 = arith.addf %287, %288 : vector<2x8x32xf32>
    %290 = vector.extract_strided_slice %282 {offsets = [8, 0, 0], sizes = [2, 8, 32], strides = [1, 1, 1]} : vector<16x8x32xf32> to vector<2x8x32xf32>
    %291 = arith.addf %289, %290 : vector<2x8x32xf32>
    %292 = vector.extract_strided_slice %282 {offsets = [10, 0, 0], sizes = [2, 8, 32], strides = [1, 1, 1]} : vector<16x8x32xf32> to vector<2x8x32xf32>
    %293 = arith.addf %291, %292 : vector<2x8x32xf32>
    %294 = vector.extract_strided_slice %282 {offsets = [12, 0, 0], sizes = [2, 8, 32], strides = [1, 1, 1]} : vector<16x8x32xf32> to vector<2x8x32xf32>
    %295 = arith.addf %293, %294 : vector<2x8x32xf32>
    %296 = vector.extract_strided_slice %282 {offsets = [14, 0, 0], sizes = [2, 8, 32], strides = [1, 1, 1]} : vector<16x8x32xf32> to vector<2x8x32xf32>
    %297 = arith.addf %295, %296 : vector<2x8x32xf32>
    %298 = vector.shape_cast %297 : vector<2x8x32xf32> to vector<16x32xf32>
    %299 = vector.broadcast %241 : vector<1x32xf32> to vector<16x32xf32>
    %300 = arith.addf %298, %299 : vector<16x32xf32>
    %301 = arith.addf %300, %238 : vector<16x32xf32>
    %cst_91 = arith.constant dense<0.000000e+00> : vector<16xf32>
    %302 = vector.multi_reduction <add>, %301, %cst_91 [1] : vector<16x32xf32> to vector<16xf32>
    %303 = vector.shape_cast %302 : vector<16xf32> to vector<16x1xf32>
    %cst_92 = arith.constant 3.200000e+01 : f32
    %304 = vector.broadcast %cst_92 : f32 to vector<16x1xf32>
    %305 = arith.divf %303, %304 : vector<16x1xf32>
    %306 = vector.broadcast %305 : vector<16x1xf32> to vector<16x32xf32>
    %307 = arith.subf %301, %306 : vector<16x32xf32>
    %308 = arith.mulf %307, %307 : vector<16x32xf32>
    %cst_93 = arith.constant dense<0.000000e+00> : vector<16xf32>
    %309 = vector.multi_reduction <add>, %308, %cst_93 [1] : vector<16x32xf32> to vector<16xf32>
    %310 = vector.shape_cast %309 : vector<16xf32> to vector<16x1xf32>
    %cst_94 = arith.constant 3.200000e+01 : f32
    %311 = vector.broadcast %cst_94 : f32 to vector<16x1xf32>
    %312 = arith.divf %310, %311 : vector<16x1xf32>
    %313 = vector.broadcast %305 : vector<16x1xf32> to vector<16x32xf32>
    %314 = arith.subf %301, %313 : vector<16x32xf32>
    %cst_95 = arith.constant 9.99999996E-13 : f32
    %315 = vector.broadcast %cst_95 : f32 to vector<16x1xf32>
    %316 = arith.addf %312, %315 : vector<16x1xf32>
    %317 = math.rsqrt %316 : vector<16x1xf32>
    %318 = vector.broadcast %317 : vector<16x1xf32> to vector<16x32xf32>
    %319 = arith.mulf %314, %318 : vector<16x32xf32>
    %320 = vector.broadcast %242 : vector<1x32xf32> to vector<16x32xf32>
    %321 = arith.mulf %319, %320 : vector<16x32xf32>
    %322 = vector.broadcast %243 : vector<1x32xf32> to vector<16x32xf32>
    %323 = arith.addf %321, %322 : vector<16x32xf32>
    %c1_96 = arith.constant 1 : index
    %c0_97 = arith.constant 0 : index
    %c0_98 = arith.constant 0 : index
    %324 = vector.load %arg11[%c1_96, %c0_97, %c0_98] : memref<2x32x128xbf16, #tpu.memory_space<vmem>>, vector<1x32x128xbf16>
    %325 = vector.shape_cast %324 : vector<1x32x128xbf16> to vector<32x128xbf16>
    %326 = arith.truncf %323 : vector<16x32xf32> to vector<16x32xbf16>
    %cst_99 = arith.constant dense<0.000000e+00> : vector<16x128xf32>
    %327 = tpu.matmul %326, %325, %cst_99 {dimension_numbers = #tpu.dot_dimension_numbers<[1], [0], [0], [1], [0, 0, 1, 1], [], []>} : vector<16x32xbf16>, vector<32x128xbf16>, vector<16x128xf32> -> vector<16x128xf32>
    %328 = vector.broadcast %247 : vector<1x128xf32> to vector<16x128xf32>
    %329 = arith.addf %327, %328 : vector<16x128xf32>
    %330 = arith.mulf %329, %329 : vector<16x128xf32>
    %331 = arith.mulf %329, %330 : vector<16x128xf32>
    %cst_100 = arith.constant 4.471500e-02 : f32
    %332 = vector.broadcast %cst_100 : f32 to vector<16x128xf32>
    %333 = arith.mulf %332, %331 : vector<16x128xf32>
    %334 = arith.addf %329, %333 : vector<16x128xf32>
    %cst_101 = arith.constant 0.797884583 : f32
    %335 = vector.broadcast %cst_101 : f32 to vector<16x128xf32>
    %336 = arith.mulf %335, %334 : vector<16x128xf32>
    %337 = math.tanh %336 : vector<16x128xf32>
    %cst_102 = arith.constant 1.000000e+00 : f32
    %338 = vector.broadcast %cst_102 : f32 to vector<16x128xf32>
    %339 = arith.addf %338, %337 : vector<16x128xf32>
    %cst_103 = arith.constant 5.000000e-01 : f32
    %340 = vector.broadcast %cst_103 : f32 to vector<16x128xf32>
    %341 = arith.mulf %340, %339 : vector<16x128xf32>
    %342 = arith.mulf %329, %341 : vector<16x128xf32>
    %c1_104 = arith.constant 1 : index
    %c0_105 = arith.constant 0 : index
    %c0_106 = arith.constant 0 : index
    %343 = vector.load %arg10[%c1_104, %c0_105, %c0_106] : memref<2x128x32xbf16, #tpu.memory_space<vmem>>, vector<1x128x32xbf16>
    %344 = vector.shape_cast %343 : vector<1x128x32xbf16> to vector<128x32xbf16>
    %345 = arith.truncf %342 : vector<16x128xf32> to vector<16x128xbf16>
    %cst_107 = arith.constant dense<0.000000e+00> : vector<16x32xf32>
    %346 = tpu.matmul %345, %344, %cst_107 {dimension_numbers = #tpu.dot_dimension_numbers<[1], [0], [0], [1], [0, 0, 1, 1], [], []>} : vector<16x128xbf16>, vector<128x32xbf16>, vector<16x32xf32> -> vector<16x32xf32>
    %347 = vector.broadcast %244 : vector<1x32xf32> to vector<16x32xf32>
    %348 = arith.addf %346, %347 : vector<16x32xf32>
    %349 = arith.addf %348, %323 : vector<16x32xf32>
    %cst_108 = arith.constant dense<0.000000e+00> : vector<16xf32>
    %350 = vector.multi_reduction <add>, %349, %cst_108 [1] : vector<16x32xf32> to vector<16xf32>
    %351 = vector.shape_cast %350 : vector<16xf32> to vector<16x1xf32>
    %cst_109 = arith.constant 3.200000e+01 : f32
    %352 = vector.broadcast %cst_109 : f32 to vector<16x1xf32>
    %353 = arith.divf %351, %352 : vector<16x1xf32>
    %354 = vector.broadcast %353 : vector<16x1xf32> to vector<16x32xf32>
    %355 = arith.subf %349, %354 : vector<16x32xf32>
    %356 = arith.mulf %355, %355 : vector<16x32xf32>
    %cst_110 = arith.constant dense<0.000000e+00> : vector<16xf32>
    %357 = vector.multi_reduction <add>, %356, %cst_110 [1] : vector<16x32xf32> to vector<16xf32>
    %358 = vector.shape_cast %357 : vector<16xf32> to vector<16x1xf32>
    %cst_111 = arith.constant 3.200000e+01 : f32
    %359 = vector.broadcast %cst_111 : f32 to vector<16x1xf32>
    %360 = arith.divf %358, %359 : vector<16x1xf32>
    %361 = vector.broadcast %353 : vector<16x1xf32> to vector<16x32xf32>
    %362 = arith.subf %349, %361 : vector<16x32xf32>
    %cst_112 = arith.constant 9.99999996E-13 : f32
    %363 = vector.broadcast %cst_112 : f32 to vector<16x1xf32>
    %364 = arith.addf %360, %363 : vector<16x1xf32>
    %365 = math.rsqrt %364 : vector<16x1xf32>
    %366 = vector.broadcast %365 : vector<16x1xf32> to vector<16x32xf32>
    %367 = arith.mulf %362, %366 : vector<16x32xf32>
    %368 = vector.broadcast %245 : vector<1x32xf32> to vector<16x32xf32>
    %369 = arith.mulf %367, %368 : vector<16x32xf32>
    %370 = vector.broadcast %246 : vector<1x32xf32> to vector<16x32xf32>
    %371 = arith.addf %369, %370 : vector<16x32xf32>
    %372 = arith.truncf %371 : vector<16x32xf32> to vector<16x32xbf16>
    %cst_113 = arith.constant dense<0.000000e+00> : vector<16x32xf32>
    %373 = tpu.matmul %372, %17, %cst_113 {dimension_numbers = #tpu.dot_dimension_numbers<[1], [0], [0], [1], [0, 0, 1, 1], [], []>} : vector<16x32xbf16>, vector<32x32xbf16>, vector<16x32xf32> -> vector<16x32xf32>
    %374 = vector.broadcast %9 : vector<1x32xf32> to vector<16x32xf32>
    %375 = arith.addf %373, %374 : vector<16x32xf32>
    %cst_114 = arith.constant dense<0.000000e+00> : vector<16xf32>
    %376 = vector.multi_reduction <add>, %375, %cst_114 [1] : vector<16x32xf32> to vector<16xf32>
    %377 = vector.shape_cast %376 : vector<16xf32> to vector<16x1xf32>
    %cst_115 = arith.constant 3.200000e+01 : f32
    %378 = vector.broadcast %cst_115 : f32 to vector<16x1xf32>
    %379 = arith.divf %377, %378 : vector<16x1xf32>
    %380 = vector.broadcast %379 : vector<16x1xf32> to vector<16x32xf32>
    %381 = arith.subf %375, %380 : vector<16x32xf32>
    %382 = arith.mulf %381, %381 : vector<16x32xf32>
    %cst_116 = arith.constant dense<0.000000e+00> : vector<16xf32>
    %383 = vector.multi_reduction <add>, %382, %cst_116 [1] : vector<16x32xf32> to vector<16xf32>
    %384 = vector.shape_cast %383 : vector<16xf32> to vector<16x1xf32>
    %cst_117 = arith.constant 3.200000e+01 : f32
    %385 = vector.broadcast %cst_117 : f32 to vector<16x1xf32>
    %386 = arith.divf %384, %385 : vector<16x1xf32>
    %387 = vector.broadcast %379 : vector<16x1xf32> to vector<16x32xf32>
    %388 = arith.subf %375, %387 : vector<16x32xf32>
    %cst_118 = arith.constant 9.99999974E-6 : f32
    %389 = vector.broadcast %cst_118 : f32 to vector<16x1xf32>
    %390 = arith.addf %386, %389 : vector<16x1xf32>
    %391 = math.rsqrt %390 : vector<16x1xf32>
    %392 = vector.broadcast %391 : vector<16x1xf32> to vector<16x32xf32>
    %393 = arith.mulf %388, %392 : vector<16x32xf32>
    %394 = vector.broadcast %10 : vector<1x32xf32> to vector<16x32xf32>
    %395 = arith.mulf %393, %394 : vector<16x32xf32>
    %396 = vector.broadcast %11 : vector<1x32xf32> to vector<16x32xf32>
    %397 = arith.addf %395, %396 : vector<16x32xf32>
    %398 = arith.mulf %397, %397 : vector<16x32xf32>
    %399 = arith.mulf %397, %398 : vector<16x32xf32>
    %cst_119 = arith.constant 4.471500e-02 : f32
    %400 = vector.broadcast %cst_119 : f32 to vector<16x32xf32>
    %401 = arith.mulf %400, %399 : vector<16x32xf32>
    %402 = arith.addf %397, %401 : vector<16x32xf32>
    %cst_120 = arith.constant 0.797884583 : f32
    %403 = vector.broadcast %cst_120 : f32 to vector<16x32xf32>
    %404 = arith.mulf %403, %402 : vector<16x32xf32>
    %405 = math.tanh %404 : vector<16x32xf32>
    %cst_121 = arith.constant 1.000000e+00 : f32
    %406 = vector.broadcast %cst_121 : f32 to vector<16x32xf32>
    %407 = arith.addf %406, %405 : vector<16x32xf32>
    %cst_122 = arith.constant 5.000000e-01 : f32
    %408 = vector.broadcast %cst_122 : f32 to vector<16x32xf32>
    %409 = arith.mulf %408, %407 : vector<16x32xf32>
    %410 = arith.mulf %397, %409 : vector<16x32xf32>
    %c0_123 = arith.constant 0 : index
    %c0_124 = arith.constant 0 : index
    %411 = vector.load %arg6[%c0_123, %c0_124] : memref<32x128xbf16, #tpu.memory_space<vmem>>, vector<32x128xbf16>
    %412 = arith.truncf %410 : vector<16x32xf32> to vector<16x32xbf16>
    %cst_125 = arith.constant dense<0.000000e+00> : vector<16x128xf32>
    %413 = tpu.matmul %412, %411, %cst_125 {dimension_numbers = #tpu.dot_dimension_numbers<[1], [0], [0], [1], [0, 0, 1, 1], [], []>} : vector<16x32xbf16>, vector<32x128xbf16>, vector<16x128xf32> -> vector<16x128xf32>
    %414 = vector.broadcast %12 : vector<1x128xf32> to vector<16x128xf32>
    %415 = arith.addf %413, %414 : vector<16x128xf32>
    %416 = arith.negf %415 : vector<16x128xf32>
    %417 = math.exp %416 : vector<16x128xf32>
    %cst_126 = arith.constant 1.000000e+00 : f32
    %418 = vector.broadcast %cst_126 : f32 to vector<16x128xf32>
    %419 = arith.addf %418, %417 : vector<16x128xf32>
    %420 = arith.divf %418, %419 : vector<16x128xf32>
    %c0_127 = arith.constant 0 : index
    %c0_128 = arith.constant 0 : index
    %421 = vector.load %arg13[%c0_127, %c0_128] : memref<16x128xf32, #tpu.memory_space<vmem>>, vector<16x128xf32>
    tpu.vector_store %arg13[%c0_127, %c0_128], %420 {strides = array<i32>} : memref<16x128xf32, #tpu.memory_space<vmem>>, vector<16x128xf32>,
    %cst_129 = arith.constant 0.000000e+00 : f32
    %422 = vector.broadcast %cst_129 : f32 to vector<16x128xf32>
    %c0_130 = arith.constant 0 : index
    %c0_131 = arith.constant 0 : index
    %423 = vector.load %arg12[%c0_130, %c0_131] : memref<16x128xf32, #tpu.memory_space<vmem>>, vector<16x128xf32>
    tpu.vector_store %arg12[%c0_130, %c0_131], %422 {strides = array<i32>} : memref<16x128xf32, #tpu.memory_space<vmem>>, vector<16x128xf32>,
    %c0_132 = arith.constant 0 : index
    %c0_133 = arith.constant 0 : index
    %424 = vector.load %arg12[%c0_132, %c0_133] : memref<16x128xf32, #tpu.memory_space<vmem>>, vector<16x32xf32>
    tpu.vector_store %arg12[%c0_132, %c0_133], %371 {strides = array<i32>} : memref<16x128xf32, #tpu.memory_space<vmem>>, vector<16x32xf32>,
    return
  }
  func.func @transform_0(%arg0: i32) -> (i32, i32) {
    %c0_i32 = arith.constant 0 : i32
    %c0_i32_0 = arith.constant 0 : i32
    %c0_i32_1 = arith.constant 0 : i32
    return %c0_i32, %c0_i32_0 : i32, i32
  }
  func.func @transform_1(%arg0: i32) -> (i32, i32) {
    %c0_i32 = arith.constant 0 : i32
    %c0_i32_0 = arith.constant 0 : i32
    %c0_i32_1 = arith.constant 0 : i32
    return %c0_i32, %c0_i32_0 : i32, i32
  }
  func.func @transform_2(%arg0: i32) -> (i32, i32, i32) {
    %c0_i32 = arith.constant 0 : i32
    %c0_i32_0 = arith.constant 0 : i32
    %c0_i32_1 = arith.constant 0 : i32
    %c0_i32_2 = arith.constant 0 : i32
    return %c0_i32, %c0_i32_0, %c0_i32_1 : i32, i32, i32
  }
  func.func @transform_3(%arg0: i32) -> (i32, i32) {
    %c0_i32 = arith.constant 0 : i32
    %c0_i32_0 = arith.constant 0 : i32
    %c0_i32_1 = arith.constant 0 : i32
    return %c0_i32, %c0_i32_0 : i32, i32
  }
  func.func @transform_4(%arg0: i32) -> (i32, i32) {
    %c0_i32 = arith.constant 0 : i32
    %c0_i32_0 = arith.constant 0 : i32
    %c0_i32_1 = arith.constant 0 : i32
    return %c0_i32, %c0_i32_0 : i32, i32
  }
  func.func @transform_5(%arg0: i32) -> (i32, i32) {
    %c0_i32 = arith.constant 0 : i32
    %c0_i32_0 = arith.constant 0 : i32
    %c0_i32_1 = arith.constant 0 : i32
    return %c0_i32, %c0_i32_0 : i32, i32
  }
  func.func @transform_6(%arg0: i32) -> (i32, i32, i32, i32) {
    %c0_i32 = arith.constant 0 : i32
    %c0_i32_0 = arith.constant 0 : i32
    %c0_i32_1 = arith.constant 0 : i32
    %c0_i32_2 = arith.constant 0 : i32
    %c0_i32_3 = arith.constant 0 : i32
    return %c0_i32, %c0_i32_0, %c0_i32_1, %c0_i32_2 : i32, i32, i32, i32
  }
  func.func @transform_7(%arg0: i32) -> (i32, i32, i32, i32) {
    %c0_i32 = arith.constant 0 : i32
    %c0_i32_0 = arith.constant 0 : i32
    %c0_i32_1 = arith.constant 0 : i32
    %c0_i32_2 = arith.constant 0 : i32
    %c0_i32_3 = arith.constant 0 : i32
    return %c0_i32, %c0_i32_0, %c0_i32_1, %c0_i32_2 : i32, i32, i32, i32
  }
  func.func @transform_8(%arg0: i32) -> (i32, i32, i32, i32) {
    %c0_i32 = arith.constant 0 : i32
    %c0_i32_0 = arith.constant 0 : i32
    %c0_i32_1 = arith.constant 0 : i32
    %c0_i32_2 = arith.constant 0 : i32
    %c0_i32_3 = arith.constant 0 : i32
    return %c0_i32, %c0_i32_0, %c0_i32_1, %c0_i32_2 : i32, i32, i32, i32
  }
  func.func @transform_9(%arg0: i32) -> (i32, i32, i32) {
    %c0_i32 = arith.constant 0 : i32
    %c0_i32_0 = arith.constant 0 : i32
    %c0_i32_1 = arith.constant 0 : i32
    %c0_i32_2 = arith.constant 0 : i32
    return %c0_i32, %c0_i32_0, %c0_i32_1 : i32, i32, i32
  }
  func.func @transform_10(%arg0: i32) -> (i32, i32, i32) {
    %c0_i32 = arith.constant 0 : i32
    %c0_i32_0 = arith.constant 0 : i32
    %c0_i32_1 = arith.constant 0 : i32
    %c0_i32_2 = arith.constant 0 : i32
    return %c0_i32, %c0_i32_0, %c0_i32_1 : i32, i32, i32
  }
  func.func @transform_11(%arg0: i32) -> (i32, i32) {
    %c0_i32 = arith.constant 0 : i32
    %c0_i32_0 = arith.constant 0 : i32
    %c0_i32_1 = arith.constant 0 : i32
    return %c0_i32, %c0_i32_0 : i32, i32
  }
  func.func @transform_12(%arg0: i32) -> (i32, i32) {
    %c0_i32 = arith.constant 0 : i32
    %c0_i32_0 = arith.constant 0 : i32
    %c0_i32_1 = arith.constant 0 : i32
    return %c0_i32, %c0_i32_0 : i32, i32
  }
}

</mosaic_0001>

<llo_original>
// kernel: squeeze.1
$region0: #{squeeze.1}
  %s0 = inlined_call_operand.vmem [shape: f32[16], index: 0, kind: input, shape index: {}]
  %s1 = inlined_call_operand.vmem [shape: f32[2,8], index: 1, kind: output, shape index: {}]
  $region1: #{squeeze.1} parent=0
    #allocation0 [shape = 'u8[4096]{0}', space=vmem, size = 0x1000, scoped, tag = 'scoped mem for output reshape']
    #allocation1 [shape = 'u8[4096]{0}', space=vmem, size = 0x1000, scoped, tag = 'scoped mem for input reshape']
    %s3 = sshllo.u32 0, 1
    %v4 = vld [vmem:[%s0] sm:%s3]
    %5 = vst [vmem:[#allocation1] sm:%s3] %v4
    %v6 = vld [vmem:[#allocation1] sm:$0x1]
    %vm7 = vcmask 64512
    %8 = vst.msk [vmem:[#allocation0] sm:$0x1] %vm7, %v6
    %v9 = vld [vmem:[#allocation1] sm:$0x1]
    %10 = vrot.lane.b32.xlu0 %v9, 120
    %v11 = vpop.permute.xlu0 %10
    %vm12 = vcmask 64512
    %s13 = scalar_lea.vmem [#allocation0], 1
    %14 = vst.msk [vmem:[%s13] sm:$0x1] %vm12, %v11
    %s16 = sshllo.u32 0, 2
    %v18 = vld [vmem:[#allocation0] sm:%s16]
    %s19 = sshllo.u32 0, 2
    %20 = vst [vmem:[%s1] sm:%s19] %v18

// kernel: mul.9
$region0: #{mul.9}
  #allocation2 [shape = 's32[1]{0}', space=sflag, size = 0x4, scoped, tag = 'scoped memory for mul.9']
  %s0 = inlined_call_operand.vmem [shape: f32[2,8], index: 0, kind: input, shape index: {}]
  %s1 = inlined_call_operand.vmem [shape: f32[2,8], index: 1, kind: input, shape index: {}]
  %s2 = inlined_call_operand.hbm [shape: f32[2,8], index: 2, kind: output, shape index: {}]
  $region1: #{mul.9} parent=0
    #allocation0 [shape = 'u8[1024]{0}', space=vmem, size = 0x400, scoped, tag = 'operand span for operand 2']
    #allocation1 [shape = 's32[1]{0}', space=sflag, size = 0x4, scoped, tag = 'scoped memory for mul.9']
    %3 = vsyncpa [#allocation1], 0
    %v4 = vld [vmem:[%s0] sm:$0x3]
    %v5 = vld [vmem:[%s1] sm:$0x3]
    %6 = xla_tuple %v4, %v5
    %7 = xla_tuple %6
    %v8 = vmul.f32 %v4, %v5
    %9 = xla_tuple %v8
    %10 = vst [vmem:[#allocation0] sm:$0x3] %v8
    %s12 = ssub.s32 32, 32
    %13 = vsyncadd [#allocation1], %s12
    %s15 = sshll.u32 [#allocation0], 4
    %s16 = int_to_ptr.vmem [resolvable:$true] %s15
    %18 = dma.vmem_to_hbm [thread:$0]  %s16, 32, %s2, [#allocation1]
    %19 = dma.done [#allocation1], 32
    %20 = vsyncpa [#allocation1], 1

// kernel: detection_network.1
$region0: #{detection_network.1}
  #allocation0 [shape = 'u32[]', space=smem, size = 0x4, offset = 0x4, fixed_abs, tag = 'smem constant byte address 0x4 - core index']
  #allocation1 [shape = 'u32[144,128]{1,0:T(1,128)}', space=vmem, size = 0x12000, scoped, tag = 'internal scratch']
  %s0 = inlined_call_operand.vmem [shape: f32[48,32], index: 0, kind: input, shape index: {}]
  %s1 = inlined_call_operand.vmem [shape: f32[5,128], index: 1, kind: input, shape index: {}]
  %s2 = inlined_call_operand.vmem [shape: f32[2,6,32], index: 2, kind: input, shape index: {}]
  %s3 = inlined_call_operand.vmem [shape: bf16[32,96], index: 3, kind: input, shape index: {}]
  %s4 = inlined_call_operand.vmem [shape: bf16[128,32], index: 4, kind: input, shape index: {}]
  %s5 = inlined_call_operand.vmem [shape: bf16[32,128], index: 5, kind: input, shape index: {}]
  %s6 = inlined_call_operand.vmem [shape: bf16[2,16,32,12], index: 6, kind: input, shape index: {}]
  %s7 = inlined_call_operand.vmem [shape: f32[2,16,1,12], index: 7, kind: input, shape index: {}]
  %s8 = inlined_call_operand.vmem [shape: bf16[2,16,4,32], index: 8, kind: input, shape index: {}]
  %s9 = inlined_call_operand.vmem [shape: bf16[2,128,32], index: 9, kind: input, shape index: {}]
  %s10 = inlined_call_operand.vmem [shape: bf16[2,32,128], index: 10, kind: input, shape index: {}]
  %s11 = inlined_call_operand.vmem [shape: f32[16,128], index: 11, kind: output, shape index: {0}]
  %s12 = inlined_call_operand.vmem [shape: f32[16,128], index: 12, kind: output, shape index: {1}]
  %13 = xla_tuple %s11, %s12
  %s14 = sld [smem:[#allocation0]]
  $region62: #{detection_network.1} parent=0
    _
  %s16 = ssub.s32 1, %s14
  %s17 = scalar_select 0, %s16, %s14
  // Predicated region
  $region2: #{detection_network.1} parent=0 // pred_check
    _
  $region3: #{detection_network.1} parent=0 // pred_check_branch
    %19 = sbr.rel (0) target = $region5
  $region4: #{detection_network.1} parent=0 // pred_region
    _
  $region5: #{detection_network.1} parent=0 // pred_fallthru
    _
  // Predicated region
  $region6: #{detection_network.1} parent=0 // pred_check
    _
  $region7: #{detection_network.1} parent=0 // pred_check_branch
    %21 = sbr.rel (0) target = $region9
  $region8: #{detection_network.1} parent=0 // pred_region
    _
  $region9: #{detection_network.1} parent=0 // pred_fallthru
    _
  // Predicated region
  $region10: #{detection_network.1} parent=0 // pred_check
    _
  $region11: #{detection_network.1} parent=0 // pred_check_branch
    %23 = sbr.rel (0) target = $region13
  $region12: #{detection_network.1} parent=0 // pred_region
    _
  $region13: #{detection_network.1} parent=0 // pred_fallthru
    _
  // Predicated region
  $region14: #{detection_network.1} parent=0 // pred_check
    _
  $region15: #{detection_network.1} parent=0 // pred_check_branch
    %25 = sbr.rel (0) target = $region17
  $region16: #{detection_network.1} parent=0 // pred_region
    _
  $region17: #{detection_network.1} parent=0 // pred_fallthru
    _
  // Predicated region
  $region18: #{detection_network.1} parent=0 // pred_check
    _
  $region19: #{detection_network.1} parent=0 // pred_check_branch
    %27 = sbr.rel (0) target = $region21
  $region20: #{detection_network.1} parent=0 // pred_region
    _
  $region21: #{detection_network.1} parent=0 // pred_fallthru
    _
  // Predicated region
  $region22: #{detection_network.1} parent=0 // pred_check
    _
  $region23: #{detection_network.1} parent=0 // pred_check_branch
    %29 = sbr.rel (0) target = $region25
  $region24: #{detection_network.1} parent=0 // pred_region
    _
  $region25: #{detection_network.1} parent=0 // pred_fallthru
    _
  // Predicated region
  $region26: #{detection_network.1} parent=0 // pred_check
    _
  $region27: #{detection_network.1} parent=0 // pred_check_branch
    %31 = sbr.rel (0) target = $region29
  $region28: #{detection_network.1} parent=0 // pred_region
    _
  $region29: #{detection_network.1} parent=0 // pred_fallthru
    _
  // Predicated region
  $region30: #{detection_network.1} parent=0 // pred_check
    _
  $region31: #{detection_network.1} parent=0 // pred_check_branch
    %33 = sbr.rel (0) target = $region33
  $region32: #{detection_network.1} parent=0 // pred_region
    _
  $region33: #{detection_network.1} parent=0 // pred_fallthru
    _
  // Predicated region
  $region34: #{detection_network.1} parent=0 // pred_check
    _
  $region35: #{detection_network.1} parent=0 // pred_check_branch
    %35 = sbr.rel (0) target = $region37
  $region36: #{detection_network.1} parent=0 // pred_region
    _
  $region37: #{detection_network.1} parent=0 // pred_fallthru
    _
  // Predicated region
  $region38: #{detection_network.1} parent=0 // pred_check
    _
  $region39: #{detection_network.1} parent=0 // pred_check_branch
    %37 = sbr.rel (0) target = $region41
  $region40: #{detection_network.1} parent=0 // pred_region
    _
  $region41: #{detection_network.1} parent=0 // pred_fallthru
    _
  // Predicated region
  $region42: #{detection_network.1} parent=0 // pred_check
    _
  $region43: #{detection_network.1} parent=0 // pred_check_branch
    %39 = sbr.rel (0) target = $region45
  $region44: #{detection_network.1} parent=0 // pred_region
    _
  $region45: #{detection_network.1} parent=0 // pred_fallthru
    _
  %v41 = vld [vmem:[%s0] sm:$0xff]
  %v42 = vld [vmem:[%s0 + $0x8] sm:$0xff]
  %v43 = vld [vmem:[%s0 + $0x10] sm:$0xff]
  %v44 = vld [vmem:[%s0 + $0x18] sm:$0xff]
  %v45 = vld [vmem:[%s0 + $0x20] sm:$0xff]
  %v46 = vld [vmem:[%s0 + $0x28] sm:$0xff]
  %v47 = vld [vmem:[%s1] sm:$0x1f]
  %v48 = vld [vmem:[%s4] sm:$0xf]
  %v49 = vld [vmem:[%s4 + $0x4] sm:$0xf]
  %v50 = vld [vmem:[%s4 + $0x8] sm:$0xf]
  %v51 = vld [vmem:[%s4 + $0xc] sm:$0xf]
  %v52 = vld [vmem:[%s4 + $0x10] sm:$0xf]
  %v53 = vld [vmem:[%s4 + $0x14] sm:$0xf]
  %v54 = vld [vmem:[%s4 + $0x18] sm:$0xf]
  %v55 = vld [vmem:[%s4 + $0x1c] sm:$0xf]
  %v56 = vld [vmem:[%s4 + $0x20] sm:$0xf]
  %v57 = vld [vmem:[%s4 + $0x24] sm:$0xf]
  %v58 = vld [vmem:[%s4 + $0x28] sm:$0xf]
  %v59 = vld [vmem:[%s4 + $0x2c] sm:$0xf]
  %v60 = vld [vmem:[%s4 + $0x30] sm:$0xf]
  %v61 = vld [vmem:[%s4 + $0x34] sm:$0xf]
  %v62 = vld [vmem:[%s4 + $0x38] sm:$0xf]
  %v63 = vld [vmem:[%s4 + $0x3c] sm:$0xf]
  %v64 = vlaneseq
  %v65 = vshrl.u32 %v64, 7
  %v66 = vadd.s32 %v65, 8
  %v67 = vadd.s32 %v65, 16
  %v68 = vadd.s32 %v65, 24
  %v69 = vlaneseq
  %v70 = vand.u32 %v69, 127
  %v71 = vmul.u32 %v70, 4
  %vm72 = vcmp.ge.s32.totalorder %v65, %v71
  %vm73 = vcmp.ge.s32.totalorder %v66, %v71
  %vm74 = vcmp.ge.s32.totalorder %v67, %v71
  %vm75 = vcmp.ge.s32.totalorder %v68, %v71
  %v76 = vadd.s32 %v70, 1
  %v77 = vmul.u32 %v76, 4
  %vm78 = vcmp.lt.s32.totalorder %v65, %v77
  %vm79 = vcmp.lt.s32.totalorder %v66, %v77
  %vm80 = vcmp.lt.s32.totalorder %v67, %v77
  %vm81 = vcmp.lt.s32.totalorder %v68, %v77
  %vm82 = vmand %vm72, %vm78
  %vm83 = vmand %vm73, %vm79
  %vm84 = vmand %vm74, %vm80
  %vm85 = vmand %vm75, %vm81
  %v86 = vsel %vm82, 1.0, 0.0
  %v87 = vsel %vm83, 1.0, 0.0
  %v88 = vsel %vm84, 1.0, 0.0
  %v89 = vsel %vm85, 1.0, 0.0
  %v90 = vpack.c.bf16 %v87, %v86
  %v91 = vpack.c.bf16 %v89, %v88
  %v92 = vmul.u32 %v65, 4
  %vm93 = vcmp.ge.s32.totalorder %v70, %v92
  %v94 = vadd.s32 %v65, 1
  %v95 = vmul.u32 %v94, 4
  %vm96 = vcmp.lt.s32.totalorder %v70, %v95
  %vm97 = vmand %vm93, %vm96
  %v98 = vsel %vm97, 1.0, 0.0
  %v99 = vpack.c.bf16 %v98, %v98
  %v100 = vld [vmem:[%s3] sm:$0xf]
  %v101 = vld [vmem:[%s3 + $0x4] sm:$0xf]
  %v102 = vld [vmem:[%s3 + $0x8] sm:$0xf]
  %v103 = vld [vmem:[%s3 + $0xc] sm:$0xf]
  %v104 = vpack.c.bf16 %v42, %v41
  %v105 = vlaneseq
  %v106 = vshrl.u32 %v105, 7
  %v107 = vsub.s32 2, %v106
  %v108 = vrot.slane %v47, %v107
  %v113 = vunpack.c.l.b16 %v100
  %v114 = vunpack.c.l.b16 %v101
  %v115 = vunpack.c.l.b16 %v102
  %v116 = vunpack.c.l.b16 %v103
  %v117 = vpack.c.b16 %v114, %v113
  %v118 = vpack.c.b16 %v116, %v115
  %vm121 = vcmask 261120
  %v123 = vsel %vm121, %v104, 0
  %125 = vmatprep.subr.bf16.mxu0 0
  %126 = vmatpush1.bf16.msra.mxu0 %v117
  %127 = vmatprep.subr.bf16.mxu0 0
  %128 = vmatpush1.bf16.msra.mxu0 %v118
  %129 = vmatprep.subr.bf16.mxu0 0
  %130 = vmatpush1.bf16.msra.mxu0 0
  %131 = vmatprep.subr.bf16.mxu0 0
  %132 = vmatpush1.bf16.msra.mxu0 0
  %133 = vmatprep.subr.bf16.mxu0 0
  %134 = vmatpush1.bf16.msra.mxu0 0
  %135 = vmatprep.subr.bf16.mxu0 0
  %136 = vmatpush1.bf16.msra.mxu0 0
  %137 = vmatprep.subr.bf16.mxu0 0
  %138 = vmatpush1.bf16.msra.mxu0 0
  %139 = vmatprep.subr.bf16.mxu0 0
  %140 = vmatpush1.bf16.msra.mxu0 0
  %141 = vmatprep.subr.bf16.mxu0 0
  %142 = vmatpush1.bf16.msra.mxu0 0
  %143 = vmatprep.subr.bf16.mxu0 0
  %144 = vmatpush1.bf16.msra.mxu0 0
  %145 = vmatprep.subr.bf16.mxu0 0
  %146 = vmatpush1.bf16.msra.mxu0 0
  %147 = vmatprep.subr.bf16.mxu0 0
  %148 = vmatpush1.bf16.msra.mxu0 0
  %149 = vmatprep.subr.bf16.mxu0 0
  %150 = vmatpush1.bf16.msra.mxu0 0
  %151 = vmatprep.subr.bf16.mxu0 0
  %152 = vmatpush1.bf16.msra.mxu0 0
  %153 = vmatprep.subr.bf16.mxu0 0
  %154 = vmatpush1.bf16.msra.mxu0 0
  %155 = vmatprep.subr.bf16.mxu0 0
  %156 = vmatpush1.bf16.msra.mxu0 0
  %157 = vmatprep.mubr.bf16.mxu0 0
  %158 = vmatmul.mubr.bf16.gmra.mrb[0].mxu0 %v123
  %v159 = vpop.f32.mrb[0].mxu0
  %v160 = vadd.f32 %v108, %v159
  %v161 = vpop.f32.mrb[0].mxu0
  %v162 = vpop.f32.mrb[0].mxu0
  %v163 = vadd.f32 %v108, %v162
  %v164 = vpop.f32.mrb[0].mxu0
  %165 = vdwg.mxu0
  %v166 = vpack.c.bf16 %v44, %v43
  %v168 = vsel %vm121, %v166, 0
  %170 = vmatprep.subr.bf16.mxu0 0
  %171 = vmatpush1.bf16.msra.mxu0 %v117
  %172 = vmatprep.subr.bf16.mxu0 0
  %173 = vmatpush1.bf16.msra.mxu0 %v118
  %174 = vmatprep.subr.bf16.mxu0 0
  %175 = vmatpush1.bf16.msra.mxu0 0
  %176 = vmatprep.subr.bf16.mxu0 0
  %177 = vmatpush1.bf16.msra.mxu0 0
  %178 = vmatprep.subr.bf16.mxu0 0
  %179 = vmatpush1.bf16.msra.mxu0 0
  %180 = vmatprep.subr.bf16.mxu0 0
  %181 = vmatpush1.bf16.msra.mxu0 0
  %182 = vmatprep.subr.bf16.mxu0 0
  %183 = vmatpush1.bf16.msra.mxu0 0
  %184 = vmatprep.subr.bf16.mxu0 0
  %185 = vmatpush1.bf16.msra.mxu0 0
  %186 = vmatprep.subr.bf16.mxu0 0
  %187 = vmatpush1.bf16.msra.mxu0 0
  %188 = vmatprep.subr.bf16.mxu0 0
  %189 = vmatpush1.bf16.msra.mxu0 0
  %190 = vmatprep.subr.bf16.mxu0 0
  %191 = vmatpush1.bf16.msra.mxu0 0
  %192 = vmatprep.subr.bf16.mxu0 0
  %193 = vmatpush1.bf16.msra.mxu0 0
  %194 = vmatprep.subr.bf16.mxu0 0
  %195 = vmatpush1.bf16.msra.mxu0 0
  %196 = vmatprep.subr.bf16.mxu0 0
  %197 = vmatpush1.bf16.msra.mxu0 0
  %198 = vmatprep.subr.bf16.mxu0 0
  %199 = vmatpush1.bf16.msra.mxu0 0
  %200 = vmatprep.subr.bf16.mxu0 0
  %201 = vmatpush1.bf16.msra.mxu0 0
  %202 = vmatprep.mubr.bf16.mxu0 0
  %203 = vmatmul.mubr.bf16.gmra.mrb[0].mxu0 %v168
  %v204 = vpop.f32.mrb[0].mxu0
  %v205 = vadd.f32 %v108, %v204
  %v206 = vpop.f32.mrb[0].mxu0
  %v207 = vpop.f32.mrb[0].mxu0
  %v208 = vadd.f32 %v108, %v207
  %v209 = vpop.f32.mrb[0].mxu0
  %210 = vdwg.mxu0
  %212 = vrot.lane.b32.xlu0 %v160, 96
  %v213 = vpop.permute.xlu0 %212
  %v215 = vmul.f32 %v205, %v213
  %v216 = vmul.f32 %v208, %v213
  %v217 = vpack.c.bf16 %v216, %v215
  %v219 = vsel %vm121, %v217, 0
  %221 = vmatprep.subr.bf16.mxu0 0
  %222 = vmatpush1.bf16.msra.mxu0 %v90
  %223 = vmatprep.subr.bf16.mxu0 0
  %224 = vmatpush1.bf16.msra.mxu0 %v91
  %225 = vmatprep.subr.bf16.mxu0 0
  %226 = vmatpush1.bf16.msra.mxu0 0
  %227 = vmatprep.subr.bf16.mxu0 0
  %228 = vmatpush1.bf16.msra.mxu0 0
  %229 = vmatprep.subr.bf16.mxu0 0
  %230 = vmatpush1.bf16.msra.mxu0 0
  %231 = vmatprep.subr.bf16.mxu0 0
  %232 = vmatpush1.bf16.msra.mxu0 0
  %233 = vmatprep.subr.bf16.mxu0 0
  %234 = vmatpush1.bf16.msra.mxu0 0
  %235 = vmatprep.subr.bf16.mxu0 0
  %236 = vmatpush1.bf16.msra.mxu0 0
  %237 = vmatprep.subr.bf16.mxu0 0
  %238 = vmatpush1.bf16.msra.mxu0 0
  %239 = vmatprep.subr.bf16.mxu0 0
  %240 = vmatpush1.bf16.msra.mxu0 0
  %241 = vmatprep.subr.bf16.mxu0 0
  %242 = vmatpush1.bf16.msra.mxu0 0
  %243 = vmatprep.subr.bf16.mxu0 0
  %244 = vmatpush1.bf16.msra.mxu0 0
  %245 = vmatprep.subr.bf16.mxu0 0
  %246 = vmatpush1.bf16.msra.mxu0 0
  %247 = vmatprep.subr.bf16.mxu0 0
  %248 = vmatpush1.bf16.msra.mxu0 0
  %249 = vmatprep.subr.bf16.mxu0 0
  %250 = vmatpush1.bf16.msra.mxu0 0
  %251 = vmatprep.subr.bf16.mxu0 0
  %252 = vmatpush1.bf16.msra.mxu0 0
  %253 = vmatprep.mubr.bf16.mxu0 0
  %254 = vmatmul.mubr.bf16.gmra.mrb[0].mxu0 %v219
  %v255 = vpop.f32.mrb[0].mxu0
  %v256 = vadd.f32 0.0, %v255
  %v257 = vpop.f32.mrb[0].mxu0
  %v258 = vpop.f32.mrb[0].mxu0
  %v259 = vadd.f32 0.0, %v258
  %v260 = vpop.f32.mrb[0].mxu0
  %261 = vdwg.mxu0
  %v262 = vmul.f32 %v256, 0.5
  %v263 = vmul.f32 %v259, 0.5
  %265 = vrot.lane.b32.xlu0 %v163, 96
  %v266 = vpop.permute.xlu0 %265
  %v268 = vmul.f32 %v205, %v266
  %v269 = vmul.f32 %v208, %v266
  %v270 = vpack.c.bf16 %v269, %v268
  %v272 = vsel %vm121, %v270, 0
  %274 = vmatprep.subr.bf16.mxu0 0
  %275 = vmatpush1.bf16.msra.mxu0 %v90
  %276 = vmatprep.subr.bf16.mxu0 0
  %277 = vmatpush1.bf16.msra.mxu0 %v91
  %278 = vmatprep.subr.bf16.mxu0 0
  %279 = vmatpush1.bf16.msra.mxu0 0
  %280 = vmatprep.subr.bf16.mxu0 0
  %281 = vmatpush1.bf16.msra.mxu0 0
  %282 = vmatprep.subr.bf16.mxu0 0
  %283 = vmatpush1.bf16.msra.mxu0 0
  %284 = vmatprep.subr.bf16.mxu0 0
  %285 = vmatpush1.bf16.msra.mxu0 0
  %286 = vmatprep.subr.bf16.mxu0 0
  %287 = vmatpush1.bf16.msra.mxu0 0
  %288 = vmatprep.subr.bf16.mxu0 0
  %289 = vmatpush1.bf16.msra.mxu0 0
  %290 = vmatprep.subr.bf16.mxu0 0
  %291 = vmatpush1.bf16.msra.mxu0 0
  %292 = vmatprep.subr.bf16.mxu0 0
  %293 = vmatpush1.bf16.msra.mxu0 0
  %294 = vmatprep.subr.bf16.mxu0 0
  %295 = vmatpush1.bf16.msra.mxu0 0
  %296 = vmatprep.subr.bf16.mxu0 0
  %297 = vmatpush1.bf16.msra.mxu0 0
  %298 = vmatprep.subr.bf16.mxu0 0
  %299 = vmatpush1.bf16.msra.mxu0 0
  %300 = vmatprep.subr.bf16.mxu0 0
  %301 = vmatpush1.bf16.msra.mxu0 0
  %302 = vmatprep.subr.bf16.mxu0 0
  %303 = vmatpush1.bf16.msra.mxu0 0
  %304 = vmatprep.subr.bf16.mxu0 0
  %305 = vmatpush1.bf16.msra.mxu0 0
  %306 = vmatprep.mubr.bf16.mxu0 0
  %307 = vmatmul.mubr.bf16.gmra.mrb[0].mxu0 %v272
  %v308 = vpop.f32.mrb[0].mxu0
  %v309 = vadd.f32 0.0, %v308
  %v310 = vpop.f32.mrb[0].mxu0
  %v311 = vpop.f32.mrb[0].mxu0
  %v312 = vadd.f32 0.0, %v311
  %v313 = vpop.f32.mrb[0].mxu0
  %314 = vdwg.mxu0
  %v315 = vmul.f32 %v309, 0.5
  %v316 = vmul.f32 %v312, 0.5
  %v317 = vmax.f32 %v262, %v315
  %v318 = vmax.f32 %v263, %v316
  %v319 = vsub.f32 %v262, %v317
  %v320 = vsub.f32 %v263, %v318
  %v321 = vmul.f32 %v319, 1.442695
  %v322 = vpow.pop %v321
  %v323 = vmul.f32 %v320, 1.442695
  %v324 = vpow.pop %v323
  %v325 = vsub.f32 %v315, %v317
  %v326 = vsub.f32 %v316, %v318
  %v327 = vmul.f32 %v325, 1.442695
  %v328 = vpow.pop %v327
  %v329 = vmul.f32 %v326, 1.442695
  %v330 = vpow.pop %v329
  %v331 = vadd.f32 %v322, %v328
  %v332 = vadd.f32 %v324, %v330
  %v333 = vrcp.pop %v331
  %v334 = vrcp.pop %v332
  %v335 = vmul.f32 %v322, %v333
  %v336 = vmul.f32 %v324, %v334
  %v337 = vpack.c.bf16 %v336, %v335
  %vm338 = vcmask 64512
  %v340 = vsel %vm338, %v337, 0
  %vm342 = vcmask 1043456
  %v344 = vsel %vm342, %v99, 0
  %346 = vmatprep.subr.bf16.mxu0 0
  %347 = vmatpush1.bf16.msra.mxu0 %v344
  %348 = vmatprep.subr.bf16.mxu0 0
  %349 = vmatpush1.bf16.msra.mxu0 0
  %350 = vmatprep.subr.bf16.mxu0 0
  %351 = vmatpush1.bf16.msra.mxu0 0
  %352 = vmatprep.subr.bf16.mxu0 0
  %353 = vmatpush1.bf16.msra.mxu0 0
  %354 = vmatprep.subr.bf16.mxu0 0
  %355 = vmatpush1.bf16.msra.mxu0 0
  %356 = vmatprep.subr.bf16.mxu0 0
  %357 = vmatpush1.bf16.msra.mxu0 0
  %358 = vmatprep.subr.bf16.mxu0 0
  %359 = vmatpush1.bf16.msra.mxu0 0
  %360 = vmatprep.subr.bf16.mxu0 0
  %361 = vmatpush1.bf16.msra.mxu0 0
  %362 = vmatprep.subr.bf16.mxu0 0
  %363 = vmatpush1.bf16.msra.mxu0 0
  %364 = vmatprep.subr.bf16.mxu0 0
  %365 = vmatpush1.bf16.msra.mxu0 0
  %366 = vmatprep.subr.bf16.mxu0 0
  %367 = vmatpush1.bf16.msra.mxu0 0
  %368 = vmatprep.subr.bf16.mxu0 0
  %369 = vmatpush1.bf16.msra.mxu0 0
  %370 = vmatprep.subr.bf16.mxu0 0
  %371 = vmatpush1.bf16.msra.mxu0 0
  %372 = vmatprep.subr.bf16.mxu0 0
  %373 = vmatpush1.bf16.msra.mxu0 0
  %374 = vmatprep.subr.bf16.mxu0 0
  %375 = vmatpush1.bf16.msra.mxu0 0
  %376 = vmatprep.subr.bf16.mxu0 0
  %377 = vmatpush1.bf16.msra.mxu0 0
  %378 = vmatprep.mubr.bf16.mxu0 0
  %379 = vmatmul.mubr.bf16.gmra.mrb[0].mxu0 %v340
  %v380 = vpop.f32.mrb[0].mxu0
  %v381 = vadd.f32 0.0, %v380
  %v382 = vpop.f32.mrb[0].mxu0
  %v383 = vpop.f32.mrb[0].mxu0
  %v384 = vadd.f32 0.0, %v383
  %v385 = vpop.f32.mrb[0].mxu0
  %386 = vdwg.mxu0
  %387 = vrot.lane.b32.xlu0 %v160, 64
  %v388 = vpop.permute.xlu0 %387
  %v390 = vmul.f32 %v381, %v388
  %v391 = vmul.f32 %v384, %v388
  %v392 = vadd.f32 %v390, 0.0
  %v393 = vadd.f32 %v391, 0.0
  %v394 = vmul.f32 %v328, %v333
  %v395 = vmul.f32 %v330, %v334
  %v396 = vpack.c.bf16 %v395, %v394
  %v398 = vsel %vm338, %v396, 0
  %400 = vmatprep.subr.bf16.mxu0 0
  %401 = vmatpush1.bf16.msra.mxu0 %v344
  %402 = vmatprep.subr.bf16.mxu0 0
  %403 = vmatpush1.bf16.msra.mxu0 0
  %404 = vmatprep.subr.bf16.mxu0 0
  %405 = vmatpush1.bf16.msra.mxu0 0
  %406 = vmatprep.subr.bf16.mxu0 0
  %407 = vmatpush1.bf16.msra.mxu0 0
  %408 = vmatprep.subr.bf16.mxu0 0
  %409 = vmatpush1.bf16.msra.mxu0 0
  %410 = vmatprep.subr.bf16.mxu0 0
  %411 = vmatpush1.bf16.msra.mxu0 0
  %412 = vmatprep.subr.bf16.mxu0 0
  %413 = vmatpush1.bf16.msra.mxu0 0
  %414 = vmatprep.subr.bf16.mxu0 0
  %415 = vmatpush1.bf16.msra.mxu0 0
  %416 = vmatprep.subr.bf16.mxu0 0
  %417 = vmatpush1.bf16.msra.mxu0 0
  %418 = vmatprep.subr.bf16.mxu0 0
  %419 = vmatpush1.bf16.msra.mxu0 0
  %420 = vmatprep.subr.bf16.mxu0 0
  %421 = vmatpush1.bf16.msra.mxu0 0
  %422 = vmatprep.subr.bf16.mxu0 0
  %423 = vmatpush1.bf16.msra.mxu0 0
  %424 = vmatprep.subr.bf16.mxu0 0
  %425 = vmatpush1.bf16.msra.mxu0 0
  %426 = vmatprep.subr.bf16.mxu0 0
  %427 = vmatpush1.bf16.msra.mxu0 0
  %428 = vmatprep.subr.bf16.mxu0 0
  %429 = vmatpush1.bf16.msra.mxu0 0
  %430 = vmatprep.subr.bf16.mxu0 0
  %431 = vmatpush1.bf16.msra.mxu0 0
  %432 = vmatprep.mubr.bf16.mxu0 0
  %433 = vmatmul.mubr.bf16.gmra.mrb[0].mxu0 %v398
  %v434 = vpop.f32.mrb[0].mxu0
  %v435 = vadd.f32 0.0, %v434
  %v436 = vpop.f32.mrb[0].mxu0
  %v437 = vpop.f32.mrb[0].mxu0
  %v438 = vadd.f32 0.0, %v437
  %v439 = vpop.f32.mrb[0].mxu0
  %440 = vdwg.mxu0
  %441 = vrot.lane.b32.xlu0 %v163, 64
  %v442 = vpop.permute.xlu0 %441
  %v444 = vmul.f32 %v435, %v442
  %v445 = vmul.f32 %v438, %v442
  %v446 = vadd.f32 %v392, %v444
  %v447 = vadd.f32 %v393, %v445
  %v448 = vpack.c.bf16 %v447, %v446
  %v453 = vunpack.c.l.b16 %v48
  %v454 = vunpack.c.l.b16 %v49
  %v455 = vunpack.c.l.b16 %v50
  %v456 = vunpack.c.l.b16 %v51
  %v457 = vpack.c.b16 %v454, %v453
  %v458 = vpack.c.b16 %v456, %v455
  %462 = vrot.lane.b32.xlu0 %v108, 32
  %v463 = vpop.permute.xlu0 %462
  %v466 = vsel %vm121, %v448, 0
  %468 = vmatprep.subr.bf16.mxu0 0
  %469 = vmatpush1.bf16.msra.mxu0 %v457
  %470 = vmatprep.subr.bf16.mxu0 0
  %471 = vmatpush1.bf16.msra.mxu0 %v458
  %472 = vmatprep.subr.bf16.mxu0 0
  %473 = vmatpush1.bf16.msra.mxu0 0
  %474 = vmatprep.subr.bf16.mxu0 0
  %475 = vmatpush1.bf16.msra.mxu0 0
  %476 = vmatprep.subr.bf16.mxu0 0
  %477 = vmatpush1.bf16.msra.mxu0 0
  %478 = vmatprep.subr.bf16.mxu0 0
  %479 = vmatpush1.bf16.msra.mxu0 0
  %480 = vmatprep.subr.bf16.mxu0 0
  %481 = vmatpush1.bf16.msra.mxu0 0
  %482 = vmatprep.subr.bf16.mxu0 0
  %483 = vmatpush1.bf16.msra.mxu0 0
  %484 = vmatprep.subr.bf16.mxu0 0
  %485 = vmatpush1.bf16.msra.mxu0 0
  %486 = vmatprep.subr.bf16.mxu0 0
  %487 = vmatpush1.bf16.msra.mxu0 0
  %488 = vmatprep.subr.bf16.mxu0 0
  %489 = vmatpush1.bf16.msra.mxu0 0
  %490 = vmatprep.subr.bf16.mxu0 0
  %491 = vmatpush1.bf16.msra.mxu0 0
  %492 = vmatprep.subr.bf16.mxu0 0
  %493 = vmatpush1.bf16.msra.mxu0 0
  %494 = vmatprep.subr.bf16.mxu0 0
  %495 = vmatpush1.bf16.msra.mxu0 0
  %496 = vmatprep.subr.bf16.mxu0 0
  %497 = vmatpush1.bf16.msra.mxu0 0
  %498 = vmatprep.subr.bf16.mxu0 0
  %499 = vmatpush1.bf16.msra.mxu0 0
  %500 = vmatprep.mubr.bf16.mxu0 0
  %501 = vmatmul.mubr.bf16.gmra.mrb[0].mxu0 %v466
  %v502 = vpop.f32.mrb[0].mxu0
  %v503 = vadd.f32 %v463, %v502
  %v504 = vpop.f32.mrb[0].mxu0
  %v505 = vpop.f32.mrb[0].mxu0
  %v506 = vadd.f32 %v463, %v505
  %v507 = vpop.f32.mrb[0].mxu0
  %508 = vdwg.mxu0
  %v509 = vpack.c.bf16 %v506, %v503
  %v514 = vunpack.c.l.b16 %v56
  %v515 = vunpack.c.l.b16 %v57
  %v516 = vunpack.c.l.b16 %v58
  %v517 = vunpack.c.l.b16 %v59
  %v518 = vpack.c.b16 %v515, %v514
  %v519 = vpack.c.b16 %v517, %v516
  %v523 = vsel %vm121, %v509, 0
  %525 = vmatprep.subr.bf16.mxu0 0
  %526 = vmatpush1.bf16.msra.mxu0 %v518
  %527 = vmatprep.subr.bf16.mxu0 0
  %528 = vmatpush1.bf16.msra.mxu0 %v519
  %529 = vmatprep.subr.bf16.mxu0 0
  %530 = vmatpush1.bf16.msra.mxu0 0
  %531 = vmatprep.subr.bf16.mxu0 0
  %532 = vmatpush1.bf16.msra.mxu0 0
  %533 = vmatprep.subr.bf16.mxu0 0
  %534 = vmatpush1.bf16.msra.mxu0 0
  %535 = vmatprep.subr.bf16.mxu0 0
  %536 = vmatpush1.bf16.msra.mxu0 0
  %537 = vmatprep.subr.bf16.mxu0 0
  %538 = vmatpush1.bf16.msra.mxu0 0
  %539 = vmatprep.subr.bf16.mxu0 0
  %540 = vmatpush1.bf16.msra.mxu0 0
  %541 = vmatprep.subr.bf16.mxu0 0
  %542 = vmatpush1.bf16.msra.mxu0 0
  %543 = vmatprep.subr.bf16.mxu0 0
  %544 = vmatpush1.bf16.msra.mxu0 0
  %545 = vmatprep.subr.bf16.mxu0 0
  %546 = vmatpush1.bf16.msra.mxu0 0
  %547 = vmatprep.subr.bf16.mxu0 0
  %548 = vmatpush1.bf16.msra.mxu0 0
  %549 = vmatprep.subr.bf16.mxu0 0
  %550 = vmatpush1.bf16.msra.mxu0 0
  %551 = vmatprep.subr.bf16.mxu0 0
  %552 = vmatpush1.bf16.msra.mxu0 0
  %553 = vmatprep.subr.bf16.mxu0 0
  %554 = vmatpush1.bf16.msra.mxu0 0
  %555 = vmatprep.subr.bf16.mxu0 0
  %556 = vmatpush1.bf16.msra.mxu0 0
  %557 = vmatprep.mubr.bf16.mxu0 0
  %558 = vmatmul.mubr.bf16.gmra.mrb[0].mxu0 %v523
  %v559 = vpop.f32.mrb[0].mxu0
  %v560 = vadd.f32 0.0, %v559
  %v561 = vpop.f32.mrb[0].mxu0
  %v562 = vpop.f32.mrb[0].mxu0
  %v563 = vadd.f32 0.0, %v562
  %v564 = vpop.f32.mrb[0].mxu0
  %565 = vdwg.mxu0
  %v570 = vunpack.c.l.b16 %v52
  %v571 = vunpack.c.l.b16 %v53
  %v572 = vunpack.c.l.b16 %v54
  %v573 = vunpack.c.l.b16 %v55
  %v574 = vpack.c.b16 %v571, %v570
  %v575 = vpack.c.b16 %v573, %v572
  %578 = vmatprep.subr.bf16.mxu0 0
  %579 = vmatpush1.bf16.msra.mxu0 %v574
  %580 = vmatprep.subr.bf16.mxu0 0
  %581 = vmatpush1.bf16.msra.mxu0 %v575
  %582 = vmatprep.subr.bf16.mxu0 0
  %583 = vmatpush1.bf16.msra.mxu0 0
  %584 = vmatprep.subr.bf16.mxu0 0
  %585 = vmatpush1.bf16.msra.mxu0 0
  %586 = vmatprep.subr.bf16.mxu0 0
  %587 = vmatpush1.bf16.msra.mxu0 0
  %588 = vmatprep.subr.bf16.mxu0 0
  %589 = vmatpush1.bf16.msra.mxu0 0
  %590 = vmatprep.subr.bf16.mxu0 0
  %591 = vmatpush1.bf16.msra.mxu0 0
  %592 = vmatprep.subr.bf16.mxu0 0
  %593 = vmatpush1.bf16.msra.mxu0 0
  %594 = vmatprep.subr.bf16.mxu0 0
  %595 = vmatpush1.bf16.msra.mxu0 0
  %596 = vmatprep.subr.bf16.mxu0 0
  %597 = vmatpush1.bf16.msra.mxu0 0
  %598 = vmatprep.subr.bf16.mxu0 0
  %599 = vmatpush1.bf16.msra.mxu0 0
  %600 = vmatprep.subr.bf16.mxu0 0
  %601 = vmatpush1.bf16.msra.mxu0 0
  %602 = vmatprep.subr.bf16.mxu0 0
  %603 = vmatpush1.bf16.msra.mxu0 0
  %604 = vmatprep.subr.bf16.mxu0 0
  %605 = vmatpush1.bf16.msra.mxu0 0
  %606 = vmatprep.subr.bf16.mxu0 0
  %607 = vmatpush1.bf16.msra.mxu0 0
  %608 = vmatprep.subr.bf16.mxu0 0
  %609 = vmatpush1.bf16.msra.mxu0 0
  %610 = vmatprep.mubr.bf16.mxu0 0
  %611 = vmatmul.mubr.bf16.gmra.mrb[0].mxu0 %v123
  %v612 = vpop.f32.mrb[0].mxu0
  %v613 = vadd.f32 %v560, %v612
  %v614 = vpop.f32.mrb[0].mxu0
  %v615 = vpop.f32.mrb[0].mxu0
  %v616 = vadd.f32 %v563, %v615
  %v617 = vpop.f32.mrb[0].mxu0
  %618 = vdwg.mxu0
  %v619 = vadd.f32 %v613, %v45
  %v620 = vadd.f32 %v616, %v46
  %v621 = vld [vmem:[%s2] sm:$0x3f]
  %v622 = vld [vmem:[%s6] sm:$0xf]
  %v623 = vld [vmem:[%s6 + $0x4] sm:$0xf]
  %v624 = vld [vmem:[%s6 + $0x8] sm:$0xf]
  %v625 = vld [vmem:[%s6 + $0xc] sm:$0xf]
  %v626 = vld [vmem:[%s6 + $0x10] sm:$0xf]
  %v627 = vld [vmem:[%s6 + $0x14] sm:$0xf]
  %v628 = vld [vmem:[%s6 + $0x18] sm:$0xf]
  %v629 = vld [vmem:[%s6 + $0x1c] sm:$0xf]
  %v630 = vld [vmem:[%s6 + $0x20] sm:$0xf]
  %v631 = vld [vmem:[%s6 + $0x24] sm:$0xf]
  %v632 = vld [vmem:[%s6 + $0x28] sm:$0xf]
  %v633 = vld [vmem:[%s6 + $0x2c] sm:$0xf]
  %v634 = vld [vmem:[%s6 + $0x30] sm:$0xf]
  %v635 = vld [vmem:[%s6 + $0x34] sm:$0xf]
  %v636 = vld [vmem:[%s6 + $0x38] sm:$0xf]
  %v637 = vld [vmem:[%s6 + $0x3c] sm:$0xf]
  %v638 = vld [vmem:[%s6 + $0x40] sm:$0xf]
  %v639 = vld [vmem:[%s6 + $0x44] sm:$0xf]
  %v640 = vld [vmem:[%s6 + $0x48] sm:$0xf]
  %v641 = vld [vmem:[%s6 + $0x4c] sm:$0xf]
  %v642 = vld [vmem:[%s6 + $0x50] sm:$0xf]
  %v643 = vld [vmem:[%s6 + $0x54] sm:$0xf]
  %v644 = vld [vmem:[%s6 + $0x58] sm:$0xf]
  %v645 = vld [vmem:[%s6 + $0x5c] sm:$0xf]
  %v646 = vld [vmem:[%s6 + $0x60] sm:$0xf]
  %v647 = vld [vmem:[%s6 + $0x64] sm:$0xf]
  %v648 = vld [vmem:[%s6 + $0x68] sm:$0xf]
  %v649 = vld [vmem:[%s6 + $0x6c] sm:$0xf]
  %v650 = vld [vmem:[%s6 + $0x70] sm:$0xf]
  %v651 = vld [vmem:[%s6 + $0x74] sm:$0xf]
  %v652 = vld [vmem:[%s6 + $0x78] sm:$0xf]
  %v653 = vld [vmem:[%s6 + $0x7c] sm:$0xf]
  %v654 = vld [vmem:[%s6 + $0x80] sm:$0xf]
  %v655 = vld [vmem:[%s6 + $0x84] sm:$0xf]
  %v656 = vld [vmem:[%s6 + $0x88] sm:$0xf]
  %v657 = vld [vmem:[%s6 + $0x8c] sm:$0xf]
  %v658 = vld [vmem:[%s6 + $0x90] sm:$0xf]
  %v659 = vld [vmem:[%s6 + $0x94] sm:$0xf]
  %v660 = vld [vmem:[%s6 + $0x98] sm:$0xf]
  %v661 = vld [vmem:[%s6 + $0x9c] sm:$0xf]
  %v662 = vld [vmem:[%s6 + $0xa0] sm:$0xf]
  %v663 = vld [vmem:[%s6 + $0xa4] sm:$0xf]
  %v664 = vld [vmem:[%s6 + $0xa8] sm:$0xf]
  %v665 = vld [vmem:[%s6 + $0xac] sm:$0xf]
  %v666 = vld [vmem:[%s6 + $0xb0] sm:$0xf]
  %v667 = vld [vmem:[%s6 + $0xb4] sm:$0xf]
  %v668 = vld [vmem:[%s6 + $0xb8] sm:$0xf]
  %v669 = vld [vmem:[%s6 + $0xbc] sm:$0xf]
  %v670 = vld [vmem:[%s6 + $0xc0] sm:$0xf]
  %v671 = vld [vmem:[%s6 + $0xc4] sm:$0xf]
  %v672 = vld [vmem:[%s6 + $0xc8] sm:$0xf]
  %v673 = vld [vmem:[%s6 + $0xcc] sm:$0xf]
  %v674 = vld [vmem:[%s6 + $0xd0] sm:$0xf]
  %v675 = vld [vmem:[%s6 + $0xd4] sm:$0xf]
  %v676 = vld [vmem:[%s6 + $0xd8] sm:$0xf]
  %v677 = vld [vmem:[%s6 + $0xdc] sm:$0xf]
  %v678 = vld [vmem:[%s6 + $0xe0] sm:$0xf]
  %v679 = vld [vmem:[%s6 + $0xe4] sm:$0xf]
  %v680 = vld [vmem:[%s6 + $0xe8] sm:$0xf]
  %v681 = vld [vmem:[%s6 + $0xec] sm:$0xf]
  %v682 = vld [vmem:[%s6 + $0xf0] sm:$0xf]
  %v683 = vld [vmem:[%s6 + $0xf4] sm:$0xf]
  %v684 = vld [vmem:[%s6 + $0xf8] sm:$0xf]
  %v685 = vld [vmem:[%s6 + $0xfc] sm:$0xf]
  %v686 = vld [vmem:[%s7] sm:$0x1]
  %v687 = vld [vmem:[%s7 + $0x1] sm:$0x1]
  %v688 = vld [vmem:[%s7 + $0x2] sm:$0x1]
  %v689 = vld [vmem:[%s7 + $0x3] sm:$0x1]
  %v690 = vld [vmem:[%s7 + $0x4] sm:$0x1]
  %v691 = vld [vmem:[%s7 + $0x5] sm:$0x1]
  %v692 = vld [vmem:[%s7 + $0x6] sm:$0x1]
  %v693 = vld [vmem:[%s7 + $0x7] sm:$0x1]
  %v694 = vld [vmem:[%s7 + $0x8] sm:$0x1]
  %v695 = vld [vmem:[%s7 + $0x9] sm:$0x1]
  %v696 = vld [vmem:[%s7 + $0xa] sm:$0x1]
  %v697 = vld [vmem:[%s7 + $0xb] sm:$0x1]
  %v698 = vld [vmem:[%s7 + $0xc] sm:$0x1]
  %v699 = vld [vmem:[%s7 + $0xd] sm:$0x1]
  %v700 = vld [vmem:[%s7 + $0xe] sm:$0x1]
  %v701 = vld [vmem:[%s7 + $0xf] sm:$0x1]
  %v702 = vld [vmem:[%s8] sm:$0x3]
  %v703 = vld [vmem:[%s8 + $0x2] sm:$0x3]
  %v704 = vld [vmem:[%s8 + $0x4] sm:$0x3]
  %v705 = vld [vmem:[%s8 + $0x6] sm:$0x3]
  %v706 = vld [vmem:[%s8 + $0x8] sm:$0x3]
  %v707 = vld [vmem:[%s8 + $0xa] sm:$0x3]
  %v708 = vld [vmem:[%s8 + $0xc] sm:$0x3]
  %v709 = vld [vmem:[%s8 + $0xe] sm:$0x3]
  %v710 = vld [vmem:[%s8 + $0x10] sm:$0x3]
  %v711 = vld [vmem:[%s8 + $0x12] sm:$0x3]
  %v712 = vld [vmem:[%s8 + $0x14] sm:$0x3]
  %v713 = vld [vmem:[%s8 + $0x16] sm:$0x3]
  %v714 = vld [vmem:[%s8 + $0x18] sm:$0x3]
  %v715 = vld [vmem:[%s8 + $0x1a] sm:$0x3]
  %v716 = vld [vmem:[%s8 + $0x1c] sm:$0x3]
  %v717 = vld [vmem:[%s8 + $0x1e] sm:$0x3]
  %v718 = vpack.c.bf16 %v619, %v619
  %v719 = vpack.c.bf16 %v620, %v620
  %v736 = vlaneseq
  %v737 = vshrl.u32 %v736, 7
  %v738 = vsub.s32 0, %v737
  %v739 = vrot.slane %v686, %v738
  %v740 = vlaneseq
  %v741 = vshrl.u32 %v740, 7
  %v742 = vsub.s32 0, %v741
  %v743 = vrot.slane %v687, %v742
  %v744 = vlaneseq
  %v745 = vshrl.u32 %v744, 7
  %v746 = vsub.s32 0, %v745
  %v747 = vrot.slane %v688, %v746
  %v748 = vlaneseq
  %v749 = vshrl.u32 %v748, 7
  %v750 = vsub.s32 0, %v749
  %v751 = vrot.slane %v689, %v750
  %v752 = vlaneseq
  %v753 = vshrl.u32 %v752, 7
  %v754 = vsub.s32 0, %v753
  %v755 = vrot.slane %v690, %v754
  %v756 = vlaneseq
  %v757 = vshrl.u32 %v756, 7
  %v758 = vsub.s32 0, %v757
  %v759 = vrot.slane %v691, %v758
  %v760 = vlaneseq
  %v761 = vshrl.u32 %v760, 7
  %v762 = vsub.s32 0, %v761
  %v763 = vrot.slane %v692, %v762
  %v764 = vlaneseq
  %v765 = vshrl.u32 %v764, 7
  %v766 = vsub.s32 0, %v765
  %v767 = vrot.slane %v693, %v766
  %v768 = vlaneseq
  %v769 = vshrl.u32 %v768, 7
  %v770 = vsub.s32 0, %v769
  %v771 = vrot.slane %v694, %v770
  %v772 = vlaneseq
  %v773 = vshrl.u32 %v772, 7
  %v774 = vsub.s32 0, %v773
  %v775 = vrot.slane %v695, %v774
  %v776 = vlaneseq
  %v777 = vshrl.u32 %v776, 7
  %v778 = vsub.s32 0, %v777
  %v779 = vrot.slane %v696, %v778
  %v780 = vlaneseq
  %v781 = vshrl.u32 %v780, 7
  %v782 = vsub.s32 0, %v781
  %v783 = vrot.slane %v697, %v782
  %v784 = vlaneseq
  %v785 = vshrl.u32 %v784, 7
  %v786 = vsub.s32 0, %v785
  %v787 = vrot.slane %v698, %v786
  %v788 = vlaneseq
  %v789 = vshrl.u32 %v788, 7
  %v790 = vsub.s32 0, %v789
  %v791 = vrot.slane %v699, %v790
  %v792 = vlaneseq
  %v793 = vshrl.u32 %v792, 7
  %v794 = vsub.s32 0, %v793
  %v795 = vrot.slane %v700, %v794
  %v796 = vlaneseq
  %v797 = vshrl.u32 %v796, 7
  %v798 = vsub.s32 0, %v797
  %v799 = vrot.slane %v701, %v798
  %v820 = vunpack.c.l.b16 %v622
  %v821 = vunpack.c.l.b16 %v623
  %v822 = vunpack.c.l.b16 %v624
  %v823 = vunpack.c.l.b16 %v625
  %v824 = vpack.c.b16 %v821, %v820
  %v825 = vpack.c.b16 %v823, %v822
  %v829 = vsel %vm121, %v718, 0
  %831 = vmatprep.subr.bf16.mxu0 0
  %832 = vmatpush1.bf16.msra.mxu0 %v824
  %833 = vmatprep.subr.bf16.mxu0 0
  %834 = vmatpush1.bf16.msra.mxu0 %v825
  %835 = vmatprep.subr.bf16.mxu0 0
  %836 = vmatpush1.bf16.msra.mxu0 0
  %837 = vmatprep.subr.bf16.mxu0 0
  %838 = vmatpush1.bf16.msra.mxu0 0
  %839 = vmatprep.subr.bf16.mxu0 0
  %840 = vmatpush1.bf16.msra.mxu0 0
  %841 = vmatprep.subr.bf16.mxu0 0
  %842 = vmatpush1.bf16.msra.mxu0 0
  %843 = vmatprep.subr.bf16.mxu0 0
  %844 = vmatpush1.bf16.msra.mxu0 0
  %845 = vmatprep.subr.bf16.mxu0 0
  %846 = vmatpush1.bf16.msra.mxu0 0
  %847 = vmatprep.subr.bf16.mxu0 0
  %848 = vmatpush1.bf16.msra.mxu0 0
  %849 = vmatprep.subr.bf16.mxu0 0
  %850 = vmatpush1.bf16.msra.mxu0 0
  %851 = vmatprep.subr.bf16.mxu0 0
  %852 = vmatpush1.bf16.msra.mxu0 0
  %853 = vmatprep.subr.bf16.mxu0 0
  %854 = vmatpush1.bf16.msra.mxu0 0
  %855 = vmatprep.subr.bf16.mxu0 0
  %856 = vmatpush1.bf16.msra.mxu0 0
  %857 = vmatprep.subr.bf16.mxu0 0
  %858 = vmatpush1.bf16.msra.mxu0 0
  %859 = vmatprep.subr.bf16.mxu0 0
  %860 = vmatpush1.bf16.msra.mxu0 0
  %861 = vmatprep.subr.bf16.mxu0 0
  %862 = vmatpush1.bf16.msra.mxu0 0
  %863 = vmatprep.mubr.bf16.mxu0 0
  %864 = vmatmul.mubr.bf16.gmra.mrb[0].mxu0 %v829
  %v865 = vpop.f32.mrb[0].mxu0
  %v866 = vadd.f32 %v739, %v865
  %v867 = vpop.f32.mrb[0].mxu0
  %v868 = vpop.f32.mrb[0].mxu0
  %v869 = vpop.f32.mrb[0].mxu0
  %870 = vdwg.mxu0
  %v875 = vunpack.c.l.b16 %v626
  %v876 = vunpack.c.l.b16 %v627
  %v877 = vunpack.c.l.b16 %v628
  %v878 = vunpack.c.l.b16 %v629
  %v879 = vpack.c.b16 %v876, %v875
  %v880 = vpack.c.b16 %v878, %v877
  %v884 = vsel %vm121, %v719, 0
  %886 = vmatprep.subr.bf16.mxu0 0
  %887 = vmatpush1.bf16.msra.mxu0 %v879
  %888 = vmatprep.subr.bf16.mxu0 0
  %889 = vmatpush1.bf16.msra.mxu0 %v880
  %890 = vmatprep.subr.bf16.mxu0 0
  %891 = vmatpush1.bf16.msra.mxu0 0
  %892 = vmatprep.subr.bf16.mxu0 0
  %893 = vmatpush1.bf16.msra.mxu0 0
  %894 = vmatprep.subr.bf16.mxu0 0
  %895 = vmatpush1.bf16.msra.mxu0 0
  %896 = vmatprep.subr.bf16.mxu0 0
  %897 = vmatpush1.bf16.msra.mxu0 0
  %898 = vmatprep.subr.bf16.mxu0 0
  %899 = vmatpush1.bf16.msra.mxu0 0
  %900 = vmatprep.subr.bf16.mxu0 0
  %901 = vmatpush1.bf16.msra.mxu0 0
  %902 = vmatprep.subr.bf16.mxu0 0
  %903 = vmatpush1.bf16.msra.mxu0 0
  %904 = vmatprep.subr.bf16.mxu0 0
  %905 = vmatpush1.bf16.msra.mxu0 0
  %906 = vmatprep.subr.bf16.mxu0 0
  %907 = vmatpush1.bf16.msra.mxu0 0
  %908 = vmatprep.subr.bf16.mxu0 0
  %909 = vmatpush1.bf16.msra.mxu0 0
  %910 = vmatprep.subr.bf16.mxu0 0
  %911 = vmatpush1.bf16.msra.mxu0 0
  %912 = vmatprep.subr.bf16.mxu0 0
  %913 = vmatpush1.bf16.msra.mxu0 0
  %914 = vmatprep.subr.bf16.mxu0 0
  %915 = vmatpush1.bf16.msra.mxu0 0
  %916 = vmatprep.subr.bf16.mxu0 0
  %917 = vmatpush1.bf16.msra.mxu0 0
  %918 = vmatprep.mubr.bf16.mxu0 0
  %919 = vmatmul.mubr.bf16.gmra.mrb[0].mxu0 %v884
  %v920 = vpop.f32.mrb[0].mxu0
  %v921 = vadd.f32 %v743, %v920
  %v922 = vpop.f32.mrb[0].mxu0
  %v923 = vpop.f32.mrb[0].mxu0
  %v924 = vpop.f32.mrb[0].mxu0
  %925 = vdwg.mxu0
  %v930 = vunpack.c.l.b16 %v630
  %v931 = vunpack.c.l.b16 %v631
  %v932 = vunpack.c.l.b16 %v632
  %v933 = vunpack.c.l.b16 %v633
  %v934 = vpack.c.b16 %v931, %v930
  %v935 = vpack.c.b16 %v933, %v932
  %938 = vmatprep.subr.bf16.mxu0 0
  %939 = vmatpush1.bf16.msra.mxu0 %v934
  %940 = vmatprep.subr.bf16.mxu0 0
  %941 = vmatpush1.bf16.msra.mxu0 %v935
  %942 = vmatprep.subr.bf16.mxu0 0
  %943 = vmatpush1.bf16.msra.mxu0 0
  %944 = vmatprep.subr.bf16.mxu0 0
  %945 = vmatpush1.bf16.msra.mxu0 0
  %946 = vmatprep.subr.bf16.mxu0 0
  %947 = vmatpush1.bf16.msra.mxu0 0
  %948 = vmatprep.subr.bf16.mxu0 0
  %949 = vmatpush1.bf16.msra.mxu0 0
  %950 = vmatprep.subr.bf16.mxu0 0
  %951 = vmatpush1.bf16.msra.mxu0 0
  %952 = vmatprep.subr.bf16.mxu0 0
  %953 = vmatpush1.bf16.msra.mxu0 0
  %954 = vmatprep.subr.bf16.mxu0 0
  %955 = vmatpush1.bf16.msra.mxu0 0
  %956 = vmatprep.subr.bf16.mxu0 0
  %957 = vmatpush1.bf16.msra.mxu0 0
  %958 = vmatprep.subr.bf16.mxu0 0
  %959 = vmatpush1.bf16.msra.mxu0 0
  %960 = vmatprep.subr.bf16.mxu0 0
  %961 = vmatpush1.bf16.msra.mxu0 0
  %962 = vmatprep.subr.bf16.mxu0 0
  %963 = vmatpush1.bf16.msra.mxu0 0
  %964 = vmatprep.subr.bf16.mxu0 0
  %965 = vmatpush1.bf16.msra.mxu0 0
  %966 = vmatprep.subr.bf16.mxu0 0
  %967 = vmatpush1.bf16.msra.mxu0 0
  %968 = vmatprep.subr.bf16.mxu0 0
  %969 = vmatpush1.bf16.msra.mxu0 0
  %970 = vmatprep.mubr.bf16.mxu0 0
  %971 = vmatmul.mubr.bf16.gmra.mrb[0].mxu0 %v829
  %v972 = vpop.f32.mrb[0].mxu0
  %v973 = vadd.f32 %v747, %v972
  %v974 = vpop.f32.mrb[0].mxu0
  %v975 = vpop.f32.mrb[0].mxu0
  %v976 = vpop.f32.mrb[0].mxu0
  %977 = vdwg.mxu0
  %v982 = vunpack.c.l.b16 %v634
  %v983 = vunpack.c.l.b16 %v635
  %v984 = vunpack.c.l.b16 %v636
  %v985 = vunpack.c.l.b16 %v637
  %v986 = vpack.c.b16 %v983, %v982
  %v987 = vpack.c.b16 %v985, %v984
  %990 = vmatprep.subr.bf16.mxu0 0
  %991 = vmatpush1.bf16.msra.mxu0 %v986
  %992 = vmatprep.subr.bf16.mxu0 0
  %993 = vmatpush1.bf16.msra.mxu0 %v987
  %994 = vmatprep.subr.bf16.mxu0 0
  %995 = vmatpush1.bf16.msra.mxu0 0
  %996 = vmatprep.subr.bf16.mxu0 0
  %997 = vmatpush1.bf16.msra.mxu0 0
  %998 = vmatprep.subr.bf16.mxu0 0
  %999 = vmatpush1.bf16.msra.mxu0 0
  %1000 = vmatprep.subr.bf16.mxu0 0
  %1001 = vmatpush1.bf16.msra.mxu0 0
  %1002 = vmatprep.subr.bf16.mxu0 0
  %1003 = vmatpush1.bf16.msra.mxu0 0
  %1004 = vmatprep.subr.bf16.mxu0 0
  %1005 = vmatpush1.bf16.msra.mxu0 0
  %1006 = vmatprep.subr.bf16.mxu0 0
  %1007 = vmatpush1.bf16.msra.mxu0 0
  %1008 = vmatprep.subr.bf16.mxu0 0
  %1009 = vmatpush1.bf16.msra.mxu0 0
  %1010 = vmatprep.subr.bf16.mxu0 0
  %1011 = vmatpush1.bf16.msra.mxu0 0
  %1012 = vmatprep.subr.bf16.mxu0 0
  %1013 = vmatpush1.bf16.msra.mxu0 0
  %1014 = vmatprep.subr.bf16.mxu0 0
  %1015 = vmatpush1.bf16.msra.mxu0 0
  %1016 = vmatprep.subr.bf16.mxu0 0
  %1017 = vmatpush1.bf16.msra.mxu0 0
  %1018 = vmatprep.subr.bf16.mxu0 0
  %1019 = vmatpush1.bf16.msra.mxu0 0
  %1020 = vmatprep.subr.bf16.mxu0 0
  %1021 = vmatpush1.bf16.msra.mxu0 0
  %1022 = vmatprep.mubr.bf16.mxu0 0
  %1023 = vmatmul.mubr.bf16.gmra.mrb[0].mxu0 %v884
  %v1024 = vpop.f32.mrb[0].mxu0
  %v1025 = vadd.f32 %v751, %v1024
  %v1026 = vpop.f32.mrb[0].mxu0
  %v1027 = vpop.f32.mrb[0].mxu0
  %v1028 = vpop.f32.mrb[0].mxu0
  %1029 = vdwg.mxu0
  %v1034 = vunpack.c.l.b16 %v638
  %v1035 = vunpack.c.l.b16 %v639
  %v1036 = vunpack.c.l.b16 %v640
  %v1037 = vunpack.c.l.b16 %v641
  %v1038 = vpack.c.b16 %v1035, %v1034
  %v1039 = vpack.c.b16 %v1037, %v1036
  %1042 = vmatprep.subr.bf16.mxu0 0
  %1043 = vmatpush1.bf16.msra.mxu0 %v1038
  %1044 = vmatprep.subr.bf16.mxu0 0
  %1045 = vmatpush1.bf16.msra.mxu0 %v1039
  %1046 = vmatprep.subr.bf16.mxu0 0
  %1047 = vmatpush1.bf16.msra.mxu0 0
  %1048 = vmatprep.subr.bf16.mxu0 0
  %1049 = vmatpush1.bf16.msra.mxu0 0
  %1050 = vmatprep.subr.bf16.mxu0 0
  %1051 = vmatpush1.bf16.msra.mxu0 0
  %1052 = vmatprep.subr.bf16.mxu0 0
  %1053 = vmatpush1.bf16.msra.mxu0 0
  %1054 = vmatprep.subr.bf16.mxu0 0
  %1055 = vmatpush1.bf16.msra.mxu0 0
  %1056 = vmatprep.subr.bf16.mxu0 0
  %1057 = vmatpush1.bf16.msra.mxu0 0
  %1058 = vmatprep.subr.bf16.mxu0 0
  %1059 = vmatpush1.bf16.msra.mxu0 0
  %1060 = vmatprep.subr.bf16.mxu0 0
  %1061 = vmatpush1.bf16.msra.mxu0 0
  %1062 = vmatprep.subr.bf16.mxu0 0
  %1063 = vmatpush1.bf16.msra.mxu0 0
  %1064 = vmatprep.subr.bf16.mxu0 0
  %1065 = vmatpush1.bf16.msra.mxu0 0
  %1066 = vmatprep.subr.bf16.mxu0 0
  %1067 = vmatpush1.bf16.msra.mxu0 0
  %1068 = vmatprep.subr.bf16.mxu0 0
  %1069 = vmatpush1.bf16.msra.mxu0 0
  %1070 = vmatprep.subr.bf16.mxu0 0
  %1071 = vmatpush1.bf16.msra.mxu0 0
  %1072 = vmatprep.subr.bf16.mxu0 0
  %1073 = vmatpush1.bf16.msra.mxu0 0
  %1074 = vmatprep.mubr.bf16.mxu0 0
  %1075 = vmatmul.mubr.bf16.gmra.mrb[0].mxu0 %v829
  %v1076 = vpop.f32.mrb[0].mxu0
  %v1077 = vadd.f32 %v755, %v1076
  %v1078 = vpop.f32.mrb[0].mxu0
  %v1079 = vpop.f32.mrb[0].mxu0
  %v1080 = vpop.f32.mrb[0].mxu0
  %1081 = vdwg.mxu0
  %v1086 = vunpack.c.l.b16 %v642
  %v1087 = vunpack.c.l.b16 %v643
  %v1088 = vunpack.c.l.b16 %v644
  %v1089 = vunpack.c.l.b16 %v645
  %v1090 = vpack.c.b16 %v1087, %v1086
  %v1091 = vpack.c.b16 %v1089, %v1088
  %1094 = vmatprep.subr.bf16.mxu0 0
  %1095 = vmatpush1.bf16.msra.mxu0 %v1090
  %1096 = vmatprep.subr.bf16.mxu0 0
  %1097 = vmatpush1.bf16.msra.mxu0 %v1091
  %1098 = vmatprep.subr.bf16.mxu0 0
  %1099 = vmatpush1.bf16.msra.mxu0 0
  %1100 = vmatprep.subr.bf16.mxu0 0
  %1101 = vmatpush1.bf16.msra.mxu0 0
  %1102 = vmatprep.subr.bf16.mxu0 0
  %1103 = vmatpush1.bf16.msra.mxu0 0
  %1104 = vmatprep.subr.bf16.mxu0 0
  %1105 = vmatpush1.bf16.msra.mxu0 0
  %1106 = vmatprep.subr.bf16.mxu0 0
  %1107 = vmatpush1.bf16.msra.mxu0 0
  %1108 = vmatprep.subr.bf16.mxu0 0
  %1109 = vmatpush1.bf16.msra.mxu0 0
  %1110 = vmatprep.subr.bf16.mxu0 0
  %1111 = vmatpush1.bf16.msra.mxu0 0
  %1112 = vmatprep.subr.bf16.mxu0 0
  %1113 = vmatpush1.bf16.msra.mxu0 0
  %1114 = vmatprep.subr.bf16.mxu0 0
  %1115 = vmatpush1.bf16.msra.mxu0 0
  %1116 = vmatprep.subr.bf16.mxu0 0
  %1117 = vmatpush1.bf16.msra.mxu0 0
  %1118 = vmatprep.subr.bf16.mxu0 0
  %1119 = vmatpush1.bf16.msra.mxu0 0
  %1120 = vmatprep.subr.bf16.mxu0 0
  %1121 = vmatpush1.bf16.msra.mxu0 0
  %1122 = vmatprep.subr.bf16.mxu0 0
  %1123 = vmatpush1.bf16.msra.mxu0 0
  %1124 = vmatprep.subr.bf16.mxu0 0
  %1125 = vmatpush1.bf16.msra.mxu0 0
  %1126 = vmatprep.mubr.bf16.mxu0 0
  %1127 = vmatmul.mubr.bf16.gmra.mrb[0].mxu0 %v884
  %v1128 = vpop.f32.mrb[0].mxu0
  %v1129 = vadd.f32 %v759, %v1128
  %v1130 = vpop.f32.mrb[0].mxu0
  %v1131 = vpop.f32.mrb[0].mxu0
  %v1132 = vpop.f32.mrb[0].mxu0
  %1133 = vdwg.mxu0
  %v1138 = vunpack.c.l.b16 %v646
  %v1139 = vunpack.c.l.b16 %v647
  %v1140 = vunpack.c.l.b16 %v648
  %v1141 = vunpack.c.l.b16 %v649
  %v1142 = vpack.c.b16 %v1139, %v1138
  %v1143 = vpack.c.b16 %v1141, %v1140
  %1146 = vmatprep.subr.bf16.mxu0 0
  %1147 = vmatpush1.bf16.msra.mxu0 %v1142
  %1148 = vmatprep.subr.bf16.mxu0 0
  %1149 = vmatpush1.bf16.msra.mxu0 %v1143
  %1150 = vmatprep.subr.bf16.mxu0 0
  %1151 = vmatpush1.bf16.msra.mxu0 0
  %1152 = vmatprep.subr.bf16.mxu0 0
  %1153 = vmatpush1.bf16.msra.mxu0 0
  %1154 = vmatprep.subr.bf16.mxu0 0
  %1155 = vmatpush1.bf16.msra.mxu0 0
  %1156 = vmatprep.subr.bf16.mxu0 0
  %1157 = vmatpush1.bf16.msra.mxu0 0
  %1158 = vmatprep.subr.bf16.mxu0 0
  %1159 = vmatpush1.bf16.msra.mxu0 0
  %1160 = vmatprep.subr.bf16.mxu0 0
  %1161 = vmatpush1.bf16.msra.mxu0 0
  %1162 = vmatprep.subr.bf16.mxu0 0
  %1163 = vmatpush1.bf16.msra.mxu0 0
  %1164 = vmatprep.subr.bf16.mxu0 0
  %1165 = vmatpush1.bf16.msra.mxu0 0
  %1166 = vmatprep.subr.bf16.mxu0 0
  %1167 = vmatpush1.bf16.msra.mxu0 0
  %1168 = vmatprep.subr.bf16.mxu0 0
  %1169 = vmatpush1.bf16.msra.mxu0 0
  %1170 = vmatprep.subr.bf16.mxu0 0
  %1171 = vmatpush1.bf16.msra.mxu0 0
  %1172 = vmatprep.subr.bf16.mxu0 0
  %1173 = vmatpush1.bf16.msra.mxu0 0
  %1174 = vmatprep.subr.bf16.mxu0 0
  %1175 = vmatpush1.bf16.msra.mxu0 0
  %1176 = vmatprep.subr.bf16.mxu0 0
  %1177 = vmatpush1.bf16.msra.mxu0 0
  %1178 = vmatprep.mubr.bf16.mxu0 0
  %1179 = vmatmul.mubr.bf16.gmra.mrb[0].mxu0 %v829
  %v1180 = vpop.f32.mrb[0].mxu0
  %v1181 = vadd.f32 %v763, %v1180
  %v1182 = vpop.f32.mrb[0].mxu0
  %v1183 = vpop.f32.mrb[0].mxu0
  %v1184 = vpop.f32.mrb[0].mxu0
  %1185 = vdwg.mxu0
  %v1190 = vunpack.c.l.b16 %v650
  %v1191 = vunpack.c.l.b16 %v651
  %v1192 = vunpack.c.l.b16 %v652
  %v1193 = vunpack.c.l.b16 %v653
  %v1194 = vpack.c.b16 %v1191, %v1190
  %v1195 = vpack.c.b16 %v1193, %v1192
  %1198 = vmatprep.subr.bf16.mxu0 0
  %1199 = vmatpush1.bf16.msra.mxu0 %v1194
  %1200 = vmatprep.subr.bf16.mxu0 0
  %1201 = vmatpush1.bf16.msra.mxu0 %v1195
  %1202 = vmatprep.subr.bf16.mxu0 0
  %1203 = vmatpush1.bf16.msra.mxu0 0
  %1204 = vmatprep.subr.bf16.mxu0 0
  %1205 = vmatpush1.bf16.msra.mxu0 0
  %1206 = vmatprep.subr.bf16.mxu0 0
  %1207 = vmatpush1.bf16.msra.mxu0 0
  %1208 = vmatprep.subr.bf16.mxu0 0
  %1209 = vmatpush1.bf16.msra.mxu0 0
  %1210 = vmatprep.subr.bf16.mxu0 0
  %1211 = vmatpush1.bf16.msra.mxu0 0
  %1212 = vmatprep.subr.bf16.mxu0 0
  %1213 = vmatpush1.bf16.msra.mxu0 0
  %1214 = vmatprep.subr.bf16.mxu0 0
  %1215 = vmatpush1.bf16.msra.mxu0 0
  %1216 = vmatprep.subr.bf16.mxu0 0
  %1217 = vmatpush1.bf16.msra.mxu0 0
  %1218 = vmatprep.subr.bf16.mxu0 0
  %1219 = vmatpush1.bf16.msra.mxu0 0
  %1220 = vmatprep.subr.bf16.mxu0 0
  %1221 = vmatpush1.bf16.msra.mxu0 0
  %1222 = vmatprep.subr.bf16.mxu0 0
  %1223 = vmatpush1.bf16.msra.mxu0 0
  %1224 = vmatprep.subr.bf16.mxu0 0
  %1225 = vmatpush1.bf16.msra.mxu0 0
  %1226 = vmatprep.subr.bf16.mxu0 0
  %1227 = vmatpush1.bf16.msra.mxu0 0
  %1228 = vmatprep.subr.bf16.mxu0 0
  %1229 = vmatpush1.bf16.msra.mxu0 0
  %1230 = vmatprep.mubr.bf16.mxu0 0
  %1231 = vmatmul.mubr.bf16.gmra.mrb[0].mxu0 %v884
  %v1232 = vpop.f32.mrb[0].mxu0
  %v1233 = vadd.f32 %v767, %v1232
  %v1234 = vpop.f32.mrb[0].mxu0
  %v1235 = vpop.f32.mrb[0].mxu0
  %v1236 = vpop.f32.mrb[0].mxu0
  %1237 = vdwg.mxu0
  %v1242 = vunpack.c.l.b16 %v654
  %v1243 = vunpack.c.l.b16 %v655
  %v1244 = vunpack.c.l.b16 %v656
  %v1245 = vunpack.c.l.b16 %v657
  %v1246 = vpack.c.b16 %v1243, %v1242
  %v1247 = vpack.c.b16 %v1245, %v1244
  %1250 = vmatprep.subr.bf16.mxu0 0
  %1251 = vmatpush1.bf16.msra.mxu0 %v1246
  %1252 = vmatprep.subr.bf16.mxu0 0
  %1253 = vmatpush1.bf16.msra.mxu0 %v1247
  %1254 = vmatprep.subr.bf16.mxu0 0
  %1255 = vmatpush1.bf16.msra.mxu0 0
  %1256 = vmatprep.subr.bf16.mxu0 0
  %1257 = vmatpush1.bf16.msra.mxu0 0
  %1258 = vmatprep.subr.bf16.mxu0 0
  %1259 = vmatpush1.bf16.msra.mxu0 0
  %1260 = vmatprep.subr.bf16.mxu0 0
  %1261 = vmatpush1.bf16.msra.mxu0 0
  %1262 = vmatprep.subr.bf16.mxu0 0
  %1263 = vmatpush1.bf16.msra.mxu0 0
  %1264 = vmatprep.subr.bf16.mxu0 0
  %1265 = vmatpush1.bf16.msra.mxu0 0
  %1266 = vmatprep.subr.bf16.mxu0 0
  %1267 = vmatpush1.bf16.msra.mxu0 0
  %1268 = vmatprep.subr.bf16.mxu0 0
  %1269 = vmatpush1.bf16.msra.mxu0 0
  %1270 = vmatprep.subr.bf16.mxu0 0
  %1271 = vmatpush1.bf16.msra.mxu0 0
  %1272 = vmatprep.subr.bf16.mxu0 0
  %1273 = vmatpush1.bf16.msra.mxu0 0
  %1274 = vmatprep.subr.bf16.mxu0 0
  %1275 = vmatpush1.bf16.msra.mxu0 0
  %1276 = vmatprep.subr.bf16.mxu0 0
  %1277 = vmatpush1.bf16.msra.mxu0 0
  %1278 = vmatprep.subr.bf16.mxu0 0
  %1279 = vmatpush1.bf16.msra.mxu0 0
  %1280 = vmatprep.subr.bf16.mxu0 0
  %1281 = vmatpush1.bf16.msra.mxu0 0
  %1282 = vmatprep.mubr.bf16.mxu0 0
  %1283 = vmatmul.mubr.bf16.gmra.mrb[0].mxu0 %v829
  %v1284 = vpop.f32.mrb[0].mxu0
  %v1285 = vadd.f32 %v771, %v1284
  %v1286 = vpop.f32.mrb[0].mxu0
  %v1287 = vpop.f32.mrb[0].mxu0
  %v1288 = vpop.f32.mrb[0].mxu0
  %1289 = vdwg.mxu0
  %v1294 = vunpack.c.l.b16 %v658
  %v1295 = vunpack.c.l.b16 %v659
  %v1296 = vunpack.c.l.b16 %v660
  %v1297 = vunpack.c.l.b16 %v661
  %v1298 = vpack.c.b16 %v1295, %v1294
  %v1299 = vpack.c.b16 %v1297, %v1296
  %1302 = vmatprep.subr.bf16.mxu0 0
  %1303 = vmatpush1.bf16.msra.mxu0 %v1298
  %1304 = vmatprep.subr.bf16.mxu0 0
  %1305 = vmatpush1.bf16.msra.mxu0 %v1299
  %1306 = vmatprep.subr.bf16.mxu0 0
  %1307 = vmatpush1.bf16.msra.mxu0 0
  %1308 = vmatprep.subr.bf16.mxu0 0
  %1309 = vmatpush1.bf16.msra.mxu0 0
  %1310 = vmatprep.subr.bf16.mxu0 0
  %1311 = vmatpush1.bf16.msra.mxu0 0
  %1312 = vmatprep.subr.bf16.mxu0 0
  %1313 = vmatpush1.bf16.msra.mxu0 0
  %1314 = vmatprep.subr.bf16.mxu0 0
  %1315 = vmatpush1.bf16.msra.mxu0 0
  %1316 = vmatprep.subr.bf16.mxu0 0
  %1317 = vmatpush1.bf16.msra.mxu0 0
  %1318 = vmatprep.subr.bf16.mxu0 0
  %1319 = vmatpush1.bf16.msra.mxu0 0
  %1320 = vmatprep.subr.bf16.mxu0 0
  %1321 = vmatpush1.bf16.msra.mxu0 0
  %1322 = vmatprep.subr.bf16.mxu0 0
  %1323 = vmatpush1.bf16.msra.mxu0 0
  %1324 = vmatprep.subr.bf16.mxu0 0
  %1325 = vmatpush1.bf16.msra.mxu0 0
  %1326 = vmatprep.subr.bf16.mxu0 0
  %1327 = vmatpush1.bf16.msra.mxu0 0
  %1328 = vmatprep.subr.bf16.mxu0 0
  %1329 = vmatpush1.bf16.msra.mxu0 0
  %1330 = vmatprep.subr.bf16.mxu0 0
  %1331 = vmatpush1.bf16.msra.mxu0 0
  %1332 = vmatprep.subr.bf16.mxu0 0
  %1333 = vmatpush1.bf16.msra.mxu0 0
  %1334 = vmatprep.mubr.bf16.mxu0 0
  %1335 = vmatmul.mubr.bf16.gmra.mrb[0].mxu0 %v884
  %v1336 = vpop.f32.mrb[0].mxu0
  %v1337 = vadd.f32 %v775, %v1336
  %v1338 = vpop.f32.mrb[0].mxu0
  %v1339 = vpop.f32.mrb[0].mxu0
  %v1340 = vpop.f32.mrb[0].mxu0
  %1341 = vdwg.mxu0
  %v1346 = vunpack.c.l.b16 %v662
  %v1347 = vunpack.c.l.b16 %v663
  %v1348 = vunpack.c.l.b16 %v664
  %v1349 = vunpack.c.l.b16 %v665
  %v1350 = vpack.c.b16 %v1347, %v1346
  %v1351 = vpack.c.b16 %v1349, %v1348
  %1354 = vmatprep.subr.bf16.mxu0 0
  %1355 = vmatpush1.bf16.msra.mxu0 %v1350
  %1356 = vmatprep.subr.bf16.mxu0 0
  %1357 = vmatpush1.bf16.msra.mxu0 %v1351
  %1358 = vmatprep.subr.bf16.mxu0 0
  %1359 = vmatpush1.bf16.msra.mxu0 0
  %1360 = vmatprep.subr.bf16.mxu0 0
  %1361 = vmatpush1.bf16.msra.mxu0 0
  %1362 = vmatprep.subr.bf16.mxu0 0
  %1363 = vmatpush1.bf16.msra.mxu0 0
  %1364 = vmatprep.subr.bf16.mxu0 0
  %1365 = vmatpush1.bf16.msra.mxu0 0
  %1366 = vmatprep.subr.bf16.mxu0 0
  %1367 = vmatpush1.bf16.msra.mxu0 0
  %1368 = vmatprep.subr.bf16.mxu0 0
  %1369 = vmatpush1.bf16.msra.mxu0 0
  %1370 = vmatprep.subr.bf16.mxu0 0
  %1371 = vmatpush1.bf16.msra.mxu0 0
  %1372 = vmatprep.subr.bf16.mxu0 0
  %1373 = vmatpush1.bf16.msra.mxu0 0
  %1374 = vmatprep.subr.bf16.mxu0 0
  %1375 = vmatpush1.bf16.msra.mxu0 0
  %1376 = vmatprep.subr.bf16.mxu0 0
  %1377 = vmatpush1.bf16.msra.mxu0 0
  %1378 = vmatprep.subr.bf16.mxu0 0
  %1379 = vmatpush1.bf16.msra.mxu0 0
  %1380 = vmatprep.subr.bf16.mxu0 0
  %1381 = vmatpush1.bf16.msra.mxu0 0
  %1382 = vmatprep.subr.bf16.mxu0 0
  %1383 = vmatpush1.bf16.msra.mxu0 0
  %1384 = vmatprep.subr.bf16.mxu0 0
  %1385 = vmatpush1.bf16.msra.mxu0 0
  %1386 = vmatprep.mubr.bf16.mxu0 0
  %1387 = vmatmul.mubr.bf16.gmra.mrb[0].mxu0 %v829
  %v1388 = vpop.f32.mrb[0].mxu0
  %v1389 = vadd.f32 %v779, %v1388
  %v1390 = vpop.f32.mrb[0].mxu0
  %v1391 = vpop.f32.mrb[0].mxu0
  %v1392 = vpop.f32.mrb[0].mxu0
  %1393 = vdwg.mxu0
  %v1398 = vunpack.c.l.b16 %v666
  %v1399 = vunpack.c.l.b16 %v667
  %v1400 = vunpack.c.l.b16 %v668
  %v1401 = vunpack.c.l.b16 %v669
  %v1402 = vpack.c.b16 %v1399, %v1398
  %v1403 = vpack.c.b16 %v1401, %v1400
  %1406 = vmatprep.subr.bf16.mxu0 0
  %1407 = vmatpush1.bf16.msra.mxu0 %v1402
  %1408 = vmatprep.subr.bf16.mxu0 0
  %1409 = vmatpush1.bf16.msra.mxu0 %v1403
  %1410 = vmatprep.subr.bf16.mxu0 0
  %1411 = vmatpush1.bf16.msra.mxu0 0
  %1412 = vmatprep.subr.bf16.mxu0 0
  %1413 = vmatpush1.bf16.msra.mxu0 0
  %1414 = vmatprep.subr.bf16.mxu0 0
  %1415 = vmatpush1.bf16.msra.mxu0 0
  %1416 = vmatprep.subr.bf16.mxu0 0
  %1417 = vmatpush1.bf16.msra.mxu0 0
  %1418 = vmatprep.subr.bf16.mxu0 0
  %1419 = vmatpush1.bf16.msra.mxu0 0
  %1420 = vmatprep.subr.bf16.mxu0 0
  %1421 = vmatpush1.bf16.msra.mxu0 0
  %1422 = vmatprep.subr.bf16.mxu0 0
  %1423 = vmatpush1.bf16.msra.mxu0 0
  %1424 = vmatprep.subr.bf16.mxu0 0
  %1425 = vmatpush1.bf16.msra.mxu0 0
  %1426 = vmatprep.subr.bf16.mxu0 0
  %1427 = vmatpush1.bf16.msra.mxu0 0
  %1428 = vmatprep.subr.bf16.mxu0 0
  %1429 = vmatpush1.bf16.msra.mxu0 0
  %1430 = vmatprep.subr.bf16.mxu0 0
  %1431 = vmatpush1.bf16.msra.mxu0 0
  %1432 = vmatprep.subr.bf16.mxu0 0
  %1433 = vmatpush1.bf16.msra.mxu0 0
  %1434 = vmatprep.subr.bf16.mxu0 0
  %1435 = vmatpush1.bf16.msra.mxu0 0
  %1436 = vmatprep.subr.bf16.mxu0 0
  %1437 = vmatpush1.bf16.msra.mxu0 0
  %1438 = vmatprep.mubr.bf16.mxu0 0
  %1439 = vmatmul.mubr.bf16.gmra.mrb[0].mxu0 %v884
  %v1440 = vpop.f32.mrb[0].mxu0
  %v1441 = vadd.f32 %v783, %v1440
  %v1442 = vpop.f32.mrb[0].mxu0
  %v1443 = vpop.f32.mrb[0].mxu0
  %v1444 = vpop.f32.mrb[0].mxu0
  %1445 = vdwg.mxu0
  %v1450 = vunpack.c.l.b16 %v670
  %v1451 = vunpack.c.l.b16 %v671
  %v1452 = vunpack.c.l.b16 %v672
  %v1453 = vunpack.c.l.b16 %v673
  %v1454 = vpack.c.b16 %v1451, %v1450
  %v1455 = vpack.c.b16 %v1453, %v1452
  %1458 = vmatprep.subr.bf16.mxu0 0
  %1459 = vmatpush1.bf16.msra.mxu0 %v1454
  %1460 = vmatprep.subr.bf16.mxu0 0
  %1461 = vmatpush1.bf16.msra.mxu0 %v1455
  %1462 = vmatprep.subr.bf16.mxu0 0
  %1463 = vmatpush1.bf16.msra.mxu0 0
  %1464 = vmatprep.subr.bf16.mxu0 0
  %1465 = vmatpush1.bf16.msra.mxu0 0
  %1466 = vmatprep.subr.bf16.mxu0 0
  %1467 = vmatpush1.bf16.msra.mxu0 0
  %1468 = vmatprep.subr.bf16.mxu0 0
  %1469 = vmatpush1.bf16.msra.mxu0 0
  %1470 = vmatprep.subr.bf16.mxu0 0
  %1471 = vmatpush1.bf16.msra.mxu0 0
  %1472 = vmatprep.subr.bf16.mxu0 0
  %1473 = vmatpush1.bf16.msra.mxu0 0
  %1474 = vmatprep.subr.bf16.mxu0 0
  %1475 = vmatpush1.bf16.msra.mxu0 0
  %1476 = vmatprep.subr.bf16.mxu0 0
  %1477 = vmatpush1.bf16.msra.mxu0 0
  %1478 = vmatprep.subr.bf16.mxu0 0
  %1479 = vmatpush1.bf16.msra.mxu0 0
  %1480 = vmatprep.subr.bf16.mxu0 0
  %1481 = vmatpush1.bf16.msra.mxu0 0
  %1482 = vmatprep.subr.bf16.mxu0 0
  %1483 = vmatpush1.bf16.msra.mxu0 0
  %1484 = vmatprep.subr.bf16.mxu0 0
  %1485 = vmatpush1.bf16.msra.mxu0 0
  %1486 = vmatprep.subr.bf16.mxu0 0
  %1487 = vmatpush1.bf16.msra.mxu0 0
  %1488 = vmatprep.subr.bf16.mxu0 0
  %1489 = vmatpush1.bf16.msra.mxu0 0
  %1490 = vmatprep.mubr.bf16.mxu0 0
  %1491 = vmatmul.mubr.bf16.gmra.mrb[0].mxu0 %v829
  %v1492 = vpop.f32.mrb[0].mxu0
  %v1493 = vadd.f32 %v787, %v1492
  %v1494 = vpop.f32.mrb[0].mxu0
  %v1495 = vpop.f32.mrb[0].mxu0
  %v1496 = vpop.f32.mrb[0].mxu0
  %1497 = vdwg.mxu0
  %v1502 = vunpack.c.l.b16 %v674
  %v1503 = vunpack.c.l.b16 %v675
  %v1504 = vunpack.c.l.b16 %v676
  %v1505 = vunpack.c.l.b16 %v677
  %v1506 = vpack.c.b16 %v1503, %v1502
  %v1507 = vpack.c.b16 %v1505, %v1504
  %1510 = vmatprep.subr.bf16.mxu0 0
  %1511 = vmatpush1.bf16.msra.mxu0 %v1506
  %1512 = vmatprep.subr.bf16.mxu0 0
  %1513 = vmatpush1.bf16.msra.mxu0 %v1507
  %1514 = vmatprep.subr.bf16.mxu0 0
  %1515 = vmatpush1.bf16.msra.mxu0 0
  %1516 = vmatprep.subr.bf16.mxu0 0
  %1517 = vmatpush1.bf16.msra.mxu0 0
  %1518 = vmatprep.subr.bf16.mxu0 0
  %1519 = vmatpush1.bf16.msra.mxu0 0
  %1520 = vmatprep.subr.bf16.mxu0 0
  %1521 = vmatpush1.bf16.msra.mxu0 0
  %1522 = vmatprep.subr.bf16.mxu0 0
  %1523 = vmatpush1.bf16.msra.mxu0 0
  %1524 = vmatprep.subr.bf16.mxu0 0
  %1525 = vmatpush1.bf16.msra.mxu0 0
  %1526 = vmatprep.subr.bf16.mxu0 0
  %1527 = vmatpush1.bf16.msra.mxu0 0
  %1528 = vmatprep.subr.bf16.mxu0 0
  %1529 = vmatpush1.bf16.msra.mxu0 0
  %1530 = vmatprep.subr.bf16.mxu0 0
  %1531 = vmatpush1.bf16.msra.mxu0 0
  %1532 = vmatprep.subr.bf16.mxu0 0
  %1533 = vmatpush1.bf16.msra.mxu0 0
  %1534 = vmatprep.subr.bf16.mxu0 0
  %1535 = vmatpush1.bf16.msra.mxu0 0
  %1536 = vmatprep.subr.bf16.mxu0 0
  %1537 = vmatpush1.bf16.msra.mxu0 0
  %1538 = vmatprep.subr.bf16.mxu0 0
  %1539 = vmatpush1.bf16.msra.mxu0 0
  %1540 = vmatprep.subr.bf16.mxu0 0
  %1541 = vmatpush1.bf16.msra.mxu0 0
  %1542 = vmatprep.mubr.bf16.mxu0 0
  %1543 = vmatmul.mubr.bf16.gmra.mrb[0].mxu0 %v884
  %v1544 = vpop.f32.mrb[0].mxu0
  %v1545 = vadd.f32 %v791, %v1544
  %v1546 = vpop.f32.mrb[0].mxu0
  %v1547 = vpop.f32.mrb[0].mxu0
  %v1548 = vpop.f32.mrb[0].mxu0
  %1549 = vdwg.mxu0
  %v1554 = vunpack.c.l.b16 %v678
  %v1555 = vunpack.c.l.b16 %v679
  %v1556 = vunpack.c.l.b16 %v680
  %v1557 = vunpack.c.l.b16 %v681
  %v1558 = vpack.c.b16 %v1555, %v1554
  %v1559 = vpack.c.b16 %v1557, %v1556
  %1562 = vmatprep.subr.bf16.mxu0 0
  %1563 = vmatpush1.bf16.msra.mxu0 %v1558
  %1564 = vmatprep.subr.bf16.mxu0 0
  %1565 = vmatpush1.bf16.msra.mxu0 %v1559
  %1566 = vmatprep.subr.bf16.mxu0 0
  %1567 = vmatpush1.bf16.msra.mxu0 0
  %1568 = vmatprep.subr.bf16.mxu0 0
  %1569 = vmatpush1.bf16.msra.mxu0 0
  %1570 = vmatprep.subr.bf16.mxu0 0
  %1571 = vmatpush1.bf16.msra.mxu0 0
  %1572 = vmatprep.subr.bf16.mxu0 0
  %1573 = vmatpush1.bf16.msra.mxu0 0
  %1574 = vmatprep.subr.bf16.mxu0 0
  %1575 = vmatpush1.bf16.msra.mxu0 0
  %1576 = vmatprep.subr.bf16.mxu0 0
  %1577 = vmatpush1.bf16.msra.mxu0 0
  %1578 = vmatprep.subr.bf16.mxu0 0
  %1579 = vmatpush1.bf16.msra.mxu0 0
  %1580 = vmatprep.subr.bf16.mxu0 0
  %1581 = vmatpush1.bf16.msra.mxu0 0
  %1582 = vmatprep.subr.bf16.mxu0 0
  %1583 = vmatpush1.bf16.msra.mxu0 0
  %1584 = vmatprep.subr.bf16.mxu0 0
  %1585 = vmatpush1.bf16.msra.mxu0 0
  %1586 = vmatprep.subr.bf16.mxu0 0
  %1587 = vmatpush1.bf16.msra.mxu0 0
  %1588 = vmatprep.subr.bf16.mxu0 0
  %1589 = vmatpush1.bf16.msra.mxu0 0
  %1590 = vmatprep.subr.bf16.mxu0 0
  %1591 = vmatpush1.bf16.msra.mxu0 0
  %1592 = vmatprep.subr.bf16.mxu0 0
  %1593 = vmatpush1.bf16.msra.mxu0 0
  %1594 = vmatprep.mubr.bf16.mxu0 0
  %1595 = vmatmul.mubr.bf16.gmra.mrb[0].mxu0 %v829
  %v1596 = vpop.f32.mrb[0].mxu0
  %v1597 = vadd.f32 %v795, %v1596
  %v1598 = vpop.f32.mrb[0].mxu0
  %v1599 = vpop.f32.mrb[0].mxu0
  %v1600 = vpop.f32.mrb[0].mxu0
  %1601 = vdwg.mxu0
  %v1606 = vunpack.c.l.b16 %v682
  %v1607 = vunpack.c.l.b16 %v683
  %v1608 = vunpack.c.l.b16 %v684
  %v1609 = vunpack.c.l.b16 %v685
  %v1610 = vpack.c.b16 %v1607, %v1606
  %v1611 = vpack.c.b16 %v1609, %v1608
  %1614 = vmatprep.subr.bf16.mxu0 0
  %1615 = vmatpush1.bf16.msra.mxu0 %v1610
  %1616 = vmatprep.subr.bf16.mxu0 0
  %1617 = vmatpush1.bf16.msra.mxu0 %v1611
  %1618 = vmatprep.subr.bf16.mxu0 0
  %1619 = vmatpush1.bf16.msra.mxu0 0
  %1620 = vmatprep.subr.bf16.mxu0 0
  %1621 = vmatpush1.bf16.msra.mxu0 0
  %1622 = vmatprep.subr.bf16.mxu0 0
  %1623 = vmatpush1.bf16.msra.mxu0 0
  %1624 = vmatprep.subr.bf16.mxu0 0
  %1625 = vmatpush1.bf16.msra.mxu0 0
  %1626 = vmatprep.subr.bf16.mxu0 0
  %1627 = vmatpush1.bf16.msra.mxu0 0
  %1628 = vmatprep.subr.bf16.mxu0 0
  %1629 = vmatpush1.bf16.msra.mxu0 0
  %1630 = vmatprep.subr.bf16.mxu0 0
  %1631 = vmatpush1.bf16.msra.mxu0 0
  %1632 = vmatprep.subr.bf16.mxu0 0
  %1633 = vmatpush1.bf16.msra.mxu0 0
  %1634 = vmatprep.subr.bf16.mxu0 0
  %1635 = vmatpush1.bf16.msra.mxu0 0
  %1636 = vmatprep.subr.bf16.mxu0 0
  %1637 = vmatpush1.bf16.msra.mxu0 0
  %1638 = vmatprep.subr.bf16.mxu0 0
  %1639 = vmatpush1.bf16.msra.mxu0 0
  %1640 = vmatprep.subr.bf16.mxu0 0
  %1641 = vmatpush1.bf16.msra.mxu0 0
  %1642 = vmatprep.subr.bf16.mxu0 0
  %1643 = vmatpush1.bf16.msra.mxu0 0
  %1644 = vmatprep.subr.bf16.mxu0 0
  %1645 = vmatpush1.bf16.msra.mxu0 0
  %1646 = vmatprep.mubr.bf16.mxu0 0
  %1647 = vmatmul.mubr.bf16.gmra.mrb[0].mxu0 %v884
  %v1648 = vpop.f32.mrb[0].mxu0
  %v1649 = vadd.f32 %v799, %v1648
  %v1650 = vpop.f32.mrb[0].mxu0
  %v1651 = vpop.f32.mrb[0].mxu0
  %v1652 = vpop.f32.mrb[0].mxu0
  %1653 = vdwg.mxu0
  %v1654 = vpack.c.bf16 %v866, %v866
  %v1655 = vpack.c.bf16 %v921, %v921
  %v1656 = vpack.c.bf16 %v973, %v973
  %v1657 = vpack.c.bf16 %v1025, %v1025
  %v1658 = vpack.c.bf16 %v1077, %v1077
  %v1659 = vpack.c.bf16 %v1129, %v1129
  %v1660 = vpack.c.bf16 %v1181, %v1181
  %v1661 = vpack.c.bf16 %v1233, %v1233
  %v1662 = vpack.c.bf16 %v1285, %v1285
  %v1663 = vpack.c.bf16 %v1337, %v1337
  %v1664 = vpack.c.bf16 %v1389, %v1389
  %v1665 = vpack.c.bf16 %v1441, %v1441
  %v1666 = vpack.c.bf16 %v1493, %v1493
  %v1667 = vpack.c.bf16 %v1545, %v1545
  %v1668 = vpack.c.bf16 %v1597, %v1597
  %v1669 = vpack.c.bf16 %v1649, %v1649
  %1671 = vrot.lane.b32.xlu0 %v1654, 124
  %v1672 = vpop.permute.xlu0 %1671
  %vm1673 = vcmask 31744
  %v1675 = vsel %vm1673, %v1654, 0
  %v1678 = vsel %vm1673, %v1672, 0
  %1680 = vmatprep.subr.bf16.mxu0 0
  %1681 = vmatpush1.bf16.xpose.msra.mxu0 %v1678
  %1682 = vmatprep.subr.bf16.mxu0 0
  %1683 = vmatpush1.bf16.xpose.msra.mxu0 0
  %1684 = vmatprep.subr.bf16.mxu0 0
  %1685 = vmatpush1.bf16.xpose.msra.mxu0 0
  %1686 = vmatprep.subr.bf16.mxu0 0
  %1687 = vmatpush1.bf16.xpose.msra.mxu0 0
  %1688 = vmatprep.subr.bf16.mxu0 0
  %1689 = vmatpush1.bf16.xpose.msra.mxu0 0
  %1690 = vmatprep.subr.bf16.mxu0 0
  %1691 = vmatpush1.bf16.xpose.msra.mxu0 0
  %1692 = vmatprep.subr.bf16.mxu0 0
  %1693 = vmatpush1.bf16.xpose.msra.mxu0 0
  %1694 = vmatprep.subr.bf16.mxu0 0
  %1695 = vmatpush1.bf16.xpose.msra.mxu0 0
  %1696 = vmatprep.subr.bf16.mxu0 0
  %1697 = vmatpush1.bf16.xpose.msra.mxu0 0
  %1698 = vmatprep.subr.bf16.mxu0 0
  %1699 = vmatpush1.bf16.xpose.msra.mxu0 0
  %1700 = vmatprep.subr.bf16.mxu0 0
  %1701 = vmatpush1.bf16.xpose.msra.mxu0 0
  %1702 = vmatprep.subr.bf16.mxu0 0
  %1703 = vmatpush1.bf16.xpose.msra.mxu0 0
  %1704 = vmatprep.subr.bf16.mxu0 0
  %1705 = vmatpush1.bf16.xpose.msra.mxu0 0
  %1706 = vmatprep.subr.bf16.mxu0 0
  %1707 = vmatpush1.bf16.xpose.msra.mxu0 0
  %1708 = vmatprep.subr.bf16.mxu0 0
  %1709 = vmatpush1.bf16.xpose.msra.mxu0 0
  %1710 = vmatprep.subr.bf16.mxu0 0
  %1711 = vmatpush1.bf16.xpose.msra.mxu0 0
  %1712 = vmatprep.mubr.bf16.mxu0 0
  %1713 = vmatmul.mubr.bf16.gmra.mrb[0].mxu0 %v1675
  %v1714 = vpop.f32.mrb[0].mxu0
  %v1715 = vadd.f32 0.0, %v1714
  %v1716 = vpop.f32.mrb[0].mxu0
  %v1717 = vpop.f32.mrb[0].mxu0
  %v1718 = vpop.f32.mrb[0].mxu0
  %1719 = vdwg.mxu0
  %1721 = vrot.lane.b32.xlu0 %v1655, 124
  %v1722 = vpop.permute.xlu0 %1721
  %v1724 = vsel %vm1673, %v1655, 0
  %v1727 = vsel %vm1673, %v1722, 0
  %1729 = vmatprep.subr.bf16.mxu0 0
  %1730 = vmatpush1.bf16.xpose.msra.mxu0 %v1727
  %1731 = vmatprep.subr.bf16.mxu0 0
  %1732 = vmatpush1.bf16.xpose.msra.mxu0 0
  %1733 = vmatprep.subr.bf16.mxu0 0
  %1734 = vmatpush1.bf16.xpose.msra.mxu0 0
  %1735 = vmatprep.subr.bf16.mxu0 0
  %1736 = vmatpush1.bf16.xpose.msra.mxu0 0
  %1737 = vmatprep.subr.bf16.mxu0 0
  %1738 = vmatpush1.bf16.xpose.msra.mxu0 0
  %1739 = vmatprep.subr.bf16.mxu0 0
  %1740 = vmatpush1.bf16.xpose.msra.mxu0 0
  %1741 = vmatprep.subr.bf16.mxu0 0
  %1742 = vmatpush1.bf16.xpose.msra.mxu0 0
  %1743 = vmatprep.subr.bf16.mxu0 0
  %1744 = vmatpush1.bf16.xpose.msra.mxu0 0
  %1745 = vmatprep.subr.bf16.mxu0 0
  %1746 = vmatpush1.bf16.xpose.msra.mxu0 0
  %1747 = vmatprep.subr.bf16.mxu0 0
  %1748 = vmatpush1.bf16.xpose.msra.mxu0 0
  %1749 = vmatprep.subr.bf16.mxu0 0
  %1750 = vmatpush1.bf16.xpose.msra.mxu0 0
  %1751 = vmatprep.subr.bf16.mxu0 0
  %1752 = vmatpush1.bf16.xpose.msra.mxu0 0
  %1753 = vmatprep.subr.bf16.mxu0 0
  %1754 = vmatpush1.bf16.xpose.msra.mxu0 0
  %1755 = vmatprep.subr.bf16.mxu0 0
  %1756 = vmatpush1.bf16.xpose.msra.mxu0 0
  %1757 = vmatprep.subr.bf16.mxu0 0
  %1758 = vmatpush1.bf16.xpose.msra.mxu0 0
  %1759 = vmatprep.subr.bf16.mxu0 0
  %1760 = vmatpush1.bf16.xpose.msra.mxu0 0
  %1761 = vmatprep.mubr.bf16.mxu0 0
  %1762 = vmatmul.mubr.bf16.gmra.mrb[0].mxu0 %v1724
  %v1763 = vpop.f32.mrb[0].mxu0
  %v1764 = vadd.f32 0.0, %v1763
  %v1765 = vpop.f32.mrb[0].mxu0
  %v1766 = vpop.f32.mrb[0].mxu0
  %v1767 = vpop.f32.mrb[0].mxu0
  %1768 = vdwg.mxu0
  %1770 = vrot.lane.b32.xlu0 %v1656, 124
  %v1771 = vpop.permute.xlu0 %1770
  %v1773 = vsel %vm1673, %v1656, 0
  %v1776 = vsel %vm1673, %v1771, 0
  %1778 = vmatprep.subr.bf16.mxu0 0
  %1779 = vmatpush1.bf16.xpose.msra.mxu0 %v1776
  %1780 = vmatprep.subr.bf16.mxu0 0
  %1781 = vmatpush1.bf16.xpose.msra.mxu0 0
  %1782 = vmatprep.subr.bf16.mxu0 0
  %1783 = vmatpush1.bf16.xpose.msra.mxu0 0
  %1784 = vmatprep.subr.bf16.mxu0 0
  %1785 = vmatpush1.bf16.xpose.msra.mxu0 0
  %1786 = vmatprep.subr.bf16.mxu0 0
  %1787 = vmatpush1.bf16.xpose.msra.mxu0 0
  %1788 = vmatprep.subr.bf16.mxu0 0
  %1789 = vmatpush1.bf16.xpose.msra.mxu0 0
  %1790 = vmatprep.subr.bf16.mxu0 0
  %1791 = vmatpush1.bf16.xpose.msra.mxu0 0
  %1792 = vmatprep.subr.bf16.mxu0 0
  %1793 = vmatpush1.bf16.xpose.msra.mxu0 0
  %1794 = vmatprep.subr.bf16.mxu0 0
  %1795 = vmatpush1.bf16.xpose.msra.mxu0 0
  %1796 = vmatprep.subr.bf16.mxu0 0
  %1797 = vmatpush1.bf16.xpose.msra.mxu0 0
  %1798 = vmatprep.subr.bf16.mxu0 0
  %1799 = vmatpush1.bf16.xpose.msra.mxu0 0
  %1800 = vmatprep.subr.bf16.mxu0 0
  %1801 = vmatpush1.bf16.xpose.msra.mxu0 0
  %1802 = vmatprep.subr.bf16.mxu0 0
  %1803 = vmatpush1.bf16.xpose.msra.mxu0 0
  %1804 = vmatprep.subr.bf16.mxu0 0
  %1805 = vmatpush1.bf16.xpose.msra.mxu0 0
  %1806 = vmatprep.subr.bf16.mxu0 0
  %1807 = vmatpush1.bf16.xpose.msra.mxu0 0
  %1808 = vmatprep.subr.bf16.mxu0 0
  %1809 = vmatpush1.bf16.xpose.msra.mxu0 0
  %1810 = vmatprep.mubr.bf16.mxu0 0
  %1811 = vmatmul.mubr.bf16.gmra.mrb[0].mxu0 %v1773
  %v1812 = vpop.f32.mrb[0].mxu0
  %v1813 = vadd.f32 0.0, %v1812
  %v1814 = vpop.f32.mrb[0].mxu0
  %v1815 = vpop.f32.mrb[0].mxu0
  %v1816 = vpop.f32.mrb[0].mxu0
  %1817 = vdwg.mxu0
  %1819 = vrot.lane.b32.xlu0 %v1657, 124
  %v1820 = vpop.permute.xlu0 %1819
  %v1822 = vsel %vm1673, %v1657, 0
  %v1825 = vsel %vm1673, %v1820, 0
  %1827 = vmatprep.subr.bf16.mxu0 0
  %1828 = vmatpush1.bf16.xpose.msra.mxu0 %v1825
  %1829 = vmatprep.subr.bf16.mxu0 0
  %1830 = vmatpush1.bf16.xpose.msra.mxu0 0
  %1831 = vmatprep.subr.bf16.mxu0 0
  %1832 = vmatpush1.bf16.xpose.msra.mxu0 0
  %1833 = vmatprep.subr.bf16.mxu0 0
  %1834 = vmatpush1.bf16.xpose.msra.mxu0 0
  %1835 = vmatprep.subr.bf16.mxu0 0
  %1836 = vmatpush1.bf16.xpose.msra.mxu0 0
  %1837 = vmatprep.subr.bf16.mxu0 0
  %1838 = vmatpush1.bf16.xpose.msra.mxu0 0
  %1839 = vmatprep.subr.bf16.mxu0 0
  %1840 = vmatpush1.bf16.xpose.msra.mxu0 0
  %1841 = vmatprep.subr.bf16.mxu0 0
  %1842 = vmatpush1.bf16.xpose.msra.mxu0 0
  %1843 = vmatprep.subr.bf16.mxu0 0
  %1844 = vmatpush1.bf16.xpose.msra.mxu0 0
  %1845 = vmatprep.subr.bf16.mxu0 0
  %1846 = vmatpush1.bf16.xpose.msra.mxu0 0
  %1847 = vmatprep.subr.bf16.mxu0 0
  %1848 = vmatpush1.bf16.xpose.msra.mxu0 0
  %1849 = vmatprep.subr.bf16.mxu0 0
  %1850 = vmatpush1.bf16.xpose.msra.mxu0 0
  %1851 = vmatprep.subr.bf16.mxu0 0
  %1852 = vmatpush1.bf16.xpose.msra.mxu0 0
  %1853 = vmatprep.subr.bf16.mxu0 0
  %1854 = vmatpush1.bf16.xpose.msra.mxu0 0
  %1855 = vmatprep.subr.bf16.mxu0 0
  %1856 = vmatpush1.bf16.xpose.msra.mxu0 0
  %1857 = vmatprep.subr.bf16.mxu0 0
  %1858 = vmatpush1.bf16.xpose.msra.mxu0 0
  %1859 = vmatprep.mubr.bf16.mxu0 0
  %1860 = vmatmul.mubr.bf16.gmra.mrb[0].mxu0 %v1822
  %v1861 = vpop.f32.mrb[0].mxu0
  %v1862 = vadd.f32 0.0, %v1861
  %v1863 = vpop.f32.mrb[0].mxu0
  %v1864 = vpop.f32.mrb[0].mxu0
  %v1865 = vpop.f32.mrb[0].mxu0
  %1866 = vdwg.mxu0
  %1868 = vrot.lane.b32.xlu0 %v1658, 124
  %v1869 = vpop.permute.xlu0 %1868
  %v1871 = vsel %vm1673, %v1658, 0
  %v1874 = vsel %vm1673, %v1869, 0
  %1876 = vmatprep.subr.bf16.mxu0 0
  %1877 = vmatpush1.bf16.xpose.msra.mxu0 %v1874
  %1878 = vmatprep.subr.bf16.mxu0 0
  %1879 = vmatpush1.bf16.xpose.msra.mxu0 0
  %1880 = vmatprep.subr.bf16.mxu0 0
  %1881 = vmatpush1.bf16.xpose.msra.mxu0 0
  %1882 = vmatprep.subr.bf16.mxu0 0
  %1883 = vmatpush1.bf16.xpose.msra.mxu0 0
  %1884 = vmatprep.subr.bf16.mxu0 0
  %1885 = vmatpush1.bf16.xpose.msra.mxu0 0
  %1886 = vmatprep.subr.bf16.mxu0 0
  %1887 = vmatpush1.bf16.xpose.msra.mxu0 0
  %1888 = vmatprep.subr.bf16.mxu0 0
  %1889 = vmatpush1.bf16.xpose.msra.mxu0 0
  %1890 = vmatprep.subr.bf16.mxu0 0
  %1891 = vmatpush1.bf16.xpose.msra.mxu0 0
  %1892 = vmatprep.subr.bf16.mxu0 0
  %1893 = vmatpush1.bf16.xpose.msra.mxu0 0
  %1894 = vmatprep.subr.bf16.mxu0 0
  %1895 = vmatpush1.bf16.xpose.msra.mxu0 0
  %1896 = vmatprep.subr.bf16.mxu0 0
  %1897 = vmatpush1.bf16.xpose.msra.mxu0 0
  %1898 = vmatprep.subr.bf16.mxu0 0
  %1899 = vmatpush1.bf16.xpose.msra.mxu0 0
  %1900 = vmatprep.subr.bf16.mxu0 0
  %1901 = vmatpush1.bf16.xpose.msra.mxu0 0
  %1902 = vmatprep.subr.bf16.mxu0 0
  %1903 = vmatpush1.bf16.xpose.msra.mxu0 0
  %1904 = vmatprep.subr.bf16.mxu0 0
  %1905 = vmatpush1.bf16.xpose.msra.mxu0 0
  %1906 = vmatprep.subr.bf16.mxu0 0
  %1907 = vmatpush1.bf16.xpose.msra.mxu0 0
  %1908 = vmatprep.mubr.bf16.mxu0 0
  %1909 = vmatmul.mubr.bf16.gmra.mrb[0].mxu0 %v1871
  %v1910 = vpop.f32.mrb[0].mxu0
  %v1911 = vadd.f32 0.0, %v1910
  %v1912 = vpop.f32.mrb[0].mxu0
  %v1913 = vpop.f32.mrb[0].mxu0
  %v1914 = vpop.f32.mrb[0].mxu0
  %1915 = vdwg.mxu0
  %1917 = vrot.lane.b32.xlu0 %v1659, 124
  %v1918 = vpop.permute.xlu0 %1917
  %v1920 = vsel %vm1673, %v1659, 0
  %v1923 = vsel %vm1673, %v1918, 0
  %1925 = vmatprep.subr.bf16.mxu0 0
  %1926 = vmatpush1.bf16.xpose.msra.mxu0 %v1923
  %1927 = vmatprep.subr.bf16.mxu0 0
  %1928 = vmatpush1.bf16.xpose.msra.mxu0 0
  %1929 = vmatprep.subr.bf16.mxu0 0
  %1930 = vmatpush1.bf16.xpose.msra.mxu0 0
  %1931 = vmatprep.subr.bf16.mxu0 0
  %1932 = vmatpush1.bf16.xpose.msra.mxu0 0
  %1933 = vmatprep.subr.bf16.mxu0 0
  %1934 = vmatpush1.bf16.xpose.msra.mxu0 0
  %1935 = vmatprep.subr.bf16.mxu0 0
  %1936 = vmatpush1.bf16.xpose.msra.mxu0 0
  %1937 = vmatprep.subr.bf16.mxu0 0
  %1938 = vmatpush1.bf16.xpose.msra.mxu0 0
  %1939 = vmatprep.subr.bf16.mxu0 0
  %1940 = vmatpush1.bf16.xpose.msra.mxu0 0
  %1941 = vmatprep.subr.bf16.mxu0 0
  %1942 = vmatpush1.bf16.xpose.msra.mxu0 0
  %1943 = vmatprep.subr.bf16.mxu0 0
  %1944 = vmatpush1.bf16.xpose.msra.mxu0 0
  %1945 = vmatprep.subr.bf16.mxu0 0
  %1946 = vmatpush1.bf16.xpose.msra.mxu0 0
  %1947 = vmatprep.subr.bf16.mxu0 0
  %1948 = vmatpush1.bf16.xpose.msra.mxu0 0
  %1949 = vmatprep.subr.bf16.mxu0 0
  %1950 = vmatpush1.bf16.xpose.msra.mxu0 0
  %1951 = vmatprep.subr.bf16.mxu0 0
  %1952 = vmatpush1.bf16.xpose.msra.mxu0 0
  %1953 = vmatprep.subr.bf16.mxu0 0
  %1954 = vmatpush1.bf16.xpose.msra.mxu0 0
  %1955 = vmatprep.subr.bf16.mxu0 0
  %1956 = vmatpush1.bf16.xpose.msra.mxu0 0
  %1957 = vmatprep.mubr.bf16.mxu0 0
  %1958 = vmatmul.mubr.bf16.gmra.mrb[0].mxu0 %v1920
  %v1959 = vpop.f32.mrb[0].mxu0
  %v1960 = vadd.f32 0.0, %v1959
  %v1961 = vpop.f32.mrb[0].mxu0
  %v1962 = vpop.f32.mrb[0].mxu0
  %v1963 = vpop.f32.mrb[0].mxu0
  %1964 = vdwg.mxu0
  %1966 = vrot.lane.b32.xlu0 %v1660, 124
  %v1967 = vpop.permute.xlu0 %1966
  %v1969 = vsel %vm1673, %v1660, 0
  %v1972 = vsel %vm1673, %v1967, 0
  %1974 = vmatprep.subr.bf16.mxu0 0
  %1975 = vmatpush1.bf16.xpose.msra.mxu0 %v1972
  %1976 = vmatprep.subr.bf16.mxu0 0
  %1977 = vmatpush1.bf16.xpose.msra.mxu0 0
  %1978 = vmatprep.subr.bf16.mxu0 0
  %1979 = vmatpush1.bf16.xpose.msra.mxu0 0
  %1980 = vmatprep.subr.bf16.mxu0 0
  %1981 = vmatpush1.bf16.xpose.msra.mxu0 0
  %1982 = vmatprep.subr.bf16.mxu0 0
  %1983 = vmatpush1.bf16.xpose.msra.mxu0 0
  %1984 = vmatprep.subr.bf16.mxu0 0
  %1985 = vmatpush1.bf16.xpose.msra.mxu0 0
  %1986 = vmatprep.subr.bf16.mxu0 0
  %1987 = vmatpush1.bf16.xpose.msra.mxu0 0
  %1988 = vmatprep.subr.bf16.mxu0 0
  %1989 = vmatpush1.bf16.xpose.msra.mxu0 0
  %1990 = vmatprep.subr.bf16.mxu0 0
  %1991 = vmatpush1.bf16.xpose.msra.mxu0 0
  %1992 = vmatprep.subr.bf16.mxu0 0
  %1993 = vmatpush1.bf16.xpose.msra.mxu0 0
  %1994 = vmatprep.subr.bf16.mxu0 0
  %1995 = vmatpush1.bf16.xpose.msra.mxu0 0
  %1996 = vmatprep.subr.bf16.mxu0 0
  %1997 = vmatpush1.bf16.xpose.msra.mxu0 0
  %1998 = vmatprep.subr.bf16.mxu0 0
  %1999 = vmatpush1.bf16.xpose.msra.mxu0 0
  %2000 = vmatprep.subr.bf16.mxu0 0
  %2001 = vmatpush1.bf16.xpose.msra.mxu0 0
  %2002 = vmatprep.subr.bf16.mxu0 0
  %2003 = vmatpush1.bf16.xpose.msra.mxu0 0
  %2004 = vmatprep.subr.bf16.mxu0 0
  %2005 = vmatpush1.bf16.xpose.msra.mxu0 0
  %2006 = vmatprep.mubr.bf16.mxu0 0
  %2007 = vmatmul.mubr.bf16.gmra.mrb[0].mxu0 %v1969
  %v2008 = vpop.f32.mrb[0].mxu0
  %v2009 = vadd.f32 0.0, %v2008
  %v2010 = vpop.f32.mrb[0].mxu0
  %v2011 = vpop.f32.mrb[0].mxu0
  %v2012 = vpop.f32.mrb[0].mxu0
  %2013 = vdwg.mxu0
  %2015 = vrot.lane.b32.xlu0 %v1661, 124
  %v2016 = vpop.permute.xlu0 %2015
  %v2018 = vsel %vm1673, %v1661, 0
  %v2021 = vsel %vm1673, %v2016, 0
  %2023 = vmatprep.subr.bf16.mxu0 0
  %2024 = vmatpush1.bf16.xpose.msra.mxu0 %v2021
  %2025 = vmatprep.subr.bf16.mxu0 0
  %2026 = vmatpush1.bf16.xpose.msra.mxu0 0
  %2027 = vmatprep.subr.bf16.mxu0 0
  %2028 = vmatpush1.bf16.xpose.msra.mxu0 0
  %2029 = vmatprep.subr.bf16.mxu0 0
  %2030 = vmatpush1.bf16.xpose.msra.mxu0 0
  %2031 = vmatprep.subr.bf16.mxu0 0
  %2032 = vmatpush1.bf16.xpose.msra.mxu0 0
  %2033 = vmatprep.subr.bf16.mxu0 0
  %2034 = vmatpush1.bf16.xpose.msra.mxu0 0
  %2035 = vmatprep.subr.bf16.mxu0 0
  %2036 = vmatpush1.bf16.xpose.msra.mxu0 0
  %2037 = vmatprep.subr.bf16.mxu0 0
  %2038 = vmatpush1.bf16.xpose.msra.mxu0 0
  %2039 = vmatprep.subr.bf16.mxu0 0
  %2040 = vmatpush1.bf16.xpose.msra.mxu0 0
  %2041 = vmatprep.subr.bf16.mxu0 0
  %2042 = vmatpush1.bf16.xpose.msra.mxu0 0
  %2043 = vmatprep.subr.bf16.mxu0 0
  %2044 = vmatpush1.bf16.xpose.msra.mxu0 0
  %2045 = vmatprep.subr.bf16.mxu0 0
  %2046 = vmatpush1.bf16.xpose.msra.mxu0 0
  %2047 = vmatprep.subr.bf16.mxu0 0
  %2048 = vmatpush1.bf16.xpose.msra.mxu0 0
  %2049 = vmatprep.subr.bf16.mxu0 0
  %2050 = vmatpush1.bf16.xpose.msra.mxu0 0
  %2051 = vmatprep.subr.bf16.mxu0 0
  %2052 = vmatpush1.bf16.xpose.msra.mxu0 0
  %2053 = vmatprep.subr.bf16.mxu0 0
  %2054 = vmatpush1.bf16.xpose.msra.mxu0 0
  %2055 = vmatprep.mubr.bf16.mxu0 0
  %2056 = vmatmul.mubr.bf16.gmra.mrb[0].mxu0 %v2018
  %v2057 = vpop.f32.mrb[0].mxu0
  %v2058 = vadd.f32 0.0, %v2057
  %v2059 = vpop.f32.mrb[0].mxu0
  %v2060 = vpop.f32.mrb[0].mxu0
  %v2061 = vpop.f32.mrb[0].mxu0
  %2062 = vdwg.mxu0
  %2064 = vrot.lane.b32.xlu0 %v1662, 124
  %v2065 = vpop.permute.xlu0 %2064
  %v2067 = vsel %vm1673, %v1662, 0
  %v2070 = vsel %vm1673, %v2065, 0
  %2072 = vmatprep.subr.bf16.mxu0 0
  %2073 = vmatpush1.bf16.xpose.msra.mxu0 %v2070
  %2074 = vmatprep.subr.bf16.mxu0 0
  %2075 = vmatpush1.bf16.xpose.msra.mxu0 0
  %2076 = vmatprep.subr.bf16.mxu0 0
  %2077 = vmatpush1.bf16.xpose.msra.mxu0 0
  %2078 = vmatprep.subr.bf16.mxu0 0
  %2079 = vmatpush1.bf16.xpose.msra.mxu0 0
  %2080 = vmatprep.subr.bf16.mxu0 0
  %2081 = vmatpush1.bf16.xpose.msra.mxu0 0
  %2082 = vmatprep.subr.bf16.mxu0 0
  %2083 = vmatpush1.bf16.xpose.msra.mxu0 0
  %2084 = vmatprep.subr.bf16.mxu0 0
  %2085 = vmatpush1.bf16.xpose.msra.mxu0 0
  %2086 = vmatprep.subr.bf16.mxu0 0
  %2087 = vmatpush1.bf16.xpose.msra.mxu0 0
  %2088 = vmatprep.subr.bf16.mxu0 0
  %2089 = vmatpush1.bf16.xpose.msra.mxu0 0
  %2090 = vmatprep.subr.bf16.mxu0 0
  %2091 = vmatpush1.bf16.xpose.msra.mxu0 0
  %2092 = vmatprep.subr.bf16.mxu0 0
  %2093 = vmatpush1.bf16.xpose.msra.mxu0 0
  %2094 = vmatprep.subr.bf16.mxu0 0
  %2095 = vmatpush1.bf16.xpose.msra.mxu0 0
  %2096 = vmatprep.subr.bf16.mxu0 0
  %2097 = vmatpush1.bf16.xpose.msra.mxu0 0
  %2098 = vmatprep.subr.bf16.mxu0 0
  %2099 = vmatpush1.bf16.xpose.msra.mxu0 0
  %2100 = vmatprep.subr.bf16.mxu0 0
  %2101 = vmatpush1.bf16.xpose.msra.mxu0 0
  %2102 = vmatprep.subr.bf16.mxu0 0
  %2103 = vmatpush1.bf16.xpose.msra.mxu0 0
  %2104 = vmatprep.mubr.bf16.mxu0 0
  %2105 = vmatmul.mubr.bf16.gmra.mrb[0].mxu0 %v2067
  %v2106 = vpop.f32.mrb[0].mxu0
  %v2107 = vadd.f32 0.0, %v2106
  %v2108 = vpop.f32.mrb[0].mxu0
  %v2109 = vpop.f32.mrb[0].mxu0
  %v2110 = vpop.f32.mrb[0].mxu0
  %2111 = vdwg.mxu0
  %2113 = vrot.lane.b32.xlu0 %v1663, 124
  %v2114 = vpop.permute.xlu0 %2113
  %v2116 = vsel %vm1673, %v1663, 0
  %v2119 = vsel %vm1673, %v2114, 0
  %2121 = vmatprep.subr.bf16.mxu0 0
  %2122 = vmatpush1.bf16.xpose.msra.mxu0 %v2119
  %2123 = vmatprep.subr.bf16.mxu0 0
  %2124 = vmatpush1.bf16.xpose.msra.mxu0 0
  %2125 = vmatprep.subr.bf16.mxu0 0
  %2126 = vmatpush1.bf16.xpose.msra.mxu0 0
  %2127 = vmatprep.subr.bf16.mxu0 0
  %2128 = vmatpush1.bf16.xpose.msra.mxu0 0
  %2129 = vmatprep.subr.bf16.mxu0 0
  %2130 = vmatpush1.bf16.xpose.msra.mxu0 0
  %2131 = vmatprep.subr.bf16.mxu0 0
  %2132 = vmatpush1.bf16.xpose.msra.mxu0 0
  %2133 = vmatprep.subr.bf16.mxu0 0
  %2134 = vmatpush1.bf16.xpose.msra.mxu0 0
  %2135 = vmatprep.subr.bf16.mxu0 0
  %2136 = vmatpush1.bf16.xpose.msra.mxu0 0
  %2137 = vmatprep.subr.bf16.mxu0 0
  %2138 = vmatpush1.bf16.xpose.msra.mxu0 0
  %2139 = vmatprep.subr.bf16.mxu0 0
  %2140 = vmatpush1.bf16.xpose.msra.mxu0 0
  %2141 = vmatprep.subr.bf16.mxu0 0
  %2142 = vmatpush1.bf16.xpose.msra.mxu0 0
  %2143 = vmatprep.subr.bf16.mxu0 0
  %2144 = vmatpush1.bf16.xpose.msra.mxu0 0
  %2145 = vmatprep.subr.bf16.mxu0 0
  %2146 = vmatpush1.bf16.xpose.msra.mxu0 0
  %2147 = vmatprep.subr.bf16.mxu0 0
  %2148 = vmatpush1.bf16.xpose.msra.mxu0 0
  %2149 = vmatprep.subr.bf16.mxu0 0
  %2150 = vmatpush1.bf16.xpose.msra.mxu0 0
  %2151 = vmatprep.subr.bf16.mxu0 0
  %2152 = vmatpush1.bf16.xpose.msra.mxu0 0
  %2153 = vmatprep.mubr.bf16.mxu0 0
  %2154 = vmatmul.mubr.bf16.gmra.mrb[0].mxu0 %v2116
  %v2155 = vpop.f32.mrb[0].mxu0
  %v2156 = vadd.f32 0.0, %v2155
  %v2157 = vpop.f32.mrb[0].mxu0
  %v2158 = vpop.f32.mrb[0].mxu0
  %v2159 = vpop.f32.mrb[0].mxu0
  %2160 = vdwg.mxu0
  %2162 = vrot.lane.b32.xlu0 %v1664, 124
  %v2163 = vpop.permute.xlu0 %2162
  %v2165 = vsel %vm1673, %v1664, 0
  %v2168 = vsel %vm1673, %v2163, 0
  %2170 = vmatprep.subr.bf16.mxu0 0
  %2171 = vmatpush1.bf16.xpose.msra.mxu0 %v2168
  %2172 = vmatprep.subr.bf16.mxu0 0
  %2173 = vmatpush1.bf16.xpose.msra.mxu0 0
  %2174 = vmatprep.subr.bf16.mxu0 0
  %2175 = vmatpush1.bf16.xpose.msra.mxu0 0
  %2176 = vmatprep.subr.bf16.mxu0 0
  %2177 = vmatpush1.bf16.xpose.msra.mxu0 0
  %2178 = vmatprep.subr.bf16.mxu0 0
  %2179 = vmatpush1.bf16.xpose.msra.mxu0 0
  %2180 = vmatprep.subr.bf16.mxu0 0
  %2181 = vmatpush1.bf16.xpose.msra.mxu0 0
  %2182 = vmatprep.subr.bf16.mxu0 0
  %2183 = vmatpush1.bf16.xpose.msra.mxu0 0
  %2184 = vmatprep.subr.bf16.mxu0 0
  %2185 = vmatpush1.bf16.xpose.msra.mxu0 0
  %2186 = vmatprep.subr.bf16.mxu0 0
  %2187 = vmatpush1.bf16.xpose.msra.mxu0 0
  %2188 = vmatprep.subr.bf16.mxu0 0
  %2189 = vmatpush1.bf16.xpose.msra.mxu0 0
  %2190 = vmatprep.subr.bf16.mxu0 0
  %2191 = vmatpush1.bf16.xpose.msra.mxu0 0
  %2192 = vmatprep.subr.bf16.mxu0 0
  %2193 = vmatpush1.bf16.xpose.msra.mxu0 0
  %2194 = vmatprep.subr.bf16.mxu0 0
  %2195 = vmatpush1.bf16.xpose.msra.mxu0 0
  %2196 = vmatprep.subr.bf16.mxu0 0
  %2197 = vmatpush1.bf16.xpose.msra.mxu0 0
  %2198 = vmatprep.subr.bf16.mxu0 0
  %2199 = vmatpush1.bf16.xpose.msra.mxu0 0
  %2200 = vmatprep.subr.bf16.mxu0 0
  %2201 = vmatpush1.bf16.xpose.msra.mxu0 0
  %2202 = vmatprep.mubr.bf16.mxu0 0
  %2203 = vmatmul.mubr.bf16.gmra.mrb[0].mxu0 %v2165
  %v2204 = vpop.f32.mrb[0].mxu0
  %v2205 = vadd.f32 0.0, %v2204
  %v2206 = vpop.f32.mrb[0].mxu0
  %v2207 = vpop.f32.mrb[0].mxu0
  %v2208 = vpop.f32.mrb[0].mxu0
  %2209 = vdwg.mxu0
  %2211 = vrot.lane.b32.xlu0 %v1665, 124
  %v2212 = vpop.permute.xlu0 %2211
  %v2214 = vsel %vm1673, %v1665, 0
  %v2217 = vsel %vm1673, %v2212, 0
  %2219 = vmatprep.subr.bf16.mxu0 0
  %2220 = vmatpush1.bf16.xpose.msra.mxu0 %v2217
  %2221 = vmatprep.subr.bf16.mxu0 0
  %2222 = vmatpush1.bf16.xpose.msra.mxu0 0
  %2223 = vmatprep.subr.bf16.mxu0 0
  %2224 = vmatpush1.bf16.xpose.msra.mxu0 0
  %2225 = vmatprep.subr.bf16.mxu0 0
  %2226 = vmatpush1.bf16.xpose.msra.mxu0 0
  %2227 = vmatprep.subr.bf16.mxu0 0
  %2228 = vmatpush1.bf16.xpose.msra.mxu0 0
  %2229 = vmatprep.subr.bf16.mxu0 0
  %2230 = vmatpush1.bf16.xpose.msra.mxu0 0
  %2231 = vmatprep.subr.bf16.mxu0 0
  %2232 = vmatpush1.bf16.xpose.msra.mxu0 0
  %2233 = vmatprep.subr.bf16.mxu0 0
  %2234 = vmatpush1.bf16.xpose.msra.mxu0 0
  %2235 = vmatprep.subr.bf16.mxu0 0
  %2236 = vmatpush1.bf16.xpose.msra.mxu0 0
  %2237 = vmatprep.subr.bf16.mxu0 0
  %2238 = vmatpush1.bf16.xpose.msra.mxu0 0
  %2239 = vmatprep.subr.bf16.mxu0 0
  %2240 = vmatpush1.bf16.xpose.msra.mxu0 0
  %2241 = vmatprep.subr.bf16.mxu0 0
  %2242 = vmatpush1.bf16.xpose.msra.mxu0 0
  %2243 = vmatprep.subr.bf16.mxu0 0
  %2244 = vmatpush1.bf16.xpose.msra.mxu0 0
  %2245 = vmatprep.subr.bf16.mxu0 0
  %2246 = vmatpush1.bf16.xpose.msra.mxu0 0
  %2247 = vmatprep.subr.bf16.mxu0 0
  %2248 = vmatpush1.bf16.xpose.msra.mxu0 0
  %2249 = vmatprep.subr.bf16.mxu0 0
  %2250 = vmatpush1.bf16.xpose.msra.mxu0 0
  %2251 = vmatprep.mubr.bf16.mxu0 0
  %2252 = vmatmul.mubr.bf16.gmra.mrb[0].mxu0 %v2214
  %v2253 = vpop.f32.mrb[0].mxu0
  %v2254 = vadd.f32 0.0, %v2253
  %v2255 = vpop.f32.mrb[0].mxu0
  %v2256 = vpop.f32.mrb[0].mxu0
  %v2257 = vpop.f32.mrb[0].mxu0
  %2258 = vdwg.mxu0
  %2260 = vrot.lane.b32.xlu0 %v1666, 124
  %v2261 = vpop.permute.xlu0 %2260
  %v2263 = vsel %vm1673, %v1666, 0
  %v2266 = vsel %vm1673, %v2261, 0
  %2268 = vmatprep.subr.bf16.mxu0 0
  %2269 = vmatpush1.bf16.xpose.msra.mxu0 %v2266
  %2270 = vmatprep.subr.bf16.mxu0 0
  %2271 = vmatpush1.bf16.xpose.msra.mxu0 0
  %2272 = vmatprep.subr.bf16.mxu0 0
  %2273 = vmatpush1.bf16.xpose.msra.mxu0 0
  %2274 = vmatprep.subr.bf16.mxu0 0
  %2275 = vmatpush1.bf16.xpose.msra.mxu0 0
  %2276 = vmatprep.subr.bf16.mxu0 0
  %2277 = vmatpush1.bf16.xpose.msra.mxu0 0
  %2278 = vmatprep.subr.bf16.mxu0 0
  %2279 = vmatpush1.bf16.xpose.msra.mxu0 0
  %2280 = vmatprep.subr.bf16.mxu0 0
  %2281 = vmatpush1.bf16.xpose.msra.mxu0 0
  %2282 = vmatprep.subr.bf16.mxu0 0
  %2283 = vmatpush1.bf16.xpose.msra.mxu0 0
  %2284 = vmatprep.subr.bf16.mxu0 0
  %2285 = vmatpush1.bf16.xpose.msra.mxu0 0
  %2286 = vmatprep.subr.bf16.mxu0 0
  %2287 = vmatpush1.bf16.xpose.msra.mxu0 0
  %2288 = vmatprep.subr.bf16.mxu0 0
  %2289 = vmatpush1.bf16.xpose.msra.mxu0 0
  %2290 = vmatprep.subr.bf16.mxu0 0
  %2291 = vmatpush1.bf16.xpose.msra.mxu0 0
  %2292 = vmatprep.subr.bf16.mxu0 0
  %2293 = vmatpush1.bf16.xpose.msra.mxu0 0
  %2294 = vmatprep.subr.bf16.mxu0 0
  %2295 = vmatpush1.bf16.xpose.msra.mxu0 0
  %2296 = vmatprep.subr.bf16.mxu0 0
  %2297 = vmatpush1.bf16.xpose.msra.mxu0 0
  %2298 = vmatprep.subr.bf16.mxu0 0
  %2299 = vmatpush1.bf16.xpose.msra.mxu0 0
  %2300 = vmatprep.mubr.bf16.mxu0 0
  %2301 = vmatmul.mubr.bf16.gmra.mrb[0].mxu0 %v2263
  %v2302 = vpop.f32.mrb[0].mxu0
  %v2303 = vadd.f32 0.0, %v2302
  %v2304 = vpop.f32.mrb[0].mxu0
  %v2305 = vpop.f32.mrb[0].mxu0
  %v2306 = vpop.f32.mrb[0].mxu0
  %2307 = vdwg.mxu0
  %2309 = vrot.lane.b32.xlu0 %v1667, 124
  %v2310 = vpop.permute.xlu0 %2309
  %v2312 = vsel %vm1673, %v1667, 0
  %v2315 = vsel %vm1673, %v2310, 0
  %2317 = vmatprep.subr.bf16.mxu0 0
  %2318 = vmatpush1.bf16.xpose.msra.mxu0 %v2315
  %2319 = vmatprep.subr.bf16.mxu0 0
  %2320 = vmatpush1.bf16.xpose.msra.mxu0 0
  %2321 = vmatprep.subr.bf16.mxu0 0
  %2322 = vmatpush1.bf16.xpose.msra.mxu0 0
  %2323 = vmatprep.subr.bf16.mxu0 0
  %2324 = vmatpush1.bf16.xpose.msra.mxu0 0
  %2325 = vmatprep.subr.bf16.mxu0 0
  %2326 = vmatpush1.bf16.xpose.msra.mxu0 0
  %2327 = vmatprep.subr.bf16.mxu0 0
  %2328 = vmatpush1.bf16.xpose.msra.mxu0 0
  %2329 = vmatprep.subr.bf16.mxu0 0
  %2330 = vmatpush1.bf16.xpose.msra.mxu0 0
  %2331 = vmatprep.subr.bf16.mxu0 0
  %2332 = vmatpush1.bf16.xpose.msra.mxu0 0
  %2333 = vmatprep.subr.bf16.mxu0 0
  %2334 = vmatpush1.bf16.xpose.msra.mxu0 0
  %2335 = vmatprep.subr.bf16.mxu0 0
  %2336 = vmatpush1.bf16.xpose.msra.mxu0 0
  %2337 = vmatprep.subr.bf16.mxu0 0
  %2338 = vmatpush1.bf16.xpose.msra.mxu0 0
  %2339 = vmatprep.subr.bf16.mxu0 0
  %2340 = vmatpush1.bf16.xpose.msra.mxu0 0
  %2341 = vmatprep.subr.bf16.mxu0 0
  %2342 = vmatpush1.bf16.xpose.msra.mxu0 0
  %2343 = vmatprep.subr.bf16.mxu0 0
  %2344 = vmatpush1.bf16.xpose.msra.mxu0 0
  %2345 = vmatprep.subr.bf16.mxu0 0
  %2346 = vmatpush1.bf16.xpose.msra.mxu0 0
  %2347 = vmatprep.subr.bf16.mxu0 0
  %2348 = vmatpush1.bf16.xpose.msra.mxu0 0
  %2349 = vmatprep.mubr.bf16.mxu0 0
  %2350 = vmatmul.mubr.bf16.gmra.mrb[0].mxu0 %v2312
  %v2351 = vpop.f32.mrb[0].mxu0
  %v2352 = vadd.f32 0.0, %v2351
  %v2353 = vpop.f32.mrb[0].mxu0
  %v2354 = vpop.f32.mrb[0].mxu0
  %v2355 = vpop.f32.mrb[0].mxu0
  %2356 = vdwg.mxu0
  %2358 = vrot.lane.b32.xlu0 %v1668, 124
  %v2359 = vpop.permute.xlu0 %2358
  %v2361 = vsel %vm1673, %v1668, 0
  %v2364 = vsel %vm1673, %v2359, 0
  %2366 = vmatprep.subr.bf16.mxu0 0
  %2367 = vmatpush1.bf16.xpose.msra.mxu0 %v2364
  %2368 = vmatprep.subr.bf16.mxu0 0
  %2369 = vmatpush1.bf16.xpose.msra.mxu0 0
  %2370 = vmatprep.subr.bf16.mxu0 0
  %2371 = vmatpush1.bf16.xpose.msra.mxu0 0
  %2372 = vmatprep.subr.bf16.mxu0 0
  %2373 = vmatpush1.bf16.xpose.msra.mxu0 0
  %2374 = vmatprep.subr.bf16.mxu0 0
  %2375 = vmatpush1.bf16.xpose.msra.mxu0 0
  %2376 = vmatprep.subr.bf16.mxu0 0
  %2377 = vmatpush1.bf16.xpose.msra.mxu0 0
  %2378 = vmatprep.subr.bf16.mxu0 0
  %2379 = vmatpush1.bf16.xpose.msra.mxu0 0
  %2380 = vmatprep.subr.bf16.mxu0 0
  %2381 = vmatpush1.bf16.xpose.msra.mxu0 0
  %2382 = vmatprep.subr.bf16.mxu0 0
  %2383 = vmatpush1.bf16.xpose.msra.mxu0 0
  %2384 = vmatprep.subr.bf16.mxu0 0
  %2385 = vmatpush1.bf16.xpose.msra.mxu0 0
  %2386 = vmatprep.subr.bf16.mxu0 0
  %2387 = vmatpush1.bf16.xpose.msra.mxu0 0
  %2388 = vmatprep.subr.bf16.mxu0 0
  %2389 = vmatpush1.bf16.xpose.msra.mxu0 0
  %2390 = vmatprep.subr.bf16.mxu0 0
  %2391 = vmatpush1.bf16.xpose.msra.mxu0 0
  %2392 = vmatprep.subr.bf16.mxu0 0
  %2393 = vmatpush1.bf16.xpose.msra.mxu0 0
  %2394 = vmatprep.subr.bf16.mxu0 0
  %2395 = vmatpush1.bf16.xpose.msra.mxu0 0
  %2396 = vmatprep.subr.bf16.mxu0 0
  %2397 = vmatpush1.bf16.xpose.msra.mxu0 0
  %2398 = vmatprep.mubr.bf16.mxu0 0
  %2399 = vmatmul.mubr.bf16.gmra.mrb[0].mxu0 %v2361
  %v2400 = vpop.f32.mrb[0].mxu0
  %v2401 = vadd.f32 0.0, %v2400
  %v2402 = vpop.f32.mrb[0].mxu0
  %v2403 = vpop.f32.mrb[0].mxu0
  %v2404 = vpop.f32.mrb[0].mxu0
  %2405 = vdwg.mxu0
  %2407 = vrot.lane.b32.xlu0 %v1669, 124
  %v2408 = vpop.permute.xlu0 %2407
  %v2410 = vsel %vm1673, %v1669, 0
  %v2413 = vsel %vm1673, %v2408, 0
  %2415 = vmatprep.subr.bf16.mxu0 0
  %2416 = vmatpush1.bf16.xpose.msra.mxu0 %v2413
  %2417 = vmatprep.subr.bf16.mxu0 0
  %2418 = vmatpush1.bf16.xpose.msra.mxu0 0
  %2419 = vmatprep.subr.bf16.mxu0 0
  %2420 = vmatpush1.bf16.xpose.msra.mxu0 0
  %2421 = vmatprep.subr.bf16.mxu0 0
  %2422 = vmatpush1.bf16.xpose.msra.mxu0 0
  %2423 = vmatprep.subr.bf16.mxu0 0
  %2424 = vmatpush1.bf16.xpose.msra.mxu0 0
  %2425 = vmatprep.subr.bf16.mxu0 0
  %2426 = vmatpush1.bf16.xpose.msra.mxu0 0
  %2427 = vmatprep.subr.bf16.mxu0 0
  %2428 = vmatpush1.bf16.xpose.msra.mxu0 0
  %2429 = vmatprep.subr.bf16.mxu0 0
  %2430 = vmatpush1.bf16.xpose.msra.mxu0 0
  %2431 = vmatprep.subr.bf16.mxu0 0
  %2432 = vmatpush1.bf16.xpose.msra.mxu0 0
  %2433 = vmatprep.subr.bf16.mxu0 0
  %2434 = vmatpush1.bf16.xpose.msra.mxu0 0
  %2435 = vmatprep.subr.bf16.mxu0 0
  %2436 = vmatpush1.bf16.xpose.msra.mxu0 0
  %2437 = vmatprep.subr.bf16.mxu0 0
  %2438 = vmatpush1.bf16.xpose.msra.mxu0 0
  %2439 = vmatprep.subr.bf16.mxu0 0
  %2440 = vmatpush1.bf16.xpose.msra.mxu0 0
  %2441 = vmatprep.subr.bf16.mxu0 0
  %2442 = vmatpush1.bf16.xpose.msra.mxu0 0
  %2443 = vmatprep.subr.bf16.mxu0 0
  %2444 = vmatpush1.bf16.xpose.msra.mxu0 0
  %2445 = vmatprep.subr.bf16.mxu0 0
  %2446 = vmatpush1.bf16.xpose.msra.mxu0 0
  %2447 = vmatprep.mubr.bf16.mxu0 0
  %2448 = vmatmul.mubr.bf16.gmra.mrb[0].mxu0 %v2410
  %v2449 = vpop.f32.mrb[0].mxu0
  %v2450 = vadd.f32 0.0, %v2449
  %v2451 = vpop.f32.mrb[0].mxu0
  %v2452 = vpop.f32.mrb[0].mxu0
  %v2453 = vpop.f32.mrb[0].mxu0
  %2454 = vdwg.mxu0
  %v2455 = vmul.f32 %v1715, 0.5
  %v2456 = vmul.f32 %v1764, 0.5
  %v2457 = vmul.f32 %v1813, 0.5
  %v2458 = vmul.f32 %v1862, 0.5
  %v2459 = vmul.f32 %v1911, 0.5
  %v2460 = vmul.f32 %v1960, 0.5
  %v2461 = vmul.f32 %v2009, 0.5
  %v2462 = vmul.f32 %v2058, 0.5
  %v2463 = vmul.f32 %v2107, 0.5
  %v2464 = vmul.f32 %v2156, 0.5
  %v2465 = vmul.f32 %v2205, 0.5
  %v2466 = vmul.f32 %v2254, 0.5
  %v2467 = vmul.f32 %v2303, 0.5
  %v2468 = vmul.f32 %v2352, 0.5
  %v2469 = vmul.f32 %v2401, 0.5
  %v2470 = vmul.f32 %v2450, 0.5
  %v2471 = vsel %vm338, %v2455, -inf
  %2472 = vmax.xlane.f32.xlu0 %v2471
  %v2473 = vpop.xlane.xlu0 %2472
  %v2474 = vsel %vm338, %v2456, -inf
  %2475 = vmax.xlane.f32.xlu0 %v2474
  %v2476 = vpop.xlane.xlu0 %2475
  %v2477 = vsel %vm338, %v2457, -inf
  %2478 = vmax.xlane.f32.xlu0 %v2477
  %v2479 = vpop.xlane.xlu0 %2478
  %v2480 = vsel %vm338, %v2458, -inf
  %2481 = vmax.xlane.f32.xlu0 %v2480
  %v2482 = vpop.xlane.xlu0 %2481
  %v2483 = vsel %vm338, %v2459, -inf
  %2484 = vmax.xlane.f32.xlu0 %v2483
  %v2485 = vpop.xlane.xlu0 %2484
  %v2486 = vsel %vm338, %v2460, -inf
  %2487 = vmax.xlane.f32.xlu0 %v2486
  %v2488 = vpop.xlane.xlu0 %2487
  %v2489 = vsel %vm338, %v2461, -inf
  %2490 = vmax.xlane.f32.xlu0 %v2489
  %v2491 = vpop.xlane.xlu0 %2490
  %v2492 = vsel %vm338, %v2462, -inf
  %2493 = vmax.xlane.f32.xlu0 %v2492
  %v2494 = vpop.xlane.xlu0 %2493
  %v2495 = vsel %vm338, %v2463, -inf
  %2496 = vmax.xlane.f32.xlu0 %v2495
  %v2497 = vpop.xlane.xlu0 %2496
  %v2498 = vsel %vm338, %v2464, -inf
  %2499 = vmax.xlane.f32.xlu0 %v2498
  %v2500 = vpop.xlane.xlu0 %2499
  %v2501 = vsel %vm338, %v2465, -inf
  %2502 = vmax.xlane.f32.xlu0 %v2501
  %v2503 = vpop.xlane.xlu0 %2502
  %v2504 = vsel %vm338, %v2466, -inf
  %2505 = vmax.xlane.f32.xlu0 %v2504
  %v2506 = vpop.xlane.xlu0 %2505
  %v2507 = vsel %vm338, %v2467, -inf
  %2508 = vmax.xlane.f32.xlu0 %v2507
  %v2509 = vpop.xlane.xlu0 %2508
  %v2510 = vsel %vm338, %v2468, -inf
  %2511 = vmax.xlane.f32.xlu0 %v2510
  %v2512 = vpop.xlane.xlu0 %2511
  %v2513 = vsel %vm338, %v2469, -inf
  %2514 = vmax.xlane.f32.xlu0 %v2513
  %v2515 = vpop.xlane.xlu0 %2514
  %v2516 = vsel %vm338, %v2470, -inf
  %2517 = vmax.xlane.f32.xlu0 %v2516
  %v2518 = vpop.xlane.xlu0 %2517
  %v2519 = vsub.f32 %v2455, %v2473
  %v2520 = vsub.f32 %v2456, %v2476
  %v2521 = vsub.f32 %v2457, %v2479
  %v2522 = vsub.f32 %v2458, %v2482
  %v2523 = vsub.f32 %v2459, %v2485
  %v2524 = vsub.f32 %v2460, %v2488
  %v2525 = vsub.f32 %v2461, %v2491
  %v2526 = vsub.f32 %v2462, %v2494
  %v2527 = vsub.f32 %v2463, %v2497
  %v2528 = vsub.f32 %v2464, %v2500
  %v2529 = vsub.f32 %v2465, %v2503
  %v2530 = vsub.f32 %v2466, %v2506
  %v2531 = vsub.f32 %v2467, %v2509
  %v2532 = vsub.f32 %v2468, %v2512
  %v2533 = vsub.f32 %v2469, %v2515
  %v2534 = vsub.f32 %v2470, %v2518
  %v2535 = vmul.f32 %v2519, 1.442695
  %v2536 = vpow.pop %v2535
  %v2537 = vmul.f32 %v2520, 1.442695
  %v2538 = vpow.pop %v2537
  %v2539 = vmul.f32 %v2521, 1.442695
  %v2540 = vpow.pop %v2539
  %v2541 = vmul.f32 %v2522, 1.442695
  %v2542 = vpow.pop %v2541
  %v2543 = vmul.f32 %v2523, 1.442695
  %v2544 = vpow.pop %v2543
  %v2545 = vmul.f32 %v2524, 1.442695
  %v2546 = vpow.pop %v2545
  %v2547 = vmul.f32 %v2525, 1.442695
  %v2548 = vpow.pop %v2547
  %v2549 = vmul.f32 %v2526, 1.442695
  %v2550 = vpow.pop %v2549
  %v2551 = vmul.f32 %v2527, 1.442695
  %v2552 = vpow.pop %v2551
  %v2553 = vmul.f32 %v2528, 1.442695
  %v2554 = vpow.pop %v2553
  %v2555 = vmul.f32 %v2529, 1.442695
  %v2556 = vpow.pop %v2555
  %v2557 = vmul.f32 %v2530, 1.442695
  %v2558 = vpow.pop %v2557
  %v2559 = vmul.f32 %v2531, 1.442695
  %v2560 = vpow.pop %v2559
  %v2561 = vmul.f32 %v2532, 1.442695
  %v2562 = vpow.pop %v2561
  %v2563 = vmul.f32 %v2533, 1.442695
  %v2564 = vpow.pop %v2563
  %v2565 = vmul.f32 %v2534, 1.442695
  %v2566 = vpow.pop %v2565
  %v2567 = vsel %vm338, %v2536, 0.0
  %2568 = vadd.xlane.f32.xlu0 %v2567
  %v2569 = vpop.xlane.xlu0 %2568
  %v2570 = vsel %vm338, %v2538, 0.0
  %2571 = vadd.xlane.f32.xlu0 %v2570
  %v2572 = vpop.xlane.xlu0 %2571
  %v2573 = vsel %vm338, %v2540, 0.0
  %2574 = vadd.xlane.f32.xlu0 %v2573
  %v2575 = vpop.xlane.xlu0 %2574
  %v2576 = vsel %vm338, %v2542, 0.0
  %2577 = vadd.xlane.f32.xlu0 %v2576
  %v2578 = vpop.xlane.xlu0 %2577
  %v2579 = vsel %vm338, %v2544, 0.0
  %2580 = vadd.xlane.f32.xlu0 %v2579
  %v2581 = vpop.xlane.xlu0 %2580
  %v2582 = vsel %vm338, %v2546, 0.0
  %2583 = vadd.xlane.f32.xlu0 %v2582
  %v2584 = vpop.xlane.xlu0 %2583
  %v2585 = vsel %vm338, %v2548, 0.0
  %2586 = vadd.xlane.f32.xlu0 %v2585
  %v2587 = vpop.xlane.xlu0 %2586
  %v2588 = vsel %vm338, %v2550, 0.0
  %2589 = vadd.xlane.f32.xlu0 %v2588
  %v2590 = vpop.xlane.xlu0 %2589
  %v2591 = vsel %vm338, %v2552, 0.0
  %2592 = vadd.xlane.f32.xlu0 %v2591
  %v2593 = vpop.xlane.xlu0 %2592
  %v2594 = vsel %vm338, %v2554, 0.0
  %2595 = vadd.xlane.f32.xlu0 %v2594
  %v2596 = vpop.xlane.xlu0 %2595
  %v2597 = vsel %vm338, %v2556, 0.0
  %2598 = vadd.xlane.f32.xlu0 %v2597
  %v2599 = vpop.xlane.xlu0 %2598
  %v2600 = vsel %vm338, %v2558, 0.0
  %2601 = vadd.xlane.f32.xlu0 %v2600
  %v2602 = vpop.xlane.xlu0 %2601
  %v2603 = vsel %vm338, %v2560, 0.0
  %2604 = vadd.xlane.f32.xlu0 %v2603
  %v2605 = vpop.xlane.xlu0 %2604
  %v2606 = vsel %vm338, %v2562, 0.0
  %2607 = vadd.xlane.f32.xlu0 %v2606
  %v2608 = vpop.xlane.xlu0 %2607
  %v2609 = vsel %vm338, %v2564, 0.0
  %2610 = vadd.xlane.f32.xlu0 %v2609
  %v2611 = vpop.xlane.xlu0 %2610
  %v2612 = vsel %vm338, %v2566, 0.0
  %2613 = vadd.xlane.f32.xlu0 %v2612
  %v2614 = vpop.xlane.xlu0 %2613
  %v2615 = vrcp.pop %v2569
  %v2616 = vrcp.pop %v2572
  %v2617 = vrcp.pop %v2575
  %v2618 = vrcp.pop %v2578
  %v2619 = vrcp.pop %v2581
  %v2620 = vrcp.pop %v2584
  %v2621 = vrcp.pop %v2587
  %v2622 = vrcp.pop %v2590
  %v2623 = vrcp.pop %v2593
  %v2624 = vrcp.pop %v2596
  %v2625 = vrcp.pop %v2599
  %v2626 = vrcp.pop %v2602
  %v2627 = vrcp.pop %v2605
  %v2628 = vrcp.pop %v2608
  %v2629 = vrcp.pop %v2611
  %v2630 = vrcp.pop %v2614
  %v2631 = vmul.f32 %v2536, %v2615
  %v2632 = vmul.f32 %v2538, %v2616
  %v2633 = vmul.f32 %v2540, %v2617
  %v2634 = vmul.f32 %v2542, %v2618
  %v2635 = vmul.f32 %v2544, %v2619
  %v2636 = vmul.f32 %v2546, %v2620
  %v2637 = vmul.f32 %v2548, %v2621
  %v2638 = vmul.f32 %v2550, %v2622
  %v2639 = vmul.f32 %v2552, %v2623
  %v2640 = vmul.f32 %v2554, %v2624
  %v2641 = vmul.f32 %v2556, %v2625
  %v2642 = vmul.f32 %v2558, %v2626
  %v2643 = vmul.f32 %v2560, %v2627
  %v2644 = vmul.f32 %v2562, %v2628
  %v2645 = vmul.f32 %v2564, %v2629
  %v2646 = vmul.f32 %v2566, %v2630
  %v2647 = vpack.c.bf16 %v2631, %v2631
  %v2648 = vpack.c.bf16 %v2632, %v2632
  %v2649 = vpack.c.bf16 %v2633, %v2633
  %v2650 = vpack.c.bf16 %v2634, %v2634
  %v2651 = vpack.c.bf16 %v2635, %v2635
  %v2652 = vpack.c.bf16 %v2636, %v2636
  %v2653 = vpack.c.bf16 %v2637, %v2637
  %v2654 = vpack.c.bf16 %v2638, %v2638
  %v2655 = vpack.c.bf16 %v2639, %v2639
  %v2656 = vpack.c.bf16 %v2640, %v2640
  %v2657 = vpack.c.bf16 %v2641, %v2641
  %v2658 = vpack.c.bf16 %v2642, %v2642
  %v2659 = vpack.c.bf16 %v2643, %v2643
  %v2660 = vpack.c.bf16 %v2644, %v2644
  %v2661 = vpack.c.bf16 %v2645, %v2645
  %v2662 = vpack.c.bf16 %v2646, %v2646
  %2663 = vrot.lane.b32.xlu0 %v1654, 120
  %v2664 = vpop.permute.xlu0 %2663
  %v2666 = vsel %vm338, %v2647, 0
  %v2669 = vsel %vm342, %v2664, 0
  %2671 = vmatprep.subr.bf16.mxu0 0
  %2672 = vmatpush1.bf16.msra.mxu0 %v2669
  %2673 = vmatprep.subr.bf16.mxu0 0
  %2674 = vmatpush1.bf16.msra.mxu0 0
  %2675 = vmatprep.subr.bf16.mxu0 0
  %2676 = vmatpush1.bf16.msra.mxu0 0
  %2677 = vmatprep.subr.bf16.mxu0 0
  %2678 = vmatpush1.bf16.msra.mxu0 0
  %2679 = vmatprep.subr.bf16.mxu0 0
  %2680 = vmatpush1.bf16.msra.mxu0 0
  %2681 = vmatprep.subr.bf16.mxu0 0
  %2682 = vmatpush1.bf16.msra.mxu0 0
  %2683 = vmatprep.subr.bf16.mxu0 0
  %2684 = vmatpush1.bf16.msra.mxu0 0
  %2685 = vmatprep.subr.bf16.mxu0 0
  %2686 = vmatpush1.bf16.msra.mxu0 0
  %2687 = vmatprep.subr.bf16.mxu0 0
  %2688 = vmatpush1.bf16.msra.mxu0 0
  %2689 = vmatprep.subr.bf16.mxu0 0
  %2690 = vmatpush1.bf16.msra.mxu0 0
  %2691 = vmatprep.subr.bf16.mxu0 0
  %2692 = vmatpush1.bf16.msra.mxu0 0
  %2693 = vmatprep.subr.bf16.mxu0 0
  %2694 = vmatpush1.bf16.msra.mxu0 0
  %2695 = vmatprep.subr.bf16.mxu0 0
  %2696 = vmatpush1.bf16.msra.mxu0 0
  %2697 = vmatprep.subr.bf16.mxu0 0
  %2698 = vmatpush1.bf16.msra.mxu0 0
  %2699 = vmatprep.subr.bf16.mxu0 0
  %2700 = vmatpush1.bf16.msra.mxu0 0
  %2701 = vmatprep.subr.bf16.mxu0 0
  %2702 = vmatpush1.bf16.msra.mxu0 0
  %2703 = vmatprep.mubr.bf16.mxu0 0
  %2704 = vmatmul.mubr.bf16.gmra.mrb[0].mxu0 %v2666
  %v2705 = vpop.f32.mrb[0].mxu0
  %v2706 = vadd.f32 0.0, %v2705
  %v2707 = vpop.f32.mrb[0].mxu0
  %v2708 = vpop.f32.mrb[0].mxu0
  %v2709 = vpop.f32.mrb[0].mxu0
  %2710 = vdwg.mxu0
  %2711 = vrot.lane.b32.xlu0 %v1655, 120
  %v2712 = vpop.permute.xlu0 %2711
  %v2714 = vsel %vm338, %v2648, 0
  %v2717 = vsel %vm342, %v2712, 0
  %2719 = vmatprep.subr.bf16.mxu0 0
  %2720 = vmatpush1.bf16.msra.mxu0 %v2717
  %2721 = vmatprep.subr.bf16.mxu0 0
  %2722 = vmatpush1.bf16.msra.mxu0 0
  %2723 = vmatprep.subr.bf16.mxu0 0
  %2724 = vmatpush1.bf16.msra.mxu0 0
  %2725 = vmatprep.subr.bf16.mxu0 0
  %2726 = vmatpush1.bf16.msra.mxu0 0
  %2727 = vmatprep.subr.bf16.mxu0 0
  %2728 = vmatpush1.bf16.msra.mxu0 0
  %2729 = vmatprep.subr.bf16.mxu0 0
  %2730 = vmatpush1.bf16.msra.mxu0 0
  %2731 = vmatprep.subr.bf16.mxu0 0
  %2732 = vmatpush1.bf16.msra.mxu0 0
  %2733 = vmatprep.subr.bf16.mxu0 0
  %2734 = vmatpush1.bf16.msra.mxu0 0
  %2735 = vmatprep.subr.bf16.mxu0 0
  %2736 = vmatpush1.bf16.msra.mxu0 0
  %2737 = vmatprep.subr.bf16.mxu0 0
  %2738 = vmatpush1.bf16.msra.mxu0 0
  %2739 = vmatprep.subr.bf16.mxu0 0
  %2740 = vmatpush1.bf16.msra.mxu0 0
  %2741 = vmatprep.subr.bf16.mxu0 0
  %2742 = vmatpush1.bf16.msra.mxu0 0
  %2743 = vmatprep.subr.bf16.mxu0 0
  %2744 = vmatpush1.bf16.msra.mxu0 0
  %2745 = vmatprep.subr.bf16.mxu0 0
  %2746 = vmatpush1.bf16.msra.mxu0 0
  %2747 = vmatprep.subr.bf16.mxu0 0
  %2748 = vmatpush1.bf16.msra.mxu0 0
  %2749 = vmatprep.subr.bf16.mxu0 0
  %2750 = vmatpush1.bf16.msra.mxu0 0
  %2751 = vmatprep.mubr.bf16.mxu0 0
  %2752 = vmatmul.mubr.bf16.gmra.mrb[0].mxu0 %v2714
  %v2753 = vpop.f32.mrb[0].mxu0
  %v2754 = vadd.f32 0.0, %v2753
  %v2755 = vpop.f32.mrb[0].mxu0
  %v2756 = vpop.f32.mrb[0].mxu0
  %v2757 = vpop.f32.mrb[0].mxu0
  %2758 = vdwg.mxu0
  %2759 = vrot.lane.b32.xlu0 %v1656, 120
  %v2760 = vpop.permute.xlu0 %2759
  %v2762 = vsel %vm338, %v2649, 0
  %v2765 = vsel %vm342, %v2760, 0
  %2767 = vmatprep.subr.bf16.mxu0 0
  %2768 = vmatpush1.bf16.msra.mxu0 %v2765
  %2769 = vmatprep.subr.bf16.mxu0 0
  %2770 = vmatpush1.bf16.msra.mxu0 0
  %2771 = vmatprep.subr.bf16.mxu0 0
  %2772 = vmatpush1.bf16.msra.mxu0 0
  %2773 = vmatprep.subr.bf16.mxu0 0
  %2774 = vmatpush1.bf16.msra.mxu0 0
  %2775 = vmatprep.subr.bf16.mxu0 0
  %2776 = vmatpush1.bf16.msra.mxu0 0
  %2777 = vmatprep.subr.bf16.mxu0 0
  %2778 = vmatpush1.bf16.msra.mxu0 0
  %2779 = vmatprep.subr.bf16.mxu0 0
  %2780 = vmatpush1.bf16.msra.mxu0 0
  %2781 = vmatprep.subr.bf16.mxu0 0
  %2782 = vmatpush1.bf16.msra.mxu0 0
  %2783 = vmatprep.subr.bf16.mxu0 0
  %2784 = vmatpush1.bf16.msra.mxu0 0
  %2785 = vmatprep.subr.bf16.mxu0 0
  %2786 = vmatpush1.bf16.msra.mxu0 0
  %2787 = vmatprep.subr.bf16.mxu0 0
  %2788 = vmatpush1.bf16.msra.mxu0 0
  %2789 = vmatprep.subr.bf16.mxu0 0
  %2790 = vmatpush1.bf16.msra.mxu0 0
  %2791 = vmatprep.subr.bf16.mxu0 0
  %2792 = vmatpush1.bf16.msra.mxu0 0
  %2793 = vmatprep.subr.bf16.mxu0 0
  %2794 = vmatpush1.bf16.msra.mxu0 0
  %2795 = vmatprep.subr.bf16.mxu0 0
  %2796 = vmatpush1.bf16.msra.mxu0 0
  %2797 = vmatprep.subr.bf16.mxu0 0
  %2798 = vmatpush1.bf16.msra.mxu0 0
  %2799 = vmatprep.mubr.bf16.mxu0 0
  %2800 = vmatmul.mubr.bf16.gmra.mrb[0].mxu0 %v2762
  %v2801 = vpop.f32.mrb[0].mxu0
  %v2802 = vadd.f32 0.0, %v2801
  %v2803 = vpop.f32.mrb[0].mxu0
  %v2804 = vpop.f32.mrb[0].mxu0
  %v2805 = vpop.f32.mrb[0].mxu0
  %2806 = vdwg.mxu0
  %2807 = vrot.lane.b32.xlu0 %v1657, 120
  %v2808 = vpop.permute.xlu0 %2807
  %v2810 = vsel %vm338, %v2650, 0
  %v2813 = vsel %vm342, %v2808, 0
  %2815 = vmatprep.subr.bf16.mxu0 0
  %2816 = vmatpush1.bf16.msra.mxu0 %v2813
  %2817 = vmatprep.subr.bf16.mxu0 0
  %2818 = vmatpush1.bf16.msra.mxu0 0
  %2819 = vmatprep.subr.bf16.mxu0 0
  %2820 = vmatpush1.bf16.msra.mxu0 0
  %2821 = vmatprep.subr.bf16.mxu0 0
  %2822 = vmatpush1.bf16.msra.mxu0 0
  %2823 = vmatprep.subr.bf16.mxu0 0
  %2824 = vmatpush1.bf16.msra.mxu0 0
  %2825 = vmatprep.subr.bf16.mxu0 0
  %2826 = vmatpush1.bf16.msra.mxu0 0
  %2827 = vmatprep.subr.bf16.mxu0 0
  %2828 = vmatpush1.bf16.msra.mxu0 0
  %2829 = vmatprep.subr.bf16.mxu0 0
  %2830 = vmatpush1.bf16.msra.mxu0 0
  %2831 = vmatprep.subr.bf16.mxu0 0
  %2832 = vmatpush1.bf16.msra.mxu0 0
  %2833 = vmatprep.subr.bf16.mxu0 0
  %2834 = vmatpush1.bf16.msra.mxu0 0
  %2835 = vmatprep.subr.bf16.mxu0 0
  %2836 = vmatpush1.bf16.msra.mxu0 0
  %2837 = vmatprep.subr.bf16.mxu0 0
  %2838 = vmatpush1.bf16.msra.mxu0 0
  %2839 = vmatprep.subr.bf16.mxu0 0
  %2840 = vmatpush1.bf16.msra.mxu0 0
  %2841 = vmatprep.subr.bf16.mxu0 0
  %2842 = vmatpush1.bf16.msra.mxu0 0
  %2843 = vmatprep.subr.bf16.mxu0 0
  %2844 = vmatpush1.bf16.msra.mxu0 0
  %2845 = vmatprep.subr.bf16.mxu0 0
  %2846 = vmatpush1.bf16.msra.mxu0 0
  %2847 = vmatprep.mubr.bf16.mxu0 0
  %2848 = vmatmul.mubr.bf16.gmra.mrb[0].mxu0 %v2810
  %v2849 = vpop.f32.mrb[0].mxu0
  %v2850 = vadd.f32 0.0, %v2849
  %v2851 = vpop.f32.mrb[0].mxu0
  %v2852 = vpop.f32.mrb[0].mxu0
  %v2853 = vpop.f32.mrb[0].mxu0
  %2854 = vdwg.mxu0
  %2855 = vrot.lane.b32.xlu0 %v1658, 120
  %v2856 = vpop.permute.xlu0 %2855
  %v2858 = vsel %vm338, %v2651, 0
  %v2861 = vsel %vm342, %v2856, 0
  %2863 = vmatprep.subr.bf16.mxu0 0
  %2864 = vmatpush1.bf16.msra.mxu0 %v2861
  %2865 = vmatprep.subr.bf16.mxu0 0
  %2866 = vmatpush1.bf16.msra.mxu0 0
  %2867 = vmatprep.subr.bf16.mxu0 0
  %2868 = vmatpush1.bf16.msra.mxu0 0
  %2869 = vmatprep.subr.bf16.mxu0 0
  %2870 = vmatpush1.bf16.msra.mxu0 0
  %2871 = vmatprep.subr.bf16.mxu0 0
  %2872 = vmatpush1.bf16.msra.mxu0 0
  %2873 = vmatprep.subr.bf16.mxu0 0
  %2874 = vmatpush1.bf16.msra.mxu0 0
  %2875 = vmatprep.subr.bf16.mxu0 0
  %2876 = vmatpush1.bf16.msra.mxu0 0
  %2877 = vmatprep.subr.bf16.mxu0 0
  %2878 = vmatpush1.bf16.msra.mxu0 0
  %2879 = vmatprep.subr.bf16.mxu0 0
  %2880 = vmatpush1.bf16.msra.mxu0 0
  %2881 = vmatprep.subr.bf16.mxu0 0
  %2882 = vmatpush1.bf16.msra.mxu0 0
  %2883 = vmatprep.subr.bf16.mxu0 0
  %2884 = vmatpush1.bf16.msra.mxu0 0
  %2885 = vmatprep.subr.bf16.mxu0 0
  %2886 = vmatpush1.bf16.msra.mxu0 0
  %2887 = vmatprep.subr.bf16.mxu0 0
  %2888 = vmatpush1.bf16.msra.mxu0 0
  %2889 = vmatprep.subr.bf16.mxu0 0
  %2890 = vmatpush1.bf16.msra.mxu0 0
  %2891 = vmatprep.subr.bf16.mxu0 0
  %2892 = vmatpush1.bf16.msra.mxu0 0
  %2893 = vmatprep.subr.bf16.mxu0 0
  %2894 = vmatpush1.bf16.msra.mxu0 0
  %2895 = vmatprep.mubr.bf16.mxu0 0
  %2896 = vmatmul.mubr.bf16.gmra.mrb[0].mxu0 %v2858
  %v2897 = vpop.f32.mrb[0].mxu0
  %v2898 = vadd.f32 0.0, %v2897
  %v2899 = vpop.f32.mrb[0].mxu0
  %v2900 = vpop.f32.mrb[0].mxu0
  %v2901 = vpop.f32.mrb[0].mxu0
  %2902 = vdwg.mxu0
  %2903 = vrot.lane.b32.xlu0 %v1659, 120
  %v2904 = vpop.permute.xlu0 %2903
  %v2906 = vsel %vm338, %v2652, 0
  %v2909 = vsel %vm342, %v2904, 0
  %2911 = vmatprep.subr.bf16.mxu0 0
  %2912 = vmatpush1.bf16.msra.mxu0 %v2909
  %2913 = vmatprep.subr.bf16.mxu0 0
  %2914 = vmatpush1.bf16.msra.mxu0 0
  %2915 = vmatprep.subr.bf16.mxu0 0
  %2916 = vmatpush1.bf16.msra.mxu0 0
  %2917 = vmatprep.subr.bf16.mxu0 0
  %2918 = vmatpush1.bf16.msra.mxu0 0
  %2919 = vmatprep.subr.bf16.mxu0 0
  %2920 = vmatpush1.bf16.msra.mxu0 0
  %2921 = vmatprep.subr.bf16.mxu0 0
  %2922 = vmatpush1.bf16.msra.mxu0 0
  %2923 = vmatprep.subr.bf16.mxu0 0
  %2924 = vmatpush1.bf16.msra.mxu0 0
  %2925 = vmatprep.subr.bf16.mxu0 0
  %2926 = vmatpush1.bf16.msra.mxu0 0
  %2927 = vmatprep.subr.bf16.mxu0 0
  %2928 = vmatpush1.bf16.msra.mxu0 0
  %2929 = vmatprep.subr.bf16.mxu0 0
  %2930 = vmatpush1.bf16.msra.mxu0 0
  %2931 = vmatprep.subr.bf16.mxu0 0
  %2932 = vmatpush1.bf16.msra.mxu0 0
  %2933 = vmatprep.subr.bf16.mxu0 0
  %2934 = vmatpush1.bf16.msra.mxu0 0
  %2935 = vmatprep.subr.bf16.mxu0 0
  %2936 = vmatpush1.bf16.msra.mxu0 0
  %2937 = vmatprep.subr.bf16.mxu0 0
  %2938 = vmatpush1.bf16.msra.mxu0 0
  %2939 = vmatprep.subr.bf16.mxu0 0
  %2940 = vmatpush1.bf16.msra.mxu0 0
  %2941 = vmatprep.subr.bf16.mxu0 0
  %2942 = vmatpush1.bf16.msra.mxu0 0
  %2943 = vmatprep.mubr.bf16.mxu0 0
  %2944 = vmatmul.mubr.bf16.gmra.mrb[0].mxu0 %v2906
  %v2945 = vpop.f32.mrb[0].mxu0
  %v2946 = vadd.f32 0.0, %v2945
  %v2947 = vpop.f32.mrb[0].mxu0
  %v2948 = vpop.f32.mrb[0].mxu0
  %v2949 = vpop.f32.mrb[0].mxu0
  %2950 = vdwg.mxu0
  %2951 = vrot.lane.b32.xlu0 %v1660, 120
  %v2952 = vpop.permute.xlu0 %2951
  %v2954 = vsel %vm338, %v2653, 0
  %v2957 = vsel %vm342, %v2952, 0
  %2959 = vmatprep.subr.bf16.mxu0 0
  %2960 = vmatpush1.bf16.msra.mxu0 %v2957
  %2961 = vmatprep.subr.bf16.mxu0 0
  %2962 = vmatpush1.bf16.msra.mxu0 0
  %2963 = vmatprep.subr.bf16.mxu0 0
  %2964 = vmatpush1.bf16.msra.mxu0 0
  %2965 = vmatprep.subr.bf16.mxu0 0
  %2966 = vmatpush1.bf16.msra.mxu0 0
  %2967 = vmatprep.subr.bf16.mxu0 0
  %2968 = vmatpush1.bf16.msra.mxu0 0
  %2969 = vmatprep.subr.bf16.mxu0 0
  %2970 = vmatpush1.bf16.msra.mxu0 0
  %2971 = vmatprep.subr.bf16.mxu0 0
  %2972 = vmatpush1.bf16.msra.mxu0 0
  %2973 = vmatprep.subr.bf16.mxu0 0
  %2974 = vmatpush1.bf16.msra.mxu0 0
  %2975 = vmatprep.subr.bf16.mxu0 0
  %2976 = vmatpush1.bf16.msra.mxu0 0
  %2977 = vmatprep.subr.bf16.mxu0 0
  %2978 = vmatpush1.bf16.msra.mxu0 0
  %2979 = vmatprep.subr.bf16.mxu0 0
  %2980 = vmatpush1.bf16.msra.mxu0 0
  %2981 = vmatprep.subr.bf16.mxu0 0
  %2982 = vmatpush1.bf16.msra.mxu0 0
  %2983 = vmatprep.subr.bf16.mxu0 0
  %2984 = vmatpush1.bf16.msra.mxu0 0
  %2985 = vmatprep.subr.bf16.mxu0 0
  %2986 = vmatpush1.bf16.msra.mxu0 0
  %2987 = vmatprep.subr.bf16.mxu0 0
  %2988 = vmatpush1.bf16.msra.mxu0 0
  %2989 = vmatprep.subr.bf16.mxu0 0
  %2990 = vmatpush1.bf16.msra.mxu0 0
  %2991 = vmatprep.mubr.bf16.mxu0 0
  %2992 = vmatmul.mubr.bf16.gmra.mrb[0].mxu0 %v2954
  %v2993 = vpop.f32.mrb[0].mxu0
  %v2994 = vadd.f32 0.0, %v2993
  %v2995 = vpop.f32.mrb[0].mxu0
  %v2996 = vpop.f32.mrb[0].mxu0
  %v2997 = vpop.f32.mrb[0].mxu0
  %2998 = vdwg.mxu0
  %2999 = vrot.lane.b32.xlu0 %v1661, 120
  %v3000 = vpop.permute.xlu0 %2999
  %v3002 = vsel %vm338, %v2654, 0
  %v3005 = vsel %vm342, %v3000, 0
  %3007 = vmatprep.subr.bf16.mxu0 0
  %3008 = vmatpush1.bf16.msra.mxu0 %v3005
  %3009 = vmatprep.subr.bf16.mxu0 0
  %3010 = vmatpush1.bf16.msra.mxu0 0
  %3011 = vmatprep.subr.bf16.mxu0 0
  %3012 = vmatpush1.bf16.msra.mxu0 0
  %3013 = vmatprep.subr.bf16.mxu0 0
  %3014 = vmatpush1.bf16.msra.mxu0 0
  %3015 = vmatprep.subr.bf16.mxu0 0
  %3016 = vmatpush1.bf16.msra.mxu0 0
  %3017 = vmatprep.subr.bf16.mxu0 0
  %3018 = vmatpush1.bf16.msra.mxu0 0
  %3019 = vmatprep.subr.bf16.mxu0 0
  %3020 = vmatpush1.bf16.msra.mxu0 0
  %3021 = vmatprep.subr.bf16.mxu0 0
  %3022 = vmatpush1.bf16.msra.mxu0 0
  %3023 = vmatprep.subr.bf16.mxu0 0
  %3024 = vmatpush1.bf16.msra.mxu0 0
  %3025 = vmatprep.subr.bf16.mxu0 0
  %3026 = vmatpush1.bf16.msra.mxu0 0
  %3027 = vmatprep.subr.bf16.mxu0 0
  %3028 = vmatpush1.bf16.msra.mxu0 0
  %3029 = vmatprep.subr.bf16.mxu0 0
  %3030 = vmatpush1.bf16.msra.mxu0 0
  %3031 = vmatprep.subr.bf16.mxu0 0
  %3032 = vmatpush1.bf16.msra.mxu0 0
  %3033 = vmatprep.subr.bf16.mxu0 0
  %3034 = vmatpush1.bf16.msra.mxu0 0
  %3035 = vmatprep.subr.bf16.mxu0 0
  %3036 = vmatpush1.bf16.msra.mxu0 0
  %3037 = vmatprep.subr.bf16.mxu0 0
  %3038 = vmatpush1.bf16.msra.mxu0 0
  %3039 = vmatprep.mubr.bf16.mxu0 0
  %3040 = vmatmul.mubr.bf16.gmra.mrb[0].mxu0 %v3002
  %v3041 = vpop.f32.mrb[0].mxu0
  %v3042 = vadd.f32 0.0, %v3041
  %v3043 = vpop.f32.mrb[0].mxu0
  %v3044 = vpop.f32.mrb[0].mxu0
  %v3045 = vpop.f32.mrb[0].mxu0
  %3046 = vdwg.mxu0
  %3047 = vrot.lane.b32.xlu0 %v1662, 120
  %v3048 = vpop.permute.xlu0 %3047
  %v3050 = vsel %vm338, %v2655, 0
  %v3053 = vsel %vm342, %v3048, 0
  %3055 = vmatprep.subr.bf16.mxu0 0
  %3056 = vmatpush1.bf16.msra.mxu0 %v3053
  %3057 = vmatprep.subr.bf16.mxu0 0
  %3058 = vmatpush1.bf16.msra.mxu0 0
  %3059 = vmatprep.subr.bf16.mxu0 0
  %3060 = vmatpush1.bf16.msra.mxu0 0
  %3061 = vmatprep.subr.bf16.mxu0 0
  %3062 = vmatpush1.bf16.msra.mxu0 0
  %3063 = vmatprep.subr.bf16.mxu0 0
  %3064 = vmatpush1.bf16.msra.mxu0 0
  %3065 = vmatprep.subr.bf16.mxu0 0
  %3066 = vmatpush1.bf16.msra.mxu0 0
  %3067 = vmatprep.subr.bf16.mxu0 0
  %3068 = vmatpush1.bf16.msra.mxu0 0
  %3069 = vmatprep.subr.bf16.mxu0 0
  %3070 = vmatpush1.bf16.msra.mxu0 0
  %3071 = vmatprep.subr.bf16.mxu0 0
  %3072 = vmatpush1.bf16.msra.mxu0 0
  %3073 = vmatprep.subr.bf16.mxu0 0
  %3074 = vmatpush1.bf16.msra.mxu0 0
  %3075 = vmatprep.subr.bf16.mxu0 0
  %3076 = vmatpush1.bf16.msra.mxu0 0
  %3077 = vmatprep.subr.bf16.mxu0 0
  %3078 = vmatpush1.bf16.msra.mxu0 0
  %3079 = vmatprep.subr.bf16.mxu0 0
  %3080 = vmatpush1.bf16.msra.mxu0 0
  %3081 = vmatprep.subr.bf16.mxu0 0
  %3082 = vmatpush1.bf16.msra.mxu0 0
  %3083 = vmatprep.subr.bf16.mxu0 0
  %3084 = vmatpush1.bf16.msra.mxu0 0
  %3085 = vmatprep.subr.bf16.mxu0 0
  %3086 = vmatpush1.bf16.msra.mxu0 0
  %3087 = vmatprep.mubr.bf16.mxu0 0
  %3088 = vmatmul.mubr.bf16.gmra.mrb[0].mxu0 %v3050
  %v3089 = vpop.f32.mrb[0].mxu0
  %v3090 = vadd.f32 0.0, %v3089
  %v3091 = vpop.f32.mrb[0].mxu0
  %v3092 = vpop.f32.mrb[0].mxu0
  %v3093 = vpop.f32.mrb[0].mxu0
  %3094 = vdwg.mxu0
  %3095 = vrot.lane.b32.xlu0 %v1663, 120
  %v3096 = vpop.permute.xlu0 %3095
  %v3098 = vsel %vm338, %v2656, 0
  %v3101 = vsel %vm342, %v3096, 0
  %3103 = vmatprep.subr.bf16.mxu0 0
  %3104 = vmatpush1.bf16.msra.mxu0 %v3101
  %3105 = vmatprep.subr.bf16.mxu0 0
  %3106 = vmatpush1.bf16.msra.mxu0 0
  %3107 = vmatprep.subr.bf16.mxu0 0
  %3108 = vmatpush1.bf16.msra.mxu0 0
  %3109 = vmatprep.subr.bf16.mxu0 0
  %3110 = vmatpush1.bf16.msra.mxu0 0
  %3111 = vmatprep.subr.bf16.mxu0 0
  %3112 = vmatpush1.bf16.msra.mxu0 0
  %3113 = vmatprep.subr.bf16.mxu0 0
  %3114 = vmatpush1.bf16.msra.mxu0 0
  %3115 = vmatprep.subr.bf16.mxu0 0
  %3116 = vmatpush1.bf16.msra.mxu0 0
  %3117 = vmatprep.subr.bf16.mxu0 0
  %3118 = vmatpush1.bf16.msra.mxu0 0
  %3119 = vmatprep.subr.bf16.mxu0 0
  %3120 = vmatpush1.bf16.msra.mxu0 0
  %3121 = vmatprep.subr.bf16.mxu0 0
  %3122 = vmatpush1.bf16.msra.mxu0 0
  %3123 = vmatprep.subr.bf16.mxu0 0
  %3124 = vmatpush1.bf16.msra.mxu0 0
  %3125 = vmatprep.subr.bf16.mxu0 0
  %3126 = vmatpush1.bf16.msra.mxu0 0
  %3127 = vmatprep.subr.bf16.mxu0 0
  %3128 = vmatpush1.bf16.msra.mxu0 0
  %3129 = vmatprep.subr.bf16.mxu0 0
  %3130 = vmatpush1.bf16.msra.mxu0 0
  %3131 = vmatprep.subr.bf16.mxu0 0
  %3132 = vmatpush1.bf16.msra.mxu0 0
  %3133 = vmatprep.subr.bf16.mxu0 0
  %3134 = vmatpush1.bf16.msra.mxu0 0
  %3135 = vmatprep.mubr.bf16.mxu0 0
  %3136 = vmatmul.mubr.bf16.gmra.mrb[0].mxu0 %v3098
  %v3137 = vpop.f32.mrb[0].mxu0
  %v3138 = vadd.f32 0.0, %v3137
  %v3139 = vpop.f32.mrb[0].mxu0
  %v3140 = vpop.f32.mrb[0].mxu0
  %v3141 = vpop.f32.mrb[0].mxu0
  %3142 = vdwg.mxu0
  %3143 = vrot.lane.b32.xlu0 %v1664, 120
  %v3144 = vpop.permute.xlu0 %3143
  %v3146 = vsel %vm338, %v2657, 0
  %v3149 = vsel %vm342, %v3144, 0
  %3151 = vmatprep.subr.bf16.mxu0 0
  %3152 = vmatpush1.bf16.msra.mxu0 %v3149
  %3153 = vmatprep.subr.bf16.mxu0 0
  %3154 = vmatpush1.bf16.msra.mxu0 0
  %3155 = vmatprep.subr.bf16.mxu0 0
  %3156 = vmatpush1.bf16.msra.mxu0 0
  %3157 = vmatprep.subr.bf16.mxu0 0
  %3158 = vmatpush1.bf16.msra.mxu0 0
  %3159 = vmatprep.subr.bf16.mxu0 0
  %3160 = vmatpush1.bf16.msra.mxu0 0
  %3161 = vmatprep.subr.bf16.mxu0 0
  %3162 = vmatpush1.bf16.msra.mxu0 0
  %3163 = vmatprep.subr.bf16.mxu0 0
  %3164 = vmatpush1.bf16.msra.mxu0 0
  %3165 = vmatprep.subr.bf16.mxu0 0
  %3166 = vmatpush1.bf16.msra.mxu0 0
  %3167 = vmatprep.subr.bf16.mxu0 0
  %3168 = vmatpush1.bf16.msra.mxu0 0
  %3169 = vmatprep.subr.bf16.mxu0 0
  %3170 = vmatpush1.bf16.msra.mxu0 0
  %3171 = vmatprep.subr.bf16.mxu0 0
  %3172 = vmatpush1.bf16.msra.mxu0 0
  %3173 = vmatprep.subr.bf16.mxu0 0
  %3174 = vmatpush1.bf16.msra.mxu0 0
  %3175 = vmatprep.subr.bf16.mxu0 0
  %3176 = vmatpush1.bf16.msra.mxu0 0
  %3177 = vmatprep.subr.bf16.mxu0 0
  %3178 = vmatpush1.bf16.msra.mxu0 0
  %3179 = vmatprep.subr.bf16.mxu0 0
  %3180 = vmatpush1.bf16.msra.mxu0 0
  %3181 = vmatprep.subr.bf16.mxu0 0
  %3182 = vmatpush1.bf16.msra.mxu0 0
  %3183 = vmatprep.mubr.bf16.mxu0 0
  %3184 = vmatmul.mubr.bf16.gmra.mrb[0].mxu0 %v3146
  %v3185 = vpop.f32.mrb[0].mxu0
  %v3186 = vadd.f32 0.0, %v3185
  %v3187 = vpop.f32.mrb[0].mxu0
  %v3188 = vpop.f32.mrb[0].mxu0
  %v3189 = vpop.f32.mrb[0].mxu0
  %3190 = vdwg.mxu0
  %3191 = vrot.lane.b32.xlu0 %v1665, 120
  %v3192 = vpop.permute.xlu0 %3191
  %v3194 = vsel %vm338, %v2658, 0
  %v3197 = vsel %vm342, %v3192, 0
  %3199 = vmatprep.subr.bf16.mxu0 0
  %3200 = vmatpush1.bf16.msra.mxu0 %v3197
  %3201 = vmatprep.subr.bf16.mxu0 0
  %3202 = vmatpush1.bf16.msra.mxu0 0
  %3203 = vmatprep.subr.bf16.mxu0 0
  %3204 = vmatpush1.bf16.msra.mxu0 0
  %3205 = vmatprep.subr.bf16.mxu0 0
  %3206 = vmatpush1.bf16.msra.mxu0 0
  %3207 = vmatprep.subr.bf16.mxu0 0
  %3208 = vmatpush1.bf16.msra.mxu0 0
  %3209 = vmatprep.subr.bf16.mxu0 0
  %3210 = vmatpush1.bf16.msra.mxu0 0
  %3211 = vmatprep.subr.bf16.mxu0 0
  %3212 = vmatpush1.bf16.msra.mxu0 0
  %3213 = vmatprep.subr.bf16.mxu0 0
  %3214 = vmatpush1.bf16.msra.mxu0 0
  %3215 = vmatprep.subr.bf16.mxu0 0
  %3216 = vmatpush1.bf16.msra.mxu0 0
  %3217 = vmatprep.subr.bf16.mxu0 0
  %3218 = vmatpush1.bf16.msra.mxu0 0
  %3219 = vmatprep.subr.bf16.mxu0 0
  %3220 = vmatpush1.bf16.msra.mxu0 0
  %3221 = vmatprep.subr.bf16.mxu0 0
  %3222 = vmatpush1.bf16.msra.mxu0 0
  %3223 = vmatprep.subr.bf16.mxu0 0
  %3224 = vmatpush1.bf16.msra.mxu0 0
  %3225 = vmatprep.subr.bf16.mxu0 0
  %3226 = vmatpush1.bf16.msra.mxu0 0
  %3227 = vmatprep.subr.bf16.mxu0 0
  %3228 = vmatpush1.bf16.msra.mxu0 0
  %3229 = vmatprep.subr.bf16.mxu0 0
  %3230 = vmatpush1.bf16.msra.mxu0 0
  %3231 = vmatprep.mubr.bf16.mxu0 0
  %3232 = vmatmul.mubr.bf16.gmra.mrb[0].mxu0 %v3194
  %v3233 = vpop.f32.mrb[0].mxu0
  %v3234 = vadd.f32 0.0, %v3233
  %v3235 = vpop.f32.mrb[0].mxu0
  %v3236 = vpop.f32.mrb[0].mxu0
  %v3237 = vpop.f32.mrb[0].mxu0
  %3238 = vdwg.mxu0
  %3239 = vrot.lane.b32.xlu0 %v1666, 120
  %v3240 = vpop.permute.xlu0 %3239
  %v3242 = vsel %vm338, %v2659, 0
  %v3245 = vsel %vm342, %v3240, 0
  %3247 = vmatprep.subr.bf16.mxu0 0
  %3248 = vmatpush1.bf16.msra.mxu0 %v3245
  %3249 = vmatprep.subr.bf16.mxu0 0
  %3250 = vmatpush1.bf16.msra.mxu0 0
  %3251 = vmatprep.subr.bf16.mxu0 0
  %3252 = vmatpush1.bf16.msra.mxu0 0
  %3253 = vmatprep.subr.bf16.mxu0 0
  %3254 = vmatpush1.bf16.msra.mxu0 0
  %3255 = vmatprep.subr.bf16.mxu0 0
  %3256 = vmatpush1.bf16.msra.mxu0 0
  %3257 = vmatprep.subr.bf16.mxu0 0
  %3258 = vmatpush1.bf16.msra.mxu0 0
  %3259 = vmatprep.subr.bf16.mxu0 0
  %3260 = vmatpush1.bf16.msra.mxu0 0
  %3261 = vmatprep.subr.bf16.mxu0 0
  %3262 = vmatpush1.bf16.msra.mxu0 0
  %3263 = vmatprep.subr.bf16.mxu0 0
  %3264 = vmatpush1.bf16.msra.mxu0 0
  %3265 = vmatprep.subr.bf16.mxu0 0
  %3266 = vmatpush1.bf16.msra.mxu0 0
  %3267 = vmatprep.subr.bf16.mxu0 0
  %3268 = vmatpush1.bf16.msra.mxu0 0
  %3269 = vmatprep.subr.bf16.mxu0 0
  %3270 = vmatpush1.bf16.msra.mxu0 0
  %3271 = vmatprep.subr.bf16.mxu0 0
  %3272 = vmatpush1.bf16.msra.mxu0 0
  %3273 = vmatprep.subr.bf16.mxu0 0
  %3274 = vmatpush1.bf16.msra.mxu0 0
  %3275 = vmatprep.subr.bf16.mxu0 0
  %3276 = vmatpush1.bf16.msra.mxu0 0
  %3277 = vmatprep.subr.bf16.mxu0 0
  %3278 = vmatpush1.bf16.msra.mxu0 0
  %3279 = vmatprep.mubr.bf16.mxu0 0
  %3280 = vmatmul.mubr.bf16.gmra.mrb[0].mxu0 %v3242
  %v3281 = vpop.f32.mrb[0].mxu0
  %v3282 = vadd.f32 0.0, %v3281
  %v3283 = vpop.f32.mrb[0].mxu0
  %v3284 = vpop.f32.mrb[0].mxu0
  %v3285 = vpop.f32.mrb[0].mxu0
  %3286 = vdwg.mxu0
  %3287 = vrot.lane.b32.xlu0 %v1667, 120
  %v3288 = vpop.permute.xlu0 %3287
  %v3290 = vsel %vm338, %v2660, 0
  %v3293 = vsel %vm342, %v3288, 0
  %3295 = vmatprep.subr.bf16.mxu0 0
  %3296 = vmatpush1.bf16.msra.mxu0 %v3293
  %3297 = vmatprep.subr.bf16.mxu0 0
  %3298 = vmatpush1.bf16.msra.mxu0 0
  %3299 = vmatprep.subr.bf16.mxu0 0
  %3300 = vmatpush1.bf16.msra.mxu0 0
  %3301 = vmatprep.subr.bf16.mxu0 0
  %3302 = vmatpush1.bf16.msra.mxu0 0
  %3303 = vmatprep.subr.bf16.mxu0 0
  %3304 = vmatpush1.bf16.msra.mxu0 0
  %3305 = vmatprep.subr.bf16.mxu0 0
  %3306 = vmatpush1.bf16.msra.mxu0 0
  %3307 = vmatprep.subr.bf16.mxu0 0
  %3308 = vmatpush1.bf16.msra.mxu0 0
  %3309 = vmatprep.subr.bf16.mxu0 0
  %3310 = vmatpush1.bf16.msra.mxu0 0
  %3311 = vmatprep.subr.bf16.mxu0 0
  %3312 = vmatpush1.bf16.msra.mxu0 0
  %3313 = vmatprep.subr.bf16.mxu0 0
  %3314 = vmatpush1.bf16.msra.mxu0 0
  %3315 = vmatprep.subr.bf16.mxu0 0
  %3316 = vmatpush1.bf16.msra.mxu0 0
  %3317 = vmatprep.subr.bf16.mxu0 0
  %3318 = vmatpush1.bf16.msra.mxu0 0
  %3319 = vmatprep.subr.bf16.mxu0 0
  %3320 = vmatpush1.bf16.msra.mxu0 0
  %3321 = vmatprep.subr.bf16.mxu0 0
  %3322 = vmatpush1.bf16.msra.mxu0 0
  %3323 = vmatprep.subr.bf16.mxu0 0
  %3324 = vmatpush1.bf16.msra.mxu0 0
  %3325 = vmatprep.subr.bf16.mxu0 0
  %3326 = vmatpush1.bf16.msra.mxu0 0
  %3327 = vmatprep.mubr.bf16.mxu0 0
  %3328 = vmatmul.mubr.bf16.gmra.mrb[0].mxu0 %v3290
  %v3329 = vpop.f32.mrb[0].mxu0
  %v3330 = vadd.f32 0.0, %v3329
  %v3331 = vpop.f32.mrb[0].mxu0
  %v3332 = vpop.f32.mrb[0].mxu0
  %v3333 = vpop.f32.mrb[0].mxu0
  %3334 = vdwg.mxu0
  %3335 = vrot.lane.b32.xlu0 %v1668, 120
  %v3336 = vpop.permute.xlu0 %3335
  %v3338 = vsel %vm338, %v2661, 0
  %v3341 = vsel %vm342, %v3336, 0
  %3343 = vmatprep.subr.bf16.mxu0 0
  %3344 = vmatpush1.bf16.msra.mxu0 %v3341
  %3345 = vmatprep.subr.bf16.mxu0 0
  %3346 = vmatpush1.bf16.msra.mxu0 0
  %3347 = vmatprep.subr.bf16.mxu0 0
  %3348 = vmatpush1.bf16.msra.mxu0 0
  %3349 = vmatprep.subr.bf16.mxu0 0
  %3350 = vmatpush1.bf16.msra.mxu0 0
  %3351 = vmatprep.subr.bf16.mxu0 0
  %3352 = vmatpush1.bf16.msra.mxu0 0
  %3353 = vmatprep.subr.bf16.mxu0 0
  %3354 = vmatpush1.bf16.msra.mxu0 0
  %3355 = vmatprep.subr.bf16.mxu0 0
  %3356 = vmatpush1.bf16.msra.mxu0 0
  %3357 = vmatprep.subr.bf16.mxu0 0
  %3358 = vmatpush1.bf16.msra.mxu0 0
  %3359 = vmatprep.subr.bf16.mxu0 0
  %3360 = vmatpush1.bf16.msra.mxu0 0
  %3361 = vmatprep.subr.bf16.mxu0 0
  %3362 = vmatpush1.bf16.msra.mxu0 0
  %3363 = vmatprep.subr.bf16.mxu0 0
  %3364 = vmatpush1.bf16.msra.mxu0 0
  %3365 = vmatprep.subr.bf16.mxu0 0
  %3366 = vmatpush1.bf16.msra.mxu0 0
  %3367 = vmatprep.subr.bf16.mxu0 0
  %3368 = vmatpush1.bf16.msra.mxu0 0
  %3369 = vmatprep.subr.bf16.mxu0 0
  %3370 = vmatpush1.bf16.msra.mxu0 0
  %3371 = vmatprep.subr.bf16.mxu0 0
  %3372 = vmatpush1.bf16.msra.mxu0 0
  %3373 = vmatprep.subr.bf16.mxu0 0
  %3374 = vmatpush1.bf16.msra.mxu0 0
  %3375 = vmatprep.mubr.bf16.mxu0 0
  %3376 = vmatmul.mubr.bf16.gmra.mrb[0].mxu0 %v3338
  %v3377 = vpop.f32.mrb[0].mxu0
  %v3378 = vadd.f32 0.0, %v3377
  %v3379 = vpop.f32.mrb[0].mxu0
  %v3380 = vpop.f32.mrb[0].mxu0
  %v3381 = vpop.f32.mrb[0].mxu0
  %3382 = vdwg.mxu0
  %3383 = vrot.lane.b32.xlu0 %v1669, 120
  %v3384 = vpop.permute.xlu0 %3383
  %v3386 = vsel %vm338, %v2662, 0
  %v3389 = vsel %vm342, %v3384, 0
  %3391 = vmatprep.subr.bf16.mxu0 0
  %3392 = vmatpush1.bf16.msra.mxu0 %v3389
  %3393 = vmatprep.subr.bf16.mxu0 0
  %3394 = vmatpush1.bf16.msra.mxu0 0
  %3395 = vmatprep.subr.bf16.mxu0 0
  %3396 = vmatpush1.bf16.msra.mxu0 0
  %3397 = vmatprep.subr.bf16.mxu0 0
  %3398 = vmatpush1.bf16.msra.mxu0 0
  %3399 = vmatprep.subr.bf16.mxu0 0
  %3400 = vmatpush1.bf16.msra.mxu0 0
  %3401 = vmatprep.subr.bf16.mxu0 0
  %3402 = vmatpush1.bf16.msra.mxu0 0
  %3403 = vmatprep.subr.bf16.mxu0 0
  %3404 = vmatpush1.bf16.msra.mxu0 0
  %3405 = vmatprep.subr.bf16.mxu0 0
  %3406 = vmatpush1.bf16.msra.mxu0 0
  %3407 = vmatprep.subr.bf16.mxu0 0
  %3408 = vmatpush1.bf16.msra.mxu0 0
  %3409 = vmatprep.subr.bf16.mxu0 0
  %3410 = vmatpush1.bf16.msra.mxu0 0
  %3411 = vmatprep.subr.bf16.mxu0 0
  %3412 = vmatpush1.bf16.msra.mxu0 0
  %3413 = vmatprep.subr.bf16.mxu0 0
  %3414 = vmatpush1.bf16.msra.mxu0 0
  %3415 = vmatprep.subr.bf16.mxu0 0
  %3416 = vmatpush1.bf16.msra.mxu0 0
  %3417 = vmatprep.subr.bf16.mxu0 0
  %3418 = vmatpush1.bf16.msra.mxu0 0
  %3419 = vmatprep.subr.bf16.mxu0 0
  %3420 = vmatpush1.bf16.msra.mxu0 0
  %3421 = vmatprep.subr.bf16.mxu0 0
  %3422 = vmatpush1.bf16.msra.mxu0 0
  %3423 = vmatprep.mubr.bf16.mxu0 0
  %3424 = vmatmul.mubr.bf16.gmra.mrb[0].mxu0 %v3386
  %v3425 = vpop.f32.mrb[0].mxu0
  %v3426 = vadd.f32 0.0, %v3425
  %v3427 = vpop.f32.mrb[0].mxu0
  %v3428 = vpop.f32.mrb[0].mxu0
  %v3429 = vpop.f32.mrb[0].mxu0
  %3430 = vdwg.mxu0
  %v3431 = vpack.c.bf16 %v2706, %v2706
  %v3432 = vpack.c.bf16 %v2754, %v2754
  %v3433 = vpack.c.bf16 %v2802, %v2802
  %v3434 = vpack.c.bf16 %v2850, %v2850
  %v3435 = vpack.c.bf16 %v2898, %v2898
  %v3436 = vpack.c.bf16 %v2946, %v2946
  %v3437 = vpack.c.bf16 %v2994, %v2994
  %v3438 = vpack.c.bf16 %v3042, %v3042
  %v3439 = vpack.c.bf16 %v3090, %v3090
  %v3440 = vpack.c.bf16 %v3138, %v3138
  %v3441 = vpack.c.bf16 %v3186, %v3186
  %v3442 = vpack.c.bf16 %v3234, %v3234
  %v3443 = vpack.c.bf16 %v3282, %v3282
  %v3444 = vpack.c.bf16 %v3330, %v3330
  %v3445 = vpack.c.bf16 %v3378, %v3378
  %v3446 = vpack.c.bf16 %v3426, %v3426
  %v3448 = vsel %vm1673, %v3431, 0
  %vm3450 = vcmask 1041408
  %v3452 = vsel %vm3450, %v702, 0
  %3454 = vmatprep.subr.bf16.mxu0 0
  %3455 = vmatpush1.bf16.msra.mxu0 %v3452
  %3456 = vmatprep.subr.bf16.mxu0 0
  %3457 = vmatpush1.bf16.msra.mxu0 0
  %3458 = vmatprep.subr.bf16.mxu0 0
  %3459 = vmatpush1.bf16.msra.mxu0 0
  %3460 = vmatprep.subr.bf16.mxu0 0
  %3461 = vmatpush1.bf16.msra.mxu0 0
  %3462 = vmatprep.subr.bf16.mxu0 0
  %3463 = vmatpush1.bf16.msra.mxu0 0
  %3464 = vmatprep.subr.bf16.mxu0 0
  %3465 = vmatpush1.bf16.msra.mxu0 0
  %3466 = vmatprep.subr.bf16.mxu0 0
  %3467 = vmatpush1.bf16.msra.mxu0 0
  %3468 = vmatprep.subr.bf16.mxu0 0
  %3469 = vmatpush1.bf16.msra.mxu0 0
  %3470 = vmatprep.subr.bf16.mxu0 0
  %3471 = vmatpush1.bf16.msra.mxu0 0
  %3472 = vmatprep.subr.bf16.mxu0 0
  %3473 = vmatpush1.bf16.msra.mxu0 0
  %3474 = vmatprep.subr.bf16.mxu0 0
  %3475 = vmatpush1.bf16.msra.mxu0 0
  %3476 = vmatprep.subr.bf16.mxu0 0
  %3477 = vmatpush1.bf16.msra.mxu0 0
  %3478 = vmatprep.subr.bf16.mxu0 0
  %3479 = vmatpush1.bf16.msra.mxu0 0
  %3480 = vmatprep.subr.bf16.mxu0 0
  %3481 = vmatpush1.bf16.msra.mxu0 0
  %3482 = vmatprep.subr.bf16.mxu0 0
  %3483 = vmatpush1.bf16.msra.mxu0 0
  %3484 = vmatprep.subr.bf16.mxu0 0
  %3485 = vmatpush1.bf16.msra.mxu0 0
  %3486 = vmatprep.mubr.bf16.mxu0 0
  %3487 = vmatmul.mubr.bf16.gmra.mrb[0].mxu0 %v3448
  %v3488 = vpop.f32.mrb[0].mxu0
  %v3489 = vadd.f32 0.0, %v3488
  %v3490 = vpop.f32.mrb[0].mxu0
  %v3491 = vpop.f32.mrb[0].mxu0
  %v3492 = vpop.f32.mrb[0].mxu0
  %3493 = vdwg.mxu0
  %v3495 = vsel %vm1673, %v3432, 0
  %v3498 = vsel %vm3450, %v703, 0
  %3500 = vmatprep.subr.bf16.mxu0 0
  %3501 = vmatpush1.bf16.msra.mxu0 %v3498
  %3502 = vmatprep.subr.bf16.mxu0 0
  %3503 = vmatpush1.bf16.msra.mxu0 0
  %3504 = vmatprep.subr.bf16.mxu0 0
  %3505 = vmatpush1.bf16.msra.mxu0 0
  %3506 = vmatprep.subr.bf16.mxu0 0
  %3507 = vmatpush1.bf16.msra.mxu0 0
  %3508 = vmatprep.subr.bf16.mxu0 0
  %3509 = vmatpush1.bf16.msra.mxu0 0
  %3510 = vmatprep.subr.bf16.mxu0 0
  %3511 = vmatpush1.bf16.msra.mxu0 0
  %3512 = vmatprep.subr.bf16.mxu0 0
  %3513 = vmatpush1.bf16.msra.mxu0 0
  %3514 = vmatprep.subr.bf16.mxu0 0
  %3515 = vmatpush1.bf16.msra.mxu0 0
  %3516 = vmatprep.subr.bf16.mxu0 0
  %3517 = vmatpush1.bf16.msra.mxu0 0
  %3518 = vmatprep.subr.bf16.mxu0 0
  %3519 = vmatpush1.bf16.msra.mxu0 0
  %3520 = vmatprep.subr.bf16.mxu0 0
  %3521 = vmatpush1.bf16.msra.mxu0 0
  %3522 = vmatprep.subr.bf16.mxu0 0
  %3523 = vmatpush1.bf16.msra.mxu0 0
  %3524 = vmatprep.subr.bf16.mxu0 0
  %3525 = vmatpush1.bf16.msra.mxu0 0
  %3526 = vmatprep.subr.bf16.mxu0 0
  %3527 = vmatpush1.bf16.msra.mxu0 0
  %3528 = vmatprep.subr.bf16.mxu0 0
  %3529 = vmatpush1.bf16.msra.mxu0 0
  %3530 = vmatprep.subr.bf16.mxu0 0
  %3531 = vmatpush1.bf16.msra.mxu0 0
  %3532 = vmatprep.mubr.bf16.mxu0 0
  %3533 = vmatmul.mubr.bf16.gmra.mrb[0].mxu0 %v3495
  %v3534 = vpop.f32.mrb[0].mxu0
  %v3535 = vadd.f32 0.0, %v3534
  %v3536 = vpop.f32.mrb[0].mxu0
  %v3537 = vpop.f32.mrb[0].mxu0
  %v3538 = vpop.f32.mrb[0].mxu0
  %3539 = vdwg.mxu0
  %v3541 = vsel %vm1673, %v3433, 0
  %v3544 = vsel %vm3450, %v704, 0
  %3546 = vmatprep.subr.bf16.mxu0 0
  %3547 = vmatpush1.bf16.msra.mxu0 %v3544
  %3548 = vmatprep.subr.bf16.mxu0 0
  %3549 = vmatpush1.bf16.msra.mxu0 0
  %3550 = vmatprep.subr.bf16.mxu0 0
  %3551 = vmatpush1.bf16.msra.mxu0 0
  %3552 = vmatprep.subr.bf16.mxu0 0
  %3553 = vmatpush1.bf16.msra.mxu0 0
  %3554 = vmatprep.subr.bf16.mxu0 0
  %3555 = vmatpush1.bf16.msra.mxu0 0
  %3556 = vmatprep.subr.bf16.mxu0 0
  %3557 = vmatpush1.bf16.msra.mxu0 0
  %3558 = vmatprep.subr.bf16.mxu0 0
  %3559 = vmatpush1.bf16.msra.mxu0 0
  %3560 = vmatprep.subr.bf16.mxu0 0
  %3561 = vmatpush1.bf16.msra.mxu0 0
  %3562 = vmatprep.subr.bf16.mxu0 0
  %3563 = vmatpush1.bf16.msra.mxu0 0
  %3564 = vmatprep.subr.bf16.mxu0 0
  %3565 = vmatpush1.bf16.msra.mxu0 0
  %3566 = vmatprep.subr.bf16.mxu0 0
  %3567 = vmatpush1.bf16.msra.mxu0 0
  %3568 = vmatprep.subr.bf16.mxu0 0
  %3569 = vmatpush1.bf16.msra.mxu0 0
  %3570 = vmatprep.subr.bf16.mxu0 0
  %3571 = vmatpush1.bf16.msra.mxu0 0
  %3572 = vmatprep.subr.bf16.mxu0 0
  %3573 = vmatpush1.bf16.msra.mxu0 0
  %3574 = vmatprep.subr.bf16.mxu0 0
  %3575 = vmatpush1.bf16.msra.mxu0 0
  %3576 = vmatprep.subr.bf16.mxu0 0
  %3577 = vmatpush1.bf16.msra.mxu0 0
  %3578 = vmatprep.mubr.bf16.mxu0 0
  %3579 = vmatmul.mubr.bf16.gmra.mrb[0].mxu0 %v3541
  %v3580 = vpop.f32.mrb[0].mxu0
  %v3581 = vadd.f32 0.0, %v3580
  %v3582 = vpop.f32.mrb[0].mxu0
  %v3583 = vpop.f32.mrb[0].mxu0
  %v3584 = vpop.f32.mrb[0].mxu0
  %3585 = vdwg.mxu0
  %v3587 = vsel %vm1673, %v3434, 0
  %v3590 = vsel %vm3450, %v705, 0
  %3592 = vmatprep.subr.bf16.mxu0 0
  %3593 = vmatpush1.bf16.msra.mxu0 %v3590
  %3594 = vmatprep.subr.bf16.mxu0 0
  %3595 = vmatpush1.bf16.msra.mxu0 0
  %3596 = vmatprep.subr.bf16.mxu0 0
  %3597 = vmatpush1.bf16.msra.mxu0 0
  %3598 = vmatprep.subr.bf16.mxu0 0
  %3599 = vmatpush1.bf16.msra.mxu0 0
  %3600 = vmatprep.subr.bf16.mxu0 0
  %3601 = vmatpush1.bf16.msra.mxu0 0
  %3602 = vmatprep.subr.bf16.mxu0 0
  %3603 = vmatpush1.bf16.msra.mxu0 0
  %3604 = vmatprep.subr.bf16.mxu0 0
  %3605 = vmatpush1.bf16.msra.mxu0 0
  %3606 = vmatprep.subr.bf16.mxu0 0
  %3607 = vmatpush1.bf16.msra.mxu0 0
  %3608 = vmatprep.subr.bf16.mxu0 0
  %3609 = vmatpush1.bf16.msra.mxu0 0
  %3610 = vmatprep.subr.bf16.mxu0 0
  %3611 = vmatpush1.bf16.msra.mxu0 0
  %3612 = vmatprep.subr.bf16.mxu0 0
  %3613 = vmatpush1.bf16.msra.mxu0 0
  %3614 = vmatprep.subr.bf16.mxu0 0
  %3615 = vmatpush1.bf16.msra.mxu0 0
  %3616 = vmatprep.subr.bf16.mxu0 0
  %3617 = vmatpush1.bf16.msra.mxu0 0
  %3618 = vmatprep.subr.bf16.mxu0 0
  %3619 = vmatpush1.bf16.msra.mxu0 0
  %3620 = vmatprep.subr.bf16.mxu0 0
  %3621 = vmatpush1.bf16.msra.mxu0 0
  %3622 = vmatprep.subr.bf16.mxu0 0
  %3623 = vmatpush1.bf16.msra.mxu0 0
  %3624 = vmatprep.mubr.bf16.mxu0 0
  %3625 = vmatmul.mubr.bf16.gmra.mrb[0].mxu0 %v3587
  %v3626 = vpop.f32.mrb[0].mxu0
  %v3627 = vadd.f32 0.0, %v3626
  %v3628 = vpop.f32.mrb[0].mxu0
  %v3629 = vpop.f32.mrb[0].mxu0
  %v3630 = vpop.f32.mrb[0].mxu0
  %3631 = vdwg.mxu0
  %v3633 = vsel %vm1673, %v3435, 0
  %v3636 = vsel %vm3450, %v706, 0
  %3638 = vmatprep.subr.bf16.mxu0 0
  %3639 = vmatpush1.bf16.msra.mxu0 %v3636
  %3640 = vmatprep.subr.bf16.mxu0 0
  %3641 = vmatpush1.bf16.msra.mxu0 0
  %3642 = vmatprep.subr.bf16.mxu0 0
  %3643 = vmatpush1.bf16.msra.mxu0 0
  %3644 = vmatprep.subr.bf16.mxu0 0
  %3645 = vmatpush1.bf16.msra.mxu0 0
  %3646 = vmatprep.subr.bf16.mxu0 0
  %3647 = vmatpush1.bf16.msra.mxu0 0
  %3648 = vmatprep.subr.bf16.mxu0 0
  %3649 = vmatpush1.bf16.msra.mxu0 0
  %3650 = vmatprep.subr.bf16.mxu0 0
  %3651 = vmatpush1.bf16.msra.mxu0 0
  %3652 = vmatprep.subr.bf16.mxu0 0
  %3653 = vmatpush1.bf16.msra.mxu0 0
  %3654 = vmatprep.subr.bf16.mxu0 0
  %3655 = vmatpush1.bf16.msra.mxu0 0
  %3656 = vmatprep.subr.bf16.mxu0 0
  %3657 = vmatpush1.bf16.msra.mxu0 0
  %3658 = vmatprep.subr.bf16.mxu0 0
  %3659 = vmatpush1.bf16.msra.mxu0 0
  %3660 = vmatprep.subr.bf16.mxu0 0
  %3661 = vmatpush1.bf16.msra.mxu0 0
  %3662 = vmatprep.subr.bf16.mxu0 0
  %3663 = vmatpush1.bf16.msra.mxu0 0
  %3664 = vmatprep.subr.bf16.mxu0 0
  %3665 = vmatpush1.bf16.msra.mxu0 0
  %3666 = vmatprep.subr.bf16.mxu0 0
  %3667 = vmatpush1.bf16.msra.mxu0 0
  %3668 = vmatprep.subr.bf16.mxu0 0
  %3669 = vmatpush1.bf16.msra.mxu0 0
  %3670 = vmatprep.mubr.bf16.mxu0 0
  %3671 = vmatmul.mubr.bf16.gmra.mrb[0].mxu0 %v3633
  %v3672 = vpop.f32.mrb[0].mxu0
  %v3673 = vadd.f32 0.0, %v3672
  %v3674 = vpop.f32.mrb[0].mxu0
  %v3675 = vpop.f32.mrb[0].mxu0
  %v3676 = vpop.f32.mrb[0].mxu0
  %3677 = vdwg.mxu0
  %v3679 = vsel %vm1673, %v3436, 0
  %v3682 = vsel %vm3450, %v707, 0
  %3684 = vmatprep.subr.bf16.mxu0 0
  %3685 = vmatpush1.bf16.msra.mxu0 %v3682
  %3686 = vmatprep.subr.bf16.mxu0 0
  %3687 = vmatpush1.bf16.msra.mxu0 0
  %3688 = vmatprep.subr.bf16.mxu0 0
  %3689 = vmatpush1.bf16.msra.mxu0 0
  %3690 = vmatprep.subr.bf16.mxu0 0
  %3691 = vmatpush1.bf16.msra.mxu0 0
  %3692 = vmatprep.subr.bf16.mxu0 0
  %3693 = vmatpush1.bf16.msra.mxu0 0
  %3694 = vmatprep.subr.bf16.mxu0 0
  %3695 = vmatpush1.bf16.msra.mxu0 0
  %3696 = vmatprep.subr.bf16.mxu0 0
  %3697 = vmatpush1.bf16.msra.mxu0 0
  %3698 = vmatprep.subr.bf16.mxu0 0
  %3699 = vmatpush1.bf16.msra.mxu0 0
  %3700 = vmatprep.subr.bf16.mxu0 0
  %3701 = vmatpush1.bf16.msra.mxu0 0
  %3702 = vmatprep.subr.bf16.mxu0 0
  %3703 = vmatpush1.bf16.msra.mxu0 0
  %3704 = vmatprep.subr.bf16.mxu0 0
  %3705 = vmatpush1.bf16.msra.mxu0 0
  %3706 = vmatprep.subr.bf16.mxu0 0
  %3707 = vmatpush1.bf16.msra.mxu0 0
  %3708 = vmatprep.subr.bf16.mxu0 0
  %3709 = vmatpush1.bf16.msra.mxu0 0
  %3710 = vmatprep.subr.bf16.mxu0 0
  %3711 = vmatpush1.bf16.msra.mxu0 0
  %3712 = vmatprep.subr.bf16.mxu0 0
  %3713 = vmatpush1.bf16.msra.mxu0 0
  %3714 = vmatprep.subr.bf16.mxu0 0
  %3715 = vmatpush1.bf16.msra.mxu0 0
  %3716 = vmatprep.mubr.bf16.mxu0 0
  %3717 = vmatmul.mubr.bf16.gmra.mrb[0].mxu0 %v3679
  %v3718 = vpop.f32.mrb[0].mxu0
  %v3719 = vadd.f32 0.0, %v3718
  %v3720 = vpop.f32.mrb[0].mxu0
  %v3721 = vpop.f32.mrb[0].mxu0
  %v3722 = vpop.f32.mrb[0].mxu0
  %3723 = vdwg.mxu0
  %v3725 = vsel %vm1673, %v3437, 0
  %v3728 = vsel %vm3450, %v708, 0
  %3730 = vmatprep.subr.bf16.mxu0 0
  %3731 = vmatpush1.bf16.msra.mxu0 %v3728
  %3732 = vmatprep.subr.bf16.mxu0 0
  %3733 = vmatpush1.bf16.msra.mxu0 0
  %3734 = vmatprep.subr.bf16.mxu0 0
  %3735 = vmatpush1.bf16.msra.mxu0 0
  %3736 = vmatprep.subr.bf16.mxu0 0
  %3737 = vmatpush1.bf16.msra.mxu0 0
  %3738 = vmatprep.subr.bf16.mxu0 0
  %3739 = vmatpush1.bf16.msra.mxu0 0
  %3740 = vmatprep.subr.bf16.mxu0 0
  %3741 = vmatpush1.bf16.msra.mxu0 0
  %3742 = vmatprep.subr.bf16.mxu0 0
  %3743 = vmatpush1.bf16.msra.mxu0 0
  %3744 = vmatprep.subr.bf16.mxu0 0
  %3745 = vmatpush1.bf16.msra.mxu0 0
  %3746 = vmatprep.subr.bf16.mxu0 0
  %3747 = vmatpush1.bf16.msra.mxu0 0
  %3748 = vmatprep.subr.bf16.mxu0 0
  %3749 = vmatpush1.bf16.msra.mxu0 0
  %3750 = vmatprep.subr.bf16.mxu0 0
  %3751 = vmatpush1.bf16.msra.mxu0 0
  %3752 = vmatprep.subr.bf16.mxu0 0
  %3753 = vmatpush1.bf16.msra.mxu0 0
  %3754 = vmatprep.subr.bf16.mxu0 0
  %3755 = vmatpush1.bf16.msra.mxu0 0
  %3756 = vmatprep.subr.bf16.mxu0 0
  %3757 = vmatpush1.bf16.msra.mxu0 0
  %3758 = vmatprep.subr.bf16.mxu0 0
  %3759 = vmatpush1.bf16.msra.mxu0 0
  %3760 = vmatprep.subr.bf16.mxu0 0
  %3761 = vmatpush1.bf16.msra.mxu0 0
  %3762 = vmatprep.mubr.bf16.mxu0 0
  %3763 = vmatmul.mubr.bf16.gmra.mrb[0].mxu0 %v3725
  %v3764 = vpop.f32.mrb[0].mxu0
  %v3765 = vadd.f32 0.0, %v3764
  %v3766 = vpop.f32.mrb[0].mxu0
  %v3767 = vpop.f32.mrb[0].mxu0
  %v3768 = vpop.f32.mrb[0].mxu0
  %3769 = vdwg.mxu0
  %v3771 = vsel %vm1673, %v3438, 0
  %v3774 = vsel %vm3450, %v709, 0
  %3776 = vmatprep.subr.bf16.mxu0 0
  %3777 = vmatpush1.bf16.msra.mxu0 %v3774
  %3778 = vmatprep.subr.bf16.mxu0 0
  %3779 = vmatpush1.bf16.msra.mxu0 0
  %3780 = vmatprep.subr.bf16.mxu0 0
  %3781 = vmatpush1.bf16.msra.mxu0 0
  %3782 = vmatprep.subr.bf16.mxu0 0
  %3783 = vmatpush1.bf16.msra.mxu0 0
  %3784 = vmatprep.subr.bf16.mxu0 0
  %3785 = vmatpush1.bf16.msra.mxu0 0
  %3786 = vmatprep.subr.bf16.mxu0 0
  %3787 = vmatpush1.bf16.msra.mxu0 0
  %3788 = vmatprep.subr.bf16.mxu0 0
  %3789 = vmatpush1.bf16.msra.mxu0 0
  %3790 = vmatprep.subr.bf16.mxu0 0
  %3791 = vmatpush1.bf16.msra.mxu0 0
  %3792 = vmatprep.subr.bf16.mxu0 0
  %3793 = vmatpush1.bf16.msra.mxu0 0
  %3794 = vmatprep.subr.bf16.mxu0 0
  %3795 = vmatpush1.bf16.msra.mxu0 0
  %3796 = vmatprep.subr.bf16.mxu0 0
  %3797 = vmatpush1.bf16.msra.mxu0 0
  %3798 = vmatprep.subr.bf16.mxu0 0
  %3799 = vmatpush1.bf16.msra.mxu0 0
  %3800 = vmatprep.subr.bf16.mxu0 0
  %3801 = vmatpush1.bf16.msra.mxu0 0
  %3802 = vmatprep.subr.bf16.mxu0 0
  %3803 = vmatpush1.bf16.msra.mxu0 0
  %3804 = vmatprep.subr.bf16.mxu0 0
  %3805 = vmatpush1.bf16.msra.mxu0 0
  %3806 = vmatprep.subr.bf16.mxu0 0
  %3807 = vmatpush1.bf16.msra.mxu0 0
  %3808 = vmatprep.mubr.bf16.mxu0 0
  %3809 = vmatmul.mubr.bf16.gmra.mrb[0].mxu0 %v3771
  %v3810 = vpop.f32.mrb[0].mxu0
  %v3811 = vadd.f32 0.0, %v3810
  %v3812 = vpop.f32.mrb[0].mxu0
  %v3813 = vpop.f32.mrb[0].mxu0
  %v3814 = vpop.f32.mrb[0].mxu0
  %3815 = vdwg.mxu0
  %v3817 = vsel %vm1673, %v3439, 0
  %v3820 = vsel %vm3450, %v710, 0
  %3822 = vmatprep.subr.bf16.mxu0 0
  %3823 = vmatpush1.bf16.msra.mxu0 %v3820
  %3824 = vmatprep.subr.bf16.mxu0 0
  %3825 = vmatpush1.bf16.msra.mxu0 0
  %3826 = vmatprep.subr.bf16.mxu0 0
  %3827 = vmatpush1.bf16.msra.mxu0 0
  %3828 = vmatprep.subr.bf16.mxu0 0
  %3829 = vmatpush1.bf16.msra.mxu0 0
  %3830 = vmatprep.subr.bf16.mxu0 0
  %3831 = vmatpush1.bf16.msra.mxu0 0
  %3832 = vmatprep.subr.bf16.mxu0 0
  %3833 = vmatpush1.bf16.msra.mxu0 0
  %3834 = vmatprep.subr.bf16.mxu0 0
  %3835 = vmatpush1.bf16.msra.mxu0 0
  %3836 = vmatprep.subr.bf16.mxu0 0
  %3837 = vmatpush1.bf16.msra.mxu0 0
  %3838 = vmatprep.subr.bf16.mxu0 0
  %3839 = vmatpush1.bf16.msra.mxu0 0
  %3840 = vmatprep.subr.bf16.mxu0 0
  %3841 = vmatpush1.bf16.msra.mxu0 0
  %3842 = vmatprep.subr.bf16.mxu0 0
  %3843 = vmatpush1.bf16.msra.mxu0 0
  %3844 = vmatprep.subr.bf16.mxu0 0
  %3845 = vmatpush1.bf16.msra.mxu0 0
  %3846 = vmatprep.subr.bf16.mxu0 0
  %3847 = vmatpush1.bf16.msra.mxu0 0
  %3848 = vmatprep.subr.bf16.mxu0 0
  %3849 = vmatpush1.bf16.msra.mxu0 0
  %3850 = vmatprep.subr.bf16.mxu0 0
  %3851 = vmatpush1.bf16.msra.mxu0 0
  %3852 = vmatprep.subr.bf16.mxu0 0
  %3853 = vmatpush1.bf16.msra.mxu0 0
  %3854 = vmatprep.mubr.bf16.mxu0 0
  %3855 = vmatmul.mubr.bf16.gmra.mrb[0].mxu0 %v3817
  %v3856 = vpop.f32.mrb[0].mxu0
  %v3857 = vadd.f32 0.0, %v3856
  %v3858 = vpop.f32.mrb[0].mxu0
  %v3859 = vpop.f32.mrb[0].mxu0
  %v3860 = vpop.f32.mrb[0].mxu0
  %3861 = vdwg.mxu0
  %v3863 = vsel %vm1673, %v3440, 0
  %v3866 = vsel %vm3450, %v711, 0
  %3868 = vmatprep.subr.bf16.mxu0 0
  %3869 = vmatpush1.bf16.msra.mxu0 %v3866
  %3870 = vmatprep.subr.bf16.mxu0 0
  %3871 = vmatpush1.bf16.msra.mxu0 0
  %3872 = vmatprep.subr.bf16.mxu0 0
  %3873 = vmatpush1.bf16.msra.mxu0 0
  %3874 = vmatprep.subr.bf16.mxu0 0
  %3875 = vmatpush1.bf16.msra.mxu0 0
  %3876 = vmatprep.subr.bf16.mxu0 0
  %3877 = vmatpush1.bf16.msra.mxu0 0
  %3878 = vmatprep.subr.bf16.mxu0 0
  %3879 = vmatpush1.bf16.msra.mxu0 0
  %3880 = vmatprep.subr.bf16.mxu0 0
  %3881 = vmatpush1.bf16.msra.mxu0 0
  %3882 = vmatprep.subr.bf16.mxu0 0
  %3883 = vmatpush1.bf16.msra.mxu0 0
  %3884 = vmatprep.subr.bf16.mxu0 0
  %3885 = vmatpush1.bf16.msra.mxu0 0
  %3886 = vmatprep.subr.bf16.mxu0 0
  %3887 = vmatpush1.bf16.msra.mxu0 0
  %3888 = vmatprep.subr.bf16.mxu0 0
  %3889 = vmatpush1.bf16.msra.mxu0 0
  %3890 = vmatprep.subr.bf16.mxu0 0
  %3891 = vmatpush1.bf16.msra.mxu0 0
  %3892 = vmatprep.subr.bf16.mxu0 0
  %3893 = vmatpush1.bf16.msra.mxu0 0
  %3894 = vmatprep.subr.bf16.mxu0 0
  %3895 = vmatpush1.bf16.msra.mxu0 0
  %3896 = vmatprep.subr.bf16.mxu0 0
  %3897 = vmatpush1.bf16.msra.mxu0 0
  %3898 = vmatprep.subr.bf16.mxu0 0
  %3899 = vmatpush1.bf16.msra.mxu0 0
  %3900 = vmatprep.mubr.bf16.mxu0 0
  %3901 = vmatmul.mubr.bf16.gmra.mrb[0].mxu0 %v3863
  %v3902 = vpop.f32.mrb[0].mxu0
  %v3903 = vadd.f32 0.0, %v3902
  %v3904 = vpop.f32.mrb[0].mxu0
  %v3905 = vpop.f32.mrb[0].mxu0
  %v3906 = vpop.f32.mrb[0].mxu0
  %3907 = vdwg.mxu0
  %v3909 = vsel %vm1673, %v3441, 0
  %v3912 = vsel %vm3450, %v712, 0
  %3914 = vmatprep.subr.bf16.mxu0 0
  %3915 = vmatpush1.bf16.msra.mxu0 %v3912
  %3916 = vmatprep.subr.bf16.mxu0 0
  %3917 = vmatpush1.bf16.msra.mxu0 0
  %3918 = vmatprep.subr.bf16.mxu0 0
  %3919 = vmatpush1.bf16.msra.mxu0 0
  %3920 = vmatprep.subr.bf16.mxu0 0
  %3921 = vmatpush1.bf16.msra.mxu0 0
  %3922 = vmatprep.subr.bf16.mxu0 0
  %3923 = vmatpush1.bf16.msra.mxu0 0
  %3924 = vmatprep.subr.bf16.mxu0 0
  %3925 = vmatpush1.bf16.msra.mxu0 0
  %3926 = vmatprep.subr.bf16.mxu0 0
  %3927 = vmatpush1.bf16.msra.mxu0 0
  %3928 = vmatprep.subr.bf16.mxu0 0
  %3929 = vmatpush1.bf16.msra.mxu0 0
  %3930 = vmatprep.subr.bf16.mxu0 0
  %3931 = vmatpush1.bf16.msra.mxu0 0
  %3932 = vmatprep.subr.bf16.mxu0 0
  %3933 = vmatpush1.bf16.msra.mxu0 0
  %3934 = vmatprep.subr.bf16.mxu0 0
  %3935 = vmatpush1.bf16.msra.mxu0 0
  %3936 = vmatprep.subr.bf16.mxu0 0
  %3937 = vmatpush1.bf16.msra.mxu0 0
  %3938 = vmatprep.subr.bf16.mxu0 0
  %3939 = vmatpush1.bf16.msra.mxu0 0
  %3940 = vmatprep.subr.bf16.mxu0 0
  %3941 = vmatpush1.bf16.msra.mxu0 0
  %3942 = vmatprep.subr.bf16.mxu0 0
  %3943 = vmatpush1.bf16.msra.mxu0 0
  %3944 = vmatprep.subr.bf16.mxu0 0
  %3945 = vmatpush1.bf16.msra.mxu0 0
  %3946 = vmatprep.mubr.bf16.mxu0 0
  %3947 = vmatmul.mubr.bf16.gmra.mrb[0].mxu0 %v3909
  %v3948 = vpop.f32.mrb[0].mxu0
  %v3949 = vadd.f32 0.0, %v3948
  %v3950 = vpop.f32.mrb[0].mxu0
  %v3951 = vpop.f32.mrb[0].mxu0
  %v3952 = vpop.f32.mrb[0].mxu0
  %3953 = vdwg.mxu0
  %v3955 = vsel %vm1673, %v3442, 0
  %v3958 = vsel %vm3450, %v713, 0
  %3960 = vmatprep.subr.bf16.mxu0 0
  %3961 = vmatpush1.bf16.msra.mxu0 %v3958
  %3962 = vmatprep.subr.bf16.mxu0 0
  %3963 = vmatpush1.bf16.msra.mxu0 0
  %3964 = vmatprep.subr.bf16.mxu0 0
  %3965 = vmatpush1.bf16.msra.mxu0 0
  %3966 = vmatprep.subr.bf16.mxu0 0
  %3967 = vmatpush1.bf16.msra.mxu0 0
  %3968 = vmatprep.subr.bf16.mxu0 0
  %3969 = vmatpush1.bf16.msra.mxu0 0
  %3970 = vmatprep.subr.bf16.mxu0 0
  %3971 = vmatpush1.bf16.msra.mxu0 0
  %3972 = vmatprep.subr.bf16.mxu0 0
  %3973 = vmatpush1.bf16.msra.mxu0 0
  %3974 = vmatprep.subr.bf16.mxu0 0
  %3975 = vmatpush1.bf16.msra.mxu0 0
  %3976 = vmatprep.subr.bf16.mxu0 0
  %3977 = vmatpush1.bf16.msra.mxu0 0
  %3978 = vmatprep.subr.bf16.mxu0 0
  %3979 = vmatpush1.bf16.msra.mxu0 0
  %3980 = vmatprep.subr.bf16.mxu0 0
  %3981 = vmatpush1.bf16.msra.mxu0 0
  %3982 = vmatprep.subr.bf16.mxu0 0
  %3983 = vmatpush1.bf16.msra.mxu0 0
  %3984 = vmatprep.subr.bf16.mxu0 0
  %3985 = vmatpush1.bf16.msra.mxu0 0
  %3986 = vmatprep.subr.bf16.mxu0 0
  %3987 = vmatpush1.bf16.msra.mxu0 0
  %3988 = vmatprep.subr.bf16.mxu0 0
  %3989 = vmatpush1.bf16.msra.mxu0 0
  %3990 = vmatprep.subr.bf16.mxu0 0
  %3991 = vmatpush1.bf16.msra.mxu0 0
  %3992 = vmatprep.mubr.bf16.mxu0 0
  %3993 = vmatmul.mubr.bf16.gmra.mrb[0].mxu0 %v3955
  %v3994 = vpop.f32.mrb[0].mxu0
  %v3995 = vadd.f32 0.0, %v3994
  %v3996 = vpop.f32.mrb[0].mxu0
  %v3997 = vpop.f32.mrb[0].mxu0
  %v3998 = vpop.f32.mrb[0].mxu0
  %3999 = vdwg.mxu0
  %v4001 = vsel %vm1673, %v3443, 0
  %v4004 = vsel %vm3450, %v714, 0
  %4006 = vmatprep.subr.bf16.mxu0 0
  %4007 = vmatpush1.bf16.msra.mxu0 %v4004
  %4008 = vmatprep.subr.bf16.mxu0 0
  %4009 = vmatpush1.bf16.msra.mxu0 0
  %4010 = vmatprep.subr.bf16.mxu0 0
  %4011 = vmatpush1.bf16.msra.mxu0 0
  %4012 = vmatprep.subr.bf16.mxu0 0
  %4013 = vmatpush1.bf16.msra.mxu0 0
  %4014 = vmatprep.subr.bf16.mxu0 0
  %4015 = vmatpush1.bf16.msra.mxu0 0
  %4016 = vmatprep.subr.bf16.mxu0 0
  %4017 = vmatpush1.bf16.msra.mxu0 0
  %4018 = vmatprep.subr.bf16.mxu0 0
  %4019 = vmatpush1.bf16.msra.mxu0 0
  %4020 = vmatprep.subr.bf16.mxu0 0
  %4021 = vmatpush1.bf16.msra.mxu0 0
  %4022 = vmatprep.subr.bf16.mxu0 0
  %4023 = vmatpush1.bf16.msra.mxu0 0
  %4024 = vmatprep.subr.bf16.mxu0 0
  %4025 = vmatpush1.bf16.msra.mxu0 0
  %4026 = vmatprep.subr.bf16.mxu0 0
  %4027 = vmatpush1.bf16.msra.mxu0 0
  %4028 = vmatprep.subr.bf16.mxu0 0
  %4029 = vmatpush1.bf16.msra.mxu0 0
  %4030 = vmatprep.subr.bf16.mxu0 0
  %4031 = vmatpush1.bf16.msra.mxu0 0
  %4032 = vmatprep.subr.bf16.mxu0 0
  %4033 = vmatpush1.bf16.msra.mxu0 0
  %4034 = vmatprep.subr.bf16.mxu0 0
  %4035 = vmatpush1.bf16.msra.mxu0 0
  %4036 = vmatprep.subr.bf16.mxu0 0
  %4037 = vmatpush1.bf16.msra.mxu0 0
  %4038 = vmatprep.mubr.bf16.mxu0 0
  %4039 = vmatmul.mubr.bf16.gmra.mrb[0].mxu0 %v4001
  %v4040 = vpop.f32.mrb[0].mxu0
  %v4041 = vadd.f32 0.0, %v4040
  %v4042 = vpop.f32.mrb[0].mxu0
  %v4043 = vpop.f32.mrb[0].mxu0
  %v4044 = vpop.f32.mrb[0].mxu0
  %4045 = vdwg.mxu0
  %v4047 = vsel %vm1673, %v3444, 0
  %v4050 = vsel %vm3450, %v715, 0
  %4052 = vmatprep.subr.bf16.mxu0 0
  %4053 = vmatpush1.bf16.msra.mxu0 %v4050
  %4054 = vmatprep.subr.bf16.mxu0 0
  %4055 = vmatpush1.bf16.msra.mxu0 0
  %4056 = vmatprep.subr.bf16.mxu0 0
  %4057 = vmatpush1.bf16.msra.mxu0 0
  %4058 = vmatprep.subr.bf16.mxu0 0
  %4059 = vmatpush1.bf16.msra.mxu0 0
  %4060 = vmatprep.subr.bf16.mxu0 0
  %4061 = vmatpush1.bf16.msra.mxu0 0
  %4062 = vmatprep.subr.bf16.mxu0 0
  %4063 = vmatpush1.bf16.msra.mxu0 0
  %4064 = vmatprep.subr.bf16.mxu0 0
  %4065 = vmatpush1.bf16.msra.mxu0 0
  %4066 = vmatprep.subr.bf16.mxu0 0
  %4067 = vmatpush1.bf16.msra.mxu0 0
  %4068 = vmatprep.subr.bf16.mxu0 0
  %4069 = vmatpush1.bf16.msra.mxu0 0
  %4070 = vmatprep.subr.bf16.mxu0 0
  %4071 = vmatpush1.bf16.msra.mxu0 0
  %4072 = vmatprep.subr.bf16.mxu0 0
  %4073 = vmatpush1.bf16.msra.mxu0 0
  %4074 = vmatprep.subr.bf16.mxu0 0
  %4075 = vmatpush1.bf16.msra.mxu0 0
  %4076 = vmatprep.subr.bf16.mxu0 0
  %4077 = vmatpush1.bf16.msra.mxu0 0
  %4078 = vmatprep.subr.bf16.mxu0 0
  %4079 = vmatpush1.bf16.msra.mxu0 0
  %4080 = vmatprep.subr.bf16.mxu0 0
  %4081 = vmatpush1.bf16.msra.mxu0 0
  %4082 = vmatprep.subr.bf16.mxu0 0
  %4083 = vmatpush1.bf16.msra.mxu0 0
  %4084 = vmatprep.mubr.bf16.mxu0 0
  %4085 = vmatmul.mubr.bf16.gmra.mrb[0].mxu0 %v4047
  %v4086 = vpop.f32.mrb[0].mxu0
  %v4087 = vadd.f32 0.0, %v4086
  %v4088 = vpop.f32.mrb[0].mxu0
  %v4089 = vpop.f32.mrb[0].mxu0
  %v4090 = vpop.f32.mrb[0].mxu0
  %4091 = vdwg.mxu0
  %v4093 = vsel %vm1673, %v3445, 0
  %v4096 = vsel %vm3450, %v716, 0
  %4098 = vmatprep.subr.bf16.mxu0 0
  %4099 = vmatpush1.bf16.msra.mxu0 %v4096
  %4100 = vmatprep.subr.bf16.mxu0 0
  %4101 = vmatpush1.bf16.msra.mxu0 0
  %4102 = vmatprep.subr.bf16.mxu0 0
  %4103 = vmatpush1.bf16.msra.mxu0 0
  %4104 = vmatprep.subr.bf16.mxu0 0
  %4105 = vmatpush1.bf16.msra.mxu0 0
  %4106 = vmatprep.subr.bf16.mxu0 0
  %4107 = vmatpush1.bf16.msra.mxu0 0
  %4108 = vmatprep.subr.bf16.mxu0 0
  %4109 = vmatpush1.bf16.msra.mxu0 0
  %4110 = vmatprep.subr.bf16.mxu0 0
  %4111 = vmatpush1.bf16.msra.mxu0 0
  %4112 = vmatprep.subr.bf16.mxu0 0
  %4113 = vmatpush1.bf16.msra.mxu0 0
  %4114 = vmatprep.subr.bf16.mxu0 0
  %4115 = vmatpush1.bf16.msra.mxu0 0
  %4116 = vmatprep.subr.bf16.mxu0 0
  %4117 = vmatpush1.bf16.msra.mxu0 0
  %4118 = vmatprep.subr.bf16.mxu0 0
  %4119 = vmatpush1.bf16.msra.mxu0 0
  %4120 = vmatprep.subr.bf16.mxu0 0
  %4121 = vmatpush1.bf16.msra.mxu0 0
  %4122 = vmatprep.subr.bf16.mxu0 0
  %4123 = vmatpush1.bf16.msra.mxu0 0
  %4124 = vmatprep.subr.bf16.mxu0 0
  %4125 = vmatpush1.bf16.msra.mxu0 0
  %4126 = vmatprep.subr.bf16.mxu0 0
  %4127 = vmatpush1.bf16.msra.mxu0 0
  %4128 = vmatprep.subr.bf16.mxu0 0
  %4129 = vmatpush1.bf16.msra.mxu0 0
  %4130 = vmatprep.mubr.bf16.mxu0 0
  %4131 = vmatmul.mubr.bf16.gmra.mrb[0].mxu0 %v4093
  %v4132 = vpop.f32.mrb[0].mxu0
  %v4133 = vadd.f32 0.0, %v4132
  %v4134 = vpop.f32.mrb[0].mxu0
  %v4135 = vpop.f32.mrb[0].mxu0
  %v4136 = vpop.f32.mrb[0].mxu0
  %4137 = vdwg.mxu0
  %v4139 = vsel %vm1673, %v3446, 0
  %v4142 = vsel %vm3450, %v717, 0
  %4144 = vmatprep.subr.bf16.mxu0 0
  %4145 = vmatpush1.bf16.msra.mxu0 %v4142
  %4146 = vmatprep.subr.bf16.mxu0 0
  %4147 = vmatpush1.bf16.msra.mxu0 0
  %4148 = vmatprep.subr.bf16.mxu0 0
  %4149 = vmatpush1.bf16.msra.mxu0 0
  %4150 = vmatprep.subr.bf16.mxu0 0
  %4151 = vmatpush1.bf16.msra.mxu0 0
  %4152 = vmatprep.subr.bf16.mxu0 0
  %4153 = vmatpush1.bf16.msra.mxu0 0
  %4154 = vmatprep.subr.bf16.mxu0 0
  %4155 = vmatpush1.bf16.msra.mxu0 0
  %4156 = vmatprep.subr.bf16.mxu0 0
  %4157 = vmatpush1.bf16.msra.mxu0 0
  %4158 = vmatprep.subr.bf16.mxu0 0
  %4159 = vmatpush1.bf16.msra.mxu0 0
  %4160 = vmatprep.subr.bf16.mxu0 0
  %4161 = vmatpush1.bf16.msra.mxu0 0
  %4162 = vmatprep.subr.bf16.mxu0 0
  %4163 = vmatpush1.bf16.msra.mxu0 0
  %4164 = vmatprep.subr.bf16.mxu0 0
  %4165 = vmatpush1.bf16.msra.mxu0 0
  %4166 = vmatprep.subr.bf16.mxu0 0
  %4167 = vmatpush1.bf16.msra.mxu0 0
  %4168 = vmatprep.subr.bf16.mxu0 0
  %4169 = vmatpush1.bf16.msra.mxu0 0
  %4170 = vmatprep.subr.bf16.mxu0 0
  %4171 = vmatpush1.bf16.msra.mxu0 0
  %4172 = vmatprep.subr.bf16.mxu0 0
  %4173 = vmatpush1.bf16.msra.mxu0 0
  %4174 = vmatprep.subr.bf16.mxu0 0
  %4175 = vmatpush1.bf16.msra.mxu0 0
  %4176 = vmatprep.mubr.bf16.mxu0 0
  %4177 = vmatmul.mubr.bf16.gmra.mrb[0].mxu0 %v4139
  %v4178 = vpop.f32.mrb[0].mxu0
  %v4179 = vadd.f32 0.0, %v4178
  %v4180 = vpop.f32.mrb[0].mxu0
  %v4181 = vpop.f32.mrb[0].mxu0
  %v4182 = vpop.f32.mrb[0].mxu0
  %4183 = vdwg.mxu0
  %v4184 = vadd.f32 %v3489, %v3581
  %v4185 = vadd.f32 %v3535, %v3627
  %v4186 = vadd.f32 %v4184, %v3673
  %v4187 = vadd.f32 %v4185, %v3719
  %v4188 = vadd.f32 %v4186, %v3765
  %v4189 = vadd.f32 %v4187, %v3811
  %v4190 = vadd.f32 %v4188, %v3857
  %v4191 = vadd.f32 %v4189, %v3903
  %v4192 = vadd.f32 %v4190, %v3949
  %v4193 = vadd.f32 %v4191, %v3995
  %v4194 = vadd.f32 %v4192, %v4041
  %v4195 = vadd.f32 %v4193, %v4087
  %v4196 = vadd.f32 %v4194, %v4133
  %v4197 = vadd.f32 %v4195, %v4179
  %v4198 = vlaneseq
  %v4199 = vshrl.u32 %v4198, 7
  %v4200 = vsub.s32 0, %v4199
  %v4201 = vrot.slane %v621, %v4200
  %v4202 = vadd.f32 %v4196, %v4201
  %v4203 = vadd.f32 %v4197, %v4201
  %v4204 = vadd.f32 %v4202, %v619
  %v4205 = vadd.f32 %v4203, %v620
  %v4206 = vsel %vm121, %v4204, 0.0
  %4207 = vadd.xlane.f32.xlu0 %v4206
  %v4208 = vpop.xlane.xlu0 %4207
  %v4209 = vsel %vm121, %v4205, 0.0
  %4210 = vadd.xlane.f32.xlu0 %v4209
  %v4211 = vpop.xlane.xlu0 %4210
  %v4212 = vrcp.pop 32.0
  %v4213 = vmul.f32 %v4208, %v4212
  %v4214 = vmul.f32 %v4211, %v4212
  %v4215 = vsub.f32 %v4204, %v4213
  %v4216 = vsub.f32 %v4205, %v4214
  %v4217 = vmul.f32 %v4215, %v4215
  %v4218 = vmul.f32 %v4216, %v4216
  %v4219 = vsel %vm121, %v4217, 0.0
  %4220 = vadd.xlane.f32.xlu0 %v4219
  %v4221 = vpop.xlane.xlu0 %4220
  %v4222 = vsel %vm121, %v4218, 0.0
  %4223 = vadd.xlane.f32.xlu0 %v4222
  %v4224 = vpop.xlane.xlu0 %4223
  %v4225 = vmul.f32 %v4221, %v4212
  %v4226 = vmul.f32 %v4224, %v4212
  %v4227 = vadd.f32 %v4225, 1e-12
  %v4228 = vadd.f32 %v4226, 1e-12
  %v4229 = vrsqrt.pop %v4227
  %v4230 = vrsqrt.pop %v4228
  %v4231 = vmul.f32 %v4215, %v4229
  %v4232 = vmul.f32 %v4216, %v4230
  %v4233 = vlaneseq
  %v4234 = vshrl.u32 %v4233, 7
  %v4235 = vsub.s32 1, %v4234
  %v4236 = vrot.slane %v621, %v4235
  %v4237 = vmul.f32 %v4231, %v4236
  %v4238 = vmul.f32 %v4232, %v4236
  %v4239 = vlaneseq
  %v4240 = vshrl.u32 %v4239, 7
  %v4241 = vsub.s32 2, %v4240
  %v4242 = vrot.slane %v621, %v4241
  %v4243 = vadd.f32 %v4237, %v4242
  %v4244 = vadd.f32 %v4238, %v4242
  %v4245 = vld [vmem:[%s10] sm:$0xf]
  %v4246 = vld [vmem:[%s10 + $0x4] sm:$0xf]
  %v4247 = vld [vmem:[%s10 + $0x8] sm:$0xf]
  %v4248 = vld [vmem:[%s10 + $0xc] sm:$0xf]
  %v4249 = vpack.c.bf16 %v4244, %v4243
  %v4250 = vlaneseq
  %v4251 = vshrl.u32 %v4250, 7
  %v4252 = vsub.s32 0, %v4251
  %v4253 = vrot.slane %v47, %v4252
  %v4258 = vunpack.c.l.b16 %v4245
  %v4259 = vunpack.c.l.b16 %v4246
  %v4260 = vunpack.c.l.b16 %v4247
  %v4261 = vunpack.c.l.b16 %v4248
  %v4262 = vpack.c.b16 %v4259, %v4258
  %v4263 = vpack.c.b16 %v4261, %v4260
  %v4267 = vsel %vm121, %v4249, 0
  %4269 = vmatprep.subr.bf16.mxu0 0
  %4270 = vmatpush1.bf16.msra.mxu0 %v4262
  %4271 = vmatprep.subr.bf16.mxu0 0
  %4272 = vmatpush1.bf16.msra.mxu0 %v4263
  %4273 = vmatprep.subr.bf16.mxu0 0
  %4274 = vmatpush1.bf16.msra.mxu0 0
  %4275 = vmatprep.subr.bf16.mxu0 0
  %4276 = vmatpush1.bf16.msra.mxu0 0
  %4277 = vmatprep.subr.bf16.mxu0 0
  %4278 = vmatpush1.bf16.msra.mxu0 0
  %4279 = vmatprep.subr.bf16.mxu0 0
  %4280 = vmatpush1.bf16.msra.mxu0 0
  %4281 = vmatprep.subr.bf16.mxu0 0
  %4282 = vmatpush1.bf16.msra.mxu0 0
  %4283 = vmatprep.subr.bf16.mxu0 0
  %4284 = vmatpush1.bf16.msra.mxu0 0
  %4285 = vmatprep.subr.bf16.mxu0 0
  %4286 = vmatpush1.bf16.msra.mxu0 0
  %4287 = vmatprep.subr.bf16.mxu0 0
  %4288 = vmatpush1.bf16.msra.mxu0 0
  %4289 = vmatprep.subr.bf16.mxu0 0
  %4290 = vmatpush1.bf16.msra.mxu0 0
  %4291 = vmatprep.subr.bf16.mxu0 0
  %4292 = vmatpush1.bf16.msra.mxu0 0
  %4293 = vmatprep.subr.bf16.mxu0 0
  %4294 = vmatpush1.bf16.msra.mxu0 0
  %4295 = vmatprep.subr.bf16.mxu0 0
  %4296 = vmatpush1.bf16.msra.mxu0 0
  %4297 = vmatprep.subr.bf16.mxu0 0
  %4298 = vmatpush1.bf16.msra.mxu0 0
  %4299 = vmatprep.subr.bf16.mxu0 0
  %4300 = vmatpush1.bf16.msra.mxu0 0
  %4301 = vmatprep.mubr.bf16.mxu0 0
  %4302 = vmatmul.mubr.bf16.gmra.mrb[0].mxu0 %v4267
  %v4303 = vpop.f32.mrb[0].mxu0
  %v4304 = vadd.f32 %v4253, %v4303
  %v4305 = vpop.f32.mrb[0].mxu0
  %v4306 = vpop.f32.mrb[0].mxu0
  %v4307 = vadd.f32 %v4253, %v4306
  %v4308 = vpop.f32.mrb[0].mxu0
  %4309 = vdwg.mxu0
  %v4310 = vmul.f32 %v4304, %v4304
  %v4311 = vmul.f32 %v4307, %v4307
  %v4312 = vmul.f32 %v4304, %v4310
  %v4313 = vmul.f32 %v4307, %v4311
  %v4314 = vmul.f32 %v4312, 0.044715
  %v4315 = vmul.f32 %v4313, 0.044715
  %v4316 = vadd.f32 %v4304, %v4314
  %v4317 = vadd.f32 %v4307, %v4315
  %v4318 = vmul.f32 %v4316, 0.7978846
  %v4319 = vmul.f32 %v4317, 0.7978846
  %v4320 = vtanh.pop %v4318
  %v4321 = vtanh.pop %v4319
  %v4322 = vadd.f32 %v4320, 1.0
  %v4323 = vadd.f32 %v4321, 1.0
  %v4324 = vmul.f32 %v4322, 0.5
  %v4325 = vmul.f32 %v4323, 0.5
  %v4326 = vmul.f32 %v4304, %v4324
  %v4327 = vmul.f32 %v4307, %v4325
  %v4328 = vld [vmem:[%s9] sm:$0xf]
  %v4329 = vld [vmem:[%s9 + $0x4] sm:$0xf]
  %v4330 = vld [vmem:[%s9 + $0x8] sm:$0xf]
  %v4331 = vld [vmem:[%s9 + $0xc] sm:$0xf]
  %v4332 = vld [vmem:[%s9 + $0x10] sm:$0xf]
  %v4333 = vld [vmem:[%s9 + $0x14] sm:$0xf]
  %v4334 = vld [vmem:[%s9 + $0x18] sm:$0xf]
  %v4335 = vld [vmem:[%s9 + $0x1c] sm:$0xf]
  %v4336 = vld [vmem:[%s9 + $0x20] sm:$0xf]
  %v4337 = vld [vmem:[%s9 + $0x24] sm:$0xf]
  %v4338 = vld [vmem:[%s9 + $0x28] sm:$0xf]
  %v4339 = vld [vmem:[%s9 + $0x2c] sm:$0xf]
  %v4340 = vld [vmem:[%s9 + $0x30] sm:$0xf]
  %v4341 = vld [vmem:[%s9 + $0x34] sm:$0xf]
  %v4342 = vld [vmem:[%s9 + $0x38] sm:$0xf]
  %v4343 = vld [vmem:[%s9 + $0x3c] sm:$0xf]
  %v4344 = vpack.c.bf16 %v4327, %v4326
  %v4345 = vlaneseq
  %v4346 = vshrl.u32 %v4345, 7
  %v4347 = vsub.s32 3, %v4346
  %v4348 = vrot.slane %v621, %v4347
  %v4365 = vunpack.c.l.b16 %v4328
  %v4366 = vunpack.c.l.b16 %v4329
  %v4367 = vunpack.c.l.b16 %v4330
  %v4368 = vunpack.c.l.b16 %v4331
  %v4369 = vunpack.c.l.b16 %v4332
  %v4370 = vunpack.c.l.b16 %v4333
  %v4371 = vunpack.c.l.b16 %v4334
  %v4372 = vunpack.c.l.b16 %v4335
  %v4373 = vunpack.c.l.b16 %v4336
  %v4374 = vunpack.c.l.b16 %v4337
  %v4375 = vunpack.c.l.b16 %v4338
  %v4376 = vunpack.c.l.b16 %v4339
  %v4377 = vunpack.c.l.b16 %v4340
  %v4378 = vunpack.c.l.b16 %v4341
  %v4379 = vunpack.c.l.b16 %v4342
  %v4380 = vunpack.c.l.b16 %v4343
  %v4381 = vpack.c.b16 %v4366, %v4365
  %v4382 = vpack.c.b16 %v4368, %v4367
  %v4383 = vpack.c.b16 %v4370, %v4369
  %v4384 = vpack.c.b16 %v4372, %v4371
  %v4385 = vpack.c.b16 %v4374, %v4373
  %v4386 = vpack.c.b16 %v4376, %v4375
  %v4387 = vpack.c.b16 %v4378, %v4377
  %v4388 = vpack.c.b16 %v4380, %v4379
  %4397 = vmatprep.subr.bf16.mxu0 0
  %4398 = vmatpush1.bf16.msra.mxu0 %v4381
  %4399 = vmatprep.subr.bf16.mxu0 0
  %4400 = vmatpush1.bf16.msra.mxu0 %v4382
  %4401 = vmatprep.subr.bf16.mxu0 0
  %4402 = vmatpush1.bf16.msra.mxu0 %v4383
  %4403 = vmatprep.subr.bf16.mxu0 0
  %4404 = vmatpush1.bf16.msra.mxu0 %v4384
  %4405 = vmatprep.subr.bf16.mxu0 0
  %4406 = vmatpush1.bf16.msra.mxu0 %v4385
  %4407 = vmatprep.subr.bf16.mxu0 0
  %4408 = vmatpush1.bf16.msra.mxu0 %v4386
  %4409 = vmatprep.subr.bf16.mxu0 0
  %4410 = vmatpush1.bf16.msra.mxu0 %v4387
  %4411 = vmatprep.subr.bf16.mxu0 0
  %4412 = vmatpush1.bf16.msra.mxu0 %v4388
  %4413 = vmatprep.subr.bf16.mxu0 0
  %4414 = vmatpush1.bf16.msra.mxu0 0
  %4415 = vmatprep.subr.bf16.mxu0 0
  %4416 = vmatpush1.bf16.msra.mxu0 0
  %4417 = vmatprep.subr.bf16.mxu0 0
  %4418 = vmatpush1.bf16.msra.mxu0 0
  %4419 = vmatprep.subr.bf16.mxu0 0
  %4420 = vmatpush1.bf16.msra.mxu0 0
  %4421 = vmatprep.subr.bf16.mxu0 0
  %4422 = vmatpush1.bf16.msra.mxu0 0
  %4423 = vmatprep.subr.bf16.mxu0 0
  %4424 = vmatpush1.bf16.msra.mxu0 0
  %4425 = vmatprep.subr.bf16.mxu0 0
  %4426 = vmatpush1.bf16.msra.mxu0 0
  %4427 = vmatprep.subr.bf16.mxu0 0
  %4428 = vmatpush1.bf16.msra.mxu0 0
  %4429 = vmatprep.mubr.bf16.mxu0 0
  %4430 = vmatmul.mubr.bf16.gmra.mrb[0].mxu0 %v4344
  %v4431 = vpop.f32.mrb[0].mxu0
  %v4432 = vadd.f32 %v4348, %v4431
  %v4433 = vpop.f32.mrb[0].mxu0
  %v4434 = vpop.f32.mrb[0].mxu0
  %v4435 = vadd.f32 %v4348, %v4434
  %v4436 = vpop.f32.mrb[0].mxu0
  %4437 = vdwg.mxu0
  %v4438 = vadd.f32 %v4432, %v4243
  %v4439 = vadd.f32 %v4435, %v4244
  %v4440 = vsel %vm121, %v4438, 0.0
  %4441 = vadd.xlane.f32.xlu0 %v4440
  %v4442 = vpop.xlane.xlu0 %4441
  %v4443 = vsel %vm121, %v4439, 0.0
  %4444 = vadd.xlane.f32.xlu0 %v4443
  %v4445 = vpop.xlane.xlu0 %4444
  %v4446 = vmul.f32 %v4442, %v4212
  %v4447 = vmul.f32 %v4445, %v4212
  %v4448 = vsub.f32 %v4438, %v4446
  %v4449 = vsub.f32 %v4439, %v4447
  %v4450 = vmul.f32 %v4448, %v4448
  %v4451 = vmul.f32 %v4449, %v4449
  %v4452 = vsel %vm121, %v4450, 0.0
  %4453 = vadd.xlane.f32.xlu0 %v4452
  %v4454 = vpop.xlane.xlu0 %4453
  %v4455 = vsel %vm121, %v4451, 0.0
  %4456 = vadd.xlane.f32.xlu0 %v4455
  %v4457 = vpop.xlane.xlu0 %4456
  %v4458 = vmul.f32 %v4454, %v4212
  %v4459 = vmul.f32 %v4457, %v4212
  %v4460 = vadd.f32 %v4458, 1e-12
  %v4461 = vadd.f32 %v4459, 1e-12
  %v4462 = vrsqrt.pop %v4460
  %v4463 = vrsqrt.pop %v4461
  %v4464 = vmul.f32 %v4448, %v4462
  %v4465 = vmul.f32 %v4449, %v4463
  %v4466 = vlaneseq
  %v4467 = vshrl.u32 %v4466, 7
  %v4468 = vsub.s32 4, %v4467
  %v4469 = vrot.slane %v621, %v4468
  %v4470 = vmul.f32 %v4464, %v4469
  %v4471 = vmul.f32 %v4465, %v4469
  %v4472 = vlaneseq
  %v4473 = vshrl.u32 %v4472, 7
  %v4474 = vsub.s32 5, %v4473
  %v4475 = vrot.slane %v621, %v4474
  %v4476 = vadd.f32 %v4470, %v4475
  %v4477 = vadd.f32 %v4471, %v4475
  %s4478 = scalar_lea.vmem %s2, 8
  %v4479 = vld [vmem:[%s4478] sm:$0x3f]
  %s4480 = scalar_lea.vmem %s6, 256
  %v4481 = vld [vmem:[%s4480] sm:$0xf]
  %v4482 = vld [vmem:[%s4480 + $0x4] sm:$0xf]
  %v4483 = vld [vmem:[%s4480 + $0x8] sm:$0xf]
  %v4484 = vld [vmem:[%s4480 + $0xc] sm:$0xf]
  %v4485 = vld [vmem:[%s4480 + $0x10] sm:$0xf]
  %v4486 = vld [vmem:[%s4480 + $0x14] sm:$0xf]
  %v4487 = vld [vmem:[%s4480 + $0x18] sm:$0xf]
  %v4488 = vld [vmem:[%s4480 + $0x1c] sm:$0xf]
  %v4489 = vld [vmem:[%s4480 + $0x20] sm:$0xf]
  %v4490 = vld [vmem:[%s4480 + $0x24] sm:$0xf]
  %v4491 = vld [vmem:[%s4480 + $0x28] sm:$0xf]
  %v4492 = vld [vmem:[%s4480 + $0x2c] sm:$0xf]
  %v4493 = vld [vmem:[%s4480 + $0x30] sm:$0xf]
  %v4494 = vld [vmem:[%s4480 + $0x34] sm:$0xf]
  %v4495 = vld [vmem:[%s4480 + $0x38] sm:$0xf]
  %v4496 = vld [vmem:[%s4480 + $0x3c] sm:$0xf]
  %v4497 = vld [vmem:[%s4480 + $0x40] sm:$0xf]
  %v4498 = vld [vmem:[%s4480 + $0x44] sm:$0xf]
  %v4499 = vld [vmem:[%s4480 + $0x48] sm:$0xf]
  %v4500 = vld [vmem:[%s4480 + $0x4c] sm:$0xf]
  %v4501 = vld [vmem:[%s4480 + $0x50] sm:$0xf]
  %v4502 = vld [vmem:[%s4480 + $0x54] sm:$0xf]
  %v4503 = vld [vmem:[%s4480 + $0x58] sm:$0xf]
  %v4504 = vld [vmem:[%s4480 + $0x5c] sm:$0xf]
  %v4505 = vld [vmem:[%s4480 + $0x60] sm:$0xf]
  %v4506 = vld [vmem:[%s4480 + $0x64] sm:$0xf]
  %v4507 = vld [vmem:[%s4480 + $0x68] sm:$0xf]
  %v4508 = vld [vmem:[%s4480 + $0x6c] sm:$0xf]
  %v4509 = vld [vmem:[%s4480 + $0x70] sm:$0xf]
  %v4510 = vld [vmem:[%s4480 + $0x74] sm:$0xf]
  %v4511 = vld [vmem:[%s4480 + $0x78] sm:$0xf]
  %v4512 = vld [vmem:[%s4480 + $0x7c] sm:$0xf]
  %v4513 = vld [vmem:[%s4480 + $0x80] sm:$0xf]
  %v4514 = vld [vmem:[%s4480 + $0x84] sm:$0xf]
  %v4515 = vld [vmem:[%s4480 + $0x88] sm:$0xf]
  %v4516 = vld [vmem:[%s4480 + $0x8c] sm:$0xf]
  %v4517 = vld [vmem:[%s4480 + $0x90] sm:$0xf]
  %v4518 = vld [vmem:[%s4480 + $0x94] sm:$0xf]
  %v4519 = vld [vmem:[%s4480 + $0x98] sm:$0xf]
  %v4520 = vld [vmem:[%s4480 + $0x9c] sm:$0xf]
  %v4521 = vld [vmem:[%s4480 + $0xa0] sm:$0xf]
  %v4522 = vld [vmem:[%s4480 + $0xa4] sm:$0xf]
  %v4523 = vld [vmem:[%s4480 + $0xa8] sm:$0xf]
  %v4524 = vld [vmem:[%s4480 + $0xac] sm:$0xf]
  %v4525 = vld [vmem:[%s4480 + $0xb0] sm:$0xf]
  %v4526 = vld [vmem:[%s4480 + $0xb4] sm:$0xf]
  %v4527 = vld [vmem:[%s4480 + $0xb8] sm:$0xf]
  %v4528 = vld [vmem:[%s4480 + $0xbc] sm:$0xf]
  %v4529 = vld [vmem:[%s4480 + $0xc0] sm:$0xf]
  %v4530 = vld [vmem:[%s4480 + $0xc4] sm:$0xf]
  %v4531 = vld [vmem:[%s4480 + $0xc8] sm:$0xf]
  %v4532 = vld [vmem:[%s4480 + $0xcc] sm:$0xf]
  %v4533 = vld [vmem:[%s4480 + $0xd0] sm:$0xf]
  %v4534 = vld [vmem:[%s4480 + $0xd4] sm:$0xf]
  %v4535 = vld [vmem:[%s4480 + $0xd8] sm:$0xf]
  %v4536 = vld [vmem:[%s4480 + $0xdc] sm:$0xf]
  %v4537 = vld [vmem:[%s4480 + $0xe0] sm:$0xf]
  %v4538 = vld [vmem:[%s4480 + $0xe4] sm:$0xf]
  %v4539 = vld [vmem:[%s4480 + $0xe8] sm:$0xf]
  %v4540 = vld [vmem:[%s4480 + $0xec] sm:$0xf]
  %v4541 = vld [vmem:[%s4480 + $0xf0] sm:$0xf]
  %v4542 = vld [vmem:[%s4480 + $0xf4] sm:$0xf]
  %v4543 = vld [vmem:[%s4480 + $0xf8] sm:$0xf]
  %v4544 = vld [vmem:[%s4480 + $0xfc] sm:$0xf]
  %s4545 = scalar_lea.vmem %s7, 16
  %v4546 = vld [vmem:[%s4545] sm:$0x1]
  %v4547 = vld [vmem:[%s4545 + $0x1] sm:$0x1]
  %v4548 = vld [vmem:[%s4545 + $0x2] sm:$0x1]
  %v4549 = vld [vmem:[%s4545 + $0x3] sm:$0x1]
  %v4550 = vld [vmem:[%s4545 + $0x4] sm:$0x1]
  %v4551 = vld [vmem:[%s4545 + $0x5] sm:$0x1]
  %v4552 = vld [vmem:[%s4545 + $0x6] sm:$0x1]
  %v4553 = vld [vmem:[%s4545 + $0x7] sm:$0x1]
  %v4554 = vld [vmem:[%s4545 + $0x8] sm:$0x1]
  %v4555 = vld [vmem:[%s4545 + $0x9] sm:$0x1]
  %v4556 = vld [vmem:[%s4545 + $0xa] sm:$0x1]
  %v4557 = vld [vmem:[%s4545 + $0xb] sm:$0x1]
  %v4558 = vld [vmem:[%s4545 + $0xc] sm:$0x1]
  %v4559 = vld [vmem:[%s4545 + $0xd] sm:$0x1]
  %v4560 = vld [vmem:[%s4545 + $0xe] sm:$0x1]
  %v4561 = vld [vmem:[%s4545 + $0xf] sm:$0x1]
  %s4562 = scalar_lea.vmem %s8, 32
  %v4563 = vld [vmem:[%s4562] sm:$0x3]
  %v4564 = vld [vmem:[%s4562 + $0x2] sm:$0x3]
  %v4565 = vld [vmem:[%s4562 + $0x4] sm:$0x3]
  %v4566 = vld [vmem:[%s4562 + $0x6] sm:$0x3]
  %v4567 = vld [vmem:[%s4562 + $0x8] sm:$0x3]
  %v4568 = vld [vmem:[%s4562 + $0xa] sm:$0x3]
  %v4569 = vld [vmem:[%s4562 + $0xc] sm:$0x3]
  %v4570 = vld [vmem:[%s4562 + $0xe] sm:$0x3]
  %v4571 = vld [vmem:[%s4562 + $0x10] sm:$0x3]
  %v4572 = vld [vmem:[%s4562 + $0x12] sm:$0x3]
  %v4573 = vld [vmem:[%s4562 + $0x14] sm:$0x3]
  %v4574 = vld [vmem:[%s4562 + $0x16] sm:$0x3]
  %v4575 = vld [vmem:[%s4562 + $0x18] sm:$0x3]
  %v4576 = vld [vmem:[%s4562 + $0x1a] sm:$0x3]
  %v4577 = vld [vmem:[%s4562 + $0x1c] sm:$0x3]
  %v4578 = vld [vmem:[%s4562 + $0x1e] sm:$0x3]
  %v4579 = vpack.c.bf16 %v4476, %v4476
  %v4580 = vpack.c.bf16 %v4477, %v4477
  %v4597 = vlaneseq
  %v4598 = vshrl.u32 %v4597, 7
  %v4599 = vsub.s32 0, %v4598
  %v4600 = vrot.slane %v4546, %v4599
  %v4601 = vlaneseq
  %v4602 = vshrl.u32 %v4601, 7
  %v4603 = vsub.s32 0, %v4602
  %v4604 = vrot.slane %v4547, %v4603
  %v4605 = vlaneseq
  %v4606 = vshrl.u32 %v4605, 7
  %v4607 = vsub.s32 0, %v4606
  %v4608 = vrot.slane %v4548, %v4607
  %v4609 = vlaneseq
  %v4610 = vshrl.u32 %v4609, 7
  %v4611 = vsub.s32 0, %v4610
  %v4612 = vrot.slane %v4549, %v4611
  %v4613 = vlaneseq
  %v4614 = vshrl.u32 %v4613, 7
  %v4615 = vsub.s32 0, %v4614
  %v4616 = vrot.slane %v4550, %v4615
  %v4617 = vlaneseq
  %v4618 = vshrl.u32 %v4617, 7
  %v4619 = vsub.s32 0, %v4618
  %v4620 = vrot.slane %v4551, %v4619
  %v4621 = vlaneseq
  %v4622 = vshrl.u32 %v4621, 7
  %v4623 = vsub.s32 0, %v4622
  %v4624 = vrot.slane %v4552, %v4623
  %v4625 = vlaneseq
  %v4626 = vshrl.u32 %v4625, 7
  %v4627 = vsub.s32 0, %v4626
  %v4628 = vrot.slane %v4553, %v4627
  %v4629 = vlaneseq
  %v4630 = vshrl.u32 %v4629, 7
  %v4631 = vsub.s32 0, %v4630
  %v4632 = vrot.slane %v4554, %v4631
  %v4633 = vlaneseq
  %v4634 = vshrl.u32 %v4633, 7
  %v4635 = vsub.s32 0, %v4634
  %v4636 = vrot.slane %v4555, %v4635
  %v4637 = vlaneseq
  %v4638 = vshrl.u32 %v4637, 7
  %v4639 = vsub.s32 0, %v4638
  %v4640 = vrot.slane %v4556, %v4639
  %v4641 = vlaneseq
  %v4642 = vshrl.u32 %v4641, 7
  %v4643 = vsub.s32 0, %v4642
  %v4644 = vrot.slane %v4557, %v4643
  %v4645 = vlaneseq
  %v4646 = vshrl.u32 %v4645, 7
  %v4647 = vsub.s32 0, %v4646
  %v4648 = vrot.slane %v4558, %v4647
  %v4649 = vlaneseq
  %v4650 = vshrl.u32 %v4649, 7
  %v4651 = vsub.s32 0, %v4650
  %v4652 = vrot.slane %v4559, %v4651
  %v4653 = vlaneseq
  %v4654 = vshrl.u32 %v4653, 7
  %v4655 = vsub.s32 0, %v4654
  %v4656 = vrot.slane %v4560, %v4655
  %v4657 = vlaneseq
  %v4658 = vshrl.u32 %v4657, 7
  %v4659 = vsub.s32 0, %v4658
  %v4660 = vrot.slane %v4561, %v4659
  %v4681 = vunpack.c.l.b16 %v4481
  %v4682 = vunpack.c.l.b16 %v4482
  %v4683 = vunpack.c.l.b16 %v4483
  %v4684 = vunpack.c.l.b16 %v4484
  %v4685 = vpack.c.b16 %v4682, %v4681
  %v4686 = vpack.c.b16 %v4684, %v4683
  %v4690 = vsel %vm121, %v4579, 0
  %4692 = vmatprep.subr.bf16.mxu0 0
  %4693 = vmatpush1.bf16.msra.mxu0 %v4685
  %4694 = vmatprep.subr.bf16.mxu0 0
  %4695 = vmatpush1.bf16.msra.mxu0 %v4686
  %4696 = vmatprep.subr.bf16.mxu0 0
  %4697 = vmatpush1.bf16.msra.mxu0 0
  %4698 = vmatprep.subr.bf16.mxu0 0
  %4699 = vmatpush1.bf16.msra.mxu0 0
  %4700 = vmatprep.subr.bf16.mxu0 0
  %4701 = vmatpush1.bf16.msra.mxu0 0
  %4702 = vmatprep.subr.bf16.mxu0 0
  %4703 = vmatpush1.bf16.msra.mxu0 0
  %4704 = vmatprep.subr.bf16.mxu0 0
  %4705 = vmatpush1.bf16.msra.mxu0 0
  %4706 = vmatprep.subr.bf16.mxu0 0
  %4707 = vmatpush1.bf16.msra.mxu0 0
  %4708 = vmatprep.subr.bf16.mxu0 0
  %4709 = vmatpush1.bf16.msra.mxu0 0
  %4710 = vmatprep.subr.bf16.mxu0 0
  %4711 = vmatpush1.bf16.msra.mxu0 0
  %4712 = vmatprep.subr.bf16.mxu0 0
  %4713 = vmatpush1.bf16.msra.mxu0 0
  %4714 = vmatprep.subr.bf16.mxu0 0
  %4715 = vmatpush1.bf16.msra.mxu0 0
  %4716 = vmatprep.subr.bf16.mxu0 0
  %4717 = vmatpush1.bf16.msra.mxu0 0
  %4718 = vmatprep.subr.bf16.mxu0 0
  %4719 = vmatpush1.bf16.msra.mxu0 0
  %4720 = vmatprep.subr.bf16.mxu0 0
  %4721 = vmatpush1.bf16.msra.mxu0 0
  %4722 = vmatprep.subr.bf16.mxu0 0
  %4723 = vmatpush1.bf16.msra.mxu0 0
  %4724 = vmatprep.mubr.bf16.mxu0 0
  %4725 = vmatmul.mubr.bf16.gmra.mrb[0].mxu0 %v4690
  %v4726 = vpop.f32.mrb[0].mxu0
  %v4727 = vadd.f32 %v4600, %v4726
  %v4728 = vpop.f32.mrb[0].mxu0
  %v4729 = vpop.f32.mrb[0].mxu0
  %v4730 = vpop.f32.mrb[0].mxu0
  %4731 = vdwg.mxu0
  %v4736 = vunpack.c.l.b16 %v4485
  %v4737 = vunpack.c.l.b16 %v4486
  %v4738 = vunpack.c.l.b16 %v4487
  %v4739 = vunpack.c.l.b16 %v4488
  %v4740 = vpack.c.b16 %v4737, %v4736
  %v4741 = vpack.c.b16 %v4739, %v4738
  %v4745 = vsel %vm121, %v4580, 0
  %4747 = vmatprep.subr.bf16.mxu0 0
  %4748 = vmatpush1.bf16.msra.mxu0 %v4740
  %4749 = vmatprep.subr.bf16.mxu0 0
  %4750 = vmatpush1.bf16.msra.mxu0 %v4741
  %4751 = vmatprep.subr.bf16.mxu0 0
  %4752 = vmatpush1.bf16.msra.mxu0 0
  %4753 = vmatprep.subr.bf16.mxu0 0
  %4754 = vmatpush1.bf16.msra.mxu0 0
  %4755 = vmatprep.subr.bf16.mxu0 0
  %4756 = vmatpush1.bf16.msra.mxu0 0
  %4757 = vmatprep.subr.bf16.mxu0 0
  %4758 = vmatpush1.bf16.msra.mxu0 0
  %4759 = vmatprep.subr.bf16.mxu0 0
  %4760 = vmatpush1.bf16.msra.mxu0 0
  %4761 = vmatprep.subr.bf16.mxu0 0
  %4762 = vmatpush1.bf16.msra.mxu0 0
  %4763 = vmatprep.subr.bf16.mxu0 0
  %4764 = vmatpush1.bf16.msra.mxu0 0
  %4765 = vmatprep.subr.bf16.mxu0 0
  %4766 = vmatpush1.bf16.msra.mxu0 0
  %4767 = vmatprep.subr.bf16.mxu0 0
  %4768 = vmatpush1.bf16.msra.mxu0 0
  %4769 = vmatprep.subr.bf16.mxu0 0
  %4770 = vmatpush1.bf16.msra.mxu0 0
  %4771 = vmatprep.subr.bf16.mxu0 0
  %4772 = vmatpush1.bf16.msra.mxu0 0
  %4773 = vmatprep.subr.bf16.mxu0 0
  %4774 = vmatpush1.bf16.msra.mxu0 0
  %4775 = vmatprep.subr.bf16.mxu0 0
  %4776 = vmatpush1.bf16.msra.mxu0 0
  %4777 = vmatprep.subr.bf16.mxu0 0
  %4778 = vmatpush1.bf16.msra.mxu0 0
  %4779 = vmatprep.mubr.bf16.mxu0 0
  %4780 = vmatmul.mubr.bf16.gmra.mrb[0].mxu0 %v4745
  %v4781 = vpop.f32.mrb[0].mxu0
  %v4782 = vadd.f32 %v4604, %v4781
  %v4783 = vpop.f32.mrb[0].mxu0
  %v4784 = vpop.f32.mrb[0].mxu0
  %v4785 = vpop.f32.mrb[0].mxu0
  %4786 = vdwg.mxu0
  %v4791 = vunpack.c.l.b16 %v4489
  %v4792 = vunpack.c.l.b16 %v4490
  %v4793 = vunpack.c.l.b16 %v4491
  %v4794 = vunpack.c.l.b16 %v4492
  %v4795 = vpack.c.b16 %v4792, %v4791
  %v4796 = vpack.c.b16 %v4794, %v4793
  %4799 = vmatprep.subr.bf16.mxu0 0
  %4800 = vmatpush1.bf16.msra.mxu0 %v4795
  %4801 = vmatprep.subr.bf16.mxu0 0
  %4802 = vmatpush1.bf16.msra.mxu0 %v4796
  %4803 = vmatprep.subr.bf16.mxu0 0
  %4804 = vmatpush1.bf16.msra.mxu0 0
  %4805 = vmatprep.subr.bf16.mxu0 0
  %4806 = vmatpush1.bf16.msra.mxu0 0
  %4807 = vmatprep.subr.bf16.mxu0 0
  %4808 = vmatpush1.bf16.msra.mxu0 0
  %4809 = vmatprep.subr.bf16.mxu0 0
  %4810 = vmatpush1.bf16.msra.mxu0 0
  %4811 = vmatprep.subr.bf16.mxu0 0
  %4812 = vmatpush1.bf16.msra.mxu0 0
  %4813 = vmatprep.subr.bf16.mxu0 0
  %4814 = vmatpush1.bf16.msra.mxu0 0
  %4815 = vmatprep.subr.bf16.mxu0 0
  %4816 = vmatpush1.bf16.msra.mxu0 0
  %4817 = vmatprep.subr.bf16.mxu0 0
  %4818 = vmatpush1.bf16.msra.mxu0 0
  %4819 = vmatprep.subr.bf16.mxu0 0
  %4820 = vmatpush1.bf16.msra.mxu0 0
  %4821 = vmatprep.subr.bf16.mxu0 0
  %4822 = vmatpush1.bf16.msra.mxu0 0
  %4823 = vmatprep.subr.bf16.mxu0 0
  %4824 = vmatpush1.bf16.msra.mxu0 0
  %4825 = vmatprep.subr.bf16.mxu0 0
  %4826 = vmatpush1.bf16.msra.mxu0 0
  %4827 = vmatprep.subr.bf16.mxu0 0
  %4828 = vmatpush1.bf16.msra.mxu0 0
  %4829 = vmatprep.subr.bf16.mxu0 0
  %4830 = vmatpush1.bf16.msra.mxu0 0
  %4831 = vmatprep.mubr.bf16.mxu0 0
  %4832 = vmatmul.mubr.bf16.gmra.mrb[0].mxu0 %v4690
  %v4833 = vpop.f32.mrb[0].mxu0
  %v4834 = vadd.f32 %v4608, %v4833
  %v4835 = vpop.f32.mrb[0].mxu0
  %v4836 = vpop.f32.mrb[0].mxu0
  %v4837 = vpop.f32.mrb[0].mxu0
  %4838 = vdwg.mxu0
  %v4843 = vunpack.c.l.b16 %v4493
  %v4844 = vunpack.c.l.b16 %v4494
  %v4845 = vunpack.c.l.b16 %v4495
  %v4846 = vunpack.c.l.b16 %v4496
  %v4847 = vpack.c.b16 %v4844, %v4843
  %v4848 = vpack.c.b16 %v4846, %v4845
  %4851 = vmatprep.subr.bf16.mxu0 0
  %4852 = vmatpush1.bf16.msra.mxu0 %v4847
  %4853 = vmatprep.subr.bf16.mxu0 0
  %4854 = vmatpush1.bf16.msra.mxu0 %v4848
  %4855 = vmatprep.subr.bf16.mxu0 0
  %4856 = vmatpush1.bf16.msra.mxu0 0
  %4857 = vmatprep.subr.bf16.mxu0 0
  %4858 = vmatpush1.bf16.msra.mxu0 0
  %4859 = vmatprep.subr.bf16.mxu0 0
  %4860 = vmatpush1.bf16.msra.mxu0 0
  %4861 = vmatprep.subr.bf16.mxu0 0
  %4862 = vmatpush1.bf16.msra.mxu0 0
  %4863 = vmatprep.subr.bf16.mxu0 0
  %4864 = vmatpush1.bf16.msra.mxu0 0
  %4865 = vmatprep.subr.bf16.mxu0 0
  %4866 = vmatpush1.bf16.msra.mxu0 0
  %4867 = vmatprep.subr.bf16.mxu0 0
  %4868 = vmatpush1.bf16.msra.mxu0 0
  %4869 = vmatprep.subr.bf16.mxu0 0
  %4870 = vmatpush1.bf16.msra.mxu0 0
  %4871 = vmatprep.subr.bf16.mxu0 0
  %4872 = vmatpush1.bf16.msra.mxu0 0
  %4873 = vmatprep.subr.bf16.mxu0 0
  %4874 = vmatpush1.bf16.msra.mxu0 0
  %4875 = vmatprep.subr.bf16.mxu0 0
  %4876 = vmatpush1.bf16.msra.mxu0 0
  %4877 = vmatprep.subr.bf16.mxu0 0
  %4878 = vmatpush1.bf16.msra.mxu0 0
  %4879 = vmatprep.subr.bf16.mxu0 0
  %4880 = vmatpush1.bf16.msra.mxu0 0
  %4881 = vmatprep.subr.bf16.mxu0 0
  %4882 = vmatpush1.bf16.msra.mxu0 0
  %4883 = vmatprep.mubr.bf16.mxu0 0
  %4884 = vmatmul.mubr.bf16.gmra.mrb[0].mxu0 %v4745
  %v4885 = vpop.f32.mrb[0].mxu0
  %v4886 = vadd.f32 %v4612, %v4885
  %v4887 = vpop.f32.mrb[0].mxu0
  %v4888 = vpop.f32.mrb[0].mxu0
  %v4889 = vpop.f32.mrb[0].mxu0
  %4890 = vdwg.mxu0
  %v4895 = vunpack.c.l.b16 %v4497
  %v4896 = vunpack.c.l.b16 %v4498
  %v4897 = vunpack.c.l.b16 %v4499
  %v4898 = vunpack.c.l.b16 %v4500
  %v4899 = vpack.c.b16 %v4896, %v4895
  %v4900 = vpack.c.b16 %v4898, %v4897
  %4903 = vmatprep.subr.bf16.mxu0 0
  %4904 = vmatpush1.bf16.msra.mxu0 %v4899
  %4905 = vmatprep.subr.bf16.mxu0 0
  %4906 = vmatpush1.bf16.msra.mxu0 %v4900
  %4907 = vmatprep.subr.bf16.mxu0 0
  %4908 = vmatpush1.bf16.msra.mxu0 0
  %4909 = vmatprep.subr.bf16.mxu0 0
  %4910 = vmatpush1.bf16.msra.mxu0 0
  %4911 = vmatprep.subr.bf16.mxu0 0
  %4912 = vmatpush1.bf16.msra.mxu0 0
  %4913 = vmatprep.subr.bf16.mxu0 0
  %4914 = vmatpush1.bf16.msra.mxu0 0
  %4915 = vmatprep.subr.bf16.mxu0 0
  %4916 = vmatpush1.bf16.msra.mxu0 0
  %4917 = vmatprep.subr.bf16.mxu0 0
  %4918 = vmatpush1.bf16.msra.mxu0 0
  %4919 = vmatprep.subr.bf16.mxu0 0
  %4920 = vmatpush1.bf16.msra.mxu0 0
  %4921 = vmatprep.subr.bf16.mxu0 0
  %4922 = vmatpush1.bf16.msra.mxu0 0
  %4923 = vmatprep.subr.bf16.mxu0 0
  %4924 = vmatpush1.bf16.msra.mxu0 0
  %4925 = vmatprep.subr.bf16.mxu0 0
  %4926 = vmatpush1.bf16.msra.mxu0 0
  %4927 = vmatprep.subr.bf16.mxu0 0
  %4928 = vmatpush1.bf16.msra.mxu0 0
  %4929 = vmatprep.subr.bf16.mxu0 0
  %4930 = vmatpush1.bf16.msra.mxu0 0
  %4931 = vmatprep.subr.bf16.mxu0 0
  %4932 = vmatpush1.bf16.msra.mxu0 0
  %4933 = vmatprep.subr.bf16.mxu0 0
  %4934 = vmatpush1.bf16.msra.mxu0 0
  %4935 = vmatprep.mubr.bf16.mxu0 0
  %4936 = vmatmul.mubr.bf16.gmra.mrb[0].mxu0 %v4690
  %v4937 = vpop.f32.mrb[0].mxu0
  %v4938 = vadd.f32 %v4616, %v4937
  %v4939 = vpop.f32.mrb[0].mxu0
  %v4940 = vpop.f32.mrb[0].mxu0
  %v4941 = vpop.f32.mrb[0].mxu0
  %4942 = vdwg.mxu0
  %v4947 = vunpack.c.l.b16 %v4501
  %v4948 = vunpack.c.l.b16 %v4502
  %v4949 = vunpack.c.l.b16 %v4503
  %v4950 = vunpack.c.l.b16 %v4504
  %v4951 = vpack.c.b16 %v4948, %v4947
  %v4952 = vpack.c.b16 %v4950, %v4949
  %4955 = vmatprep.subr.bf16.mxu0 0
  %4956 = vmatpush1.bf16.msra.mxu0 %v4951
  %4957 = vmatprep.subr.bf16.mxu0 0
  %4958 = vmatpush1.bf16.msra.mxu0 %v4952
  %4959 = vmatprep.subr.bf16.mxu0 0
  %4960 = vmatpush1.bf16.msra.mxu0 0
  %4961 = vmatprep.subr.bf16.mxu0 0
  %4962 = vmatpush1.bf16.msra.mxu0 0
  %4963 = vmatprep.subr.bf16.mxu0 0
  %4964 = vmatpush1.bf16.msra.mxu0 0
  %4965 = vmatprep.subr.bf16.mxu0 0
  %4966 = vmatpush1.bf16.msra.mxu0 0
  %4967 = vmatprep.subr.bf16.mxu0 0
  %4968 = vmatpush1.bf16.msra.mxu0 0
  %4969 = vmatprep.subr.bf16.mxu0 0
  %4970 = vmatpush1.bf16.msra.mxu0 0
  %4971 = vmatprep.subr.bf16.mxu0 0
  %4972 = vmatpush1.bf16.msra.mxu0 0
  %4973 = vmatprep.subr.bf16.mxu0 0
  %4974 = vmatpush1.bf16.msra.mxu0 0
  %4975 = vmatprep.subr.bf16.mxu0 0
  %4976 = vmatpush1.bf16.msra.mxu0 0
  %4977 = vmatprep.subr.bf16.mxu0 0
  %4978 = vmatpush1.bf16.msra.mxu0 0
  %4979 = vmatprep.subr.bf16.mxu0 0
  %4980 = vmatpush1.bf16.msra.mxu0 0
  %4981 = vmatprep.subr.bf16.mxu0 0
  %4982 = vmatpush1.bf16.msra.mxu0 0
  %4983 = vmatprep.subr.bf16.mxu0 0
  %4984 = vmatpush1.bf16.msra.mxu0 0
  %4985 = vmatprep.subr.bf16.mxu0 0
  %4986 = vmatpush1.bf16.msra.mxu0 0
  %4987 = vmatprep.mubr.bf16.mxu0 0
  %4988 = vmatmul.mubr.bf16.gmra.mrb[0].mxu0 %v4745
  %v4989 = vpop.f32.mrb[0].mxu0
  %v4990 = vadd.f32 %v4620, %v4989
  %v4991 = vpop.f32.mrb[0].mxu0
  %v4992 = vpop.f32.mrb[0].mxu0
  %v4993 = vpop.f32.mrb[0].mxu0
  %4994 = vdwg.mxu0
  %v4999 = vunpack.c.l.b16 %v4505
  %v5000 = vunpack.c.l.b16 %v4506
  %v5001 = vunpack.c.l.b16 %v4507
  %v5002 = vunpack.c.l.b16 %v4508
  %v5003 = vpack.c.b16 %v5000, %v4999
  %v5004 = vpack.c.b16 %v5002, %v5001
  %5007 = vmatprep.subr.bf16.mxu0 0
  %5008 = vmatpush1.bf16.msra.mxu0 %v5003
  %5009 = vmatprep.subr.bf16.mxu0 0
  %5010 = vmatpush1.bf16.msra.mxu0 %v5004
  %5011 = vmatprep.subr.bf16.mxu0 0
  %5012 = vmatpush1.bf16.msra.mxu0 0
  %5013 = vmatprep.subr.bf16.mxu0 0
  %5014 = vmatpush1.bf16.msra.mxu0 0
  %5015 = vmatprep.subr.bf16.mxu0 0
  %5016 = vmatpush1.bf16.msra.mxu0 0
  %5017 = vmatprep.subr.bf16.mxu0 0
  %5018 = vmatpush1.bf16.msra.mxu0 0
  %5019 = vmatprep.subr.bf16.mxu0 0
  %5020 = vmatpush1.bf16.msra.mxu0 0
  %5021 = vmatprep.subr.bf16.mxu0 0
  %5022 = vmatpush1.bf16.msra.mxu0 0
  %5023 = vmatprep.subr.bf16.mxu0 0
  %5024 = vmatpush1.bf16.msra.mxu0 0
  %5025 = vmatprep.subr.bf16.mxu0 0
  %5026 = vmatpush1.bf16.msra.mxu0 0
  %5027 = vmatprep.subr.bf16.mxu0 0
  %5028 = vmatpush1.bf16.msra.mxu0 0
  %5029 = vmatprep.subr.bf16.mxu0 0
  %5030 = vmatpush1.bf16.msra.mxu0 0
  %5031 = vmatprep.subr.bf16.mxu0 0
  %5032 = vmatpush1.bf16.msra.mxu0 0
  %5033 = vmatprep.subr.bf16.mxu0 0
  %5034 = vmatpush1.bf16.msra.mxu0 0
  %5035 = vmatprep.subr.bf16.mxu0 0
  %5036 = vmatpush1.bf16.msra.mxu0 0
  %5037 = vmatprep.subr.bf16.mxu0 0
  %5038 = vmatpush1.bf16.msra.mxu0 0
  %5039 = vmatprep.mubr.bf16.mxu0 0
  %5040 = vmatmul.mubr.bf16.gmra.mrb[0].mxu0 %v4690
  %v5041 = vpop.f32.mrb[0].mxu0
  %v5042 = vadd.f32 %v4624, %v5041
  %v5043 = vpop.f32.mrb[0].mxu0
  %v5044 = vpop.f32.mrb[0].mxu0
  %v5045 = vpop.f32.mrb[0].mxu0
  %5046 = vdwg.mxu0
  %v5051 = vunpack.c.l.b16 %v4509
  %v5052 = vunpack.c.l.b16 %v4510
  %v5053 = vunpack.c.l.b16 %v4511
  %v5054 = vunpack.c.l.b16 %v4512
  %v5055 = vpack.c.b16 %v5052, %v5051
  %v5056 = vpack.c.b16 %v5054, %v5053
  %5059 = vmatprep.subr.bf16.mxu0 0
  %5060 = vmatpush1.bf16.msra.mxu0 %v5055
  %5061 = vmatprep.subr.bf16.mxu0 0
  %5062 = vmatpush1.bf16.msra.mxu0 %v5056
  %5063 = vmatprep.subr.bf16.mxu0 0
  %5064 = vmatpush1.bf16.msra.mxu0 0
  %5065 = vmatprep.subr.bf16.mxu0 0
  %5066 = vmatpush1.bf16.msra.mxu0 0
  %5067 = vmatprep.subr.bf16.mxu0 0
  %5068 = vmatpush1.bf16.msra.mxu0 0
  %5069 = vmatprep.subr.bf16.mxu0 0
  %5070 = vmatpush1.bf16.msra.mxu0 0
  %5071 = vmatprep.subr.bf16.mxu0 0
  %5072 = vmatpush1.bf16.msra.mxu0 0
  %5073 = vmatprep.subr.bf16.mxu0 0
  %5074 = vmatpush1.bf16.msra.mxu0 0
  %5075 = vmatprep.subr.bf16.mxu0 0
  %5076 = vmatpush1.bf16.msra.mxu0 0
  %5077 = vmatprep.subr.bf16.mxu0 0
  %5078 = vmatpush1.bf16.msra.mxu0 0
  %5079 = vmatprep.subr.bf16.mxu0 0
  %5080 = vmatpush1.bf16.msra.mxu0 0
  %5081 = vmatprep.subr.bf16.mxu0 0
  %5082 = vmatpush1.bf16.msra.mxu0 0
  %5083 = vmatprep.subr.bf16.mxu0 0
  %5084 = vmatpush1.bf16.msra.mxu0 0
  %5085 = vmatprep.subr.bf16.mxu0 0
  %5086 = vmatpush1.bf16.msra.mxu0 0
  %5087 = vmatprep.subr.bf16.mxu0 0
  %5088 = vmatpush1.bf16.msra.mxu0 0
  %5089 = vmatprep.subr.bf16.mxu0 0
  %5090 = vmatpush1.bf16.msra.mxu0 0
  %5091 = vmatprep.mubr.bf16.mxu0 0
  %5092 = vmatmul.mubr.bf16.gmra.mrb[0].mxu0 %v4745
  %v5093 = vpop.f32.mrb[0].mxu0
  %v5094 = vadd.f32 %v4628, %v5093
  %v5095 = vpop.f32.mrb[0].mxu0
  %v5096 = vpop.f32.mrb[0].mxu0
  %v5097 = vpop.f32.mrb[0].mxu0
  %5098 = vdwg.mxu0
  %v5103 = vunpack.c.l.b16 %v4513
  %v5104 = vunpack.c.l.b16 %v4514
  %v5105 = vunpack.c.l.b16 %v4515
  %v5106 = vunpack.c.l.b16 %v4516
  %v5107 = vpack.c.b16 %v5104, %v5103
  %v5108 = vpack.c.b16 %v5106, %v5105
  %5111 = vmatprep.subr.bf16.mxu0 0
  %5112 = vmatpush1.bf16.msra.mxu0 %v5107
  %5113 = vmatprep.subr.bf16.mxu0 0
  %5114 = vmatpush1.bf16.msra.mxu0 %v5108
  %5115 = vmatprep.subr.bf16.mxu0 0
  %5116 = vmatpush1.bf16.msra.mxu0 0
  %5117 = vmatprep.subr.bf16.mxu0 0
  %5118 = vmatpush1.bf16.msra.mxu0 0
  %5119 = vmatprep.subr.bf16.mxu0 0
  %5120 = vmatpush1.bf16.msra.mxu0 0
  %5121 = vmatprep.subr.bf16.mxu0 0
  %5122 = vmatpush1.bf16.msra.mxu0 0
  %5123 = vmatprep.subr.bf16.mxu0 0
  %5124 = vmatpush1.bf16.msra.mxu0 0
  %5125 = vmatprep.subr.bf16.mxu0 0
  %5126 = vmatpush1.bf16.msra.mxu0 0
  %5127 = vmatprep.subr.bf16.mxu0 0
  %5128 = vmatpush1.bf16.msra.mxu0 0
  %5129 = vmatprep.subr.bf16.mxu0 0
  %5130 = vmatpush1.bf16.msra.mxu0 0
  %5131 = vmatprep.subr.bf16.mxu0 0
  %5132 = vmatpush1.bf16.msra.mxu0 0
  %5133 = vmatprep.subr.bf16.mxu0 0
  %5134 = vmatpush1.bf16.msra.mxu0 0
  %5135 = vmatprep.subr.bf16.mxu0 0
  %5136 = vmatpush1.bf16.msra.mxu0 0
  %5137 = vmatprep.subr.bf16.mxu0 0
  %5138 = vmatpush1.bf16.msra.mxu0 0
  %5139 = vmatprep.subr.bf16.mxu0 0
  %5140 = vmatpush1.bf16.msra.mxu0 0
  %5141 = vmatprep.subr.bf16.mxu0 0
  %5142 = vmatpush1.bf16.msra.mxu0 0
  %5143 = vmatprep.mubr.bf16.mxu0 0
  %5144 = vmatmul.mubr.bf16.gmra.mrb[0].mxu0 %v4690
  %v5145 = vpop.f32.mrb[0].mxu0
  %v5146 = vadd.f32 %v4632, %v5145
  %v5147 = vpop.f32.mrb[0].mxu0
  %v5148 = vpop.f32.mrb[0].mxu0
  %v5149 = vpop.f32.mrb[0].mxu0
  %5150 = vdwg.mxu0
  %v5155 = vunpack.c.l.b16 %v4517
  %v5156 = vunpack.c.l.b16 %v4518
  %v5157 = vunpack.c.l.b16 %v4519
  %v5158 = vunpack.c.l.b16 %v4520
  %v5159 = vpack.c.b16 %v5156, %v5155
  %v5160 = vpack.c.b16 %v5158, %v5157
  %5163 = vmatprep.subr.bf16.mxu0 0
  %5164 = vmatpush1.bf16.msra.mxu0 %v5159
  %5165 = vmatprep.subr.bf16.mxu0 0
  %5166 = vmatpush1.bf16.msra.mxu0 %v5160
  %5167 = vmatprep.subr.bf16.mxu0 0
  %5168 = vmatpush1.bf16.msra.mxu0 0
  %5169 = vmatprep.subr.bf16.mxu0 0
  %5170 = vmatpush1.bf16.msra.mxu0 0
  %5171 = vmatprep.subr.bf16.mxu0 0
  %5172 = vmatpush1.bf16.msra.mxu0 0
  %5173 = vmatprep.subr.bf16.mxu0 0
  %5174 = vmatpush1.bf16.msra.mxu0 0
  %5175 = vmatprep.subr.bf16.mxu0 0
  %5176 = vmatpush1.bf16.msra.mxu0 0
  %5177 = vmatprep.subr.bf16.mxu0 0
  %5178 = vmatpush1.bf16.msra.mxu0 0
  %5179 = vmatprep.subr.bf16.mxu0 0
  %5180 = vmatpush1.bf16.msra.mxu0 0
  %5181 = vmatprep.subr.bf16.mxu0 0
  %5182 = vmatpush1.bf16.msra.mxu0 0
  %5183 = vmatprep.subr.bf16.mxu0 0
  %5184 = vmatpush1.bf16.msra.mxu0 0
  %5185 = vmatprep.subr.bf16.mxu0 0
  %5186 = vmatpush1.bf16.msra.mxu0 0
  %5187 = vmatprep.subr.bf16.mxu0 0
  %5188 = vmatpush1.bf16.msra.mxu0 0
  %5189 = vmatprep.subr.bf16.mxu0 0
  %5190 = vmatpush1.bf16.msra.mxu0 0
  %5191 = vmatprep.subr.bf16.mxu0 0
  %5192 = vmatpush1.bf16.msra.mxu0 0
  %5193 = vmatprep.subr.bf16.mxu0 0
  %5194 = vmatpush1.bf16.msra.mxu0 0
  %5195 = vmatprep.mubr.bf16.mxu0 0
  %5196 = vmatmul.mubr.bf16.gmra.mrb[0].mxu0 %v4745
  %v5197 = vpop.f32.mrb[0].mxu0
  %v5198 = vadd.f32 %v4636, %v5197
  %v5199 = vpop.f32.mrb[0].mxu0
  %v5200 = vpop.f32.mrb[0].mxu0
  %v5201 = vpop.f32.mrb[0].mxu0
  %5202 = vdwg.mxu0
  %v5207 = vunpack.c.l.b16 %v4521
  %v5208 = vunpack.c.l.b16 %v4522
  %v5209 = vunpack.c.l.b16 %v4523
  %v5210 = vunpack.c.l.b16 %v4524
  %v5211 = vpack.c.b16 %v5208, %v5207
  %v5212 = vpack.c.b16 %v5210, %v5209
  %5215 = vmatprep.subr.bf16.mxu0 0
  %5216 = vmatpush1.bf16.msra.mxu0 %v5211
  %5217 = vmatprep.subr.bf16.mxu0 0
  %5218 = vmatpush1.bf16.msra.mxu0 %v5212
  %5219 = vmatprep.subr.bf16.mxu0 0
  %5220 = vmatpush1.bf16.msra.mxu0 0
  %5221 = vmatprep.subr.bf16.mxu0 0
  %5222 = vmatpush1.bf16.msra.mxu0 0
  %5223 = vmatprep.subr.bf16.mxu0 0
  %5224 = vmatpush1.bf16.msra.mxu0 0
  %5225 = vmatprep.subr.bf16.mxu0 0
  %5226 = vmatpush1.bf16.msra.mxu0 0
  %5227 = vmatprep.subr.bf16.mxu0 0
  %5228 = vmatpush1.bf16.msra.mxu0 0
  %5229 = vmatprep.subr.bf16.mxu0 0
  %5230 = vmatpush1.bf16.msra.mxu0 0
  %5231 = vmatprep.subr.bf16.mxu0 0
  %5232 = vmatpush1.bf16.msra.mxu0 0
  %5233 = vmatprep.subr.bf16.mxu0 0
  %5234 = vmatpush1.bf16.msra.mxu0 0
  %5235 = vmatprep.subr.bf16.mxu0 0
  %5236 = vmatpush1.bf16.msra.mxu0 0
  %5237 = vmatprep.subr.bf16.mxu0 0
  %5238 = vmatpush1.bf16.msra.mxu0 0
  %5239 = vmatprep.subr.bf16.mxu0 0
  %5240 = vmatpush1.bf16.msra.mxu0 0
  %5241 = vmatprep.subr.bf16.mxu0 0
  %5242 = vmatpush1.bf16.msra.mxu0 0
  %5243 = vmatprep.subr.bf16.mxu0 0
  %5244 = vmatpush1.bf16.msra.mxu0 0
  %5245 = vmatprep.subr.bf16.mxu0 0
  %5246 = vmatpush1.bf16.msra.mxu0 0
  %5247 = vmatprep.mubr.bf16.mxu0 0
  %5248 = vmatmul.mubr.bf16.gmra.mrb[0].mxu0 %v4690
  %v5249 = vpop.f32.mrb[0].mxu0
  %v5250 = vadd.f32 %v4640, %v5249
  %v5251 = vpop.f32.mrb[0].mxu0
  %v5252 = vpop.f32.mrb[0].mxu0
  %v5253 = vpop.f32.mrb[0].mxu0
  %5254 = vdwg.mxu0
  %v5259 = vunpack.c.l.b16 %v4525
  %v5260 = vunpack.c.l.b16 %v4526
  %v5261 = vunpack.c.l.b16 %v4527
  %v5262 = vunpack.c.l.b16 %v4528
  %v5263 = vpack.c.b16 %v5260, %v5259
  %v5264 = vpack.c.b16 %v5262, %v5261
  %5267 = vmatprep.subr.bf16.mxu0 0
  %5268 = vmatpush1.bf16.msra.mxu0 %v5263
  %5269 = vmatprep.subr.bf16.mxu0 0
  %5270 = vmatpush1.bf16.msra.mxu0 %v5264
  %5271 = vmatprep.subr.bf16.mxu0 0
  %5272 = vmatpush1.bf16.msra.mxu0 0
  %5273 = vmatprep.subr.bf16.mxu0 0
  %5274 = vmatpush1.bf16.msra.mxu0 0
  %5275 = vmatprep.subr.bf16.mxu0 0
  %5276 = vmatpush1.bf16.msra.mxu0 0
  %5277 = vmatprep.subr.bf16.mxu0 0
  %5278 = vmatpush1.bf16.msra.mxu0 0
  %5279 = vmatprep.subr.bf16.mxu0 0
  %5280 = vmatpush1.bf16.msra.mxu0 0
  %5281 = vmatprep.subr.bf16.mxu0 0
  %5282 = vmatpush1.bf16.msra.mxu0 0
  %5283 = vmatprep.subr.bf16.mxu0 0
  %5284 = vmatpush1.bf16.msra.mxu0 0
  %5285 = vmatprep.subr.bf16.mxu0 0
  %5286 = vmatpush1.bf16.msra.mxu0 0
  %5287 = vmatprep.subr.bf16.mxu0 0
  %5288 = vmatpush1.bf16.msra.mxu0 0
  %5289 = vmatprep.subr.bf16.mxu0 0
  %5290 = vmatpush1.bf16.msra.mxu0 0
  %5291 = vmatprep.subr.bf16.mxu0 0
  %5292 = vmatpush1.bf16.msra.mxu0 0
  %5293 = vmatprep.subr.bf16.mxu0 0
  %5294 = vmatpush1.bf16.msra.mxu0 0
  %5295 = vmatprep.subr.bf16.mxu0 0
  %5296 = vmatpush1.bf16.msra.mxu0 0
  %5297 = vmatprep.subr.bf16.mxu0 0
  %5298 = vmatpush1.bf16.msra.mxu0 0
  %5299 = vmatprep.mubr.bf16.mxu0 0
  %5300 = vmatmul.mubr.bf16.gmra.mrb[0].mxu0 %v4745
  %v5301 = vpop.f32.mrb[0].mxu0
  %v5302 = vadd.f32 %v4644, %v5301
  %v5303 = vpop.f32.mrb[0].mxu0
  %v5304 = vpop.f32.mrb[0].mxu0
  %v5305 = vpop.f32.mrb[0].mxu0
  %5306 = vdwg.mxu0
  %v5311 = vunpack.c.l.b16 %v4529
  %v5312 = vunpack.c.l.b16 %v4530
  %v5313 = vunpack.c.l.b16 %v4531
  %v5314 = vunpack.c.l.b16 %v4532
  %v5315 = vpack.c.b16 %v5312, %v5311
  %v5316 = vpack.c.b16 %v5314, %v5313
  %5319 = vmatprep.subr.bf16.mxu0 0
  %5320 = vmatpush1.bf16.msra.mxu0 %v5315
  %5321 = vmatprep.subr.bf16.mxu0 0
  %5322 = vmatpush1.bf16.msra.mxu0 %v5316
  %5323 = vmatprep.subr.bf16.mxu0 0
  %5324 = vmatpush1.bf16.msra.mxu0 0
  %5325 = vmatprep.subr.bf16.mxu0 0
  %5326 = vmatpush1.bf16.msra.mxu0 0
  %5327 = vmatprep.subr.bf16.mxu0 0
  %5328 = vmatpush1.bf16.msra.mxu0 0
  %5329 = vmatprep.subr.bf16.mxu0 0
  %5330 = vmatpush1.bf16.msra.mxu0 0
  %5331 = vmatprep.subr.bf16.mxu0 0
  %5332 = vmatpush1.bf16.msra.mxu0 0
  %5333 = vmatprep.subr.bf16.mxu0 0
  %5334 = vmatpush1.bf16.msra.mxu0 0
  %5335 = vmatprep.subr.bf16.mxu0 0
  %5336 = vmatpush1.bf16.msra.mxu0 0
  %5337 = vmatprep.subr.bf16.mxu0 0
  %5338 = vmatpush1.bf16.msra.mxu0 0
  %5339 = vmatprep.subr.bf16.mxu0 0
  %5340 = vmatpush1.bf16.msra.mxu0 0
  %5341 = vmatprep.subr.bf16.mxu0 0
  %5342 = vmatpush1.bf16.msra.mxu0 0
  %5343 = vmatprep.subr.bf16.mxu0 0
  %5344 = vmatpush1.bf16.msra.mxu0 0
  %5345 = vmatprep.subr.bf16.mxu0 0
  %5346 = vmatpush1.bf16.msra.mxu0 0
  %5347 = vmatprep.subr.bf16.mxu0 0
  %5348 = vmatpush1.bf16.msra.mxu0 0
  %5349 = vmatprep.subr.bf16.mxu0 0
  %5350 = vmatpush1.bf16.msra.mxu0 0
  %5351 = vmatprep.mubr.bf16.mxu0 0
  %5352 = vmatmul.mubr.bf16.gmra.mrb[0].mxu0 %v4690
  %v5353 = vpop.f32.mrb[0].mxu0
  %v5354 = vadd.f32 %v4648, %v5353
  %v5355 = vpop.f32.mrb[0].mxu0
  %v5356 = vpop.f32.mrb[0].mxu0
  %v5357 = vpop.f32.mrb[0].mxu0
  %5358 = vdwg.mxu0
  %v5363 = vunpack.c.l.b16 %v4533
  %v5364 = vunpack.c.l.b16 %v4534
  %v5365 = vunpack.c.l.b16 %v4535
  %v5366 = vunpack.c.l.b16 %v4536
  %v5367 = vpack.c.b16 %v5364, %v5363
  %v5368 = vpack.c.b16 %v5366, %v5365
  %5371 = vmatprep.subr.bf16.mxu0 0
  %5372 = vmatpush1.bf16.msra.mxu0 %v5367
  %5373 = vmatprep.subr.bf16.mxu0 0
  %5374 = vmatpush1.bf16.msra.mxu0 %v5368
  %5375 = vmatprep.subr.bf16.mxu0 0
  %5376 = vmatpush1.bf16.msra.mxu0 0
  %5377 = vmatprep.subr.bf16.mxu0 0
  %5378 = vmatpush1.bf16.msra.mxu0 0
  %5379 = vmatprep.subr.bf16.mxu0 0
  %5380 = vmatpush1.bf16.msra.mxu0 0
  %5381 = vmatprep.subr.bf16.mxu0 0
  %5382 = vmatpush1.bf16.msra.mxu0 0
  %5383 = vmatprep.subr.bf16.mxu0 0
  %5384 = vmatpush1.bf16.msra.mxu0 0
  %5385 = vmatprep.subr.bf16.mxu0 0
  %5386 = vmatpush1.bf16.msra.mxu0 0
  %5387 = vmatprep.subr.bf16.mxu0 0
  %5388 = vmatpush1.bf16.msra.mxu0 0
  %5389 = vmatprep.subr.bf16.mxu0 0
  %5390 = vmatpush1.bf16.msra.mxu0 0
  %5391 = vmatprep.subr.bf16.mxu0 0
  %5392 = vmatpush1.bf16.msra.mxu0 0
  %5393 = vmatprep.subr.bf16.mxu0 0
  %5394 = vmatpush1.bf16.msra.mxu0 0
  %5395 = vmatprep.subr.bf16.mxu0 0
  %5396 = vmatpush1.bf16.msra.mxu0 0
  %5397 = vmatprep.subr.bf16.mxu0 0
  %5398 = vmatpush1.bf16.msra.mxu0 0
  %5399 = vmatprep.subr.bf16.mxu0 0
  %5400 = vmatpush1.bf16.msra.mxu0 0
  %5401 = vmatprep.subr.bf16.mxu0 0
  %5402 = vmatpush1.bf16.msra.mxu0 0
  %5403 = vmatprep.mubr.bf16.mxu0 0
  %5404 = vmatmul.mubr.bf16.gmra.mrb[0].mxu0 %v4745
  %v5405 = vpop.f32.mrb[0].mxu0
  %v5406 = vadd.f32 %v4652, %v5405
  %v5407 = vpop.f32.mrb[0].mxu0
  %v5408 = vpop.f32.mrb[0].mxu0
  %v5409 = vpop.f32.mrb[0].mxu0
  %5410 = vdwg.mxu0
  %v5415 = vunpack.c.l.b16 %v4537
  %v5416 = vunpack.c.l.b16 %v4538
  %v5417 = vunpack.c.l.b16 %v4539
  %v5418 = vunpack.c.l.b16 %v4540
  %v5419 = vpack.c.b16 %v5416, %v5415
  %v5420 = vpack.c.b16 %v5418, %v5417
  %5423 = vmatprep.subr.bf16.mxu0 0
  %5424 = vmatpush1.bf16.msra.mxu0 %v5419
  %5425 = vmatprep.subr.bf16.mxu0 0
  %5426 = vmatpush1.bf16.msra.mxu0 %v5420
  %5427 = vmatprep.subr.bf16.mxu0 0
  %5428 = vmatpush1.bf16.msra.mxu0 0
  %5429 = vmatprep.subr.bf16.mxu0 0
  %5430 = vmatpush1.bf16.msra.mxu0 0
  %5431 = vmatprep.subr.bf16.mxu0 0
  %5432 = vmatpush1.bf16.msra.mxu0 0
  %5433 = vmatprep.subr.bf16.mxu0 0
  %5434 = vmatpush1.bf16.msra.mxu0 0
  %5435 = vmatprep.subr.bf16.mxu0 0
  %5436 = vmatpush1.bf16.msra.mxu0 0
  %5437 = vmatprep.subr.bf16.mxu0 0
  %5438 = vmatpush1.bf16.msra.mxu0 0
  %5439 = vmatprep.subr.bf16.mxu0 0
  %5440 = vmatpush1.bf16.msra.mxu0 0
  %5441 = vmatprep.subr.bf16.mxu0 0
  %5442 = vmatpush1.bf16.msra.mxu0 0
  %5443 = vmatprep.subr.bf16.mxu0 0
  %5444 = vmatpush1.bf16.msra.mxu0 0
  %5445 = vmatprep.subr.bf16.mxu0 0
  %5446 = vmatpush1.bf16.msra.mxu0 0
  %5447 = vmatprep.subr.bf16.mxu0 0
  %5448 = vmatpush1.bf16.msra.mxu0 0
  %5449 = vmatprep.subr.bf16.mxu0 0
  %5450 = vmatpush1.bf16.msra.mxu0 0
  %5451 = vmatprep.subr.bf16.mxu0 0
  %5452 = vmatpush1.bf16.msra.mxu0 0
  %5453 = vmatprep.subr.bf16.mxu0 0
  %5454 = vmatpush1.bf16.msra.mxu0 0
  %5455 = vmatprep.mubr.bf16.mxu0 0
  %5456 = vmatmul.mubr.bf16.gmra.mrb[0].mxu0 %v4690
  %v5457 = vpop.f32.mrb[0].mxu0
  %v5458 = vadd.f32 %v4656, %v5457
  %v5459 = vpop.f32.mrb[0].mxu0
  %v5460 = vpop.f32.mrb[0].mxu0
  %v5461 = vpop.f32.mrb[0].mxu0
  %5462 = vdwg.mxu0
  %v5467 = vunpack.c.l.b16 %v4541
  %v5468 = vunpack.c.l.b16 %v4542
  %v5469 = vunpack.c.l.b16 %v4543
  %v5470 = vunpack.c.l.b16 %v4544
  %v5471 = vpack.c.b16 %v5468, %v5467
  %v5472 = vpack.c.b16 %v5470, %v5469
  %5475 = vmatprep.subr.bf16.mxu0 0
  %5476 = vmatpush1.bf16.msra.mxu0 %v5471
  %5477 = vmatprep.subr.bf16.mxu0 0
  %5478 = vmatpush1.bf16.msra.mxu0 %v5472
  %5479 = vmatprep.subr.bf16.mxu0 0
  %5480 = vmatpush1.bf16.msra.mxu0 0
  %5481 = vmatprep.subr.bf16.mxu0 0
  %5482 = vmatpush1.bf16.msra.mxu0 0
  %5483 = vmatprep.subr.bf16.mxu0 0
  %5484 = vmatpush1.bf16.msra.mxu0 0
  %5485 = vmatprep.subr.bf16.mxu0 0
  %5486 = vmatpush1.bf16.msra.mxu0 0
  %5487 = vmatprep.subr.bf16.mxu0 0
  %5488 = vmatpush1.bf16.msra.mxu0 0
  %5489 = vmatprep.subr.bf16.mxu0 0
  %5490 = vmatpush1.bf16.msra.mxu0 0
  %5491 = vmatprep.subr.bf16.mxu0 0
  %5492 = vmatpush1.bf16.msra.mxu0 0
  %5493 = vmatprep.subr.bf16.mxu0 0
  %5494 = vmatpush1.bf16.msra.mxu0 0
  %5495 = vmatprep.subr.bf16.mxu0 0
  %5496 = vmatpush1.bf16.msra.mxu0 0
  %5497 = vmatprep.subr.bf16.mxu0 0
  %5498 = vmatpush1.bf16.msra.mxu0 0
  %5499 = vmatprep.subr.bf16.mxu0 0
  %5500 = vmatpush1.bf16.msra.mxu0 0
  %5501 = vmatprep.subr.bf16.mxu0 0
  %5502 = vmatpush1.bf16.msra.mxu0 0
  %5503 = vmatprep.subr.bf16.mxu0 0
  %5504 = vmatpush1.bf16.msra.mxu0 0
  %5505 = vmatprep.subr.bf16.mxu0 0
  %5506 = vmatpush1.bf16.msra.mxu0 0
  %5507 = vmatprep.mubr.bf16.mxu0 0
  %5508 = vmatmul.mubr.bf16.gmra.mrb[0].mxu0 %v4745
  %v5509 = vpop.f32.mrb[0].mxu0
  %v5510 = vadd.f32 %v4660, %v5509
  %v5511 = vpop.f32.mrb[0].mxu0
  %v5512 = vpop.f32.mrb[0].mxu0
  %v5513 = vpop.f32.mrb[0].mxu0
  %5514 = vdwg.mxu0
  %v5515 = vpack.c.bf16 %v4727, %v4727
  %v5516 = vpack.c.bf16 %v4782, %v4782
  %v5517 = vpack.c.bf16 %v4834, %v4834
  %v5518 = vpack.c.bf16 %v4886, %v4886
  %v5519 = vpack.c.bf16 %v4938, %v4938
  %v5520 = vpack.c.bf16 %v4990, %v4990
  %v5521 = vpack.c.bf16 %v5042, %v5042
  %v5522 = vpack.c.bf16 %v5094, %v5094
  %v5523 = vpack.c.bf16 %v5146, %v5146
  %v5524 = vpack.c.bf16 %v5198, %v5198
  %v5525 = vpack.c.bf16 %v5250, %v5250
  %v5526 = vpack.c.bf16 %v5302, %v5302
  %v5527 = vpack.c.bf16 %v5354, %v5354
  %v5528 = vpack.c.bf16 %v5406, %v5406
  %v5529 = vpack.c.bf16 %v5458, %v5458
  %v5530 = vpack.c.bf16 %v5510, %v5510
  %5532 = vrot.lane.b32.xlu0 %v5515, 124
  %v5533 = vpop.permute.xlu0 %5532
  %v5535 = vsel %vm1673, %v5515, 0
  %v5538 = vsel %vm1673, %v5533, 0
  %5540 = vmatprep.subr.bf16.mxu0 0
  %5541 = vmatpush1.bf16.xpose.msra.mxu0 %v5538
  %5542 = vmatprep.subr.bf16.mxu0 0
  %5543 = vmatpush1.bf16.xpose.msra.mxu0 0
  %5544 = vmatprep.subr.bf16.mxu0 0
  %5545 = vmatpush1.bf16.xpose.msra.mxu0 0
  %5546 = vmatprep.subr.bf16.mxu0 0
  %5547 = vmatpush1.bf16.xpose.msra.mxu0 0
  %5548 = vmatprep.subr.bf16.mxu0 0
  %5549 = vmatpush1.bf16.xpose.msra.mxu0 0
  %5550 = vmatprep.subr.bf16.mxu0 0
  %5551 = vmatpush1.bf16.xpose.msra.mxu0 0
  %5552 = vmatprep.subr.bf16.mxu0 0
  %5553 = vmatpush1.bf16.xpose.msra.mxu0 0
  %5554 = vmatprep.subr.bf16.mxu0 0
  %5555 = vmatpush1.bf16.xpose.msra.mxu0 0
  %5556 = vmatprep.subr.bf16.mxu0 0
  %5557 = vmatpush1.bf16.xpose.msra.mxu0 0
  %5558 = vmatprep.subr.bf16.mxu0 0
  %5559 = vmatpush1.bf16.xpose.msra.mxu0 0
  %5560 = vmatprep.subr.bf16.mxu0 0
  %5561 = vmatpush1.bf16.xpose.msra.mxu0 0
  %5562 = vmatprep.subr.bf16.mxu0 0
  %5563 = vmatpush1.bf16.xpose.msra.mxu0 0
  %5564 = vmatprep.subr.bf16.mxu0 0
  %5565 = vmatpush1.bf16.xpose.msra.mxu0 0
  %5566 = vmatprep.subr.bf16.mxu0 0
  %5567 = vmatpush1.bf16.xpose.msra.mxu0 0
  %5568 = vmatprep.subr.bf16.mxu0 0
  %5569 = vmatpush1.bf16.xpose.msra.mxu0 0
  %5570 = vmatprep.subr.bf16.mxu0 0
  %5571 = vmatpush1.bf16.xpose.msra.mxu0 0
  %5572 = vmatprep.mubr.bf16.mxu0 0
  %5573 = vmatmul.mubr.bf16.gmra.mrb[0].mxu0 %v5535
  %v5574 = vpop.f32.mrb[0].mxu0
  %v5575 = vadd.f32 0.0, %v5574
  %v5576 = vpop.f32.mrb[0].mxu0
  %v5577 = vpop.f32.mrb[0].mxu0
  %v5578 = vpop.f32.mrb[0].mxu0
  %5579 = vdwg.mxu0
  %5581 = vrot.lane.b32.xlu0 %v5516, 124
  %v5582 = vpop.permute.xlu0 %5581
  %v5584 = vsel %vm1673, %v5516, 0
  %v5587 = vsel %vm1673, %v5582, 0
  %5589 = vmatprep.subr.bf16.mxu0 0
  %5590 = vmatpush1.bf16.xpose.msra.mxu0 %v5587
  %5591 = vmatprep.subr.bf16.mxu0 0
  %5592 = vmatpush1.bf16.xpose.msra.mxu0 0
  %5593 = vmatprep.subr.bf16.mxu0 0
  %5594 = vmatpush1.bf16.xpose.msra.mxu0 0
  %5595 = vmatprep.subr.bf16.mxu0 0
  %5596 = vmatpush1.bf16.xpose.msra.mxu0 0
  %5597 = vmatprep.subr.bf16.mxu0 0
  %5598 = vmatpush1.bf16.xpose.msra.mxu0 0
  %5599 = vmatprep.subr.bf16.mxu0 0
  %5600 = vmatpush1.bf16.xpose.msra.mxu0 0
  %5601 = vmatprep.subr.bf16.mxu0 0
  %5602 = vmatpush1.bf16.xpose.msra.mxu0 0
  %5603 = vmatprep.subr.bf16.mxu0 0
  %5604 = vmatpush1.bf16.xpose.msra.mxu0 0
  %5605 = vmatprep.subr.bf16.mxu0 0
  %5606 = vmatpush1.bf16.xpose.msra.mxu0 0
  %5607 = vmatprep.subr.bf16.mxu0 0
  %5608 = vmatpush1.bf16.xpose.msra.mxu0 0
  %5609 = vmatprep.subr.bf16.mxu0 0
  %5610 = vmatpush1.bf16.xpose.msra.mxu0 0
  %5611 = vmatprep.subr.bf16.mxu0 0
  %5612 = vmatpush1.bf16.xpose.msra.mxu0 0
  %5613 = vmatprep.subr.bf16.mxu0 0
  %5614 = vmatpush1.bf16.xpose.msra.mxu0 0
  %5615 = vmatprep.subr.bf16.mxu0 0
  %5616 = vmatpush1.bf16.xpose.msra.mxu0 0
  %5617 = vmatprep.subr.bf16.mxu0 0
  %5618 = vmatpush1.bf16.xpose.msra.mxu0 0
  %5619 = vmatprep.subr.bf16.mxu0 0
  %5620 = vmatpush1.bf16.xpose.msra.mxu0 0
  %5621 = vmatprep.mubr.bf16.mxu0 0
  %5622 = vmatmul.mubr.bf16.gmra.mrb[0].mxu0 %v5584
  %v5623 = vpop.f32.mrb[0].mxu0
  %v5624 = vadd.f32 0.0, %v5623
  %v5625 = vpop.f32.mrb[0].mxu0
  %v5626 = vpop.f32.mrb[0].mxu0
  %v5627 = vpop.f32.mrb[0].mxu0
  %5628 = vdwg.mxu0
  %5630 = vrot.lane.b32.xlu0 %v5517, 124
  %v5631 = vpop.permute.xlu0 %5630
  %v5633 = vsel %vm1673, %v5517, 0
  %v5636 = vsel %vm1673, %v5631, 0
  %5638 = vmatprep.subr.bf16.mxu0 0
  %5639 = vmatpush1.bf16.xpose.msra.mxu0 %v5636
  %5640 = vmatprep.subr.bf16.mxu0 0
  %5641 = vmatpush1.bf16.xpose.msra.mxu0 0
  %5642 = vmatprep.subr.bf16.mxu0 0
  %5643 = vmatpush1.bf16.xpose.msra.mxu0 0
  %5644 = vmatprep.subr.bf16.mxu0 0
  %5645 = vmatpush1.bf16.xpose.msra.mxu0 0
  %5646 = vmatprep.subr.bf16.mxu0 0
  %5647 = vmatpush1.bf16.xpose.msra.mxu0 0
  %5648 = vmatprep.subr.bf16.mxu0 0
  %5649 = vmatpush1.bf16.xpose.msra.mxu0 0
  %5650 = vmatprep.subr.bf16.mxu0 0
  %5651 = vmatpush1.bf16.xpose.msra.mxu0 0
  %5652 = vmatprep.subr.bf16.mxu0 0
  %5653 = vmatpush1.bf16.xpose.msra.mxu0 0
  %5654 = vmatprep.subr.bf16.mxu0 0
  %5655 = vmatpush1.bf16.xpose.msra.mxu0 0
  %5656 = vmatprep.subr.bf16.mxu0 0
  %5657 = vmatpush1.bf16.xpose.msra.mxu0 0
  %5658 = vmatprep.subr.bf16.mxu0 0
  %5659 = vmatpush1.bf16.xpose.msra.mxu0 0
  %5660 = vmatprep.subr.bf16.mxu0 0
  %5661 = vmatpush1.bf16.xpose.msra.mxu0 0
  %5662 = vmatprep.subr.bf16.mxu0 0
  %5663 = vmatpush1.bf16.xpose.msra.mxu0 0
  %5664 = vmatprep.subr.bf16.mxu0 0
  %5665 = vmatpush1.bf16.xpose.msra.mxu0 0
  %5666 = vmatprep.subr.bf16.mxu0 0
  %5667 = vmatpush1.bf16.xpose.msra.mxu0 0
  %5668 = vmatprep.subr.bf16.mxu0 0
  %5669 = vmatpush1.bf16.xpose.msra.mxu0 0
  %5670 = vmatprep.mubr.bf16.mxu0 0
  %5671 = vmatmul.mubr.bf16.gmra.mrb[0].mxu0 %v5633
  %v5672 = vpop.f32.mrb[0].mxu0
  %v5673 = vadd.f32 0.0, %v5672
  %v5674 = vpop.f32.mrb[0].mxu0
  %v5675 = vpop.f32.mrb[0].mxu0
  %v5676 = vpop.f32.mrb[0].mxu0
  %5677 = vdwg.mxu0
  %5679 = vrot.lane.b32.xlu0 %v5518, 124
  %v5680 = vpop.permute.xlu0 %5679
  %v5682 = vsel %vm1673, %v5518, 0
  %v5685 = vsel %vm1673, %v5680, 0
  %5687 = vmatprep.subr.bf16.mxu0 0
  %5688 = vmatpush1.bf16.xpose.msra.mxu0 %v5685
  %5689 = vmatprep.subr.bf16.mxu0 0
  %5690 = vmatpush1.bf16.xpose.msra.mxu0 0
  %5691 = vmatprep.subr.bf16.mxu0 0
  %5692 = vmatpush1.bf16.xpose.msra.mxu0 0
  %5693 = vmatprep.subr.bf16.mxu0 0
  %5694 = vmatpush1.bf16.xpose.msra.mxu0 0
  %5695 = vmatprep.subr.bf16.mxu0 0
  %5696 = vmatpush1.bf16.xpose.msra.mxu0 0
  %5697 = vmatprep.subr.bf16.mxu0 0
  %5698 = vmatpush1.bf16.xpose.msra.mxu0 0
  %5699 = vmatprep.subr.bf16.mxu0 0
  %5700 = vmatpush1.bf16.xpose.msra.mxu0 0
  %5701 = vmatprep.subr.bf16.mxu0 0
  %5702 = vmatpush1.bf16.xpose.msra.mxu0 0
  %5703 = vmatprep.subr.bf16.mxu0 0
  %5704 = vmatpush1.bf16.xpose.msra.mxu0 0
  %5705 = vmatprep.subr.bf16.mxu0 0
  %5706 = vmatpush1.bf16.xpose.msra.mxu0 0
  %5707 = vmatprep.subr.bf16.mxu0 0
  %5708 = vmatpush1.bf16.xpose.msra.mxu0 0
  %5709 = vmatprep.subr.bf16.mxu0 0
  %5710 = vmatpush1.bf16.xpose.msra.mxu0 0
  %5711 = vmatprep.subr.bf16.mxu0 0
  %5712 = vmatpush1.bf16.xpose.msra.mxu0 0
  %5713 = vmatprep.subr.bf16.mxu0 0
  %5714 = vmatpush1.bf16.xpose.msra.mxu0 0
  %5715 = vmatprep.subr.bf16.mxu0 0
  %5716 = vmatpush1.bf16.xpose.msra.mxu0 0
  %5717 = vmatprep.subr.bf16.mxu0 0
  %5718 = vmatpush1.bf16.xpose.msra.mxu0 0
  %5719 = vmatprep.mubr.bf16.mxu0 0
  %5720 = vmatmul.mubr.bf16.gmra.mrb[0].mxu0 %v5682
  %v5721 = vpop.f32.mrb[0].mxu0
  %v5722 = vadd.f32 0.0, %v5721
  %v5723 = vpop.f32.mrb[0].mxu0
  %v5724 = vpop.f32.mrb[0].mxu0
  %v5725 = vpop.f32.mrb[0].mxu0
  %5726 = vdwg.mxu0
  %5728 = vrot.lane.b32.xlu0 %v5519, 124
  %v5729 = vpop.permute.xlu0 %5728
  %v5731 = vsel %vm1673, %v5519, 0
  %v5734 = vsel %vm1673, %v5729, 0
  %5736 = vmatprep.subr.bf16.mxu0 0
  %5737 = vmatpush1.bf16.xpose.msra.mxu0 %v5734
  %5738 = vmatprep.subr.bf16.mxu0 0
  %5739 = vmatpush1.bf16.xpose.msra.mxu0 0
  %5740 = vmatprep.subr.bf16.mxu0 0
  %5741 = vmatpush1.bf16.xpose.msra.mxu0 0
  %5742 = vmatprep.subr.bf16.mxu0 0
  %5743 = vmatpush1.bf16.xpose.msra.mxu0 0
  %5744 = vmatprep.subr.bf16.mxu0 0
  %5745 = vmatpush1.bf16.xpose.msra.mxu0 0
  %5746 = vmatprep.subr.bf16.mxu0 0
  %5747 = vmatpush1.bf16.xpose.msra.mxu0 0
  %5748 = vmatprep.subr.bf16.mxu0 0
  %5749 = vmatpush1.bf16.xpose.msra.mxu0 0
  %5750 = vmatprep.subr.bf16.mxu0 0
  %5751 = vmatpush1.bf16.xpose.msra.mxu0 0
  %5752 = vmatprep.subr.bf16.mxu0 0
  %5753 = vmatpush1.bf16.xpose.msra.mxu0 0
  %5754 = vmatprep.subr.bf16.mxu0 0
  %5755 = vmatpush1.bf16.xpose.msra.mxu0 0
  %5756 = vmatprep.subr.bf16.mxu0 0
  %5757 = vmatpush1.bf16.xpose.msra.mxu0 0
  %5758 = vmatprep.subr.bf16.mxu0 0
  %5759 = vmatpush1.bf16.xpose.msra.mxu0 0
  %5760 = vmatprep.subr.bf16.mxu0 0
  %5761 = vmatpush1.bf16.xpose.msra.mxu0 0
  %5762 = vmatprep.subr.bf16.mxu0 0
  %5763 = vmatpush1.bf16.xpose.msra.mxu0 0
  %5764 = vmatprep.subr.bf16.mxu0 0
  %5765 = vmatpush1.bf16.xpose.msra.mxu0 0
  %5766 = vmatprep.subr.bf16.mxu0 0
  %5767 = vmatpush1.bf16.xpose.msra.mxu0 0
  %5768 = vmatprep.mubr.bf16.mxu0 0
  %5769 = vmatmul.mubr.bf16.gmra.mrb[0].mxu0 %v5731
  %v5770 = vpop.f32.mrb[0].mxu0
  %v5771 = vadd.f32 0.0, %v5770
  %v5772 = vpop.f32.mrb[0].mxu0
  %v5773 = vpop.f32.mrb[0].mxu0
  %v5774 = vpop.f32.mrb[0].mxu0
  %5775 = vdwg.mxu0
  %5777 = vrot.lane.b32.xlu0 %v5520, 124
  %v5778 = vpop.permute.xlu0 %5777
  %v5780 = vsel %vm1673, %v5520, 0
  %v5783 = vsel %vm1673, %v5778, 0
  %5785 = vmatprep.subr.bf16.mxu0 0
  %5786 = vmatpush1.bf16.xpose.msra.mxu0 %v5783
  %5787 = vmatprep.subr.bf16.mxu0 0
  %5788 = vmatpush1.bf16.xpose.msra.mxu0 0
  %5789 = vmatprep.subr.bf16.mxu0 0
  %5790 = vmatpush1.bf16.xpose.msra.mxu0 0
  %5791 = vmatprep.subr.bf16.mxu0 0
  %5792 = vmatpush1.bf16.xpose.msra.mxu0 0
  %5793 = vmatprep.subr.bf16.mxu0 0
  %5794 = vmatpush1.bf16.xpose.msra.mxu0 0
  %5795 = vmatprep.subr.bf16.mxu0 0
  %5796 = vmatpush1.bf16.xpose.msra.mxu0 0
  %5797 = vmatprep.subr.bf16.mxu0 0
  %5798 = vmatpush1.bf16.xpose.msra.mxu0 0
  %5799 = vmatprep.subr.bf16.mxu0 0
  %5800 = vmatpush1.bf16.xpose.msra.mxu0 0
  %5801 = vmatprep.subr.bf16.mxu0 0
  %5802 = vmatpush1.bf16.xpose.msra.mxu0 0
  %5803 = vmatprep.subr.bf16.mxu0 0
  %5804 = vmatpush1.bf16.xpose.msra.mxu0 0
  %5805 = vmatprep.subr.bf16.mxu0 0
  %5806 = vmatpush1.bf16.xpose.msra.mxu0 0
  %5807 = vmatprep.subr.bf16.mxu0 0
  %5808 = vmatpush1.bf16.xpose.msra.mxu0 0
  %5809 = vmatprep.subr.bf16.mxu0 0
  %5810 = vmatpush1.bf16.xpose.msra.mxu0 0
  %5811 = vmatprep.subr.bf16.mxu0 0
  %5812 = vmatpush1.bf16.xpose.msra.mxu0 0
  %5813 = vmatprep.subr.bf16.mxu0 0
  %5814 = vmatpush1.bf16.xpose.msra.mxu0 0
  %5815 = vmatprep.subr.bf16.mxu0 0
  %5816 = vmatpush1.bf16.xpose.msra.mxu0 0
  %5817 = vmatprep.mubr.bf16.mxu0 0
  %5818 = vmatmul.mubr.bf16.gmra.mrb[0].mxu0 %v5780
  %v5819 = vpop.f32.mrb[0].mxu0
  %v5820 = vadd.f32 0.0, %v5819
  %v5821 = vpop.f32.mrb[0].mxu0
  %v5822 = vpop.f32.mrb[0].mxu0
  %v5823 = vpop.f32.mrb[0].mxu0
  %5824 = vdwg.mxu0
  %5826 = vrot.lane.b32.xlu0 %v5521, 124
  %v5827 = vpop.permute.xlu0 %5826
  %v5829 = vsel %vm1673, %v5521, 0
  %v5832 = vsel %vm1673, %v5827, 0
  %5834 = vmatprep.subr.bf16.mxu0 0
  %5835 = vmatpush1.bf16.xpose.msra.mxu0 %v5832
  %5836 = vmatprep.subr.bf16.mxu0 0
  %5837 = vmatpush1.bf16.xpose.msra.mxu0 0
  %5838 = vmatprep.subr.bf16.mxu0 0
  %5839 = vmatpush1.bf16.xpose.msra.mxu0 0
  %5840 = vmatprep.subr.bf16.mxu0 0
  %5841 = vmatpush1.bf16.xpose.msra.mxu0 0
  %5842 = vmatprep.subr.bf16.mxu0 0
  %5843 = vmatpush1.bf16.xpose.msra.mxu0 0
  %5844 = vmatprep.subr.bf16.mxu0 0
  %5845 = vmatpush1.bf16.xpose.msra.mxu0 0
  %5846 = vmatprep.subr.bf16.mxu0 0
  %5847 = vmatpush1.bf16.xpose.msra.mxu0 0
  %5848 = vmatprep.subr.bf16.mxu0 0
  %5849 = vmatpush1.bf16.xpose.msra.mxu0 0
  %5850 = vmatprep.subr.bf16.mxu0 0
  %5851 = vmatpush1.bf16.xpose.msra.mxu0 0
  %5852 = vmatprep.subr.bf16.mxu0 0
  %5853 = vmatpush1.bf16.xpose.msra.mxu0 0
  %5854 = vmatprep.subr.bf16.mxu0 0
  %5855 = vmatpush1.bf16.xpose.msra.mxu0 0
  %5856 = vmatprep.subr.bf16.mxu0 0
  %5857 = vmatpush1.bf16.xpose.msra.mxu0 0
  %5858 = vmatprep.subr.bf16.mxu0 0
  %5859 = vmatpush1.bf16.xpose.msra.mxu0 0
  %5860 = vmatprep.subr.bf16.mxu0 0
  %5861 = vmatpush1.bf16.xpose.msra.mxu0 0
  %5862 = vmatprep.subr.bf16.mxu0 0
  %5863 = vmatpush1.bf16.xpose.msra.mxu0 0
  %5864 = vmatprep.subr.bf16.mxu0 0
  %5865 = vmatpush1.bf16.xpose.msra.mxu0 0
  %5866 = vmatprep.mubr.bf16.mxu0 0
  %5867 = vmatmul.mubr.bf16.gmra.mrb[0].mxu0 %v5829
  %v5868 = vpop.f32.mrb[0].mxu0
  %v5869 = vadd.f32 0.0, %v5868
  %v5870 = vpop.f32.mrb[0].mxu0
  %v5871 = vpop.f32.mrb[0].mxu0
  %v5872 = vpop.f32.mrb[0].mxu0
  %5873 = vdwg.mxu0
  %5875 = vrot.lane.b32.xlu0 %v5522, 124
  %v5876 = vpop.permute.xlu0 %5875
  %v5878 = vsel %vm1673, %v5522, 0
  %v5881 = vsel %vm1673, %v5876, 0
  %5883 = vmatprep.subr.bf16.mxu0 0
  %5884 = vmatpush1.bf16.xpose.msra.mxu0 %v5881
  %5885 = vmatprep.subr.bf16.mxu0 0
  %5886 = vmatpush1.bf16.xpose.msra.mxu0 0
  %5887 = vmatprep.subr.bf16.mxu0 0
  %5888 = vmatpush1.bf16.xpose.msra.mxu0 0
  %5889 = vmatprep.subr.bf16.mxu0 0
  %5890 = vmatpush1.bf16.xpose.msra.mxu0 0
  %5891 = vmatprep.subr.bf16.mxu0 0
  %5892 = vmatpush1.bf16.xpose.msra.mxu0 0
  %5893 = vmatprep.subr.bf16.mxu0 0
  %5894 = vmatpush1.bf16.xpose.msra.mxu0 0
  %5895 = vmatprep.subr.bf16.mxu0 0
  %5896 = vmatpush1.bf16.xpose.msra.mxu0 0
  %5897 = vmatprep.subr.bf16.mxu0 0
  %5898 = vmatpush1.bf16.xpose.msra.mxu0 0
  %5899 = vmatprep.subr.bf16.mxu0 0
  %5900 = vmatpush1.bf16.xpose.msra.mxu0 0
  %5901 = vmatprep.subr.bf16.mxu0 0
  %5902 = vmatpush1.bf16.xpose.msra.mxu0 0
  %5903 = vmatprep.subr.bf16.mxu0 0
  %5904 = vmatpush1.bf16.xpose.msra.mxu0 0
  %5905 = vmatprep.subr.bf16.mxu0 0
  %5906 = vmatpush1.bf16.xpose.msra.mxu0 0
  %5907 = vmatprep.subr.bf16.mxu0 0
  %5908 = vmatpush1.bf16.xpose.msra.mxu0 0
  %5909 = vmatprep.subr.bf16.mxu0 0
  %5910 = vmatpush1.bf16.xpose.msra.mxu0 0
  %5911 = vmatprep.subr.bf16.mxu0 0
  %5912 = vmatpush1.bf16.xpose.msra.mxu0 0
  %5913 = vmatprep.subr.bf16.mxu0 0
  %5914 = vmatpush1.bf16.xpose.msra.mxu0 0
  %5915 = vmatprep.mubr.bf16.mxu0 0
  %5916 = vmatmul.mubr.bf16.gmra.mrb[0].mxu0 %v5878
  %v5917 = vpop.f32.mrb[0].mxu0
  %v5918 = vadd.f32 0.0, %v5917
  %v5919 = vpop.f32.mrb[0].mxu0
  %v5920 = vpop.f32.mrb[0].mxu0
  %v5921 = vpop.f32.mrb[0].mxu0
  %5922 = vdwg.mxu0
  %5924 = vrot.lane.b32.xlu0 %v5523, 124
  %v5925 = vpop.permute.xlu0 %5924
  %v5927 = vsel %vm1673, %v5523, 0
  %v5930 = vsel %vm1673, %v5925, 0
  %5932 = vmatprep.subr.bf16.mxu0 0
  %5933 = vmatpush1.bf16.xpose.msra.mxu0 %v5930
  %5934 = vmatprep.subr.bf16.mxu0 0
  %5935 = vmatpush1.bf16.xpose.msra.mxu0 0
  %5936 = vmatprep.subr.bf16.mxu0 0
  %5937 = vmatpush1.bf16.xpose.msra.mxu0 0
  %5938 = vmatprep.subr.bf16.mxu0 0
  %5939 = vmatpush1.bf16.xpose.msra.mxu0 0
  %5940 = vmatprep.subr.bf16.mxu0 0
  %5941 = vmatpush1.bf16.xpose.msra.mxu0 0
  %5942 = vmatprep.subr.bf16.mxu0 0
  %5943 = vmatpush1.bf16.xpose.msra.mxu0 0
  %5944 = vmatprep.subr.bf16.mxu0 0
  %5945 = vmatpush1.bf16.xpose.msra.mxu0 0
  %5946 = vmatprep.subr.bf16.mxu0 0
  %5947 = vmatpush1.bf16.xpose.msra.mxu0 0
  %5948 = vmatprep.subr.bf16.mxu0 0
  %5949 = vmatpush1.bf16.xpose.msra.mxu0 0
  %5950 = vmatprep.subr.bf16.mxu0 0
  %5951 = vmatpush1.bf16.xpose.msra.mxu0 0
  %5952 = vmatprep.subr.bf16.mxu0 0
  %5953 = vmatpush1.bf16.xpose.msra.mxu0 0
  %5954 = vmatprep.subr.bf16.mxu0 0
  %5955 = vmatpush1.bf16.xpose.msra.mxu0 0
  %5956 = vmatprep.subr.bf16.mxu0 0
  %5957 = vmatpush1.bf16.xpose.msra.mxu0 0
  %5958 = vmatprep.subr.bf16.mxu0 0
  %5959 = vmatpush1.bf16.xpose.msra.mxu0 0
  %5960 = vmatprep.subr.bf16.mxu0 0
  %5961 = vmatpush1.bf16.xpose.msra.mxu0 0
  %5962 = vmatprep.subr.bf16.mxu0 0
  %5963 = vmatpush1.bf16.xpose.msra.mxu0 0
  %5964 = vmatprep.mubr.bf16.mxu0 0
  %5965 = vmatmul.mubr.bf16.gmra.mrb[0].mxu0 %v5927
  %v5966 = vpop.f32.mrb[0].mxu0
  %v5967 = vadd.f32 0.0, %v5966
  %v5968 = vpop.f32.mrb[0].mxu0
  %v5969 = vpop.f32.mrb[0].mxu0
  %v5970 = vpop.f32.mrb[0].mxu0
  %5971 = vdwg.mxu0
  %5973 = vrot.lane.b32.xlu0 %v5524, 124
  %v5974 = vpop.permute.xlu0 %5973
  %v5976 = vsel %vm1673, %v5524, 0
  %v5979 = vsel %vm1673, %v5974, 0
  %5981 = vmatprep.subr.bf16.mxu0 0
  %5982 = vmatpush1.bf16.xpose.msra.mxu0 %v5979
  %5983 = vmatprep.subr.bf16.mxu0 0
  %5984 = vmatpush1.bf16.xpose.msra.mxu0 0
  %5985 = vmatprep.subr.bf16.mxu0 0
  %5986 = vmatpush1.bf16.xpose.msra.mxu0 0
  %5987 = vmatprep.subr.bf16.mxu0 0
  %5988 = vmatpush1.bf16.xpose.msra.mxu0 0
  %5989 = vmatprep.subr.bf16.mxu0 0
  %5990 = vmatpush1.bf16.xpose.msra.mxu0 0
  %5991 = vmatprep.subr.bf16.mxu0 0
  %5992 = vmatpush1.bf16.xpose.msra.mxu0 0
  %5993 = vmatprep.subr.bf16.mxu0 0
  %5994 = vmatpush1.bf16.xpose.msra.mxu0 0
  %5995 = vmatprep.subr.bf16.mxu0 0
  %5996 = vmatpush1.bf16.xpose.msra.mxu0 0
  %5997 = vmatprep.subr.bf16.mxu0 0
  %5998 = vmatpush1.bf16.xpose.msra.mxu0 0
  %5999 = vmatprep.subr.bf16.mxu0 0
  %6000 = vmatpush1.bf16.xpose.msra.mxu0 0
  %6001 = vmatprep.subr.bf16.mxu0 0
  %6002 = vmatpush1.bf16.xpose.msra.mxu0 0
  %6003 = vmatprep.subr.bf16.mxu0 0
  %6004 = vmatpush1.bf16.xpose.msra.mxu0 0
  %6005 = vmatprep.subr.bf16.mxu0 0
  %6006 = vmatpush1.bf16.xpose.msra.mxu0 0
  %6007 = vmatprep.subr.bf16.mxu0 0
  %6008 = vmatpush1.bf16.xpose.msra.mxu0 0
  %6009 = vmatprep.subr.bf16.mxu0 0
  %6010 = vmatpush1.bf16.xpose.msra.mxu0 0
  %6011 = vmatprep.subr.bf16.mxu0 0
  %6012 = vmatpush1.bf16.xpose.msra.mxu0 0
  %6013 = vmatprep.mubr.bf16.mxu0 0
  %6014 = vmatmul.mubr.bf16.gmra.mrb[0].mxu0 %v5976
  %v6015 = vpop.f32.mrb[0].mxu0
  %v6016 = vadd.f32 0.0, %v6015
  %v6017 = vpop.f32.mrb[0].mxu0
  %v6018 = vpop.f32.mrb[0].mxu0
  %v6019 = vpop.f32.mrb[0].mxu0
  %6020 = vdwg.mxu0
  %6022 = vrot.lane.b32.xlu0 %v5525, 124
  %v6023 = vpop.permute.xlu0 %6022
  %v6025 = vsel %vm1673, %v5525, 0
  %v6028 = vsel %vm1673, %v6023, 0
  %6030 = vmatprep.subr.bf16.mxu0 0
  %6031 = vmatpush1.bf16.xpose.msra.mxu0 %v6028
  %6032 = vmatprep.subr.bf16.mxu0 0
  %6033 = vmatpush1.bf16.xpose.msra.mxu0 0
  %6034 = vmatprep.subr.bf16.mxu0 0
  %6035 = vmatpush1.bf16.xpose.msra.mxu0 0
  %6036 = vmatprep.subr.bf16.mxu0 0
  %6037 = vmatpush1.bf16.xpose.msra.mxu0 0
  %6038 = vmatprep.subr.bf16.mxu0 0
  %6039 = vmatpush1.bf16.xpose.msra.mxu0 0
  %6040 = vmatprep.subr.bf16.mxu0 0
  %6041 = vmatpush1.bf16.xpose.msra.mxu0 0
  %6042 = vmatprep.subr.bf16.mxu0 0
  %6043 = vmatpush1.bf16.xpose.msra.mxu0 0
  %6044 = vmatprep.subr.bf16.mxu0 0
  %6045 = vmatpush1.bf16.xpose.msra.mxu0 0
  %6046 = vmatprep.subr.bf16.mxu0 0
  %6047 = vmatpush1.bf16.xpose.msra.mxu0 0
  %6048 = vmatprep.subr.bf16.mxu0 0
  %6049 = vmatpush1.bf16.xpose.msra.mxu0 0
  %6050 = vmatprep.subr.bf16.mxu0 0
  %6051 = vmatpush1.bf16.xpose.msra.mxu0 0
  %6052 = vmatprep.subr.bf16.mxu0 0
  %6053 = vmatpush1.bf16.xpose.msra.mxu0 0
  %6054 = vmatprep.subr.bf16.mxu0 0
  %6055 = vmatpush1.bf16.xpose.msra.mxu0 0
  %6056 = vmatprep.subr.bf16.mxu0 0
  %6057 = vmatpush1.bf16.xpose.msra.mxu0 0
  %6058 = vmatprep.subr.bf16.mxu0 0
  %6059 = vmatpush1.bf16.xpose.msra.mxu0 0
  %6060 = vmatprep.subr.bf16.mxu0 0
  %6061 = vmatpush1.bf16.xpose.msra.mxu0 0
  %6062 = vmatprep.mubr.bf16.mxu0 0
  %6063 = vmatmul.mubr.bf16.gmra.mrb[0].mxu0 %v6025
  %v6064 = vpop.f32.mrb[0].mxu0
  %v6065 = vadd.f32 0.0, %v6064
  %v6066 = vpop.f32.mrb[0].mxu0
  %v6067 = vpop.f32.mrb[0].mxu0
  %v6068 = vpop.f32.mrb[0].mxu0
  %6069 = vdwg.mxu0
  %6071 = vrot.lane.b32.xlu0 %v5526, 124
  %v6072 = vpop.permute.xlu0 %6071
  %v6074 = vsel %vm1673, %v5526, 0
  %v6077 = vsel %vm1673, %v6072, 0
  %6079 = vmatprep.subr.bf16.mxu0 0
  %6080 = vmatpush1.bf16.xpose.msra.mxu0 %v6077
  %6081 = vmatprep.subr.bf16.mxu0 0
  %6082 = vmatpush1.bf16.xpose.msra.mxu0 0
  %6083 = vmatprep.subr.bf16.mxu0 0
  %6084 = vmatpush1.bf16.xpose.msra.mxu0 0
  %6085 = vmatprep.subr.bf16.mxu0 0
  %6086 = vmatpush1.bf16.xpose.msra.mxu0 0
  %6087 = vmatprep.subr.bf16.mxu0 0
  %6088 = vmatpush1.bf16.xpose.msra.mxu0 0
  %6089 = vmatprep.subr.bf16.mxu0 0
  %6090 = vmatpush1.bf16.xpose.msra.mxu0 0
  %6091 = vmatprep.subr.bf16.mxu0 0
  %6092 = vmatpush1.bf16.xpose.msra.mxu0 0
  %6093 = vmatprep.subr.bf16.mxu0 0
  %6094 = vmatpush1.bf16.xpose.msra.mxu0 0
  %6095 = vmatprep.subr.bf16.mxu0 0
  %6096 = vmatpush1.bf16.xpose.msra.mxu0 0
  %6097 = vmatprep.subr.bf16.mxu0 0
  %6098 = vmatpush1.bf16.xpose.msra.mxu0 0
  %6099 = vmatprep.subr.bf16.mxu0 0
  %6100 = vmatpush1.bf16.xpose.msra.mxu0 0
  %6101 = vmatprep.subr.bf16.mxu0 0
  %6102 = vmatpush1.bf16.xpose.msra.mxu0 0
  %6103 = vmatprep.subr.bf16.mxu0 0
  %6104 = vmatpush1.bf16.xpose.msra.mxu0 0
  %6105 = vmatprep.subr.bf16.mxu0 0
  %6106 = vmatpush1.bf16.xpose.msra.mxu0 0
  %6107 = vmatprep.subr.bf16.mxu0 0
  %6108 = vmatpush1.bf16.xpose.msra.mxu0 0
  %6109 = vmatprep.subr.bf16.mxu0 0
  %6110 = vmatpush1.bf16.xpose.msra.mxu0 0
  %6111 = vmatprep.mubr.bf16.mxu0 0
  %6112 = vmatmul.mubr.bf16.gmra.mrb[0].mxu0 %v6074
  %v6113 = vpop.f32.mrb[0].mxu0
  %v6114 = vadd.f32 0.0, %v6113
  %v6115 = vpop.f32.mrb[0].mxu0
  %v6116 = vpop.f32.mrb[0].mxu0
  %v6117 = vpop.f32.mrb[0].mxu0
  %6118 = vdwg.mxu0
  %6120 = vrot.lane.b32.xlu0 %v5527, 124
  %v6121 = vpop.permute.xlu0 %6120
  %v6123 = vsel %vm1673, %v5527, 0
  %v6126 = vsel %vm1673, %v6121, 0
  %6128 = vmatprep.subr.bf16.mxu0 0
  %6129 = vmatpush1.bf16.xpose.msra.mxu0 %v6126
  %6130 = vmatprep.subr.bf16.mxu0 0
  %6131 = vmatpush1.bf16.xpose.msra.mxu0 0
  %6132 = vmatprep.subr.bf16.mxu0 0
  %6133 = vmatpush1.bf16.xpose.msra.mxu0 0
  %6134 = vmatprep.subr.bf16.mxu0 0
  %6135 = vmatpush1.bf16.xpose.msra.mxu0 0
  %6136 = vmatprep.subr.bf16.mxu0 0
  %6137 = vmatpush1.bf16.xpose.msra.mxu0 0
  %6138 = vmatprep.subr.bf16.mxu0 0
  %6139 = vmatpush1.bf16.xpose.msra.mxu0 0
  %6140 = vmatprep.subr.bf16.mxu0 0
  %6141 = vmatpush1.bf16.xpose.msra.mxu0 0
  %6142 = vmatprep.subr.bf16.mxu0 0
  %6143 = vmatpush1.bf16.xpose.msra.mxu0 0
  %6144 = vmatprep.subr.bf16.mxu0 0
  %6145 = vmatpush1.bf16.xpose.msra.mxu0 0
  %6146 = vmatprep.subr.bf16.mxu0 0
  %6147 = vmatpush1.bf16.xpose.msra.mxu0 0
  %6148 = vmatprep.subr.bf16.mxu0 0
  %6149 = vmatpush1.bf16.xpose.msra.mxu0 0
  %6150 = vmatprep.subr.bf16.mxu0 0
  %6151 = vmatpush1.bf16.xpose.msra.mxu0 0
  %6152 = vmatprep.subr.bf16.mxu0 0
  %6153 = vmatpush1.bf16.xpose.msra.mxu0 0
  %6154 = vmatprep.subr.bf16.mxu0 0
  %6155 = vmatpush1.bf16.xpose.msra.mxu0 0
  %6156 = vmatprep.subr.bf16.mxu0 0
  %6157 = vmatpush1.bf16.xpose.msra.mxu0 0
  %6158 = vmatprep.subr.bf16.mxu0 0
  %6159 = vmatpush1.bf16.xpose.msra.mxu0 0
  %6160 = vmatprep.mubr.bf16.mxu0 0
  %6161 = vmatmul.mubr.bf16.gmra.mrb[0].mxu0 %v6123
  %v6162 = vpop.f32.mrb[0].mxu0
  %v6163 = vadd.f32 0.0, %v6162
  %v6164 = vpop.f32.mrb[0].mxu0
  %v6165 = vpop.f32.mrb[0].mxu0
  %v6166 = vpop.f32.mrb[0].mxu0
  %6167 = vdwg.mxu0
  %6169 = vrot.lane.b32.xlu0 %v5528, 124
  %v6170 = vpop.permute.xlu0 %6169
  %v6172 = vsel %vm1673, %v5528, 0
  %v6175 = vsel %vm1673, %v6170, 0
  %6177 = vmatprep.subr.bf16.mxu0 0
  %6178 = vmatpush1.bf16.xpose.msra.mxu0 %v6175
  %6179 = vmatprep.subr.bf16.mxu0 0
  %6180 = vmatpush1.bf16.xpose.msra.mxu0 0
  %6181 = vmatprep.subr.bf16.mxu0 0
  %6182 = vmatpush1.bf16.xpose.msra.mxu0 0
  %6183 = vmatprep.subr.bf16.mxu0 0
  %6184 = vmatpush1.bf16.xpose.msra.mxu0 0
  %6185 = vmatprep.subr.bf16.mxu0 0
  %6186 = vmatpush1.bf16.xpose.msra.mxu0 0
  %6187 = vmatprep.subr.bf16.mxu0 0
  %6188 = vmatpush1.bf16.xpose.msra.mxu0 0
  %6189 = vmatprep.subr.bf16.mxu0 0
  %6190 = vmatpush1.bf16.xpose.msra.mxu0 0
  %6191 = vmatprep.subr.bf16.mxu0 0
  %6192 = vmatpush1.bf16.xpose.msra.mxu0 0
  %6193 = vmatprep.subr.bf16.mxu0 0
  %6194 = vmatpush1.bf16.xpose.msra.mxu0 0
  %6195 = vmatprep.subr.bf16.mxu0 0
  %6196 = vmatpush1.bf16.xpose.msra.mxu0 0
  %6197 = vmatprep.subr.bf16.mxu0 0
  %6198 = vmatpush1.bf16.xpose.msra.mxu0 0
  %6199 = vmatprep.subr.bf16.mxu0 0
  %6200 = vmatpush1.bf16.xpose.msra.mxu0 0
  %6201 = vmatprep.subr.bf16.mxu0 0
  %6202 = vmatpush1.bf16.xpose.msra.mxu0 0
  %6203 = vmatprep.subr.bf16.mxu0 0
  %6204 = vmatpush1.bf16.xpose.msra.mxu0 0
  %6205 = vmatprep.subr.bf16.mxu0 0
  %6206 = vmatpush1.bf16.xpose.msra.mxu0 0
  %6207 = vmatprep.subr.bf16.mxu0 0
  %6208 = vmatpush1.bf16.xpose.msra.mxu0 0
  %6209 = vmatprep.mubr.bf16.mxu0 0
  %6210 = vmatmul.mubr.bf16.gmra.mrb[0].mxu0 %v6172
  %v6211 = vpop.f32.mrb[0].mxu0
  %v6212 = vadd.f32 0.0, %v6211
  %v6213 = vpop.f32.mrb[0].mxu0
  %v6214 = vpop.f32.mrb[0].mxu0
  %v6215 = vpop.f32.mrb[0].mxu0
  %6216 = vdwg.mxu0
  %6218 = vrot.lane.b32.xlu0 %v5529, 124
  %v6219 = vpop.permute.xlu0 %6218
  %v6221 = vsel %vm1673, %v5529, 0
  %v6224 = vsel %vm1673, %v6219, 0
  %6226 = vmatprep.subr.bf16.mxu0 0
  %6227 = vmatpush1.bf16.xpose.msra.mxu0 %v6224
  %6228 = vmatprep.subr.bf16.mxu0 0
  %6229 = vmatpush1.bf16.xpose.msra.mxu0 0
  %6230 = vmatprep.subr.bf16.mxu0 0
  %6231 = vmatpush1.bf16.xpose.msra.mxu0 0
  %6232 = vmatprep.subr.bf16.mxu0 0
  %6233 = vmatpush1.bf16.xpose.msra.mxu0 0
  %6234 = vmatprep.subr.bf16.mxu0 0
  %6235 = vmatpush1.bf16.xpose.msra.mxu0 0
  %6236 = vmatprep.subr.bf16.mxu0 0
  %6237 = vmatpush1.bf16.xpose.msra.mxu0 0
  %6238 = vmatprep.subr.bf16.mxu0 0
  %6239 = vmatpush1.bf16.xpose.msra.mxu0 0
  %6240 = vmatprep.subr.bf16.mxu0 0
  %6241 = vmatpush1.bf16.xpose.msra.mxu0 0
  %6242 = vmatprep.subr.bf16.mxu0 0
  %6243 = vmatpush1.bf16.xpose.msra.mxu0 0
  %6244 = vmatprep.subr.bf16.mxu0 0
  %6245 = vmatpush1.bf16.xpose.msra.mxu0 0
  %6246 = vmatprep.subr.bf16.mxu0 0
  %6247 = vmatpush1.bf16.xpose.msra.mxu0 0
  %6248 = vmatprep.subr.bf16.mxu0 0
  %6249 = vmatpush1.bf16.xpose.msra.mxu0 0
  %6250 = vmatprep.subr.bf16.mxu0 0
  %6251 = vmatpush1.bf16.xpose.msra.mxu0 0
  %6252 = vmatprep.subr.bf16.mxu0 0
  %6253 = vmatpush1.bf16.xpose.msra.mxu0 0
  %6254 = vmatprep.subr.bf16.mxu0 0
  %6255 = vmatpush1.bf16.xpose.msra.mxu0 0
  %6256 = vmatprep.subr.bf16.mxu0 0
  %6257 = vmatpush1.bf16.xpose.msra.mxu0 0
  %6258 = vmatprep.mubr.bf16.mxu0 0
  %6259 = vmatmul.mubr.bf16.gmra.mrb[0].mxu0 %v6221
  %v6260 = vpop.f32.mrb[0].mxu0
  %v6261 = vadd.f32 0.0, %v6260
  %v6262 = vpop.f32.mrb[0].mxu0
  %v6263 = vpop.f32.mrb[0].mxu0
  %v6264 = vpop.f32.mrb[0].mxu0
  %6265 = vdwg.mxu0
  %6267 = vrot.lane.b32.xlu0 %v5530, 124
  %v6268 = vpop.permute.xlu0 %6267
  %v6270 = vsel %vm1673, %v5530, 0
  %v6273 = vsel %vm1673, %v6268, 0
  %6275 = vmatprep.subr.bf16.mxu0 0
  %6276 = vmatpush1.bf16.xpose.msra.mxu0 %v6273
  %6277 = vmatprep.subr.bf16.mxu0 0
  %6278 = vmatpush1.bf16.xpose.msra.mxu0 0
  %6279 = vmatprep.subr.bf16.mxu0 0
  %6280 = vmatpush1.bf16.xpose.msra.mxu0 0
  %6281 = vmatprep.subr.bf16.mxu0 0
  %6282 = vmatpush1.bf16.xpose.msra.mxu0 0
  %6283 = vmatprep.subr.bf16.mxu0 0
  %6284 = vmatpush1.bf16.xpose.msra.mxu0 0
  %6285 = vmatprep.subr.bf16.mxu0 0
  %6286 = vmatpush1.bf16.xpose.msra.mxu0 0
  %6287 = vmatprep.subr.bf16.mxu0 0
  %6288 = vmatpush1.bf16.xpose.msra.mxu0 0
  %6289 = vmatprep.subr.bf16.mxu0 0
  %6290 = vmatpush1.bf16.xpose.msra.mxu0 0
  %6291 = vmatprep.subr.bf16.mxu0 0
  %6292 = vmatpush1.bf16.xpose.msra.mxu0 0
  %6293 = vmatprep.subr.bf16.mxu0 0
  %6294 = vmatpush1.bf16.xpose.msra.mxu0 0
  %6295 = vmatprep.subr.bf16.mxu0 0
  %6296 = vmatpush1.bf16.xpose.msra.mxu0 0
  %6297 = vmatprep.subr.bf16.mxu0 0
  %6298 = vmatpush1.bf16.xpose.msra.mxu0 0
  %6299 = vmatprep.subr.bf16.mxu0 0
  %6300 = vmatpush1.bf16.xpose.msra.mxu0 0
  %6301 = vmatprep.subr.bf16.mxu0 0
  %6302 = vmatpush1.bf16.xpose.msra.mxu0 0
  %6303 = vmatprep.subr.bf16.mxu0 0
  %6304 = vmatpush1.bf16.xpose.msra.mxu0 0
  %6305 = vmatprep.subr.bf16.mxu0 0
  %6306 = vmatpush1.bf16.xpose.msra.mxu0 0
  %6307 = vmatprep.mubr.bf16.mxu0 0
  %6308 = vmatmul.mubr.bf16.gmra.mrb[0].mxu0 %v6270
  %v6309 = vpop.f32.mrb[0].mxu0
  %v6310 = vadd.f32 0.0, %v6309
  %v6311 = vpop.f32.mrb[0].mxu0
  %v6312 = vpop.f32.mrb[0].mxu0
  %v6313 = vpop.f32.mrb[0].mxu0
  %6314 = vdwg.mxu0
  %v6315 = vmul.f32 %v5575, 0.5
  %v6316 = vmul.f32 %v5624, 0.5
  %v6317 = vmul.f32 %v5673, 0.5
  %v6318 = vmul.f32 %v5722, 0.5
  %v6319 = vmul.f32 %v5771, 0.5
  %v6320 = vmul.f32 %v5820, 0.5
  %v6321 = vmul.f32 %v5869, 0.5
  %v6322 = vmul.f32 %v5918, 0.5
  %v6323 = vmul.f32 %v5967, 0.5
  %v6324 = vmul.f32 %v6016, 0.5
  %v6325 = vmul.f32 %v6065, 0.5
  %v6326 = vmul.f32 %v6114, 0.5
  %v6327 = vmul.f32 %v6163, 0.5
  %v6328 = vmul.f32 %v6212, 0.5
  %v6329 = vmul.f32 %v6261, 0.5
  %v6330 = vmul.f32 %v6310, 0.5
  %v6331 = vsel %vm338, %v6315, -inf
  %6332 = vmax.xlane.f32.xlu0 %v6331
  %v6333 = vpop.xlane.xlu0 %6332
  %v6334 = vsel %vm338, %v6316, -inf
  %6335 = vmax.xlane.f32.xlu0 %v6334
  %v6336 = vpop.xlane.xlu0 %6335
  %v6337 = vsel %vm338, %v6317, -inf
  %6338 = vmax.xlane.f32.xlu0 %v6337
  %v6339 = vpop.xlane.xlu0 %6338
  %v6340 = vsel %vm338, %v6318, -inf
  %6341 = vmax.xlane.f32.xlu0 %v6340
  %v6342 = vpop.xlane.xlu0 %6341
  %v6343 = vsel %vm338, %v6319, -inf
  %6344 = vmax.xlane.f32.xlu0 %v6343
  %v6345 = vpop.xlane.xlu0 %6344
  %v6346 = vsel %vm338, %v6320, -inf
  %6347 = vmax.xlane.f32.xlu0 %v6346
  %v6348 = vpop.xlane.xlu0 %6347
  %v6349 = vsel %vm338, %v6321, -inf
  %6350 = vmax.xlane.f32.xlu0 %v6349
  %v6351 = vpop.xlane.xlu0 %6350
  %v6352 = vsel %vm338, %v6322, -inf
  %6353 = vmax.xlane.f32.xlu0 %v6352
  %v6354 = vpop.xlane.xlu0 %6353
  %v6355 = vsel %vm338, %v6323, -inf
  %6356 = vmax.xlane.f32.xlu0 %v6355
  %v6357 = vpop.xlane.xlu0 %6356
  %v6358 = vsel %vm338, %v6324, -inf
  %6359 = vmax.xlane.f32.xlu0 %v6358
  %v6360 = vpop.xlane.xlu0 %6359
  %v6361 = vsel %vm338, %v6325, -inf
  %6362 = vmax.xlane.f32.xlu0 %v6361
  %v6363 = vpop.xlane.xlu0 %6362
  %v6364 = vsel %vm338, %v6326, -inf
  %6365 = vmax.xlane.f32.xlu0 %v6364
  %v6366 = vpop.xlane.xlu0 %6365
  %v6367 = vsel %vm338, %v6327, -inf
  %6368 = vmax.xlane.f32.xlu0 %v6367
  %v6369 = vpop.xlane.xlu0 %6368
  %v6370 = vsel %vm338, %v6328, -inf
  %6371 = vmax.xlane.f32.xlu0 %v6370
  %v6372 = vpop.xlane.xlu0 %6371
  %v6373 = vsel %vm338, %v6329, -inf
  %6374 = vmax.xlane.f32.xlu0 %v6373
  %v6375 = vpop.xlane.xlu0 %6374
  %v6376 = vsel %vm338, %v6330, -inf
  %6377 = vmax.xlane.f32.xlu0 %v6376
  %v6378 = vpop.xlane.xlu0 %6377
  %v6379 = vsub.f32 %v6315, %v6333
  %v6380 = vsub.f32 %v6316, %v6336
  %v6381 = vsub.f32 %v6317, %v6339
  %v6382 = vsub.f32 %v6318, %v6342
  %v6383 = vsub.f32 %v6319, %v6345
  %v6384 = vsub.f32 %v6320, %v6348
  %v6385 = vsub.f32 %v6321, %v6351
  %v6386 = vsub.f32 %v6322, %v6354
  %v6387 = vsub.f32 %v6323, %v6357
  %v6388 = vsub.f32 %v6324, %v6360
  %v6389 = vsub.f32 %v6325, %v6363
  %v6390 = vsub.f32 %v6326, %v6366
  %v6391 = vsub.f32 %v6327, %v6369
  %v6392 = vsub.f32 %v6328, %v6372
  %v6393 = vsub.f32 %v6329, %v6375
  %v6394 = vsub.f32 %v6330, %v6378
  %v6395 = vmul.f32 %v6379, 1.442695
  %v6396 = vpow.pop %v6395
  %v6397 = vmul.f32 %v6380, 1.442695
  %v6398 = vpow.pop %v6397
  %v6399 = vmul.f32 %v6381, 1.442695
  %v6400 = vpow.pop %v6399
  %v6401 = vmul.f32 %v6382, 1.442695
  %v6402 = vpow.pop %v6401
  %v6403 = vmul.f32 %v6383, 1.442695
  %v6404 = vpow.pop %v6403
  %v6405 = vmul.f32 %v6384, 1.442695
  %v6406 = vpow.pop %v6405
  %v6407 = vmul.f32 %v6385, 1.442695
  %v6408 = vpow.pop %v6407
  %v6409 = vmul.f32 %v6386, 1.442695
  %v6410 = vpow.pop %v6409
  %v6411 = vmul.f32 %v6387, 1.442695
  %v6412 = vpow.pop %v6411
  %v6413 = vmul.f32 %v6388, 1.442695
  %v6414 = vpow.pop %v6413
  %v6415 = vmul.f32 %v6389, 1.442695
  %v6416 = vpow.pop %v6415
  %v6417 = vmul.f32 %v6390, 1.442695
  %v6418 = vpow.pop %v6417
  %v6419 = vmul.f32 %v6391, 1.442695
  %v6420 = vpow.pop %v6419
  %v6421 = vmul.f32 %v6392, 1.442695
  %v6422 = vpow.pop %v6421
  %v6423 = vmul.f32 %v6393, 1.442695
  %v6424 = vpow.pop %v6423
  %v6425 = vmul.f32 %v6394, 1.442695
  %v6426 = vpow.pop %v6425
  %v6427 = vsel %vm338, %v6396, 0.0
  %6428 = vadd.xlane.f32.xlu0 %v6427
  %v6429 = vpop.xlane.xlu0 %6428
  %v6430 = vsel %vm338, %v6398, 0.0
  %6431 = vadd.xlane.f32.xlu0 %v6430
  %v6432 = vpop.xlane.xlu0 %6431
  %v6433 = vsel %vm338, %v6400, 0.0
  %6434 = vadd.xlane.f32.xlu0 %v6433
  %v6435 = vpop.xlane.xlu0 %6434
  %v6436 = vsel %vm338, %v6402, 0.0
  %6437 = vadd.xlane.f32.xlu0 %v6436
  %v6438 = vpop.xlane.xlu0 %6437
  %v6439 = vsel %vm338, %v6404, 0.0
  %6440 = vadd.xlane.f32.xlu0 %v6439
  %v6441 = vpop.xlane.xlu0 %6440
  %v6442 = vsel %vm338, %v6406, 0.0
  %6443 = vadd.xlane.f32.xlu0 %v6442
  %v6444 = vpop.xlane.xlu0 %6443
  %v6445 = vsel %vm338, %v6408, 0.0
  %6446 = vadd.xlane.f32.xlu0 %v6445
  %v6447 = vpop.xlane.xlu0 %6446
  %v6448 = vsel %vm338, %v6410, 0.0
  %6449 = vadd.xlane.f32.xlu0 %v6448
  %v6450 = vpop.xlane.xlu0 %6449
  %v6451 = vsel %vm338, %v6412, 0.0
  %6452 = vadd.xlane.f32.xlu0 %v6451
  %v6453 = vpop.xlane.xlu0 %6452
  %v6454 = vsel %vm338, %v6414, 0.0
  %6455 = vadd.xlane.f32.xlu0 %v6454
  %v6456 = vpop.xlane.xlu0 %6455
  %v6457 = vsel %vm338, %v6416, 0.0
  %6458 = vadd.xlane.f32.xlu0 %v6457
  %v6459 = vpop.xlane.xlu0 %6458
  %v6460 = vsel %vm338, %v6418, 0.0
  %6461 = vadd.xlane.f32.xlu0 %v6460
  %v6462 = vpop.xlane.xlu0 %6461
  %v6463 = vsel %vm338, %v6420, 0.0
  %6464 = vadd.xlane.f32.xlu0 %v6463
  %v6465 = vpop.xlane.xlu0 %6464
  %v6466 = vsel %vm338, %v6422, 0.0
  %6467 = vadd.xlane.f32.xlu0 %v6466
  %v6468 = vpop.xlane.xlu0 %6467
  %v6469 = vsel %vm338, %v6424, 0.0
  %6470 = vadd.xlane.f32.xlu0 %v6469
  %v6471 = vpop.xlane.xlu0 %6470
  %v6472 = vsel %vm338, %v6426, 0.0
  %6473 = vadd.xlane.f32.xlu0 %v6472
  %v6474 = vpop.xlane.xlu0 %6473
  %v6475 = vrcp.pop %v6429
  %v6476 = vrcp.pop %v6432
  %v6477 = vrcp.pop %v6435
  %v6478 = vrcp.pop %v6438
  %v6479 = vrcp.pop %v6441
  %v6480 = vrcp.pop %v6444
  %v6481 = vrcp.pop %v6447
  %v6482 = vrcp.pop %v6450
  %v6483 = vrcp.pop %v6453
  %v6484 = vrcp.pop %v6456
  %v6485 = vrcp.pop %v6459
  %v6486 = vrcp.pop %v6462
  %v6487 = vrcp.pop %v6465
  %v6488 = vrcp.pop %v6468
  %v6489 = vrcp.pop %v6471
  %v6490 = vrcp.pop %v6474
  %v6491 = vmul.f32 %v6396, %v6475
  %v6492 = vmul.f32 %v6398, %v6476
  %v6493 = vmul.f32 %v6400, %v6477
  %v6494 = vmul.f32 %v6402, %v6478
  %v6495 = vmul.f32 %v6404, %v6479
  %v6496 = vmul.f32 %v6406, %v6480
  %v6497 = vmul.f32 %v6408, %v6481
  %v6498 = vmul.f32 %v6410, %v6482
  %v6499 = vmul.f32 %v6412, %v6483
  %v6500 = vmul.f32 %v6414, %v6484
  %v6501 = vmul.f32 %v6416, %v6485
  %v6502 = vmul.f32 %v6418, %v6486
  %v6503 = vmul.f32 %v6420, %v6487
  %v6504 = vmul.f32 %v6422, %v6488
  %v6505 = vmul.f32 %v6424, %v6489
  %v6506 = vmul.f32 %v6426, %v6490
  %v6507 = vpack.c.bf16 %v6491, %v6491
  %v6508 = vpack.c.bf16 %v6492, %v6492
  %v6509 = vpack.c.bf16 %v6493, %v6493
  %v6510 = vpack.c.bf16 %v6494, %v6494
  %v6511 = vpack.c.bf16 %v6495, %v6495
  %v6512 = vpack.c.bf16 %v6496, %v6496
  %v6513 = vpack.c.bf16 %v6497, %v6497
  %v6514 = vpack.c.bf16 %v6498, %v6498
  %v6515 = vpack.c.bf16 %v6499, %v6499
  %v6516 = vpack.c.bf16 %v6500, %v6500
  %v6517 = vpack.c.bf16 %v6501, %v6501
  %v6518 = vpack.c.bf16 %v6502, %v6502
  %v6519 = vpack.c.bf16 %v6503, %v6503
  %v6520 = vpack.c.bf16 %v6504, %v6504
  %v6521 = vpack.c.bf16 %v6505, %v6505
  %v6522 = vpack.c.bf16 %v6506, %v6506
  %6523 = vrot.lane.b32.xlu0 %v5515, 120
  %v6524 = vpop.permute.xlu0 %6523
  %v6526 = vsel %vm338, %v6507, 0
  %v6529 = vsel %vm342, %v6524, 0
  %6531 = vmatprep.subr.bf16.mxu0 0
  %6532 = vmatpush1.bf16.msra.mxu0 %v6529
  %6533 = vmatprep.subr.bf16.mxu0 0
  %6534 = vmatpush1.bf16.msra.mxu0 0
  %6535 = vmatprep.subr.bf16.mxu0 0
  %6536 = vmatpush1.bf16.msra.mxu0 0
  %6537 = vmatprep.subr.bf16.mxu0 0
  %6538 = vmatpush1.bf16.msra.mxu0 0
  %6539 = vmatprep.subr.bf16.mxu0 0
  %6540 = vmatpush1.bf16.msra.mxu0 0
  %6541 = vmatprep.subr.bf16.mxu0 0
  %6542 = vmatpush1.bf16.msra.mxu0 0
  %6543 = vmatprep.subr.bf16.mxu0 0
  %6544 = vmatpush1.bf16.msra.mxu0 0
  %6545 = vmatprep.subr.bf16.mxu0 0
  %6546 = vmatpush1.bf16.msra.mxu0 0
  %6547 = vmatprep.subr.bf16.mxu0 0
  %6548 = vmatpush1.bf16.msra.mxu0 0
  %6549 = vmatprep.subr.bf16.mxu0 0
  %6550 = vmatpush1.bf16.msra.mxu0 0
  %6551 = vmatprep.subr.bf16.mxu0 0
  %6552 = vmatpush1.bf16.msra.mxu0 0
  %6553 = vmatprep.subr.bf16.mxu0 0
  %6554 = vmatpush1.bf16.msra.mxu0 0
  %6555 = vmatprep.subr.bf16.mxu0 0
  %6556 = vmatpush1.bf16.msra.mxu0 0
  %6557 = vmatprep.subr.bf16.mxu0 0
  %6558 = vmatpush1.bf16.msra.mxu0 0
  %6559 = vmatprep.subr.bf16.mxu0 0
  %6560 = vmatpush1.bf16.msra.mxu0 0
  %6561 = vmatprep.subr.bf16.mxu0 0
  %6562 = vmatpush1.bf16.msra.mxu0 0
  %6563 = vmatprep.mubr.bf16.mxu0 0
  %6564 = vmatmul.mubr.bf16.gmra.mrb[0].mxu0 %v6526
  %v6565 = vpop.f32.mrb[0].mxu0
  %v6566 = vadd.f32 0.0, %v6565
  %v6567 = vpop.f32.mrb[0].mxu0
  %v6568 = vpop.f32.mrb[0].mxu0
  %v6569 = vpop.f32.mrb[0].mxu0
  %6570 = vdwg.mxu0
  %6571 = vrot.lane.b32.xlu0 %v5516, 120
  %v6572 = vpop.permute.xlu0 %6571
  %v6574 = vsel %vm338, %v6508, 0
  %v6577 = vsel %vm342, %v6572, 0
  %6579 = vmatprep.subr.bf16.mxu0 0
  %6580 = vmatpush1.bf16.msra.mxu0 %v6577
  %6581 = vmatprep.subr.bf16.mxu0 0
  %6582 = vmatpush1.bf16.msra.mxu0 0
  %6583 = vmatprep.subr.bf16.mxu0 0
  %6584 = vmatpush1.bf16.msra.mxu0 0
  %6585 = vmatprep.subr.bf16.mxu0 0
  %6586 = vmatpush1.bf16.msra.mxu0 0
  %6587 = vmatprep.subr.bf16.mxu0 0
  %6588 = vmatpush1.bf16.msra.mxu0 0
  %6589 = vmatprep.subr.bf16.mxu0 0
  %6590 = vmatpush1.bf16.msra.mxu0 0
  %6591 = vmatprep.subr.bf16.mxu0 0
  %6592 = vmatpush1.bf16.msra.mxu0 0
  %6593 = vmatprep.subr.bf16.mxu0 0
  %6594 = vmatpush1.bf16.msra.mxu0 0
  %6595 = vmatprep.subr.bf16.mxu0 0
  %6596 = vmatpush1.bf16.msra.mxu0 0
  %6597 = vmatprep.subr.bf16.mxu0 0
  %6598 = vmatpush1.bf16.msra.mxu0 0
  %6599 = vmatprep.subr.bf16.mxu0 0
  %6600 = vmatpush1.bf16.msra.mxu0 0
  %6601 = vmatprep.subr.bf16.mxu0 0
  %6602 = vmatpush1.bf16.msra.mxu0 0
  %6603 = vmatprep.subr.bf16.mxu0 0
  %6604 = vmatpush1.bf16.msra.mxu0 0
  %6605 = vmatprep.subr.bf16.mxu0 0
  %6606 = vmatpush1.bf16.msra.mxu0 0
  %6607 = vmatprep.subr.bf16.mxu0 0
  %6608 = vmatpush1.bf16.msra.mxu0 0
  %6609 = vmatprep.subr.bf16.mxu0 0
  %6610 = vmatpush1.bf16.msra.mxu0 0
  %6611 = vmatprep.mubr.bf16.mxu0 0
  %6612 = vmatmul.mubr.bf16.gmra.mrb[0].mxu0 %v6574
  %v6613 = vpop.f32.mrb[0].mxu0
  %v6614 = vadd.f32 0.0, %v6613
  %v6615 = vpop.f32.mrb[0].mxu0
  %v6616 = vpop.f32.mrb[0].mxu0
  %v6617 = vpop.f32.mrb[0].mxu0
  %6618 = vdwg.mxu0
  %6619 = vrot.lane.b32.xlu0 %v5517, 120
  %v6620 = vpop.permute.xlu0 %6619
  %v6622 = vsel %vm338, %v6509, 0
  %v6625 = vsel %vm342, %v6620, 0
  %6627 = vmatprep.subr.bf16.mxu0 0
  %6628 = vmatpush1.bf16.msra.mxu0 %v6625
  %6629 = vmatprep.subr.bf16.mxu0 0
  %6630 = vmatpush1.bf16.msra.mxu0 0
  %6631 = vmatprep.subr.bf16.mxu0 0
  %6632 = vmatpush1.bf16.msra.mxu0 0
  %6633 = vmatprep.subr.bf16.mxu0 0
  %6634 = vmatpush1.bf16.msra.mxu0 0
  %6635 = vmatprep.subr.bf16.mxu0 0
  %6636 = vmatpush1.bf16.msra.mxu0 0
  %6637 = vmatprep.subr.bf16.mxu0 0
  %6638 = vmatpush1.bf16.msra.mxu0 0
  %6639 = vmatprep.subr.bf16.mxu0 0
  %6640 = vmatpush1.bf16.msra.mxu0 0
  %6641 = vmatprep.subr.bf16.mxu0 0
  %6642 = vmatpush1.bf16.msra.mxu0 0
  %6643 = vmatprep.subr.bf16.mxu0 0
  %6644 = vmatpush1.bf16.msra.mxu0 0
  %6645 = vmatprep.subr.bf16.mxu0 0
  %6646 = vmatpush1.bf16.msra.mxu0 0
  %6647 = vmatprep.subr.bf16.mxu0 0
  %6648 = vmatpush1.bf16.msra.mxu0 0
  %6649 = vmatprep.subr.bf16.mxu0 0
  %6650 = vmatpush1.bf16.msra.mxu0 0
  %6651 = vmatprep.subr.bf16.mxu0 0
  %6652 = vmatpush1.bf16.msra.mxu0 0
  %6653 = vmatprep.subr.bf16.mxu0 0
  %6654 = vmatpush1.bf16.msra.mxu0 0
  %6655 = vmatprep.subr.bf16.mxu0 0
  %6656 = vmatpush1.bf16.msra.mxu0 0
  %6657 = vmatprep.subr.bf16.mxu0 0
  %6658 = vmatpush1.bf16.msra.mxu0 0
  %6659 = vmatprep.mubr.bf16.mxu0 0
  %6660 = vmatmul.mubr.bf16.gmra.mrb[0].mxu0 %v6622
  %v6661 = vpop.f32.mrb[0].mxu0
  %v6662 = vadd.f32 0.0, %v6661
  %v6663 = vpop.f32.mrb[0].mxu0
  %v6664 = vpop.f32.mrb[0].mxu0
  %v6665 = vpop.f32.mrb[0].mxu0
  %6666 = vdwg.mxu0
  %6667 = vrot.lane.b32.xlu0 %v5518, 120
  %v6668 = vpop.permute.xlu0 %6667
  %v6670 = vsel %vm338, %v6510, 0
  %v6673 = vsel %vm342, %v6668, 0
  %6675 = vmatprep.subr.bf16.mxu0 0
  %6676 = vmatpush1.bf16.msra.mxu0 %v6673
  %6677 = vmatprep.subr.bf16.mxu0 0
  %6678 = vmatpush1.bf16.msra.mxu0 0
  %6679 = vmatprep.subr.bf16.mxu0 0
  %6680 = vmatpush1.bf16.msra.mxu0 0
  %6681 = vmatprep.subr.bf16.mxu0 0
  %6682 = vmatpush1.bf16.msra.mxu0 0
  %6683 = vmatprep.subr.bf16.mxu0 0
  %6684 = vmatpush1.bf16.msra.mxu0 0
  %6685 = vmatprep.subr.bf16.mxu0 0
  %6686 = vmatpush1.bf16.msra.mxu0 0
  %6687 = vmatprep.subr.bf16.mxu0 0
  %6688 = vmatpush1.bf16.msra.mxu0 0
  %6689 = vmatprep.subr.bf16.mxu0 0
  %6690 = vmatpush1.bf16.msra.mxu0 0
  %6691 = vmatprep.subr.bf16.mxu0 0
  %6692 = vmatpush1.bf16.msra.mxu0 0
  %6693 = vmatprep.subr.bf16.mxu0 0
  %6694 = vmatpush1.bf16.msra.mxu0 0
  %6695 = vmatprep.subr.bf16.mxu0 0
  %6696 = vmatpush1.bf16.msra.mxu0 0
  %6697 = vmatprep.subr.bf16.mxu0 0
  %6698 = vmatpush1.bf16.msra.mxu0 0
  %6699 = vmatprep.subr.bf16.mxu0 0
  %6700 = vmatpush1.bf16.msra.mxu0 0
  %6701 = vmatprep.subr.bf16.mxu0 0
  %6702 = vmatpush1.bf16.msra.mxu0 0
  %6703 = vmatprep.subr.bf16.mxu0 0
  %6704 = vmatpush1.bf16.msra.mxu0 0
  %6705 = vmatprep.subr.bf16.mxu0 0
  %6706 = vmatpush1.bf16.msra.mxu0 0
  %6707 = vmatprep.mubr.bf16.mxu0 0
  %6708 = vmatmul.mubr.bf16.gmra.mrb[0].mxu0 %v6670
  %v6709 = vpop.f32.mrb[0].mxu0
  %v6710 = vadd.f32 0.0, %v6709
  %v6711 = vpop.f32.mrb[0].mxu0
  %v6712 = vpop.f32.mrb[0].mxu0
  %v6713 = vpop.f32.mrb[0].mxu0
  %6714 = vdwg.mxu0
  %6715 = vrot.lane.b32.xlu0 %v5519, 120
  %v6716 = vpop.permute.xlu0 %6715
  %v6718 = vsel %vm338, %v6511, 0
  %v6721 = vsel %vm342, %v6716, 0
  %6723 = vmatprep.subr.bf16.mxu0 0
  %6724 = vmatpush1.bf16.msra.mxu0 %v6721
  %6725 = vmatprep.subr.bf16.mxu0 0
  %6726 = vmatpush1.bf16.msra.mxu0 0
  %6727 = vmatprep.subr.bf16.mxu0 0
  %6728 = vmatpush1.bf16.msra.mxu0 0
  %6729 = vmatprep.subr.bf16.mxu0 0
  %6730 = vmatpush1.bf16.msra.mxu0 0
  %6731 = vmatprep.subr.bf16.mxu0 0
  %6732 = vmatpush1.bf16.msra.mxu0 0
  %6733 = vmatprep.subr.bf16.mxu0 0
  %6734 = vmatpush1.bf16.msra.mxu0 0
  %6735 = vmatprep.subr.bf16.mxu0 0
  %6736 = vmatpush1.bf16.msra.mxu0 0
  %6737 = vmatprep.subr.bf16.mxu0 0
  %6738 = vmatpush1.bf16.msra.mxu0 0
  %6739 = vmatprep.subr.bf16.mxu0 0
  %6740 = vmatpush1.bf16.msra.mxu0 0
  %6741 = vmatprep.subr.bf16.mxu0 0
  %6742 = vmatpush1.bf16.msra.mxu0 0
  %6743 = vmatprep.subr.bf16.mxu0 0
  %6744 = vmatpush1.bf16.msra.mxu0 0
  %6745 = vmatprep.subr.bf16.mxu0 0
  %6746 = vmatpush1.bf16.msra.mxu0 0
  %6747 = vmatprep.subr.bf16.mxu0 0
  %6748 = vmatpush1.bf16.msra.mxu0 0
  %6749 = vmatprep.subr.bf16.mxu0 0
  %6750 = vmatpush1.bf16.msra.mxu0 0
  %6751 = vmatprep.subr.bf16.mxu0 0
  %6752 = vmatpush1.bf16.msra.mxu0 0
  %6753 = vmatprep.subr.bf16.mxu0 0
  %6754 = vmatpush1.bf16.msra.mxu0 0
  %6755 = vmatprep.mubr.bf16.mxu0 0
  %6756 = vmatmul.mubr.bf16.gmra.mrb[0].mxu0 %v6718
  %v6757 = vpop.f32.mrb[0].mxu0
  %v6758 = vadd.f32 0.0, %v6757
  %v6759 = vpop.f32.mrb[0].mxu0
  %v6760 = vpop.f32.mrb[0].mxu0
  %v6761 = vpop.f32.mrb[0].mxu0
  %6762 = vdwg.mxu0
  %6763 = vrot.lane.b32.xlu0 %v5520, 120
  %v6764 = vpop.permute.xlu0 %6763
  %v6766 = vsel %vm338, %v6512, 0
  %v6769 = vsel %vm342, %v6764, 0
  %6771 = vmatprep.subr.bf16.mxu0 0
  %6772 = vmatpush1.bf16.msra.mxu0 %v6769
  %6773 = vmatprep.subr.bf16.mxu0 0
  %6774 = vmatpush1.bf16.msra.mxu0 0
  %6775 = vmatprep.subr.bf16.mxu0 0
  %6776 = vmatpush1.bf16.msra.mxu0 0
  %6777 = vmatprep.subr.bf16.mxu0 0
  %6778 = vmatpush1.bf16.msra.mxu0 0
  %6779 = vmatprep.subr.bf16.mxu0 0
  %6780 = vmatpush1.bf16.msra.mxu0 0
  %6781 = vmatprep.subr.bf16.mxu0 0
  %6782 = vmatpush1.bf16.msra.mxu0 0
  %6783 = vmatprep.subr.bf16.mxu0 0
  %6784 = vmatpush1.bf16.msra.mxu0 0
  %6785 = vmatprep.subr.bf16.mxu0 0
  %6786 = vmatpush1.bf16.msra.mxu0 0
  %6787 = vmatprep.subr.bf16.mxu0 0
  %6788 = vmatpush1.bf16.msra.mxu0 0
  %6789 = vmatprep.subr.bf16.mxu0 0
  %6790 = vmatpush1.bf16.msra.mxu0 0
  %6791 = vmatprep.subr.bf16.mxu0 0
  %6792 = vmatpush1.bf16.msra.mxu0 0
  %6793 = vmatprep.subr.bf16.mxu0 0
  %6794 = vmatpush1.bf16.msra.mxu0 0
  %6795 = vmatprep.subr.bf16.mxu0 0
  %6796 = vmatpush1.bf16.msra.mxu0 0
  %6797 = vmatprep.subr.bf16.mxu0 0
  %6798 = vmatpush1.bf16.msra.mxu0 0
  %6799 = vmatprep.subr.bf16.mxu0 0
  %6800 = vmatpush1.bf16.msra.mxu0 0
  %6801 = vmatprep.subr.bf16.mxu0 0
  %6802 = vmatpush1.bf16.msra.mxu0 0
  %6803 = vmatprep.mubr.bf16.mxu0 0
  %6804 = vmatmul.mubr.bf16.gmra.mrb[0].mxu0 %v6766
  %v6805 = vpop.f32.mrb[0].mxu0
  %v6806 = vadd.f32 0.0, %v6805
  %v6807 = vpop.f32.mrb[0].mxu0
  %v6808 = vpop.f32.mrb[0].mxu0
  %v6809 = vpop.f32.mrb[0].mxu0
  %6810 = vdwg.mxu0
  %6811 = vrot.lane.b32.xlu0 %v5521, 120
  %v6812 = vpop.permute.xlu0 %6811
  %v6814 = vsel %vm338, %v6513, 0
  %v6817 = vsel %vm342, %v6812, 0
  %6819 = vmatprep.subr.bf16.mxu0 0
  %6820 = vmatpush1.bf16.msra.mxu0 %v6817
  %6821 = vmatprep.subr.bf16.mxu0 0
  %6822 = vmatpush1.bf16.msra.mxu0 0
  %6823 = vmatprep.subr.bf16.mxu0 0
  %6824 = vmatpush1.bf16.msra.mxu0 0
  %6825 = vmatprep.subr.bf16.mxu0 0
  %6826 = vmatpush1.bf16.msra.mxu0 0
  %6827 = vmatprep.subr.bf16.mxu0 0
  %6828 = vmatpush1.bf16.msra.mxu0 0
  %6829 = vmatprep.subr.bf16.mxu0 0
  %6830 = vmatpush1.bf16.msra.mxu0 0
  %6831 = vmatprep.subr.bf16.mxu0 0
  %6832 = vmatpush1.bf16.msra.mxu0 0
  %6833 = vmatprep.subr.bf16.mxu0 0
  %6834 = vmatpush1.bf16.msra.mxu0 0
  %6835 = vmatprep.subr.bf16.mxu0 0
  %6836 = vmatpush1.bf16.msra.mxu0 0
  %6837 = vmatprep.subr.bf16.mxu0 0
  %6838 = vmatpush1.bf16.msra.mxu0 0
  %6839 = vmatprep.subr.bf16.mxu0 0
  %6840 = vmatpush1.bf16.msra.mxu0 0
  %6841 = vmatprep.subr.bf16.mxu0 0
  %6842 = vmatpush1.bf16.msra.mxu0 0
  %6843 = vmatprep.subr.bf16.mxu0 0
  %6844 = vmatpush1.bf16.msra.mxu0 0
  %6845 = vmatprep.subr.bf16.mxu0 0
  %6846 = vmatpush1.bf16.msra.mxu0 0
  %6847 = vmatprep.subr.bf16.mxu0 0
  %6848 = vmatpush1.bf16.msra.mxu0 0
  %6849 = vmatprep.subr.bf16.mxu0 0
  %6850 = vmatpush1.bf16.msra.mxu0 0
  %6851 = vmatprep.mubr.bf16.mxu0 0
  %6852 = vmatmul.mubr.bf16.gmra.mrb[0].mxu0 %v6814
  %v6853 = vpop.f32.mrb[0].mxu0
  %v6854 = vadd.f32 0.0, %v6853
  %v6855 = vpop.f32.mrb[0].mxu0
  %v6856 = vpop.f32.mrb[0].mxu0
  %v6857 = vpop.f32.mrb[0].mxu0
  %6858 = vdwg.mxu0
  %6859 = vrot.lane.b32.xlu0 %v5522, 120
  %v6860 = vpop.permute.xlu0 %6859
  %v6862 = vsel %vm338, %v6514, 0
  %v6865 = vsel %vm342, %v6860, 0
  %6867 = vmatprep.subr.bf16.mxu0 0
  %6868 = vmatpush1.bf16.msra.mxu0 %v6865
  %6869 = vmatprep.subr.bf16.mxu0 0
  %6870 = vmatpush1.bf16.msra.mxu0 0
  %6871 = vmatprep.subr.bf16.mxu0 0
  %6872 = vmatpush1.bf16.msra.mxu0 0
  %6873 = vmatprep.subr.bf16.mxu0 0
  %6874 = vmatpush1.bf16.msra.mxu0 0
  %6875 = vmatprep.subr.bf16.mxu0 0
  %6876 = vmatpush1.bf16.msra.mxu0 0
  %6877 = vmatprep.subr.bf16.mxu0 0
  %6878 = vmatpush1.bf16.msra.mxu0 0
  %6879 = vmatprep.subr.bf16.mxu0 0
  %6880 = vmatpush1.bf16.msra.mxu0 0
  %6881 = vmatprep.subr.bf16.mxu0 0
  %6882 = vmatpush1.bf16.msra.mxu0 0
  %6883 = vmatprep.subr.bf16.mxu0 0
  %6884 = vmatpush1.bf16.msra.mxu0 0
  %6885 = vmatprep.subr.bf16.mxu0 0
  %6886 = vmatpush1.bf16.msra.mxu0 0
  %6887 = vmatprep.subr.bf16.mxu0 0
  %6888 = vmatpush1.bf16.msra.mxu0 0
  %6889 = vmatprep.subr.bf16.mxu0 0
  %6890 = vmatpush1.bf16.msra.mxu0 0
  %6891 = vmatprep.subr.bf16.mxu0 0
  %6892 = vmatpush1.bf16.msra.mxu0 0
  %6893 = vmatprep.subr.bf16.mxu0 0
  %6894 = vmatpush1.bf16.msra.mxu0 0
  %6895 = vmatprep.subr.bf16.mxu0 0
  %6896 = vmatpush1.bf16.msra.mxu0 0
  %6897 = vmatprep.subr.bf16.mxu0 0
  %6898 = vmatpush1.bf16.msra.mxu0 0
  %6899 = vmatprep.mubr.bf16.mxu0 0
  %6900 = vmatmul.mubr.bf16.gmra.mrb[0].mxu0 %v6862
  %v6901 = vpop.f32.mrb[0].mxu0
  %v6902 = vadd.f32 0.0, %v6901
  %v6903 = vpop.f32.mrb[0].mxu0
  %v6904 = vpop.f32.mrb[0].mxu0
  %v6905 = vpop.f32.mrb[0].mxu0
  %6906 = vdwg.mxu0
  %6907 = vrot.lane.b32.xlu0 %v5523, 120
  %v6908 = vpop.permute.xlu0 %6907
  %v6910 = vsel %vm338, %v6515, 0
  %v6913 = vsel %vm342, %v6908, 0
  %6915 = vmatprep.subr.bf16.mxu0 0
  %6916 = vmatpush1.bf16.msra.mxu0 %v6913
  %6917 = vmatprep.subr.bf16.mxu0 0
  %6918 = vmatpush1.bf16.msra.mxu0 0
  %6919 = vmatprep.subr.bf16.mxu0 0
  %6920 = vmatpush1.bf16.msra.mxu0 0
  %6921 = vmatprep.subr.bf16.mxu0 0
  %6922 = vmatpush1.bf16.msra.mxu0 0
  %6923 = vmatprep.subr.bf16.mxu0 0
  %6924 = vmatpush1.bf16.msra.mxu0 0
  %6925 = vmatprep.subr.bf16.mxu0 0
  %6926 = vmatpush1.bf16.msra.mxu0 0
  %6927 = vmatprep.subr.bf16.mxu0 0
  %6928 = vmatpush1.bf16.msra.mxu0 0
  %6929 = vmatprep.subr.bf16.mxu0 0
  %6930 = vmatpush1.bf16.msra.mxu0 0
  %6931 = vmatprep.subr.bf16.mxu0 0
  %6932 = vmatpush1.bf16.msra.mxu0 0
  %6933 = vmatprep.subr.bf16.mxu0 0
  %6934 = vmatpush1.bf16.msra.mxu0 0
  %6935 = vmatprep.subr.bf16.mxu0 0
  %6936 = vmatpush1.bf16.msra.mxu0 0
  %6937 = vmatprep.subr.bf16.mxu0 0
  %6938 = vmatpush1.bf16.msra.mxu0 0
  %6939 = vmatprep.subr.bf16.mxu0 0
  %6940 = vmatpush1.bf16.msra.mxu0 0
  %6941 = vmatprep.subr.bf16.mxu0 0
  %6942 = vmatpush1.bf16.msra.mxu0 0
  %6943 = vmatprep.subr.bf16.mxu0 0
  %6944 = vmatpush1.bf16.msra.mxu0 0
  %6945 = vmatprep.subr.bf16.mxu0 0
  %6946 = vmatpush1.bf16.msra.mxu0 0
  %6947 = vmatprep.mubr.bf16.mxu0 0
  %6948 = vmatmul.mubr.bf16.gmra.mrb[0].mxu0 %v6910
  %v6949 = vpop.f32.mrb[0].mxu0
  %v6950 = vadd.f32 0.0, %v6949
  %v6951 = vpop.f32.mrb[0].mxu0
  %v6952 = vpop.f32.mrb[0].mxu0
  %v6953 = vpop.f32.mrb[0].mxu0
  %6954 = vdwg.mxu0
  %6955 = vrot.lane.b32.xlu0 %v5524, 120
  %v6956 = vpop.permute.xlu0 %6955
  %v6958 = vsel %vm338, %v6516, 0
  %v6961 = vsel %vm342, %v6956, 0
  %6963 = vmatprep.subr.bf16.mxu0 0
  %6964 = vmatpush1.bf16.msra.mxu0 %v6961
  %6965 = vmatprep.subr.bf16.mxu0 0
  %6966 = vmatpush1.bf16.msra.mxu0 0
  %6967 = vmatprep.subr.bf16.mxu0 0
  %6968 = vmatpush1.bf16.msra.mxu0 0
  %6969 = vmatprep.subr.bf16.mxu0 0
  %6970 = vmatpush1.bf16.msra.mxu0 0
  %6971 = vmatprep.subr.bf16.mxu0 0
  %6972 = vmatpush1.bf16.msra.mxu0 0
  %6973 = vmatprep.subr.bf16.mxu0 0
  %6974 = vmatpush1.bf16.msra.mxu0 0
  %6975 = vmatprep.subr.bf16.mxu0 0
  %6976 = vmatpush1.bf16.msra.mxu0 0
  %6977 = vmatprep.subr.bf16.mxu0 0
  %6978 = vmatpush1.bf16.msra.mxu0 0
  %6979 = vmatprep.subr.bf16.mxu0 0
  %6980 = vmatpush1.bf16.msra.mxu0 0
  %6981 = vmatprep.subr.bf16.mxu0 0
  %6982 = vmatpush1.bf16.msra.mxu0 0
  %6983 = vmatprep.subr.bf16.mxu0 0
  %6984 = vmatpush1.bf16.msra.mxu0 0
  %6985 = vmatprep.subr.bf16.mxu0 0
  %6986 = vmatpush1.bf16.msra.mxu0 0
  %6987 = vmatprep.subr.bf16.mxu0 0
  %6988 = vmatpush1.bf16.msra.mxu0 0
  %6989 = vmatprep.subr.bf16.mxu0 0
  %6990 = vmatpush1.bf16.msra.mxu0 0
  %6991 = vmatprep.subr.bf16.mxu0 0
  %6992 = vmatpush1.bf16.msra.mxu0 0
  %6993 = vmatprep.subr.bf16.mxu0 0
  %6994 = vmatpush1.bf16.msra.mxu0 0
  %6995 = vmatprep.mubr.bf16.mxu0 0
  %6996 = vmatmul.mubr.bf16.gmra.mrb[0].mxu0 %v6958
  %v6997 = vpop.f32.mrb[0].mxu0
  %v6998 = vadd.f32 0.0, %v6997
  %v6999 = vpop.f32.mrb[0].mxu0
  %v7000 = vpop.f32.mrb[0].mxu0
  %v7001 = vpop.f32.mrb[0].mxu0
  %7002 = vdwg.mxu0
  %7003 = vrot.lane.b32.xlu0 %v5525, 120
  %v7004 = vpop.permute.xlu0 %7003
  %v7006 = vsel %vm338, %v6517, 0
  %v7009 = vsel %vm342, %v7004, 0
  %7011 = vmatprep.subr.bf16.mxu0 0
  %7012 = vmatpush1.bf16.msra.mxu0 %v7009
  %7013 = vmatprep.subr.bf16.mxu0 0
  %7014 = vmatpush1.bf16.msra.mxu0 0
  %7015 = vmatprep.subr.bf16.mxu0 0
  %7016 = vmatpush1.bf16.msra.mxu0 0
  %7017 = vmatprep.subr.bf16.mxu0 0
  %7018 = vmatpush1.bf16.msra.mxu0 0
  %7019 = vmatprep.subr.bf16.mxu0 0
  %7020 = vmatpush1.bf16.msra.mxu0 0
  %7021 = vmatprep.subr.bf16.mxu0 0
  %7022 = vmatpush1.bf16.msra.mxu0 0
  %7023 = vmatprep.subr.bf16.mxu0 0
  %7024 = vmatpush1.bf16.msra.mxu0 0
  %7025 = vmatprep.subr.bf16.mxu0 0
  %7026 = vmatpush1.bf16.msra.mxu0 0
  %7027 = vmatprep.subr.bf16.mxu0 0
  %7028 = vmatpush1.bf16.msra.mxu0 0
  %7029 = vmatprep.subr.bf16.mxu0 0
  %7030 = vmatpush1.bf16.msra.mxu0 0
  %7031 = vmatprep.subr.bf16.mxu0 0
  %7032 = vmatpush1.bf16.msra.mxu0 0
  %7033 = vmatprep.subr.bf16.mxu0 0
  %7034 = vmatpush1.bf16.msra.mxu0 0
  %7035 = vmatprep.subr.bf16.mxu0 0
  %7036 = vmatpush1.bf16.msra.mxu0 0
  %7037 = vmatprep.subr.bf16.mxu0 0
  %7038 = vmatpush1.bf16.msra.mxu0 0
  %7039 = vmatprep.subr.bf16.mxu0 0
  %7040 = vmatpush1.bf16.msra.mxu0 0
  %7041 = vmatprep.subr.bf16.mxu0 0
  %7042 = vmatpush1.bf16.msra.mxu0 0
  %7043 = vmatprep.mubr.bf16.mxu0 0
  %7044 = vmatmul.mubr.bf16.gmra.mrb[0].mxu0 %v7006
  %v7045 = vpop.f32.mrb[0].mxu0
  %v7046 = vadd.f32 0.0, %v7045
  %v7047 = vpop.f32.mrb[0].mxu0
  %v7048 = vpop.f32.mrb[0].mxu0
  %v7049 = vpop.f32.mrb[0].mxu0
  %7050 = vdwg.mxu0
  %7051 = vrot.lane.b32.xlu0 %v5526, 120
  %v7052 = vpop.permute.xlu0 %7051
  %v7054 = vsel %vm338, %v6518, 0
  %v7057 = vsel %vm342, %v7052, 0
  %7059 = vmatprep.subr.bf16.mxu0 0
  %7060 = vmatpush1.bf16.msra.mxu0 %v7057
  %7061 = vmatprep.subr.bf16.mxu0 0
  %7062 = vmatpush1.bf16.msra.mxu0 0
  %7063 = vmatprep.subr.bf16.mxu0 0
  %7064 = vmatpush1.bf16.msra.mxu0 0
  %7065 = vmatprep.subr.bf16.mxu0 0
  %7066 = vmatpush1.bf16.msra.mxu0 0
  %7067 = vmatprep.subr.bf16.mxu0 0
  %7068 = vmatpush1.bf16.msra.mxu0 0
  %7069 = vmatprep.subr.bf16.mxu0 0
  %7070 = vmatpush1.bf16.msra.mxu0 0
  %7071 = vmatprep.subr.bf16.mxu0 0
  %7072 = vmatpush1.bf16.msra.mxu0 0
  %7073 = vmatprep.subr.bf16.mxu0 0
  %7074 = vmatpush1.bf16.msra.mxu0 0
  %7075 = vmatprep.subr.bf16.mxu0 0
  %7076 = vmatpush1.bf16.msra.mxu0 0
  %7077 = vmatprep.subr.bf16.mxu0 0
  %7078 = vmatpush1.bf16.msra.mxu0 0
  %7079 = vmatprep.subr.bf16.mxu0 0
  %7080 = vmatpush1.bf16.msra.mxu0 0
  %7081 = vmatprep.subr.bf16.mxu0 0
  %7082 = vmatpush1.bf16.msra.mxu0 0
  %7083 = vmatprep.subr.bf16.mxu0 0
  %7084 = vmatpush1.bf16.msra.mxu0 0
  %7085 = vmatprep.subr.bf16.mxu0 0
  %7086 = vmatpush1.bf16.msra.mxu0 0
  %7087 = vmatprep.subr.bf16.mxu0 0
  %7088 = vmatpush1.bf16.msra.mxu0 0
  %7089 = vmatprep.subr.bf16.mxu0 0
  %7090 = vmatpush1.bf16.msra.mxu0 0
  %7091 = vmatprep.mubr.bf16.mxu0 0
  %7092 = vmatmul.mubr.bf16.gmra.mrb[0].mxu0 %v7054
  %v7093 = vpop.f32.mrb[0].mxu0
  %v7094 = vadd.f32 0.0, %v7093
  %v7095 = vpop.f32.mrb[0].mxu0
  %v7096 = vpop.f32.mrb[0].mxu0
  %v7097 = vpop.f32.mrb[0].mxu0
  %7098 = vdwg.mxu0
  %7099 = vrot.lane.b32.xlu0 %v5527, 120
  %v7100 = vpop.permute.xlu0 %7099
  %v7102 = vsel %vm338, %v6519, 0
  %v7105 = vsel %vm342, %v7100, 0
  %7107 = vmatprep.subr.bf16.mxu0 0
  %7108 = vmatpush1.bf16.msra.mxu0 %v7105
  %7109 = vmatprep.subr.bf16.mxu0 0
  %7110 = vmatpush1.bf16.msra.mxu0 0
  %7111 = vmatprep.subr.bf16.mxu0 0
  %7112 = vmatpush1.bf16.msra.mxu0 0
  %7113 = vmatprep.subr.bf16.mxu0 0
  %7114 = vmatpush1.bf16.msra.mxu0 0
  %7115 = vmatprep.subr.bf16.mxu0 0
  %7116 = vmatpush1.bf16.msra.mxu0 0
  %7117 = vmatprep.subr.bf16.mxu0 0
  %7118 = vmatpush1.bf16.msra.mxu0 0
  %7119 = vmatprep.subr.bf16.mxu0 0
  %7120 = vmatpush1.bf16.msra.mxu0 0
  %7121 = vmatprep.subr.bf16.mxu0 0
  %7122 = vmatpush1.bf16.msra.mxu0 0
  %7123 = vmatprep.subr.bf16.mxu0 0
  %7124 = vmatpush1.bf16.msra.mxu0 0
  %7125 = vmatprep.subr.bf16.mxu0 0
  %7126 = vmatpush1.bf16.msra.mxu0 0
  %7127 = vmatprep.subr.bf16.mxu0 0
  %7128 = vmatpush1.bf16.msra.mxu0 0
  %7129 = vmatprep.subr.bf16.mxu0 0
  %7130 = vmatpush1.bf16.msra.mxu0 0
  %7131 = vmatprep.subr.bf16.mxu0 0
  %7132 = vmatpush1.bf16.msra.mxu0 0
  %7133 = vmatprep.subr.bf16.mxu0 0
  %7134 = vmatpush1.bf16.msra.mxu0 0
  %7135 = vmatprep.subr.bf16.mxu0 0
  %7136 = vmatpush1.bf16.msra.mxu0 0
  %7137 = vmatprep.subr.bf16.mxu0 0
  %7138 = vmatpush1.bf16.msra.mxu0 0
  %7139 = vmatprep.mubr.bf16.mxu0 0
  %7140 = vmatmul.mubr.bf16.gmra.mrb[0].mxu0 %v7102
  %v7141 = vpop.f32.mrb[0].mxu0
  %v7142 = vadd.f32 0.0, %v7141
  %v7143 = vpop.f32.mrb[0].mxu0
  %v7144 = vpop.f32.mrb[0].mxu0
  %v7145 = vpop.f32.mrb[0].mxu0
  %7146 = vdwg.mxu0
  %7147 = vrot.lane.b32.xlu0 %v5528, 120
  %v7148 = vpop.permute.xlu0 %7147
  %v7150 = vsel %vm338, %v6520, 0
  %v7153 = vsel %vm342, %v7148, 0
  %7155 = vmatprep.subr.bf16.mxu0 0
  %7156 = vmatpush1.bf16.msra.mxu0 %v7153
  %7157 = vmatprep.subr.bf16.mxu0 0
  %7158 = vmatpush1.bf16.msra.mxu0 0
  %7159 = vmatprep.subr.bf16.mxu0 0
  %7160 = vmatpush1.bf16.msra.mxu0 0
  %7161 = vmatprep.subr.bf16.mxu0 0
  %7162 = vmatpush1.bf16.msra.mxu0 0
  %7163 = vmatprep.subr.bf16.mxu0 0
  %7164 = vmatpush1.bf16.msra.mxu0 0
  %7165 = vmatprep.subr.bf16.mxu0 0
  %7166 = vmatpush1.bf16.msra.mxu0 0
  %7167 = vmatprep.subr.bf16.mxu0 0
  %7168 = vmatpush1.bf16.msra.mxu0 0
  %7169 = vmatprep.subr.bf16.mxu0 0
  %7170 = vmatpush1.bf16.msra.mxu0 0
  %7171 = vmatprep.subr.bf16.mxu0 0
  %7172 = vmatpush1.bf16.msra.mxu0 0
  %7173 = vmatprep.subr.bf16.mxu0 0
  %7174 = vmatpush1.bf16.msra.mxu0 0
  %7175 = vmatprep.subr.bf16.mxu0 0
  %7176 = vmatpush1.bf16.msra.mxu0 0
  %7177 = vmatprep.subr.bf16.mxu0 0
  %7178 = vmatpush1.bf16.msra.mxu0 0
  %7179 = vmatprep.subr.bf16.mxu0 0
  %7180 = vmatpush1.bf16.msra.mxu0 0
  %7181 = vmatprep.subr.bf16.mxu0 0
  %7182 = vmatpush1.bf16.msra.mxu0 0
  %7183 = vmatprep.subr.bf16.mxu0 0
  %7184 = vmatpush1.bf16.msra.mxu0 0
  %7185 = vmatprep.subr.bf16.mxu0 0
  %7186 = vmatpush1.bf16.msra.mxu0 0
  %7187 = vmatprep.mubr.bf16.mxu0 0
  %7188 = vmatmul.mubr.bf16.gmra.mrb[0].mxu0 %v7150
  %v7189 = vpop.f32.mrb[0].mxu0
  %v7190 = vadd.f32 0.0, %v7189
  %v7191 = vpop.f32.mrb[0].mxu0
  %v7192 = vpop.f32.mrb[0].mxu0
  %v7193 = vpop.f32.mrb[0].mxu0
  %7194 = vdwg.mxu0
  %7195 = vrot.lane.b32.xlu0 %v5529, 120
  %v7196 = vpop.permute.xlu0 %7195
  %v7198 = vsel %vm338, %v6521, 0
  %v7201 = vsel %vm342, %v7196, 0
  %7203 = vmatprep.subr.bf16.mxu0 0
  %7204 = vmatpush1.bf16.msra.mxu0 %v7201
  %7205 = vmatprep.subr.bf16.mxu0 0
  %7206 = vmatpush1.bf16.msra.mxu0 0
  %7207 = vmatprep.subr.bf16.mxu0 0
  %7208 = vmatpush1.bf16.msra.mxu0 0
  %7209 = vmatprep.subr.bf16.mxu0 0
  %7210 = vmatpush1.bf16.msra.mxu0 0
  %7211 = vmatprep.subr.bf16.mxu0 0
  %7212 = vmatpush1.bf16.msra.mxu0 0
  %7213 = vmatprep.subr.bf16.mxu0 0
  %7214 = vmatpush1.bf16.msra.mxu0 0
  %7215 = vmatprep.subr.bf16.mxu0 0
  %7216 = vmatpush1.bf16.msra.mxu0 0
  %7217 = vmatprep.subr.bf16.mxu0 0
  %7218 = vmatpush1.bf16.msra.mxu0 0
  %7219 = vmatprep.subr.bf16.mxu0 0
  %7220 = vmatpush1.bf16.msra.mxu0 0
  %7221 = vmatprep.subr.bf16.mxu0 0
  %7222 = vmatpush1.bf16.msra.mxu0 0
  %7223 = vmatprep.subr.bf16.mxu0 0
  %7224 = vmatpush1.bf16.msra.mxu0 0
  %7225 = vmatprep.subr.bf16.mxu0 0
  %7226 = vmatpush1.bf16.msra.mxu0 0
  %7227 = vmatprep.subr.bf16.mxu0 0
  %7228 = vmatpush1.bf16.msra.mxu0 0
  %7229 = vmatprep.subr.bf16.mxu0 0
  %7230 = vmatpush1.bf16.msra.mxu0 0
  %7231 = vmatprep.subr.bf16.mxu0 0
  %7232 = vmatpush1.bf16.msra.mxu0 0
  %7233 = vmatprep.subr.bf16.mxu0 0
  %7234 = vmatpush1.bf16.msra.mxu0 0
  %7235 = vmatprep.mubr.bf16.mxu0 0
  %7236 = vmatmul.mubr.bf16.gmra.mrb[0].mxu0 %v7198
  %v7237 = vpop.f32.mrb[0].mxu0
  %v7238 = vadd.f32 0.0, %v7237
  %v7239 = vpop.f32.mrb[0].mxu0
  %v7240 = vpop.f32.mrb[0].mxu0
  %v7241 = vpop.f32.mrb[0].mxu0
  %7242 = vdwg.mxu0
  %7243 = vrot.lane.b32.xlu0 %v5530, 120
  %v7244 = vpop.permute.xlu0 %7243
  %v7246 = vsel %vm338, %v6522, 0
  %v7249 = vsel %vm342, %v7244, 0
  %7251 = vmatprep.subr.bf16.mxu0 0
  %7252 = vmatpush1.bf16.msra.mxu0 %v7249
  %7253 = vmatprep.subr.bf16.mxu0 0
  %7254 = vmatpush1.bf16.msra.mxu0 0
  %7255 = vmatprep.subr.bf16.mxu0 0
  %7256 = vmatpush1.bf16.msra.mxu0 0
  %7257 = vmatprep.subr.bf16.mxu0 0
  %7258 = vmatpush1.bf16.msra.mxu0 0
  %7259 = vmatprep.subr.bf16.mxu0 0
  %7260 = vmatpush1.bf16.msra.mxu0 0
  %7261 = vmatprep.subr.bf16.mxu0 0
  %7262 = vmatpush1.bf16.msra.mxu0 0
  %7263 = vmatprep.subr.bf16.mxu0 0
  %7264 = vmatpush1.bf16.msra.mxu0 0
  %7265 = vmatprep.subr.bf16.mxu0 0
  %7266 = vmatpush1.bf16.msra.mxu0 0
  %7267 = vmatprep.subr.bf16.mxu0 0
  %7268 = vmatpush1.bf16.msra.mxu0 0
  %7269 = vmatprep.subr.bf16.mxu0 0
  %7270 = vmatpush1.bf16.msra.mxu0 0
  %7271 = vmatprep.subr.bf16.mxu0 0
  %7272 = vmatpush1.bf16.msra.mxu0 0
  %7273 = vmatprep.subr.bf16.mxu0 0
  %7274 = vmatpush1.bf16.msra.mxu0 0
  %7275 = vmatprep.subr.bf16.mxu0 0
  %7276 = vmatpush1.bf16.msra.mxu0 0
  %7277 = vmatprep.subr.bf16.mxu0 0
  %7278 = vmatpush1.bf16.msra.mxu0 0
  %7279 = vmatprep.subr.bf16.mxu0 0
  %7280 = vmatpush1.bf16.msra.mxu0 0
  %7281 = vmatprep.subr.bf16.mxu0 0
  %7282 = vmatpush1.bf16.msra.mxu0 0
  %7283 = vmatprep.mubr.bf16.mxu0 0
  %7284 = vmatmul.mubr.bf16.gmra.mrb[0].mxu0 %v7246
  %v7285 = vpop.f32.mrb[0].mxu0
  %v7286 = vadd.f32 0.0, %v7285
  %v7287 = vpop.f32.mrb[0].mxu0
  %v7288 = vpop.f32.mrb[0].mxu0
  %v7289 = vpop.f32.mrb[0].mxu0
  %7290 = vdwg.mxu0
  %v7291 = vpack.c.bf16 %v6566, %v6566
  %v7292 = vpack.c.bf16 %v6614, %v6614
  %v7293 = vpack.c.bf16 %v6662, %v6662
  %v7294 = vpack.c.bf16 %v6710, %v6710
  %v7295 = vpack.c.bf16 %v6758, %v6758
  %v7296 = vpack.c.bf16 %v6806, %v6806
  %v7297 = vpack.c.bf16 %v6854, %v6854
  %v7298 = vpack.c.bf16 %v6902, %v6902
  %v7299 = vpack.c.bf16 %v6950, %v6950
  %v7300 = vpack.c.bf16 %v6998, %v6998
  %v7301 = vpack.c.bf16 %v7046, %v7046
  %v7302 = vpack.c.bf16 %v7094, %v7094
  %v7303 = vpack.c.bf16 %v7142, %v7142
  %v7304 = vpack.c.bf16 %v7190, %v7190
  %v7305 = vpack.c.bf16 %v7238, %v7238
  %v7306 = vpack.c.bf16 %v7286, %v7286
  %v7308 = vsel %vm1673, %v7291, 0
  %v7311 = vsel %vm3450, %v4563, 0
  %7313 = vmatprep.subr.bf16.mxu0 0
  %7314 = vmatpush1.bf16.msra.mxu0 %v7311
  %7315 = vmatprep.subr.bf16.mxu0 0
  %7316 = vmatpush1.bf16.msra.mxu0 0
  %7317 = vmatprep.subr.bf16.mxu0 0
  %7318 = vmatpush1.bf16.msra.mxu0 0
  %7319 = vmatprep.subr.bf16.mxu0 0
  %7320 = vmatpush1.bf16.msra.mxu0 0
  %7321 = vmatprep.subr.bf16.mxu0 0
  %7322 = vmatpush1.bf16.msra.mxu0 0
  %7323 = vmatprep.subr.bf16.mxu0 0
  %7324 = vmatpush1.bf16.msra.mxu0 0
  %7325 = vmatprep.subr.bf16.mxu0 0
  %7326 = vmatpush1.bf16.msra.mxu0 0
  %7327 = vmatprep.subr.bf16.mxu0 0
  %7328 = vmatpush1.bf16.msra.mxu0 0
  %7329 = vmatprep.subr.bf16.mxu0 0
  %7330 = vmatpush1.bf16.msra.mxu0 0
  %7331 = vmatprep.subr.bf16.mxu0 0
  %7332 = vmatpush1.bf16.msra.mxu0 0
  %7333 = vmatprep.subr.bf16.mxu0 0
  %7334 = vmatpush1.bf16.msra.mxu0 0
  %7335 = vmatprep.subr.bf16.mxu0 0
  %7336 = vmatpush1.bf16.msra.mxu0 0
  %7337 = vmatprep.subr.bf16.mxu0 0
  %7338 = vmatpush1.bf16.msra.mxu0 0
  %7339 = vmatprep.subr.bf16.mxu0 0
  %7340 = vmatpush1.bf16.msra.mxu0 0
  %7341 = vmatprep.subr.bf16.mxu0 0
  %7342 = vmatpush1.bf16.msra.mxu0 0
  %7343 = vmatprep.subr.bf16.mxu0 0
  %7344 = vmatpush1.bf16.msra.mxu0 0
  %7345 = vmatprep.mubr.bf16.mxu0 0
  %7346 = vmatmul.mubr.bf16.gmra.mrb[0].mxu0 %v7308
  %v7347 = vpop.f32.mrb[0].mxu0
  %v7348 = vadd.f32 0.0, %v7347
  %v7349 = vpop.f32.mrb[0].mxu0
  %v7350 = vpop.f32.mrb[0].mxu0
  %v7351 = vpop.f32.mrb[0].mxu0
  %7352 = vdwg.mxu0
  %v7354 = vsel %vm1673, %v7292, 0
  %v7357 = vsel %vm3450, %v4564, 0
  %7359 = vmatprep.subr.bf16.mxu0 0
  %7360 = vmatpush1.bf16.msra.mxu0 %v7357
  %7361 = vmatprep.subr.bf16.mxu0 0
  %7362 = vmatpush1.bf16.msra.mxu0 0
  %7363 = vmatprep.subr.bf16.mxu0 0
  %7364 = vmatpush1.bf16.msra.mxu0 0
  %7365 = vmatprep.subr.bf16.mxu0 0
  %7366 = vmatpush1.bf16.msra.mxu0 0
  %7367 = vmatprep.subr.bf16.mxu0 0
  %7368 = vmatpush1.bf16.msra.mxu0 0
  %7369 = vmatprep.subr.bf16.mxu0 0
  %7370 = vmatpush1.bf16.msra.mxu0 0
  %7371 = vmatprep.subr.bf16.mxu0 0
  %7372 = vmatpush1.bf16.msra.mxu0 0
  %7373 = vmatprep.subr.bf16.mxu0 0
  %7374 = vmatpush1.bf16.msra.mxu0 0
  %7375 = vmatprep.subr.bf16.mxu0 0
  %7376 = vmatpush1.bf16.msra.mxu0 0
  %7377 = vmatprep.subr.bf16.mxu0 0
  %7378 = vmatpush1.bf16.msra.mxu0 0
  %7379 = vmatprep.subr.bf16.mxu0 0
  %7380 = vmatpush1.bf16.msra.mxu0 0
  %7381 = vmatprep.subr.bf16.mxu0 0
  %7382 = vmatpush1.bf16.msra.mxu0 0
  %7383 = vmatprep.subr.bf16.mxu0 0
  %7384 = vmatpush1.bf16.msra.mxu0 0
  %7385 = vmatprep.subr.bf16.mxu0 0
  %7386 = vmatpush1.bf16.msra.mxu0 0
  %7387 = vmatprep.subr.bf16.mxu0 0
  %7388 = vmatpush1.bf16.msra.mxu0 0
  %7389 = vmatprep.subr.bf16.mxu0 0
  %7390 = vmatpush1.bf16.msra.mxu0 0
  %7391 = vmatprep.mubr.bf16.mxu0 0
  %7392 = vmatmul.mubr.bf16.gmra.mrb[0].mxu0 %v7354
  %v7393 = vpop.f32.mrb[0].mxu0
  %v7394 = vadd.f32 0.0, %v7393
  %v7395 = vpop.f32.mrb[0].mxu0
  %v7396 = vpop.f32.mrb[0].mxu0
  %v7397 = vpop.f32.mrb[0].mxu0
  %7398 = vdwg.mxu0
  %v7400 = vsel %vm1673, %v7293, 0
  %v7403 = vsel %vm3450, %v4565, 0
  %7405 = vmatprep.subr.bf16.mxu0 0
  %7406 = vmatpush1.bf16.msra.mxu0 %v7403
  %7407 = vmatprep.subr.bf16.mxu0 0
  %7408 = vmatpush1.bf16.msra.mxu0 0
  %7409 = vmatprep.subr.bf16.mxu0 0
  %7410 = vmatpush1.bf16.msra.mxu0 0
  %7411 = vmatprep.subr.bf16.mxu0 0
  %7412 = vmatpush1.bf16.msra.mxu0 0
  %7413 = vmatprep.subr.bf16.mxu0 0
  %7414 = vmatpush1.bf16.msra.mxu0 0
  %7415 = vmatprep.subr.bf16.mxu0 0
  %7416 = vmatpush1.bf16.msra.mxu0 0
  %7417 = vmatprep.subr.bf16.mxu0 0
  %7418 = vmatpush1.bf16.msra.mxu0 0
  %7419 = vmatprep.subr.bf16.mxu0 0
  %7420 = vmatpush1.bf16.msra.mxu0 0
  %7421 = vmatprep.subr.bf16.mxu0 0
  %7422 = vmatpush1.bf16.msra.mxu0 0
  %7423 = vmatprep.subr.bf16.mxu0 0
  %7424 = vmatpush1.bf16.msra.mxu0 0
  %7425 = vmatprep.subr.bf16.mxu0 0
  %7426 = vmatpush1.bf16.msra.mxu0 0
  %7427 = vmatprep.subr.bf16.mxu0 0
  %7428 = vmatpush1.bf16.msra.mxu0 0
  %7429 = vmatprep.subr.bf16.mxu0 0
  %7430 = vmatpush1.bf16.msra.mxu0 0
  %7431 = vmatprep.subr.bf16.mxu0 0
  %7432 = vmatpush1.bf16.msra.mxu0 0
  %7433 = vmatprep.subr.bf16.mxu0 0
  %7434 = vmatpush1.bf16.msra.mxu0 0
  %7435 = vmatprep.subr.bf16.mxu0 0
  %7436 = vmatpush1.bf16.msra.mxu0 0
  %7437 = vmatprep.mubr.bf16.mxu0 0
  %7438 = vmatmul.mubr.bf16.gmra.mrb[0].mxu0 %v7400
  %v7439 = vpop.f32.mrb[0].mxu0
  %v7440 = vadd.f32 0.0, %v7439
  %v7441 = vpop.f32.mrb[0].mxu0
  %v7442 = vpop.f32.mrb[0].mxu0
  %v7443 = vpop.f32.mrb[0].mxu0
  %7444 = vdwg.mxu0
  %v7446 = vsel %vm1673, %v7294, 0
  %v7449 = vsel %vm3450, %v4566, 0
  %7451 = vmatprep.subr.bf16.mxu0 0
  %7452 = vmatpush1.bf16.msra.mxu0 %v7449
  %7453 = vmatprep.subr.bf16.mxu0 0
  %7454 = vmatpush1.bf16.msra.mxu0 0
  %7455 = vmatprep.subr.bf16.mxu0 0
  %7456 = vmatpush1.bf16.msra.mxu0 0
  %7457 = vmatprep.subr.bf16.mxu0 0
  %7458 = vmatpush1.bf16.msra.mxu0 0
  %7459 = vmatprep.subr.bf16.mxu0 0
  %7460 = vmatpush1.bf16.msra.mxu0 0
  %7461 = vmatprep.subr.bf16.mxu0 0
  %7462 = vmatpush1.bf16.msra.mxu0 0
  %7463 = vmatprep.subr.bf16.mxu0 0
  %7464 = vmatpush1.bf16.msra.mxu0 0
  %7465 = vmatprep.subr.bf16.mxu0 0
  %7466 = vmatpush1.bf16.msra.mxu0 0
  %7467 = vmatprep.subr.bf16.mxu0 0
  %7468 = vmatpush1.bf16.msra.mxu0 0
  %7469 = vmatprep.subr.bf16.mxu0 0
  %7470 = vmatpush1.bf16.msra.mxu0 0
  %7471 = vmatprep.subr.bf16.mxu0 0
  %7472 = vmatpush1.bf16.msra.mxu0 0
  %7473 = vmatprep.subr.bf16.mxu0 0
  %7474 = vmatpush1.bf16.msra.mxu0 0
  %7475 = vmatprep.subr.bf16.mxu0 0
  %7476 = vmatpush1.bf16.msra.mxu0 0
  %7477 = vmatprep.subr.bf16.mxu0 0
  %7478 = vmatpush1.bf16.msra.mxu0 0
  %7479 = vmatprep.subr.bf16.mxu0 0
  %7480 = vmatpush1.bf16.msra.mxu0 0
  %7481 = vmatprep.subr.bf16.mxu0 0
  %7482 = vmatpush1.bf16.msra.mxu0 0
  %7483 = vmatprep.mubr.bf16.mxu0 0
  %7484 = vmatmul.mubr.bf16.gmra.mrb[0].mxu0 %v7446
  %v7485 = vpop.f32.mrb[0].mxu0
  %v7486 = vadd.f32 0.0, %v7485
  %v7487 = vpop.f32.mrb[0].mxu0
  %v7488 = vpop.f32.mrb[0].mxu0
  %v7489 = vpop.f32.mrb[0].mxu0
  %7490 = vdwg.mxu0
  %v7492 = vsel %vm1673, %v7295, 0
  %v7495 = vsel %vm3450, %v4567, 0
  %7497 = vmatprep.subr.bf16.mxu0 0
  %7498 = vmatpush1.bf16.msra.mxu0 %v7495
  %7499 = vmatprep.subr.bf16.mxu0 0
  %7500 = vmatpush1.bf16.msra.mxu0 0
  %7501 = vmatprep.subr.bf16.mxu0 0
  %7502 = vmatpush1.bf16.msra.mxu0 0
  %7503 = vmatprep.subr.bf16.mxu0 0
  %7504 = vmatpush1.bf16.msra.mxu0 0
  %7505 = vmatprep.subr.bf16.mxu0 0
  %7506 = vmatpush1.bf16.msra.mxu0 0
  %7507 = vmatprep.subr.bf16.mxu0 0
  %7508 = vmatpush1.bf16.msra.mxu0 0
  %7509 = vmatprep.subr.bf16.mxu0 0
  %7510 = vmatpush1.bf16.msra.mxu0 0
  %7511 = vmatprep.subr.bf16.mxu0 0
  %7512 = vmatpush1.bf16.msra.mxu0 0
  %7513 = vmatprep.subr.bf16.mxu0 0
  %7514 = vmatpush1.bf16.msra.mxu0 0
  %7515 = vmatprep.subr.bf16.mxu0 0
  %7516 = vmatpush1.bf16.msra.mxu0 0
  %7517 = vmatprep.subr.bf16.mxu0 0
  %7518 = vmatpush1.bf16.msra.mxu0 0
  %7519 = vmatprep.subr.bf16.mxu0 0
  %7520 = vmatpush1.bf16.msra.mxu0 0
  %7521 = vmatprep.subr.bf16.mxu0 0
  %7522 = vmatpush1.bf16.msra.mxu0 0
  %7523 = vmatprep.subr.bf16.mxu0 0
  %7524 = vmatpush1.bf16.msra.mxu0 0
  %7525 = vmatprep.subr.bf16.mxu0 0
  %7526 = vmatpush1.bf16.msra.mxu0 0
  %7527 = vmatprep.subr.bf16.mxu0 0
  %7528 = vmatpush1.bf16.msra.mxu0 0
  %7529 = vmatprep.mubr.bf16.mxu0 0
  %7530 = vmatmul.mubr.bf16.gmra.mrb[0].mxu0 %v7492
  %v7531 = vpop.f32.mrb[0].mxu0
  %v7532 = vadd.f32 0.0, %v7531
  %v7533 = vpop.f32.mrb[0].mxu0
  %v7534 = vpop.f32.mrb[0].mxu0
  %v7535 = vpop.f32.mrb[0].mxu0
  %7536 = vdwg.mxu0
  %v7538 = vsel %vm1673, %v7296, 0
  %v7541 = vsel %vm3450, %v4568, 0
  %7543 = vmatprep.subr.bf16.mxu0 0
  %7544 = vmatpush1.bf16.msra.mxu0 %v7541
  %7545 = vmatprep.subr.bf16.mxu0 0
  %7546 = vmatpush1.bf16.msra.mxu0 0
  %7547 = vmatprep.subr.bf16.mxu0 0
  %7548 = vmatpush1.bf16.msra.mxu0 0
  %7549 = vmatprep.subr.bf16.mxu0 0
  %7550 = vmatpush1.bf16.msra.mxu0 0
  %7551 = vmatprep.subr.bf16.mxu0 0
  %7552 = vmatpush1.bf16.msra.mxu0 0
  %7553 = vmatprep.subr.bf16.mxu0 0
  %7554 = vmatpush1.bf16.msra.mxu0 0
  %7555 = vmatprep.subr.bf16.mxu0 0
  %7556 = vmatpush1.bf16.msra.mxu0 0
  %7557 = vmatprep.subr.bf16.mxu0 0
  %7558 = vmatpush1.bf16.msra.mxu0 0
  %7559 = vmatprep.subr.bf16.mxu0 0
  %7560 = vmatpush1.bf16.msra.mxu0 0
  %7561 = vmatprep.subr.bf16.mxu0 0
  %7562 = vmatpush1.bf16.msra.mxu0 0
  %7563 = vmatprep.subr.bf16.mxu0 0
  %7564 = vmatpush1.bf16.msra.mxu0 0
  %7565 = vmatprep.subr.bf16.mxu0 0
  %7566 = vmatpush1.bf16.msra.mxu0 0
  %7567 = vmatprep.subr.bf16.mxu0 0
  %7568 = vmatpush1.bf16.msra.mxu0 0
  %7569 = vmatprep.subr.bf16.mxu0 0
  %7570 = vmatpush1.bf16.msra.mxu0 0
  %7571 = vmatprep.subr.bf16.mxu0 0
  %7572 = vmatpush1.bf16.msra.mxu0 0
  %7573 = vmatprep.subr.bf16.mxu0 0
  %7574 = vmatpush1.bf16.msra.mxu0 0
  %7575 = vmatprep.mubr.bf16.mxu0 0
  %7576 = vmatmul.mubr.bf16.gmra.mrb[0].mxu0 %v7538
  %v7577 = vpop.f32.mrb[0].mxu0
  %v7578 = vadd.f32 0.0, %v7577
  %v7579 = vpop.f32.mrb[0].mxu0
  %v7580 = vpop.f32.mrb[0].mxu0
  %v7581 = vpop.f32.mrb[0].mxu0
  %7582 = vdwg.mxu0
  %v7584 = vsel %vm1673, %v7297, 0
  %v7587 = vsel %vm3450, %v4569, 0
  %7589 = vmatprep.subr.bf16.mxu0 0
  %7590 = vmatpush1.bf16.msra.mxu0 %v7587
  %7591 = vmatprep.subr.bf16.mxu0 0
  %7592 = vmatpush1.bf16.msra.mxu0 0
  %7593 = vmatprep.subr.bf16.mxu0 0
  %7594 = vmatpush1.bf16.msra.mxu0 0
  %7595 = vmatprep.subr.bf16.mxu0 0
  %7596 = vmatpush1.bf16.msra.mxu0 0
  %7597 = vmatprep.subr.bf16.mxu0 0
  %7598 = vmatpush1.bf16.msra.mxu0 0
  %7599 = vmatprep.subr.bf16.mxu0 0
  %7600 = vmatpush1.bf16.msra.mxu0 0
  %7601 = vmatprep.subr.bf16.mxu0 0
  %7602 = vmatpush1.bf16.msra.mxu0 0
  %7603 = vmatprep.subr.bf16.mxu0 0
  %7604 = vmatpush1.bf16.msra.mxu0 0
  %7605 = vmatprep.subr.bf16.mxu0 0
  %7606 = vmatpush1.bf16.msra.mxu0 0
  %7607 = vmatprep.subr.bf16.mxu0 0
  %7608 = vmatpush1.bf16.msra.mxu0 0
  %7609 = vmatprep.subr.bf16.mxu0 0
  %7610 = vmatpush1.bf16.msra.mxu0 0
  %7611 = vmatprep.subr.bf16.mxu0 0
  %7612 = vmatpush1.bf16.msra.mxu0 0
  %7613 = vmatprep.subr.bf16.mxu0 0
  %7614 = vmatpush1.bf16.msra.mxu0 0
  %7615 = vmatprep.subr.bf16.mxu0 0
  %7616 = vmatpush1.bf16.msra.mxu0 0
  %7617 = vmatprep.subr.bf16.mxu0 0
  %7618 = vmatpush1.bf16.msra.mxu0 0
  %7619 = vmatprep.subr.bf16.mxu0 0
  %7620 = vmatpush1.bf16.msra.mxu0 0
  %7621 = vmatprep.mubr.bf16.mxu0 0
  %7622 = vmatmul.mubr.bf16.gmra.mrb[0].mxu0 %v7584
  %v7623 = vpop.f32.mrb[0].mxu0
  %v7624 = vadd.f32 0.0, %v7623
  %v7625 = vpop.f32.mrb[0].mxu0
  %v7626 = vpop.f32.mrb[0].mxu0
  %v7627 = vpop.f32.mrb[0].mxu0
  %7628 = vdwg.mxu0
  %v7630 = vsel %vm1673, %v7298, 0
  %v7633 = vsel %vm3450, %v4570, 0
  %7635 = vmatprep.subr.bf16.mxu0 0
  %7636 = vmatpush1.bf16.msra.mxu0 %v7633
  %7637 = vmatprep.subr.bf16.mxu0 0
  %7638 = vmatpush1.bf16.msra.mxu0 0
  %7639 = vmatprep.subr.bf16.mxu0 0
  %7640 = vmatpush1.bf16.msra.mxu0 0
  %7641 = vmatprep.subr.bf16.mxu0 0
  %7642 = vmatpush1.bf16.msra.mxu0 0
  %7643 = vmatprep.subr.bf16.mxu0 0
  %7644 = vmatpush1.bf16.msra.mxu0 0
  %7645 = vmatprep.subr.bf16.mxu0 0
  %7646 = vmatpush1.bf16.msra.mxu0 0
  %7647 = vmatprep.subr.bf16.mxu0 0
  %7648 = vmatpush1.bf16.msra.mxu0 0
  %7649 = vmatprep.subr.bf16.mxu0 0
  %7650 = vmatpush1.bf16.msra.mxu0 0
  %7651 = vmatprep.subr.bf16.mxu0 0
  %7652 = vmatpush1.bf16.msra.mxu0 0
  %7653 = vmatprep.subr.bf16.mxu0 0
  %7654 = vmatpush1.bf16.msra.mxu0 0
  %7655 = vmatprep.subr.bf16.mxu0 0
  %7656 = vmatpush1.bf16.msra.mxu0 0
  %7657 = vmatprep.subr.bf16.mxu0 0
  %7658 = vmatpush1.bf16.msra.mxu0 0
  %7659 = vmatprep.subr.bf16.mxu0 0
  %7660 = vmatpush1.bf16.msra.mxu0 0
  %7661 = vmatprep.subr.bf16.mxu0 0
  %7662 = vmatpush1.bf16.msra.mxu0 0
  %7663 = vmatprep.subr.bf16.mxu0 0
  %7664 = vmatpush1.bf16.msra.mxu0 0
  %7665 = vmatprep.subr.bf16.mxu0 0
  %7666 = vmatpush1.bf16.msra.mxu0 0
  %7667 = vmatprep.mubr.bf16.mxu0 0
  %7668 = vmatmul.mubr.bf16.gmra.mrb[0].mxu0 %v7630
  %v7669 = vpop.f32.mrb[0].mxu0
  %v7670 = vadd.f32 0.0, %v7669
  %v7671 = vpop.f32.mrb[0].mxu0
  %v7672 = vpop.f32.mrb[0].mxu0
  %v7673 = vpop.f32.mrb[0].mxu0
  %7674 = vdwg.mxu0
  %v7676 = vsel %vm1673, %v7299, 0
  %v7679 = vsel %vm3450, %v4571, 0
  %7681 = vmatprep.subr.bf16.mxu0 0
  %7682 = vmatpush1.bf16.msra.mxu0 %v7679
  %7683 = vmatprep.subr.bf16.mxu0 0
  %7684 = vmatpush1.bf16.msra.mxu0 0
  %7685 = vmatprep.subr.bf16.mxu0 0
  %7686 = vmatpush1.bf16.msra.mxu0 0
  %7687 = vmatprep.subr.bf16.mxu0 0
  %7688 = vmatpush1.bf16.msra.mxu0 0
  %7689 = vmatprep.subr.bf16.mxu0 0
  %7690 = vmatpush1.bf16.msra.mxu0 0
  %7691 = vmatprep.subr.bf16.mxu0 0
  %7692 = vmatpush1.bf16.msra.mxu0 0
  %7693 = vmatprep.subr.bf16.mxu0 0
  %7694 = vmatpush1.bf16.msra.mxu0 0
  %7695 = vmatprep.subr.bf16.mxu0 0
  %7696 = vmatpush1.bf16.msra.mxu0 0
  %7697 = vmatprep.subr.bf16.mxu0 0
  %7698 = vmatpush1.bf16.msra.mxu0 0
  %7699 = vmatprep.subr.bf16.mxu0 0
  %7700 = vmatpush1.bf16.msra.mxu0 0
  %7701 = vmatprep.subr.bf16.mxu0 0
  %7702 = vmatpush1.bf16.msra.mxu0 0
  %7703 = vmatprep.subr.bf16.mxu0 0
  %7704 = vmatpush1.bf16.msra.mxu0 0
  %7705 = vmatprep.subr.bf16.mxu0 0
  %7706 = vmatpush1.bf16.msra.mxu0 0
  %7707 = vmatprep.subr.bf16.mxu0 0
  %7708 = vmatpush1.bf16.msra.mxu0 0
  %7709 = vmatprep.subr.bf16.mxu0 0
  %7710 = vmatpush1.bf16.msra.mxu0 0
  %7711 = vmatprep.subr.bf16.mxu0 0
  %7712 = vmatpush1.bf16.msra.mxu0 0
  %7713 = vmatprep.mubr.bf16.mxu0 0
  %7714 = vmatmul.mubr.bf16.gmra.mrb[0].mxu0 %v7676
  %v7715 = vpop.f32.mrb[0].mxu0
  %v7716 = vadd.f32 0.0, %v7715
  %v7717 = vpop.f32.mrb[0].mxu0
  %v7718 = vpop.f32.mrb[0].mxu0
  %v7719 = vpop.f32.mrb[0].mxu0
  %7720 = vdwg.mxu0
  %v7722 = vsel %vm1673, %v7300, 0
  %v7725 = vsel %vm3450, %v4572, 0
  %7727 = vmatprep.subr.bf16.mxu0 0
  %7728 = vmatpush1.bf16.msra.mxu0 %v7725
  %7729 = vmatprep.subr.bf16.mxu0 0
  %7730 = vmatpush1.bf16.msra.mxu0 0
  %7731 = vmatprep.subr.bf16.mxu0 0
  %7732 = vmatpush1.bf16.msra.mxu0 0
  %7733 = vmatprep.subr.bf16.mxu0 0
  %7734 = vmatpush1.bf16.msra.mxu0 0
  %7735 = vmatprep.subr.bf16.mxu0 0
  %7736 = vmatpush1.bf16.msra.mxu0 0
  %7737 = vmatprep.subr.bf16.mxu0 0
  %7738 = vmatpush1.bf16.msra.mxu0 0
  %7739 = vmatprep.subr.bf16.mxu0 0
  %7740 = vmatpush1.bf16.msra.mxu0 0
  %7741 = vmatprep.subr.bf16.mxu0 0
  %7742 = vmatpush1.bf16.msra.mxu0 0
  %7743 = vmatprep.subr.bf16.mxu0 0
  %7744 = vmatpush1.bf16.msra.mxu0 0
  %7745 = vmatprep.subr.bf16.mxu0 0
  %7746 = vmatpush1.bf16.msra.mxu0 0
  %7747 = vmatprep.subr.bf16.mxu0 0
  %7748 = vmatpush1.bf16.msra.mxu0 0
  %7749 = vmatprep.subr.bf16.mxu0 0
  %7750 = vmatpush1.bf16.msra.mxu0 0
  %7751 = vmatprep.subr.bf16.mxu0 0
  %7752 = vmatpush1.bf16.msra.mxu0 0
  %7753 = vmatprep.subr.bf16.mxu0 0
  %7754 = vmatpush1.bf16.msra.mxu0 0
  %7755 = vmatprep.subr.bf16.mxu0 0
  %7756 = vmatpush1.bf16.msra.mxu0 0
  %7757 = vmatprep.subr.bf16.mxu0 0
  %7758 = vmatpush1.bf16.msra.mxu0 0
  %7759 = vmatprep.mubr.bf16.mxu0 0
  %7760 = vmatmul.mubr.bf16.gmra.mrb[0].mxu0 %v7722
  %v7761 = vpop.f32.mrb[0].mxu0
  %v7762 = vadd.f32 0.0, %v7761
  %v7763 = vpop.f32.mrb[0].mxu0
  %v7764 = vpop.f32.mrb[0].mxu0
  %v7765 = vpop.f32.mrb[0].mxu0
  %7766 = vdwg.mxu0
  %v7768 = vsel %vm1673, %v7301, 0
  %v7771 = vsel %vm3450, %v4573, 0
  %7773 = vmatprep.subr.bf16.mxu0 0
  %7774 = vmatpush1.bf16.msra.mxu0 %v7771
  %7775 = vmatprep.subr.bf16.mxu0 0
  %7776 = vmatpush1.bf16.msra.mxu0 0
  %7777 = vmatprep.subr.bf16.mxu0 0
  %7778 = vmatpush1.bf16.msra.mxu0 0
  %7779 = vmatprep.subr.bf16.mxu0 0
  %7780 = vmatpush1.bf16.msra.mxu0 0
  %7781 = vmatprep.subr.bf16.mxu0 0
  %7782 = vmatpush1.bf16.msra.mxu0 0
  %7783 = vmatprep.subr.bf16.mxu0 0
  %7784 = vmatpush1.bf16.msra.mxu0 0
  %7785 = vmatprep.subr.bf16.mxu0 0
  %7786 = vmatpush1.bf16.msra.mxu0 0
  %7787 = vmatprep.subr.bf16.mxu0 0
  %7788 = vmatpush1.bf16.msra.mxu0 0
  %7789 = vmatprep.subr.bf16.mxu0 0
  %7790 = vmatpush1.bf16.msra.mxu0 0
  %7791 = vmatprep.subr.bf16.mxu0 0
  %7792 = vmatpush1.bf16.msra.mxu0 0
  %7793 = vmatprep.subr.bf16.mxu0 0
  %7794 = vmatpush1.bf16.msra.mxu0 0
  %7795 = vmatprep.subr.bf16.mxu0 0
  %7796 = vmatpush1.bf16.msra.mxu0 0
  %7797 = vmatprep.subr.bf16.mxu0 0
  %7798 = vmatpush1.bf16.msra.mxu0 0
  %7799 = vmatprep.subr.bf16.mxu0 0
  %7800 = vmatpush1.bf16.msra.mxu0 0
  %7801 = vmatprep.subr.bf16.mxu0 0
  %7802 = vmatpush1.bf16.msra.mxu0 0
  %7803 = vmatprep.subr.bf16.mxu0 0
  %7804 = vmatpush1.bf16.msra.mxu0 0
  %7805 = vmatprep.mubr.bf16.mxu0 0
  %7806 = vmatmul.mubr.bf16.gmra.mrb[0].mxu0 %v7768
  %v7807 = vpop.f32.mrb[0].mxu0
  %v7808 = vadd.f32 0.0, %v7807
  %v7809 = vpop.f32.mrb[0].mxu0
  %v7810 = vpop.f32.mrb[0].mxu0
  %v7811 = vpop.f32.mrb[0].mxu0
  %7812 = vdwg.mxu0
  %v7814 = vsel %vm1673, %v7302, 0
  %v7817 = vsel %vm3450, %v4574, 0
  %7819 = vmatprep.subr.bf16.mxu0 0
  %7820 = vmatpush1.bf16.msra.mxu0 %v7817
  %7821 = vmatprep.subr.bf16.mxu0 0
  %7822 = vmatpush1.bf16.msra.mxu0 0
  %7823 = vmatprep.subr.bf16.mxu0 0
  %7824 = vmatpush1.bf16.msra.mxu0 0
  %7825 = vmatprep.subr.bf16.mxu0 0
  %7826 = vmatpush1.bf16.msra.mxu0 0
  %7827 = vmatprep.subr.bf16.mxu0 0
  %7828 = vmatpush1.bf16.msra.mxu0 0
  %7829 = vmatprep.subr.bf16.mxu0 0
  %7830 = vmatpush1.bf16.msra.mxu0 0
  %7831 = vmatprep.subr.bf16.mxu0 0
  %7832 = vmatpush1.bf16.msra.mxu0 0
  %7833 = vmatprep.subr.bf16.mxu0 0
  %7834 = vmatpush1.bf16.msra.mxu0 0
  %7835 = vmatprep.subr.bf16.mxu0 0
  %7836 = vmatpush1.bf16.msra.mxu0 0
  %7837 = vmatprep.subr.bf16.mxu0 0
  %7838 = vmatpush1.bf16.msra.mxu0 0
  %7839 = vmatprep.subr.bf16.mxu0 0
  %7840 = vmatpush1.bf16.msra.mxu0 0
  %7841 = vmatprep.subr.bf16.mxu0 0
  %7842 = vmatpush1.bf16.msra.mxu0 0
  %7843 = vmatprep.subr.bf16.mxu0 0
  %7844 = vmatpush1.bf16.msra.mxu0 0
  %7845 = vmatprep.subr.bf16.mxu0 0
  %7846 = vmatpush1.bf16.msra.mxu0 0
  %7847 = vmatprep.subr.bf16.mxu0 0
  %7848 = vmatpush1.bf16.msra.mxu0 0
  %7849 = vmatprep.subr.bf16.mxu0 0
  %7850 = vmatpush1.bf16.msra.mxu0 0
  %7851 = vmatprep.mubr.bf16.mxu0 0
  %7852 = vmatmul.mubr.bf16.gmra.mrb[0].mxu0 %v7814
  %v7853 = vpop.f32.mrb[0].mxu0
  %v7854 = vadd.f32 0.0, %v7853
  %v7855 = vpop.f32.mrb[0].mxu0
  %v7856 = vpop.f32.mrb[0].mxu0
  %v7857 = vpop.f32.mrb[0].mxu0
  %7858 = vdwg.mxu0
  %v7860 = vsel %vm1673, %v7303, 0
  %v7863 = vsel %vm3450, %v4575, 0
  %7865 = vmatprep.subr.bf16.mxu0 0
  %7866 = vmatpush1.bf16.msra.mxu0 %v7863
  %7867 = vmatprep.subr.bf16.mxu0 0
  %7868 = vmatpush1.bf16.msra.mxu0 0
  %7869 = vmatprep.subr.bf16.mxu0 0
  %7870 = vmatpush1.bf16.msra.mxu0 0
  %7871 = vmatprep.subr.bf16.mxu0 0
  %7872 = vmatpush1.bf16.msra.mxu0 0
  %7873 = vmatprep.subr.bf16.mxu0 0
  %7874 = vmatpush1.bf16.msra.mxu0 0
  %7875 = vmatprep.subr.bf16.mxu0 0
  %7876 = vmatpush1.bf16.msra.mxu0 0
  %7877 = vmatprep.subr.bf16.mxu0 0
  %7878 = vmatpush1.bf16.msra.mxu0 0
  %7879 = vmatprep.subr.bf16.mxu0 0
  %7880 = vmatpush1.bf16.msra.mxu0 0
  %7881 = vmatprep.subr.bf16.mxu0 0
  %7882 = vmatpush1.bf16.msra.mxu0 0
  %7883 = vmatprep.subr.bf16.mxu0 0
  %7884 = vmatpush1.bf16.msra.mxu0 0
  %7885 = vmatprep.subr.bf16.mxu0 0
  %7886 = vmatpush1.bf16.msra.mxu0 0
  %7887 = vmatprep.subr.bf16.mxu0 0
  %7888 = vmatpush1.bf16.msra.mxu0 0
  %7889 = vmatprep.subr.bf16.mxu0 0
  %7890 = vmatpush1.bf16.msra.mxu0 0
  %7891 = vmatprep.subr.bf16.mxu0 0
  %7892 = vmatpush1.bf16.msra.mxu0 0
  %7893 = vmatprep.subr.bf16.mxu0 0
  %7894 = vmatpush1.bf16.msra.mxu0 0
  %7895 = vmatprep.subr.bf16.mxu0 0
  %7896 = vmatpush1.bf16.msra.mxu0 0
  %7897 = vmatprep.mubr.bf16.mxu0 0
  %7898 = vmatmul.mubr.bf16.gmra.mrb[0].mxu0 %v7860
  %v7899 = vpop.f32.mrb[0].mxu0
  %v7900 = vadd.f32 0.0, %v7899
  %v7901 = vpop.f32.mrb[0].mxu0
  %v7902 = vpop.f32.mrb[0].mxu0
  %v7903 = vpop.f32.mrb[0].mxu0
  %7904 = vdwg.mxu0
  %v7906 = vsel %vm1673, %v7304, 0
  %v7909 = vsel %vm3450, %v4576, 0
  %7911 = vmatprep.subr.bf16.mxu0 0
  %7912 = vmatpush1.bf16.msra.mxu0 %v7909
  %7913 = vmatprep.subr.bf16.mxu0 0
  %7914 = vmatpush1.bf16.msra.mxu0 0
  %7915 = vmatprep.subr.bf16.mxu0 0
  %7916 = vmatpush1.bf16.msra.mxu0 0
  %7917 = vmatprep.subr.bf16.mxu0 0
  %7918 = vmatpush1.bf16.msra.mxu0 0
  %7919 = vmatprep.subr.bf16.mxu0 0
  %7920 = vmatpush1.bf16.msra.mxu0 0
  %7921 = vmatprep.subr.bf16.mxu0 0
  %7922 = vmatpush1.bf16.msra.mxu0 0
  %7923 = vmatprep.subr.bf16.mxu0 0
  %7924 = vmatpush1.bf16.msra.mxu0 0
  %7925 = vmatprep.subr.bf16.mxu0 0
  %7926 = vmatpush1.bf16.msra.mxu0 0
  %7927 = vmatprep.subr.bf16.mxu0 0
  %7928 = vmatpush1.bf16.msra.mxu0 0
  %7929 = vmatprep.subr.bf16.mxu0 0
  %7930 = vmatpush1.bf16.msra.mxu0 0
  %7931 = vmatprep.subr.bf16.mxu0 0
  %7932 = vmatpush1.bf16.msra.mxu0 0
  %7933 = vmatprep.subr.bf16.mxu0 0
  %7934 = vmatpush1.bf16.msra.mxu0 0
  %7935 = vmatprep.subr.bf16.mxu0 0
  %7936 = vmatpush1.bf16.msra.mxu0 0
  %7937 = vmatprep.subr.bf16.mxu0 0
  %7938 = vmatpush1.bf16.msra.mxu0 0
  %7939 = vmatprep.subr.bf16.mxu0 0
  %7940 = vmatpush1.bf16.msra.mxu0 0
  %7941 = vmatprep.subr.bf16.mxu0 0
  %7942 = vmatpush1.bf16.msra.mxu0 0
  %7943 = vmatprep.mubr.bf16.mxu0 0
  %7944 = vmatmul.mubr.bf16.gmra.mrb[0].mxu0 %v7906
  %v7945 = vpop.f32.mrb[0].mxu0
  %v7946 = vadd.f32 0.0, %v7945
  %v7947 = vpop.f32.mrb[0].mxu0
  %v7948 = vpop.f32.mrb[0].mxu0
  %v7949 = vpop.f32.mrb[0].mxu0
  %7950 = vdwg.mxu0
  %v7952 = vsel %vm1673, %v7305, 0
  %v7955 = vsel %vm3450, %v4577, 0
  %7957 = vmatprep.subr.bf16.mxu0 0
  %7958 = vmatpush1.bf16.msra.mxu0 %v7955
  %7959 = vmatprep.subr.bf16.mxu0 0
  %7960 = vmatpush1.bf16.msra.mxu0 0
  %7961 = vmatprep.subr.bf16.mxu0 0
  %7962 = vmatpush1.bf16.msra.mxu0 0
  %7963 = vmatprep.subr.bf16.mxu0 0
  %7964 = vmatpush1.bf16.msra.mxu0 0
  %7965 = vmatprep.subr.bf16.mxu0 0
  %7966 = vmatpush1.bf16.msra.mxu0 0
  %7967 = vmatprep.subr.bf16.mxu0 0
  %7968 = vmatpush1.bf16.msra.mxu0 0
  %7969 = vmatprep.subr.bf16.mxu0 0
  %7970 = vmatpush1.bf16.msra.mxu0 0
  %7971 = vmatprep.subr.bf16.mxu0 0
  %7972 = vmatpush1.bf16.msra.mxu0 0
  %7973 = vmatprep.subr.bf16.mxu0 0
  %7974 = vmatpush1.bf16.msra.mxu0 0
  %7975 = vmatprep.subr.bf16.mxu0 0
  %7976 = vmatpush1.bf16.msra.mxu0 0
  %7977 = vmatprep.subr.bf16.mxu0 0
  %7978 = vmatpush1.bf16.msra.mxu0 0
  %7979 = vmatprep.subr.bf16.mxu0 0
  %7980 = vmatpush1.bf16.msra.mxu0 0
  %7981 = vmatprep.subr.bf16.mxu0 0
  %7982 = vmatpush1.bf16.msra.mxu0 0
  %7983 = vmatprep.subr.bf16.mxu0 0
  %7984 = vmatpush1.bf16.msra.mxu0 0
  %7985 = vmatprep.subr.bf16.mxu0 0
  %7986 = vmatpush1.bf16.msra.mxu0 0
  %7987 = vmatprep.subr.bf16.mxu0 0
  %7988 = vmatpush1.bf16.msra.mxu0 0
  %7989 = vmatprep.mubr.bf16.mxu0 0
  %7990 = vmatmul.mubr.bf16.gmra.mrb[0].mxu0 %v7952
  %v7991 = vpop.f32.mrb[0].mxu0
  %v7992 = vadd.f32 0.0, %v7991
  %v7993 = vpop.f32.mrb[0].mxu0
  %v7994 = vpop.f32.mrb[0].mxu0
  %v7995 = vpop.f32.mrb[0].mxu0
  %7996 = vdwg.mxu0
  %v7998 = vsel %vm1673, %v7306, 0
  %v8001 = vsel %vm3450, %v4578, 0
  %8003 = vmatprep.subr.bf16.mxu0 0
  %8004 = vmatpush1.bf16.msra.mxu0 %v8001
  %8005 = vmatprep.subr.bf16.mxu0 0
  %8006 = vmatpush1.bf16.msra.mxu0 0
  %8007 = vmatprep.subr.bf16.mxu0 0
  %8008 = vmatpush1.bf16.msra.mxu0 0
  %8009 = vmatprep.subr.bf16.mxu0 0
  %8010 = vmatpush1.bf16.msra.mxu0 0
  %8011 = vmatprep.subr.bf16.mxu0 0
  %8012 = vmatpush1.bf16.msra.mxu0 0
  %8013 = vmatprep.subr.bf16.mxu0 0
  %8014 = vmatpush1.bf16.msra.mxu0 0
  %8015 = vmatprep.subr.bf16.mxu0 0
  %8016 = vmatpush1.bf16.msra.mxu0 0
  %8017 = vmatprep.subr.bf16.mxu0 0
  %8018 = vmatpush1.bf16.msra.mxu0 0
  %8019 = vmatprep.subr.bf16.mxu0 0
  %8020 = vmatpush1.bf16.msra.mxu0 0
  %8021 = vmatprep.subr.bf16.mxu0 0
  %8022 = vmatpush1.bf16.msra.mxu0 0
  %8023 = vmatprep.subr.bf16.mxu0 0
  %8024 = vmatpush1.bf16.msra.mxu0 0
  %8025 = vmatprep.subr.bf16.mxu0 0
  %8026 = vmatpush1.bf16.msra.mxu0 0
  %8027 = vmatprep.subr.bf16.mxu0 0
  %8028 = vmatpush1.bf16.msra.mxu0 0
  %8029 = vmatprep.subr.bf16.mxu0 0
  %8030 = vmatpush1.bf16.msra.mxu0 0
  %8031 = vmatprep.subr.bf16.mxu0 0
  %8032 = vmatpush1.bf16.msra.mxu0 0
  %8033 = vmatprep.subr.bf16.mxu0 0
  %8034 = vmatpush1.bf16.msra.mxu0 0
  %8035 = vmatprep.mubr.bf16.mxu0 0
  %8036 = vmatmul.mubr.bf16.gmra.mrb[0].mxu0 %v7998
  %v8037 = vpop.f32.mrb[0].mxu0
  %v8038 = vadd.f32 0.0, %v8037
  %v8039 = vpop.f32.mrb[0].mxu0
  %v8040 = vpop.f32.mrb[0].mxu0
  %v8041 = vpop.f32.mrb[0].mxu0
  %8042 = vdwg.mxu0
  %v8043 = vadd.f32 %v7348, %v7440
  %v8044 = vadd.f32 %v7394, %v7486
  %v8045 = vadd.f32 %v8043, %v7532
  %v8046 = vadd.f32 %v8044, %v7578
  %v8047 = vadd.f32 %v8045, %v7624
  %v8048 = vadd.f32 %v8046, %v7670
  %v8049 = vadd.f32 %v8047, %v7716
  %v8050 = vadd.f32 %v8048, %v7762
  %v8051 = vadd.f32 %v8049, %v7808
  %v8052 = vadd.f32 %v8050, %v7854
  %v8053 = vadd.f32 %v8051, %v7900
  %v8054 = vadd.f32 %v8052, %v7946
  %v8055 = vadd.f32 %v8053, %v7992
  %v8056 = vadd.f32 %v8054, %v8038
  %v8057 = vlaneseq
  %v8058 = vshrl.u32 %v8057, 7
  %v8059 = vsub.s32 0, %v8058
  %v8060 = vrot.slane %v4479, %v8059
  %v8061 = vadd.f32 %v8055, %v8060
  %v8062 = vadd.f32 %v8056, %v8060
  %v8063 = vadd.f32 %v8061, %v4476
  %v8064 = vadd.f32 %v8062, %v4477
  %v8065 = vsel %vm121, %v8063, 0.0
  %8066 = vadd.xlane.f32.xlu0 %v8065
  %v8067 = vpop.xlane.xlu0 %8066
  %v8068 = vsel %vm121, %v8064, 0.0
  %8069 = vadd.xlane.f32.xlu0 %v8068
  %v8070 = vpop.xlane.xlu0 %8069
  %v8071 = vmul.f32 %v8067, %v4212
  %v8072 = vmul.f32 %v8070, %v4212
  %v8073 = vsub.f32 %v8063, %v8071
  %v8074 = vsub.f32 %v8064, %v8072
  %v8075 = vmul.f32 %v8073, %v8073
  %v8076 = vmul.f32 %v8074, %v8074
  %v8077 = vsel %vm121, %v8075, 0.0
  %8078 = vadd.xlane.f32.xlu0 %v8077
  %v8079 = vpop.xlane.xlu0 %8078
  %v8080 = vsel %vm121, %v8076, 0.0
  %8081 = vadd.xlane.f32.xlu0 %v8080
  %v8082 = vpop.xlane.xlu0 %8081
  %v8083 = vmul.f32 %v8079, %v4212
  %v8084 = vmul.f32 %v8082, %v4212
  %v8085 = vadd.f32 %v8083, 1e-12
  %v8086 = vadd.f32 %v8084, 1e-12
  %v8087 = vrsqrt.pop %v8085
  %v8088 = vrsqrt.pop %v8086
  %v8089 = vmul.f32 %v8073, %v8087
  %v8090 = vmul.f32 %v8074, %v8088
  %v8091 = vlaneseq
  %v8092 = vshrl.u32 %v8091, 7
  %v8093 = vsub.s32 1, %v8092
  %v8094 = vrot.slane %v4479, %v8093
  %v8095 = vmul.f32 %v8089, %v8094
  %v8096 = vmul.f32 %v8090, %v8094
  %v8097 = vlaneseq
  %v8098 = vshrl.u32 %v8097, 7
  %v8099 = vsub.s32 2, %v8098
  %v8100 = vrot.slane %v4479, %v8099
  %v8101 = vadd.f32 %v8095, %v8100
  %v8102 = vadd.f32 %v8096, %v8100
  %s8103 = scalar_lea.vmem %s10, 16
  %v8104 = vld [vmem:[%s8103] sm:$0xf]
  %v8105 = vld [vmem:[%s8103 + $0x4] sm:$0xf]
  %v8106 = vld [vmem:[%s8103 + $0x8] sm:$0xf]
  %v8107 = vld [vmem:[%s8103 + $0xc] sm:$0xf]
  %v8108 = vpack.c.bf16 %v8102, %v8101
  %v8109 = vlaneseq
  %v8110 = vshrl.u32 %v8109, 7
  %v8111 = vsub.s32 1, %v8110
  %v8112 = vrot.slane %v47, %v8111
  %v8117 = vunpack.c.l.b16 %v8104
  %v8118 = vunpack.c.l.b16 %v8105
  %v8119 = vunpack.c.l.b16 %v8106
  %v8120 = vunpack.c.l.b16 %v8107
  %v8121 = vpack.c.b16 %v8118, %v8117
  %v8122 = vpack.c.b16 %v8120, %v8119
  %v8126 = vsel %vm121, %v8108, 0
  %8128 = vmatprep.subr.bf16.mxu0 0
  %8129 = vmatpush1.bf16.msra.mxu0 %v8121
  %8130 = vmatprep.subr.bf16.mxu0 0
  %8131 = vmatpush1.bf16.msra.mxu0 %v8122
  %8132 = vmatprep.subr.bf16.mxu0 0
  %8133 = vmatpush1.bf16.msra.mxu0 0
  %8134 = vmatprep.subr.bf16.mxu0 0
  %8135 = vmatpush1.bf16.msra.mxu0 0
  %8136 = vmatprep.subr.bf16.mxu0 0
  %8137 = vmatpush1.bf16.msra.mxu0 0
  %8138 = vmatprep.subr.bf16.mxu0 0
  %8139 = vmatpush1.bf16.msra.mxu0 0
  %8140 = vmatprep.subr.bf16.mxu0 0
  %8141 = vmatpush1.bf16.msra.mxu0 0
  %8142 = vmatprep.subr.bf16.mxu0 0
  %8143 = vmatpush1.bf16.msra.mxu0 0
  %8144 = vmatprep.subr.bf16.mxu0 0
  %8145 = vmatpush1.bf16.msra.mxu0 0
  %8146 = vmatprep.subr.bf16.mxu0 0
  %8147 = vmatpush1.bf16.msra.mxu0 0
  %8148 = vmatprep.subr.bf16.mxu0 0
  %8149 = vmatpush1.bf16.msra.mxu0 0
  %8150 = vmatprep.subr.bf16.mxu0 0
  %8151 = vmatpush1.bf16.msra.mxu0 0
  %8152 = vmatprep.subr.bf16.mxu0 0
  %8153 = vmatpush1.bf16.msra.mxu0 0
  %8154 = vmatprep.subr.bf16.mxu0 0
  %8155 = vmatpush1.bf16.msra.mxu0 0
  %8156 = vmatprep.subr.bf16.mxu0 0
  %8157 = vmatpush1.bf16.msra.mxu0 0
  %8158 = vmatprep.subr.bf16.mxu0 0
  %8159 = vmatpush1.bf16.msra.mxu0 0
  %8160 = vmatprep.mubr.bf16.mxu0 0
  %8161 = vmatmul.mubr.bf16.gmra.mrb[0].mxu0 %v8126
  %v8162 = vpop.f32.mrb[0].mxu0
  %v8163 = vadd.f32 %v8112, %v8162
  %v8164 = vpop.f32.mrb[0].mxu0
  %v8165 = vpop.f32.mrb[0].mxu0
  %v8166 = vadd.f32 %v8112, %v8165
  %v8167 = vpop.f32.mrb[0].mxu0
  %8168 = vdwg.mxu0
  %v8169 = vmul.f32 %v8163, %v8163
  %v8170 = vmul.f32 %v8166, %v8166
  %v8171 = vmul.f32 %v8163, %v8169
  %v8172 = vmul.f32 %v8166, %v8170
  %v8173 = vmul.f32 %v8171, 0.044715
  %v8174 = vmul.f32 %v8172, 0.044715
  %v8175 = vadd.f32 %v8163, %v8173
  %v8176 = vadd.f32 %v8166, %v8174
  %v8177 = vmul.f32 %v8175, 0.7978846
  %v8178 = vmul.f32 %v8176, 0.7978846
  %v8179 = vtanh.pop %v8177
  %v8180 = vtanh.pop %v8178
  %v8181 = vadd.f32 %v8179, 1.0
  %v8182 = vadd.f32 %v8180, 1.0
  %v8183 = vmul.f32 %v8181, 0.5
  %v8184 = vmul.f32 %v8182, 0.5
  %v8185 = vmul.f32 %v8163, %v8183
  %v8186 = vmul.f32 %v8166, %v8184
  %s8187 = scalar_lea.vmem %s9, 64
  %v8188 = vld [vmem:[%s8187] sm:$0xf]
  %v8189 = vld [vmem:[%s8187 + $0x4] sm:$0xf]
  %v8190 = vld [vmem:[%s8187 + $0x8] sm:$0xf]
  %v8191 = vld [vmem:[%s8187 + $0xc] sm:$0xf]
  %v8192 = vld [vmem:[%s8187 + $0x10] sm:$0xf]
  %v8193 = vld [vmem:[%s8187 + $0x14] sm:$0xf]
  %v8194 = vld [vmem:[%s8187 + $0x18] sm:$0xf]
  %v8195 = vld [vmem:[%s8187 + $0x1c] sm:$0xf]
  %v8196 = vld [vmem:[%s8187 + $0x20] sm:$0xf]
  %v8197 = vld [vmem:[%s8187 + $0x24] sm:$0xf]
  %v8198 = vld [vmem:[%s8187 + $0x28] sm:$0xf]
  %v8199 = vld [vmem:[%s8187 + $0x2c] sm:$0xf]
  %v8200 = vld [vmem:[%s8187 + $0x30] sm:$0xf]
  %v8201 = vld [vmem:[%s8187 + $0x34] sm:$0xf]
  %v8202 = vld [vmem:[%s8187 + $0x38] sm:$0xf]
  %v8203 = vld [vmem:[%s8187 + $0x3c] sm:$0xf]
  %v8204 = vpack.c.bf16 %v8186, %v8185
  %v8205 = vlaneseq
  %v8206 = vshrl.u32 %v8205, 7
  %v8207 = vsub.s32 3, %v8206
  %v8208 = vrot.slane %v4479, %v8207
  %v8225 = vunpack.c.l.b16 %v8188
  %v8226 = vunpack.c.l.b16 %v8189
  %v8227 = vunpack.c.l.b16 %v8190
  %v8228 = vunpack.c.l.b16 %v8191
  %v8229 = vunpack.c.l.b16 %v8192
  %v8230 = vunpack.c.l.b16 %v8193
  %v8231 = vunpack.c.l.b16 %v8194
  %v8232 = vunpack.c.l.b16 %v8195
  %v8233 = vunpack.c.l.b16 %v8196
  %v8234 = vunpack.c.l.b16 %v8197
  %v8235 = vunpack.c.l.b16 %v8198
  %v8236 = vunpack.c.l.b16 %v8199
  %v8237 = vunpack.c.l.b16 %v8200
  %v8238 = vunpack.c.l.b16 %v8201
  %v8239 = vunpack.c.l.b16 %v8202
  %v8240 = vunpack.c.l.b16 %v8203
  %v8241 = vpack.c.b16 %v8226, %v8225
  %v8242 = vpack.c.b16 %v8228, %v8227
  %v8243 = vpack.c.b16 %v8230, %v8229
  %v8244 = vpack.c.b16 %v8232, %v8231
  %v8245 = vpack.c.b16 %v8234, %v8233
  %v8246 = vpack.c.b16 %v8236, %v8235
  %v8247 = vpack.c.b16 %v8238, %v8237
  %v8248 = vpack.c.b16 %v8240, %v8239
  %8257 = vmatprep.subr.bf16.mxu0 0
  %8258 = vmatpush1.bf16.msra.mxu0 %v8241
  %8259 = vmatprep.subr.bf16.mxu0 0
  %8260 = vmatpush1.bf16.msra.mxu0 %v8242
  %8261 = vmatprep.subr.bf16.mxu0 0
  %8262 = vmatpush1.bf16.msra.mxu0 %v8243
  %8263 = vmatprep.subr.bf16.mxu0 0
  %8264 = vmatpush1.bf16.msra.mxu0 %v8244
  %8265 = vmatprep.subr.bf16.mxu0 0
  %8266 = vmatpush1.bf16.msra.mxu0 %v8245
  %8267 = vmatprep.subr.bf16.mxu0 0
  %8268 = vmatpush1.bf16.msra.mxu0 %v8246
  %8269 = vmatprep.subr.bf16.mxu0 0
  %8270 = vmatpush1.bf16.msra.mxu0 %v8247
  %8271 = vmatprep.subr.bf16.mxu0 0
  %8272 = vmatpush1.bf16.msra.mxu0 %v8248
  %8273 = vmatprep.subr.bf16.mxu0 0
  %8274 = vmatpush1.bf16.msra.mxu0 0
  %8275 = vmatprep.subr.bf16.mxu0 0
  %8276 = vmatpush1.bf16.msra.mxu0 0
  %8277 = vmatprep.subr.bf16.mxu0 0
  %8278 = vmatpush1.bf16.msra.mxu0 0
  %8279 = vmatprep.subr.bf16.mxu0 0
  %8280 = vmatpush1.bf16.msra.mxu0 0
  %8281 = vmatprep.subr.bf16.mxu0 0
  %8282 = vmatpush1.bf16.msra.mxu0 0
  %8283 = vmatprep.subr.bf16.mxu0 0
  %8284 = vmatpush1.bf16.msra.mxu0 0
  %8285 = vmatprep.subr.bf16.mxu0 0
  %8286 = vmatpush1.bf16.msra.mxu0 0
  %8287 = vmatprep.subr.bf16.mxu0 0
  %8288 = vmatpush1.bf16.msra.mxu0 0
  %8289 = vmatprep.mubr.bf16.mxu0 0
  %8290 = vmatmul.mubr.bf16.gmra.mrb[0].mxu0 %v8204
  %v8291 = vpop.f32.mrb[0].mxu0
  %v8292 = vadd.f32 %v8208, %v8291
  %v8293 = vpop.f32.mrb[0].mxu0
  %v8294 = vpop.f32.mrb[0].mxu0
  %v8295 = vadd.f32 %v8208, %v8294
  %v8296 = vpop.f32.mrb[0].mxu0
  %8297 = vdwg.mxu0
  %v8298 = vadd.f32 %v8292, %v8101
  %v8299 = vadd.f32 %v8295, %v8102
  %v8300 = vsel %vm121, %v8298, 0.0
  %8301 = vadd.xlane.f32.xlu0 %v8300
  %v8302 = vpop.xlane.xlu0 %8301
  %v8303 = vsel %vm121, %v8299, 0.0
  %8304 = vadd.xlane.f32.xlu0 %v8303
  %v8305 = vpop.xlane.xlu0 %8304
  %v8306 = vmul.f32 %v8302, %v4212
  %v8307 = vmul.f32 %v8305, %v4212
  %v8308 = vsub.f32 %v8298, %v8306
  %v8309 = vsub.f32 %v8299, %v8307
  %v8310 = vmul.f32 %v8308, %v8308
  %v8311 = vmul.f32 %v8309, %v8309
  %v8312 = vsel %vm121, %v8310, 0.0
  %8313 = vadd.xlane.f32.xlu0 %v8312
  %v8314 = vpop.xlane.xlu0 %8313
  %v8315 = vsel %vm121, %v8311, 0.0
  %8316 = vadd.xlane.f32.xlu0 %v8315
  %v8317 = vpop.xlane.xlu0 %8316
  %v8318 = vmul.f32 %v8314, %v4212
  %v8319 = vmul.f32 %v8317, %v4212
  %v8320 = vadd.f32 %v8318, 1e-12
  %v8321 = vadd.f32 %v8319, 1e-12
  %v8322 = vrsqrt.pop %v8320
  %v8323 = vrsqrt.pop %v8321
  %v8324 = vmul.f32 %v8308, %v8322
  %v8325 = vmul.f32 %v8309, %v8323
  %v8326 = vlaneseq
  %v8327 = vshrl.u32 %v8326, 7
  %v8328 = vsub.s32 4, %v8327
  %v8329 = vrot.slane %v4479, %v8328
  %v8330 = vmul.f32 %v8324, %v8329
  %v8331 = vmul.f32 %v8325, %v8329
  %v8332 = vlaneseq
  %v8333 = vshrl.u32 %v8332, 7
  %v8334 = vsub.s32 5, %v8333
  %v8335 = vrot.slane %v4479, %v8334
  %v8336 = vadd.f32 %v8330, %v8335
  %v8337 = vadd.f32 %v8331, %v8335
  %v8338 = vpack.c.bf16 %v8337, %v8336
  %v8339 = vlaneseq
  %v8340 = vshrl.u32 %v8339, 7
  %v8341 = vsub.s32 3, %v8340
  %v8342 = vrot.slane %v47, %v8341
  %v8347 = vunpack.c.l.b16 %v60
  %v8348 = vunpack.c.l.b16 %v61
  %v8349 = vunpack.c.l.b16 %v62
  %v8350 = vunpack.c.l.b16 %v63
  %v8351 = vpack.c.b16 %v8348, %v8347
  %v8352 = vpack.c.b16 %v8350, %v8349
  %v8356 = vsel %vm121, %v8338, 0
  %8358 = vmatprep.subr.bf16.mxu0 0
  %8359 = vmatpush1.bf16.msra.mxu0 %v8351
  %8360 = vmatprep.subr.bf16.mxu0 0
  %8361 = vmatpush1.bf16.msra.mxu0 %v8352
  %8362 = vmatprep.subr.bf16.mxu0 0
  %8363 = vmatpush1.bf16.msra.mxu0 0
  %8364 = vmatprep.subr.bf16.mxu0 0
  %8365 = vmatpush1.bf16.msra.mxu0 0
  %8366 = vmatprep.subr.bf16.mxu0 0
  %8367 = vmatpush1.bf16.msra.mxu0 0
  %8368 = vmatprep.subr.bf16.mxu0 0
  %8369 = vmatpush1.bf16.msra.mxu0 0
  %8370 = vmatprep.subr.bf16.mxu0 0
  %8371 = vmatpush1.bf16.msra.mxu0 0
  %8372 = vmatprep.subr.bf16.mxu0 0
  %8373 = vmatpush1.bf16.msra.mxu0 0
  %8374 = vmatprep.subr.bf16.mxu0 0
  %8375 = vmatpush1.bf16.msra.mxu0 0
  %8376 = vmatprep.subr.bf16.mxu0 0
  %8377 = vmatpush1.bf16.msra.mxu0 0
  %8378 = vmatprep.subr.bf16.mxu0 0
  %8379 = vmatpush1.bf16.msra.mxu0 0
  %8380 = vmatprep.subr.bf16.mxu0 0
  %8381 = vmatpush1.bf16.msra.mxu0 0
  %8382 = vmatprep.subr.bf16.mxu0 0
  %8383 = vmatpush1.bf16.msra.mxu0 0
  %8384 = vmatprep.subr.bf16.mxu0 0
  %8385 = vmatpush1.bf16.msra.mxu0 0
  %8386 = vmatprep.subr.bf16.mxu0 0
  %8387 = vmatpush1.bf16.msra.mxu0 0
  %8388 = vmatprep.subr.bf16.mxu0 0
  %8389 = vmatpush1.bf16.msra.mxu0 0
  %8390 = vmatprep.mubr.bf16.mxu0 0
  %8391 = vmatmul.mubr.bf16.gmra.mrb[0].mxu0 %v8356
  %v8392 = vpop.f32.mrb[0].mxu0
  %v8393 = vadd.f32 %v8342, %v8392
  %v8394 = vpop.f32.mrb[0].mxu0
  %v8395 = vpop.f32.mrb[0].mxu0
  %v8396 = vadd.f32 %v8342, %v8395
  %v8397 = vpop.f32.mrb[0].mxu0
  %8398 = vdwg.mxu0
  %v8399 = vsel %vm121, %v8393, 0.0
  %8400 = vadd.xlane.f32.xlu0 %v8399
  %v8401 = vpop.xlane.xlu0 %8400
  %v8402 = vsel %vm121, %v8396, 0.0
  %8403 = vadd.xlane.f32.xlu0 %v8402
  %v8404 = vpop.xlane.xlu0 %8403
  %v8405 = vmul.f32 %v8401, %v4212
  %v8406 = vmul.f32 %v8404, %v4212
  %v8407 = vsub.f32 %v8393, %v8405
  %v8408 = vsub.f32 %v8396, %v8406
  %v8409 = vmul.f32 %v8407, %v8407
  %v8410 = vmul.f32 %v8408, %v8408
  %v8411 = vsel %vm121, %v8409, 0.0
  %8412 = vadd.xlane.f32.xlu0 %v8411
  %v8413 = vpop.xlane.xlu0 %8412
  %v8414 = vsel %vm121, %v8410, 0.0
  %8415 = vadd.xlane.f32.xlu0 %v8414
  %v8416 = vpop.xlane.xlu0 %8415
  %v8417 = vmul.f32 %v8413, %v4212
  %v8418 = vmul.f32 %v8416, %v4212
  %v8419 = vadd.f32 %v8417, 1e-05
  %v8420 = vadd.f32 %v8418, 1e-05
  %v8421 = vrsqrt.pop %v8419
  %v8422 = vrsqrt.pop %v8420
  %v8423 = vmul.f32 %v8407, %v8421
  %v8424 = vmul.f32 %v8408, %v8422
  %8426 = vrot.lane.b32.xlu0 %v8342, 96
  %v8427 = vpop.permute.xlu0 %8426
  %v8429 = vmul.f32 %v8423, %v8427
  %v8430 = vmul.f32 %v8424, %v8427
  %8431 = vrot.lane.b32.xlu0 %v8342, 64
  %v8432 = vpop.permute.xlu0 %8431
  %v8434 = vadd.f32 %v8429, %v8432
  %v8435 = vadd.f32 %v8430, %v8432
  %v8436 = vmul.f32 %v8434, %v8434
  %v8437 = vmul.f32 %v8435, %v8435
  %v8438 = vmul.f32 %v8434, %v8436
  %v8439 = vmul.f32 %v8435, %v8437
  %v8440 = vmul.f32 %v8438, 0.044715
  %v8441 = vmul.f32 %v8439, 0.044715
  %v8442 = vadd.f32 %v8434, %v8440
  %v8443 = vadd.f32 %v8435, %v8441
  %v8444 = vmul.f32 %v8442, 0.7978846
  %v8445 = vmul.f32 %v8443, 0.7978846
  %v8446 = vtanh.pop %v8444
  %v8447 = vtanh.pop %v8445
  %v8448 = vadd.f32 %v8446, 1.0
  %v8449 = vadd.f32 %v8447, 1.0
  %v8450 = vmul.f32 %v8448, 0.5
  %v8451 = vmul.f32 %v8449, 0.5
  %v8452 = vmul.f32 %v8434, %v8450
  %v8453 = vmul.f32 %v8435, %v8451
  %v8454 = vld [vmem:[%s5] sm:$0xf]
  %v8455 = vld [vmem:[%s5 + $0x4] sm:$0xf]
  %v8456 = vld [vmem:[%s5 + $0x8] sm:$0xf]
  %v8457 = vld [vmem:[%s5 + $0xc] sm:$0xf]
  %v8458 = vpack.c.bf16 %v8453, %v8452
  %v8459 = vlaneseq
  %v8460 = vshrl.u32 %v8459, 7
  %v8461 = vsub.s32 4, %v8460
  %v8462 = vrot.slane %v47, %v8461
  %v8467 = vunpack.c.l.b16 %v8454
  %v8468 = vunpack.c.l.b16 %v8455
  %v8469 = vunpack.c.l.b16 %v8456
  %v8470 = vunpack.c.l.b16 %v8457
  %v8471 = vpack.c.b16 %v8468, %v8467
  %v8472 = vpack.c.b16 %v8470, %v8469
  %v8476 = vsel %vm121, %v8458, 0
  %8478 = vmatprep.subr.bf16.mxu0 0
  %8479 = vmatpush1.bf16.msra.mxu0 %v8471
  %8480 = vmatprep.subr.bf16.mxu0 0
  %8481 = vmatpush1.bf16.msra.mxu0 %v8472
  %8482 = vmatprep.subr.bf16.mxu0 0
  %8483 = vmatpush1.bf16.msra.mxu0 0
  %8484 = vmatprep.subr.bf16.mxu0 0
  %8485 = vmatpush1.bf16.msra.mxu0 0
  %8486 = vmatprep.subr.bf16.mxu0 0
  %8487 = vmatpush1.bf16.msra.mxu0 0
  %8488 = vmatprep.subr.bf16.mxu0 0
  %8489 = vmatpush1.bf16.msra.mxu0 0
  %8490 = vmatprep.subr.bf16.mxu0 0
  %8491 = vmatpush1.bf16.msra.mxu0 0
  %8492 = vmatprep.subr.bf16.mxu0 0
  %8493 = vmatpush1.bf16.msra.mxu0 0
  %8494 = vmatprep.subr.bf16.mxu0 0
  %8495 = vmatpush1.bf16.msra.mxu0 0
  %8496 = vmatprep.subr.bf16.mxu0 0
  %8497 = vmatpush1.bf16.msra.mxu0 0
  %8498 = vmatprep.subr.bf16.mxu0 0
  %8499 = vmatpush1.bf16.msra.mxu0 0
  %8500 = vmatprep.subr.bf16.mxu0 0
  %8501 = vmatpush1.bf16.msra.mxu0 0
  %8502 = vmatprep.subr.bf16.mxu0 0
  %8503 = vmatpush1.bf16.msra.mxu0 0
  %8504 = vmatprep.subr.bf16.mxu0 0
  %8505 = vmatpush1.bf16.msra.mxu0 0
  %8506 = vmatprep.subr.bf16.mxu0 0
  %8507 = vmatpush1.bf16.msra.mxu0 0
  %8508 = vmatprep.subr.bf16.mxu0 0
  %8509 = vmatpush1.bf16.msra.mxu0 0
  %8510 = vmatprep.mubr.bf16.mxu0 0
  %8511 = vmatmul.mubr.bf16.gmra.mrb[0].mxu0 %v8476
  %v8512 = vpop.f32.mrb[0].mxu0
  %v8513 = vadd.f32 %v8462, %v8512
  %v8514 = vpop.f32.mrb[0].mxu0
  %v8515 = vpop.f32.mrb[0].mxu0
  %v8516 = vadd.f32 %v8462, %v8515
  %v8517 = vpop.f32.mrb[0].mxu0
  %8518 = vdwg.mxu0
  %v8519 = vxor.u32 %v8513, 2147483648
  %v8520 = vxor.u32 %v8516, 2147483648
  %v8521 = vmul.f32 %v8519, 1.442695
  %v8522 = vpow.pop %v8521
  %v8523 = vmul.f32 %v8520, 1.442695
  %v8524 = vpow.pop %v8523
  %v8525 = vadd.f32 %v8522, 1.0
  %v8526 = vadd.f32 %v8524, 1.0
  %v8527 = vrcp.pop %v8525
  %v8528 = vmul.f32 1.0, %v8527
  %v8529 = vrcp.pop %v8526
  %v8530 = vmul.f32 1.0, %v8529
  %8531 = vst [vmem:[%s12] sm:$0xff] %v8528
  %8532 = vst [vmem:[%s12 + $0x8] sm:$0xff] %v8530
  %8533 = vst [vmem:[%s11] sm:$0xff] 0.0
  %8534 = vst [vmem:[%s11 + $0x8] sm:$0xff] 0.0
  %8535 = vst.msk [vmem:[%s11] sm:$0xff] %vm121, %v8336
  %8536 = vst.msk [vmem:[%s11 + $0x8] sm:$0xff] %vm121, %v8337
  // Predicated region
  $region46: #{detection_network.1} parent=0 // pred_check
    _
  $region47: #{detection_network.1} parent=0 // pred_check_branch
    %8538 = sbr.rel (0) target = $region49
  $region48: #{detection_network.1} parent=0 // pred_region
    _
  $region49: #{detection_network.1} parent=0 // pred_fallthru
    _
  // Predicated region
  $region50: #{detection_network.1} parent=0 // pred_check
    _
  $region51: #{detection_network.1} parent=0 // pred_check_branch
    %8540 = sbr.rel (0) target = $region53
  $region52: #{detection_network.1} parent=0 // pred_region
    _
  $region53: #{detection_network.1} parent=0 // pred_fallthru
    _
  // Predicated region
  $region54: #{detection_network.1} parent=0 // pred_check
    _
  $region55: #{detection_network.1} parent=0 // pred_check_branch
    %8542 = sbr.rel (0) target = $region57
  $region56: #{detection_network.1} parent=0 // pred_region
    _
  $region57: #{detection_network.1} parent=0 // pred_fallthru
    _
  // Predicated region
  $region58: #{detection_network.1} parent=0 // pred_check
    _
  $region59: #{detection_network.1} parent=0 // pred_check_branch
    %8544 = sbr.rel (0) target = $region61
  $region60: #{detection_network.1} parent=0 // pred_region
    _
  $region61: #{detection_network.1} parent=0 // pred_fallthru
    _

</llo_original>
